<compile_context>
chip_gen: v6e
topology: v6e:2x2x1
jax: 0.10.0
libtpu: 0.0.40
codegen_flags: <defaults>
</compile_context>

<pallas_src>
import functools

import jax
import jax.numpy as jnp
from jax.experimental import pallas as pl
from jax.experimental.pallas import tpu as pltpu

SMALL_M = 16            # below this a pallas_call is pure launch overhead
MAX_RESIDENT_K = 1024   # above this, tile the reduction (K) axis
TK = 512                # K tile used when K > MAX_RESIDENT_K


def _round_up(x, m):
    return (x + m - 1) // m * m


def _choose_tm(m):
    """Row tile: multiple of 8, capped at 128, and >=2 grid steps whenever
    possible so both v7x TensorCores get a 'parallel' block (megacore)."""
    m8 = _round_up(m, 8)
    if m8 <= 8:
        return 8
    if m8 >= 256:
        return 128
    return _round_up((m8 + 1) // 2, 8)


# ---------------------------------------------------------------------------
# Pallas kernel: fused (patches @ W) + bias (+ ReLU), f32 accumulator
# ---------------------------------------------------------------------------
def _mm_bias_act_kernel(x_ref, w_ref, b_ref, o_ref, acc_ref, *, relu):
    k = pl.program_id(1)

    @pl.when(k == 0)
    def _():
        acc_ref[...] = jnp.zeros_like(acc_ref)

    acc_ref[...] += jnp.dot(x_ref[...], w_ref[...],
                            preferred_element_type=jnp.float32)

    @pl.when(k == pl.num_programs(1) - 1)
    def _():
        acc = acc_ref[...] + b_ref[...]
        if relu:
            acc = jnp.maximum(acc, 0.0)
        o_ref[...] = acc.astype(o_ref.dtype)


def matmul_bias_act(x, w, b, relu=True, out_dtype=jnp.bfloat16):
    """y = act(x @ w + b).  x: (M, K), w: (K, Cout), b: (Cout,) -> (M, Cout)."""
    M, K = x.shape
    K2, Cout = w.shape
    assert K == K2
    b = b.astype(jnp.float32).reshape(1, Cout)

    if M < SMALL_M:
        # Tiny problems (ASPP at OS16, global-pool branch): a Pallas launch is
        # pure overhead here -> plain XLA matmul (still bf16/f32-acc).
        acc = jnp.dot(x.astype(jnp.bfloat16), w.astype(jnp.bfloat16),
                      preferred_element_type=jnp.float32) + b
        if relu:
            acc = jnp.maximum(acc, 0.0)
        return acc.astype(out_dtype)

    # bf16 operands (native MXU dtype on v6e/v7x, avoids f32 emulation on v5e);
    # accumulation stays f32 inside the kernel.
    x = x.astype(jnp.bfloat16)
    w = w.astype(jnp.bfloat16)

    tm = _choose_tm(M)
    Mp = _round_up(M, tm)
    if Mp != M:
        x = jnp.pad(x, ((0, Mp - M), (0, 0)))

    if K <= MAX_RESIDENT_K:
        tk = K  # full-K resident block: legal (block dim == array dim), no pad
    else:
        # K-tiling for real ResNet-101-scale channel counts (v7x 64 MiB VMEM).
        tk = TK
        Kp = _round_up(K, tk)
        if Kp != K:
            x = jnp.pad(x, ((0, 0), (0, Kp - K)))
            w = jnp.pad(w, ((0, Kp - K), (0, 0)))
        K = Kp

    grid = (Mp // tm, K // tk)

    out = pl.pallas_call(
        functools.partial(_mm_bias_act_kernel, relu=relu),
        out_shape=jax.ShapeDtypeStruct((Mp, Cout), out_dtype),
        grid=grid,
        in_specs=[
            pl.BlockSpec((tm, tk), lambda i, k: (i, k)),
            pl.BlockSpec((tk, Cout), lambda i, k: (k, 0)),
            pl.BlockSpec((1, Cout), lambda i, k: (0, 0)),
        ],
        out_specs=pl.BlockSpec((tm, Cout), lambda i, k: (i, 0)),
        scratch_shapes=[pltpu.VMEM((tm, Cout), jnp.float32)],
        compiler_params=pltpu.CompilerParams(
            dimension_semantics=("parallel", "arbitrary"),
            vmem_limit_bytes=32 * 1024 * 1024),
    )(x, w, b)
    return out[:M] if Mp != M else out


# ---------------------------------------------------------------------------
# Conv2d: 1x1 -> implicit GEMM (reshape), 3x3 -> bf16 im2col + Pallas matmul
# ---------------------------------------------------------------------------
def conv2d(x, w, b, stride=1, dilation=1, relu=True, out_dtype=jnp.bfloat16):
    """x: (N,H,W,Cin) NHWC; w: (Cout,Cin,kh,kw) PyTorch layout; b: (Cout,)."""
    N, H, W, Cin = x.shape
    Cout, _, kh, kw = w.shape

    if kh == 1 and kw == 1 and stride == 1:
        # 1x1 conv: no im2col needed at all.
        out = matmul_bias_act(x.reshape(-1, Cin), w.reshape(Cout, Cin).T, b,
                              relu, out_dtype)
        return out.reshape(N, H, W, Cout)

    ph = dilation * (kh - 1) // 2
    pw = dilation * (kw - 1) // 2
    # TODO(synk): 3x3 convs still materialize im2col patches in HBM (now bf16,
    #             half the bytes); a fully fused implicit-GEMM kernel with
    #             overlapping input slabs DMA'd into VMEM would remove this.
    patches = jax.lax.conv_general_dilated_patches(
        x.astype(jnp.bfloat16),
        filter_shape=(kh, kw),
        window_strides=(stride, stride),
        padding=[(ph, ph), (pw, pw)],
        rhs_dilation=(dilation, dilation),
        dimension_numbers=("NHWC", "HWIO", "NHWC"),
    )
    _, Ho, Wo, Kdim = patches.shape
    # patches feature dim is (Cin, kh, kw) flattened, matching the flattening
    # of PyTorch's (Cout, Cin, kh, kw) weights.
    w_flat = w.reshape(Cout, Cin * kh * kw).T
    out = matmul_bias_act(patches.reshape(-1, Kdim), w_flat, b, relu, out_dtype)
    return out.reshape(N, Ho, Wo, Cout)


def upsample(x, scale):
    N, H, W, C = x.shape
    return jax.image.resize(x, (N, H * scale, W * scale, C), method="bilinear")


# ---------------------------------------------------------------------------
# Parameters (deterministic synthetic init, PyTorch-style (Cout,Cin,kh,kw))
# ---------------------------------------------------------------------------
def conv_params(key, cout, cin, kh, kw):
    k_w, k_b = jax.random.split(key)
    fan_in = cin * kh * kw
    w = jax.random.normal(k_w, (cout, cin, kh, kw), jnp.float32) / jnp.sqrt(
        float(fan_in))
    b = 0.01 * jax.random.normal(k_b, (cout,), jnp.float32)
    return w, b


def init_params(key, num_classes):
    keys = jax.random.split(key, 16)
    p = {}
    # simplified encoder (stand-in for resnet101)
    p["stem"] = conv_params(keys[0], 16, 3, 3, 3)      # OS2
    p["enc2"] = conv_params(keys[1], 24, 16, 3, 3)     # OS4  (low-level feats)
    p["enc3"] = conv_params(keys[2], 32, 24, 3, 3)     # OS8
    p["enc4"] = conv_params(keys[3], 64, 32, 3, 3)     # OS16 (high-level feats)
    # ASPP
    p["aspp0"] = conv_params(keys[4], 32, 64, 1, 1)
    p["aspp1"] = conv_params(keys[5], 32, 64, 3, 3)
    p["aspp2"] = conv_params(keys[6], 32, 64, 3, 3)
    p["aspp3"] = conv_params(keys[7], 32, 64, 3, 3)
    p["aspp_pool"] = conv_params(keys[8], 32, 64, 1, 1)
    p["aspp_proj"] = conv_params(keys[9], 32, 5 * 32, 1, 1)
    # decoder
    p["dec_low"] = conv_params(keys[10], 16, 24, 1, 1)
    p["dec1"] = conv_params(keys[11], 32, 32 + 16, 3, 3)
    p["dec2"] = conv_params(keys[12], 32, 32, 3, 3)
    # segmentation head
    p["head"] = conv_params(keys[13], num_classes, 32, 1, 1)
    return p


# ---------------------------------------------------------------------------
# Forward pass (NCHW in / NCHW out, like the PyTorch module)
# ---------------------------------------------------------------------------
def deeplab_forward(params, x_nchw):
    x = jnp.transpose(x_nchw, (0, 2, 3, 1)).astype(jnp.bfloat16)  # -> NHWC bf16

    # encoder
    f1 = conv2d(x, *params["stem"], stride=2)     # OS2
    low = conv2d(f1, *params["enc2"], stride=2)   # OS4 low-level features
    f3 = conv2d(low, *params["enc3"], stride=2)   # OS8
    high = conv2d(f3, *params["enc4"], stride=2)  # OS16 high-level features

    # ASPP (atrous spatial pyramid pooling) -- tiny M, runs via jnp fallback
    a0 = conv2d(high, *params["aspp0"])
    a1 = conv2d(high, *params["aspp1"], dilation=2)
    a2 = conv2d(high, *params["aspp2"], dilation=4)
    a3 = conv2d(high, *params["aspp3"], dilation=6)
    gp = jnp.mean(high, axis=(1, 2), keepdims=True)          # global avg pool
    gp = conv2d(gp, *params["aspp_pool"])
    gp = jnp.broadcast_to(gp, a0.shape)
    aspp = jnp.concatenate([a0, a1, a2, a3, gp], axis=-1)
    aspp = conv2d(aspp, *params["aspp_proj"])

    # decoder
    up = upsample(aspp, 4)                                    # OS16 -> OS4
    lowp = conv2d(low, *params["dec_low"])
    d = jnp.concatenate([up, lowp], axis=-1)
    d = conv2d(d, *params["dec1"])
    d = conv2d(d, *params["dec2"])

    # segmentation head (activation=None in the PyTorch module -> raw logits)
    logits = conv2d(d, *params["head"], relu=False, out_dtype=jnp.float32)
    logits = upsample(logits, 4)                              # OS4 -> OS1

    return jnp.transpose(logits, (0, 3, 1, 2))  # -> NCHW


if __name__ == "__main__":
    key = jax.random.PRNGKey(0)
    pkey, xkey = jax.random.split(key)

    num_classes = 4
    params = init_params(pkey, num_classes)
    x = jax.random.normal(xkey, (2, 3, 32, 32), jnp.float32)  # NCHW input

    fwd = jax.jit(functools.partial(deeplab_forward, params))
    out = jax.block_until_ready(fwd(x))

    assert out.shape == (2, num_classes, 32, 32), out.shape
    assert jnp.all(jnp.isfinite(out))
    print("KERNEL_OK")
</pallas_src>

<mosaic_0001>
module attributes {stable_mosaic.version = 11 : i64} {
  func.func @_mm_bias_act_kernel(%arg0: i32, %arg1: i32, %arg2: memref<128x27xbf16, #tpu.memory_space<vmem>>, %arg3: memref<27x16xbf16, #tpu.memory_space<vmem>>, %arg4: memref<1x16xf32, #tpu.memory_space<vmem>>, %arg5: memref<128x16xbf16, #tpu.memory_space<vmem>>, %arg6: memref<128x16xf32, #tpu.memory_space<vmem>>) attributes {dimension_semantics = [#tpu.dimension_semantics<parallel>, #tpu.dimension_semantics<arbitrary>], iteration_bounds = array<i64: 4, 1>, scalar_prefetch = 0 : i64, scratch_operands = 1 : i64, tpu.core_type = #tpu.core_type<tc>, window_params = [{transform_indices = @transform_0, window_bounds = array<i64: 128, 27>}, {transform_indices = @transform_1, window_bounds = array<i64: 27, 16>}, {pipeline_mode = #tpu.pipeline_mode<synchronous>, transform_indices = @transform_2, window_bounds = array<i64: 1, 16>}, {transform_indices = @transform_3, window_bounds = array<i64: 128, 16>}]} {
    %c0_i32 = arith.constant 0 : i32
    %0 = arith.cmpi eq, %arg1, %c0_i32 : i32
    %1 = arith.extui %0 : i1 to i32
    %c0_i32_0 = arith.constant 0 : i32
    %2 = arith.cmpi ne, %1, %c0_i32_0 : i32
    scf.if %2 {
      %cst_10 = arith.constant 0.000000e+00 : f32
      %12 = vector.broadcast %cst_10 : f32 to vector<128x16xf32>
      %c0_11 = arith.constant 0 : index
      %c0_12 = arith.constant 0 : index
      %13 = vector.load %arg6[%c0_11, %c0_12] : memref<128x16xf32, #tpu.memory_space<vmem>>, vector<128x16xf32>
      tpu.vector_store %arg6[%c0_11, %c0_12], %12 {strides = array<i32>} : memref<128x16xf32, #tpu.memory_space<vmem>>, vector<128x16xf32>,
    } else {
    }
    %c0 = arith.constant 0 : index
    %c0_1 = arith.constant 0 : index
    %3 = vector.load %arg6[%c0, %c0_1] : memref<128x16xf32, #tpu.memory_space<vmem>>, vector<128x16xf32>
    %c0_2 = arith.constant 0 : index
    %c0_3 = arith.constant 0 : index
    %4 = vector.load %arg2[%c0_2, %c0_3] : memref<128x27xbf16, #tpu.memory_space<vmem>>, vector<128x27xbf16>
    %c0_4 = arith.constant 0 : index
    %c0_5 = arith.constant 0 : index
    %5 = vector.load %arg3[%c0_4, %c0_5] : memref<27x16xbf16, #tpu.memory_space<vmem>>, vector<27x16xbf16>
    %cst = arith.constant dense<0.000000e+00> : vector<128x16xf32>
    %6 = tpu.matmul %4, %5, %cst {dimension_numbers = #tpu.dot_dimension_numbers<[1], [0], [0], [1], [0, 0, 1, 1], [], []>} : vector<128x27xbf16>, vector<27x16xbf16>, vector<128x16xf32> -> vector<128x16xf32>
    %7 = arith.addf %3, %6 : vector<128x16xf32>
    %c0_6 = arith.constant 0 : index
    %c0_7 = arith.constant 0 : index
    %8 = vector.load %arg6[%c0_6, %c0_7] : memref<128x16xf32, #tpu.memory_space<vmem>>, vector<128x16xf32>
    tpu.vector_store %arg6[%c0_6, %c0_7], %7 {strides = array<i32>} : memref<128x16xf32, #tpu.memory_space<vmem>>, vector<128x16xf32>,
    %c0_i32_8 = arith.constant 0 : i32
    %9 = arith.cmpi eq, %arg1, %c0_i32_8 : i32
    %10 = arith.extui %9 : i1 to i32
    %c0_i32_9 = arith.constant 0 : i32
    %11 = arith.cmpi ne, %10, %c0_i32_9 : i32
    scf.if %11 {
      %c0_10 = arith.constant 0 : index
      %c0_11 = arith.constant 0 : index
      %12 = vector.load %arg6[%c0_10, %c0_11] : memref<128x16xf32, #tpu.memory_space<vmem>>, vector<128x16xf32>
      %c0_12 = arith.constant 0 : index
      %c0_13 = arith.constant 0 : index
      %13 = vector.load %arg4[%c0_12, %c0_13] : memref<1x16xf32, #tpu.memory_space<vmem>>, vector<1x16xf32>
      %14 = vector.broadcast %13 : vector<1x16xf32> to vector<128x16xf32>
      %15 = arith.addf %12, %14 : vector<128x16xf32>
      %cst_14 = arith.constant 0.000000e+00 : f32
      %16 = vector.broadcast %cst_14 : f32 to vector<128x16xf32>
      %17 = arith.maximumf %15, %16 : vector<128x16xf32>
      %18 = arith.truncf %17 : vector<128x16xf32> to vector<128x16xbf16>
      %c0_15 = arith.constant 0 : index
      %c0_16 = arith.constant 0 : index
      %19 = vector.load %arg5[%c0_15, %c0_16] : memref<128x16xbf16, #tpu.memory_space<vmem>>, vector<128x16xbf16>
      tpu.vector_store %arg5[%c0_15, %c0_16], %18 {strides = array<i32>} : memref<128x16xbf16, #tpu.memory_space<vmem>>, vector<128x16xbf16>,
    } else {
    }
    return
  }
  func.func @transform_0(%arg0: i32, %arg1: i32) -> (i32, i32) {
    %c0_i32 = arith.constant 0 : i32
    return %arg0, %arg1 : i32, i32
  }
  func.func @transform_1(%arg0: i32, %arg1: i32) -> (i32, i32) {
    %c0_i32 = arith.constant 0 : i32
    %c0_i32_0 = arith.constant 0 : i32
    return %arg1, %c0_i32 : i32, i32
  }
  func.func @transform_2(%arg0: i32, %arg1: i32) -> (i32, i32) {
    %c0_i32 = arith.constant 0 : i32
    %c0_i32_0 = arith.constant 0 : i32
    %c0_i32_1 = arith.constant 0 : i32
    return %c0_i32, %c0_i32_0 : i32, i32
  }
  func.func @transform_3(%arg0: i32, %arg1: i32) -> (i32, i32) {
    %c0_i32 = arith.constant 0 : i32
    %c0_i32_0 = arith.constant 0 : i32
    return %arg0, %c0_i32 : i32, i32
  }
}

module attributes {stable_mosaic.version = 11 : i64} {
  func.func @_mm_bias_act_kernel(%arg0: i32, %arg1: i32, %arg2: memref<64x144xbf16, #tpu.memory_space<vmem>>, %arg3: memref<144x24xbf16, #tpu.memory_space<vmem>>, %arg4: memref<1x24xf32, #tpu.memory_space<vmem>>, %arg5: memref<64x24xbf16, #tpu.memory_space<vmem>>, %arg6: memref<64x24xf32, #tpu.memory_space<vmem>>) attributes {dimension_semantics = [#tpu.dimension_semantics<parallel>, #tpu.dimension_semantics<arbitrary>], iteration_bounds = array<i64: 2, 1>, scalar_prefetch = 0 : i64, scratch_operands = 1 : i64, tpu.core_type = #tpu.core_type<tc>, window_params = [{transform_indices = @transform_0, window_bounds = array<i64: 64, 144>}, {transform_indices = @transform_1, window_bounds = array<i64: 144, 24>}, {pipeline_mode = #tpu.pipeline_mode<synchronous>, transform_indices = @transform_2, window_bounds = array<i64: 1, 24>}, {transform_indices = @transform_3, window_bounds = array<i64: 64, 24>}]} {
    %c0_i32 = arith.constant 0 : i32
    %0 = arith.cmpi eq, %arg1, %c0_i32 : i32
    %1 = arith.extui %0 : i1 to i32
    %c0_i32_0 = arith.constant 0 : i32
    %2 = arith.cmpi ne, %1, %c0_i32_0 : i32
    scf.if %2 {
      %cst_10 = arith.constant 0.000000e+00 : f32
      %12 = vector.broadcast %cst_10 : f32 to vector<64x24xf32>
      %c0_11 = arith.constant 0 : index
      %c0_12 = arith.constant 0 : index
      %13 = vector.load %arg6[%c0_11, %c0_12] : memref<64x24xf32, #tpu.memory_space<vmem>>, vector<64x24xf32>
      tpu.vector_store %arg6[%c0_11, %c0_12], %12 {strides = array<i32>} : memref<64x24xf32, #tpu.memory_space<vmem>>, vector<64x24xf32>,
    } else {
    }
    %c0 = arith.constant 0 : index
    %c0_1 = arith.constant 0 : index
    %3 = vector.load %arg6[%c0, %c0_1] : memref<64x24xf32, #tpu.memory_space<vmem>>, vector<64x24xf32>
    %c0_2 = arith.constant 0 : index
    %c0_3 = arith.constant 0 : index
    %4 = vector.load %arg2[%c0_2, %c0_3] : memref<64x144xbf16, #tpu.memory_space<vmem>>, vector<64x144xbf16>
    %c0_4 = arith.constant 0 : index
    %c0_5 = arith.constant 0 : index
    %5 = vector.load %arg3[%c0_4, %c0_5] : memref<144x24xbf16, #tpu.memory_space<vmem>>, vector<144x24xbf16>
    %cst = arith.constant dense<0.000000e+00> : vector<64x24xf32>
    %6 = tpu.matmul %4, %5, %cst {dimension_numbers = #tpu.dot_dimension_numbers<[1], [0], [0], [1], [0, 0, 1, 1], [], []>} : vector<64x144xbf16>, vector<144x24xbf16>, vector<64x24xf32> -> vector<64x24xf32>
    %7 = arith.addf %3, %6 : vector<64x24xf32>
    %c0_6 = arith.constant 0 : index
    %c0_7 = arith.constant 0 : index
    %8 = vector.load %arg6[%c0_6, %c0_7] : memref<64x24xf32, #tpu.memory_space<vmem>>, vector<64x24xf32>
    tpu.vector_store %arg6[%c0_6, %c0_7], %7 {strides = array<i32>} : memref<64x24xf32, #tpu.memory_space<vmem>>, vector<64x24xf32>,
    %c0_i32_8 = arith.constant 0 : i32
    %9 = arith.cmpi eq, %arg1, %c0_i32_8 : i32
    %10 = arith.extui %9 : i1 to i32
    %c0_i32_9 = arith.constant 0 : i32
    %11 = arith.cmpi ne, %10, %c0_i32_9 : i32
    scf.if %11 {
      %c0_10 = arith.constant 0 : index
      %c0_11 = arith.constant 0 : index
      %12 = vector.load %arg6[%c0_10, %c0_11] : memref<64x24xf32, #tpu.memory_space<vmem>>, vector<64x24xf32>
      %c0_12 = arith.constant 0 : index
      %c0_13 = arith.constant 0 : index
      %13 = vector.load %arg4[%c0_12, %c0_13] : memref<1x24xf32, #tpu.memory_space<vmem>>, vector<1x24xf32>
      %14 = vector.broadcast %13 : vector<1x24xf32> to vector<64x24xf32>
      %15 = arith.addf %12, %14 : vector<64x24xf32>
      %cst_14 = arith.constant 0.000000e+00 : f32
      %16 = vector.broadcast %cst_14 : f32 to vector<64x24xf32>
      %17 = arith.maximumf %15, %16 : vector<64x24xf32>
      %18 = arith.truncf %17 : vector<64x24xf32> to vector<64x24xbf16>
      %c0_15 = arith.constant 0 : index
      %c0_16 = arith.constant 0 : index
      %19 = vector.load %arg5[%c0_15, %c0_16] : memref<64x24xbf16, #tpu.memory_space<vmem>>, vector<64x24xbf16>
      tpu.vector_store %arg5[%c0_15, %c0_16], %18 {strides = array<i32>} : memref<64x24xbf16, #tpu.memory_space<vmem>>, vector<64x24xbf16>,
    } else {
    }
    return
  }
  func.func @transform_0(%arg0: i32, %arg1: i32) -> (i32, i32) {
    %c0_i32 = arith.constant 0 : i32
    return %arg0, %arg1 : i32, i32
  }
  func.func @transform_1(%arg0: i32, %arg1: i32) -> (i32, i32) {
    %c0_i32 = arith.constant 0 : i32
    %c0_i32_0 = arith.constant 0 : i32
    return %arg1, %c0_i32 : i32, i32
  }
  func.func @transform_2(%arg0: i32, %arg1: i32) -> (i32, i32) {
    %c0_i32 = arith.constant 0 : i32
    %c0_i32_0 = arith.constant 0 : i32
    %c0_i32_1 = arith.constant 0 : i32
    return %c0_i32, %c0_i32_0 : i32, i32
  }
  func.func @transform_3(%arg0: i32, %arg1: i32) -> (i32, i32) {
    %c0_i32 = arith.constant 0 : i32
    %c0_i32_0 = arith.constant 0 : i32
    return %arg0, %c0_i32 : i32, i32
  }
}

module attributes {stable_mosaic.version = 11 : i64} {
  func.func @_mm_bias_act_kernel(%arg0: i32, %arg1: i32, %arg2: memref<16x216xbf16, #tpu.memory_space<vmem>>, %arg3: memref<216x32xbf16, #tpu.memory_space<vmem>>, %arg4: memref<1x32xf32, #tpu.memory_space<vmem>>, %arg5: memref<16x32xbf16, #tpu.memory_space<vmem>>, %arg6: memref<16x32xf32, #tpu.memory_space<vmem>>) attributes {dimension_semantics = [#tpu.dimension_semantics<parallel>, #tpu.dimension_semantics<arbitrary>], iteration_bounds = array<i64: 2, 1>, scalar_prefetch = 0 : i64, scratch_operands = 1 : i64, tpu.core_type = #tpu.core_type<tc>, window_params = [{transform_indices = @transform_0, window_bounds = array<i64: 16, 216>}, {transform_indices = @transform_1, window_bounds = array<i64: 216, 32>}, {pipeline_mode = #tpu.pipeline_mode<synchronous>, transform_indices = @transform_2, window_bounds = array<i64: 1, 32>}, {transform_indices = @transform_3, window_bounds = array<i64: 16, 32>}]} {
    %c0_i32 = arith.constant 0 : i32
    %0 = arith.cmpi eq, %arg1, %c0_i32 : i32
    %1 = arith.extui %0 : i1 to i32
    %c0_i32_0 = arith.constant 0 : i32
    %2 = arith.cmpi ne, %1, %c0_i32_0 : i32
    scf.if %2 {
      %cst_10 = arith.constant 0.000000e+00 : f32
      %12 = vector.broadcast %cst_10 : f32 to vector<16x32xf32>
      %c0_11 = arith.constant 0 : index
      %c0_12 = arith.constant 0 : index
      %13 = vector.load %arg6[%c0_11, %c0_12] : memref<16x32xf32, #tpu.memory_space<vmem>>, vector<16x32xf32>
      tpu.vector_store %arg6[%c0_11, %c0_12], %12 {strides = array<i32>} : memref<16x32xf32, #tpu.memory_space<vmem>>, vector<16x32xf32>,
    } else {
    }
    %c0 = arith.constant 0 : index
    %c0_1 = arith.constant 0 : index
    %3 = vector.load %arg6[%c0, %c0_1] : memref<16x32xf32, #tpu.memory_space<vmem>>, vector<16x32xf32>
    %c0_2 = arith.constant 0 : index
    %c0_3 = arith.constant 0 : index
    %4 = vector.load %arg2[%c0_2, %c0_3] : memref<16x216xbf16, #tpu.memory_space<vmem>>, vector<16x216xbf16>
    %c0_4 = arith.constant 0 : index
    %c0_5 = arith.constant 0 : index
    %5 = vector.load %arg3[%c0_4, %c0_5] : memref<216x32xbf16, #tpu.memory_space<vmem>>, vector<216x32xbf16>
    %cst = arith.constant dense<0.000000e+00> : vector<16x32xf32>
    %6 = tpu.matmul %4, %5, %cst {dimension_numbers = #tpu.dot_dimension_numbers<[1], [0], [0], [1], [0, 0, 1, 1], [], []>} : vector<16x216xbf16>, vector<216x32xbf16>, vector<16x32xf32> -> vector<16x32xf32>
    %7 = arith.addf %3, %6 : vector<16x32xf32>
    %c0_6 = arith.constant 0 : index
    %c0_7 = arith.constant 0 : index
    %8 = vector.load %arg6[%c0_6, %c0_7] : memref<16x32xf32, #tpu.memory_space<vmem>>, vector<16x32xf32>
    tpu.vector_store %arg6[%c0_6, %c0_7], %7 {strides = array<i32>} : memref<16x32xf32, #tpu.memory_space<vmem>>, vector<16x32xf32>,
    %c0_i32_8 = arith.constant 0 : i32
    %9 = arith.cmpi eq, %arg1, %c0_i32_8 : i32
    %10 = arith.extui %9 : i1 to i32
    %c0_i32_9 = arith.constant 0 : i32
    %11 = arith.cmpi ne, %10, %c0_i32_9 : i32
    scf.if %11 {
      %c0_10 = arith.constant 0 : index
      %c0_11 = arith.constant 0 : index
      %12 = vector.load %arg6[%c0_10, %c0_11] : memref<16x32xf32, #tpu.memory_space<vmem>>, vector<16x32xf32>
      %c0_12 = arith.constant 0 : index
      %c0_13 = arith.constant 0 : index
      %13 = vector.load %arg4[%c0_12, %c0_13] : memref<1x32xf32, #tpu.memory_space<vmem>>, vector<1x32xf32>
      %14 = vector.broadcast %13 : vector<1x32xf32> to vector<16x32xf32>
      %15 = arith.addf %12, %14 : vector<16x32xf32>
      %cst_14 = arith.constant 0.000000e+00 : f32
      %16 = vector.broadcast %cst_14 : f32 to vector<16x32xf32>
      %17 = arith.maximumf %15, %16 : vector<16x32xf32>
      %18 = arith.truncf %17 : vector<16x32xf32> to vector<16x32xbf16>
      %c0_15 = arith.constant 0 : index
      %c0_16 = arith.constant 0 : index
      %19 = vector.load %arg5[%c0_15, %c0_16] : memref<16x32xbf16, #tpu.memory_space<vmem>>, vector<16x32xbf16>
      tpu.vector_store %arg5[%c0_15, %c0_16], %18 {strides = array<i32>} : memref<16x32xbf16, #tpu.memory_space<vmem>>, vector<16x32xbf16>,
    } else {
    }
    return
  }
  func.func @transform_0(%arg0: i32, %arg1: i32) -> (i32, i32) {
    %c0_i32 = arith.constant 0 : i32
    return %arg0, %arg1 : i32, i32
  }
  func.func @transform_1(%arg0: i32, %arg1: i32) -> (i32, i32) {
    %c0_i32 = arith.constant 0 : i32
    %c0_i32_0 = arith.constant 0 : i32
    return %arg1, %c0_i32 : i32, i32
  }
  func.func @transform_2(%arg0: i32, %arg1: i32) -> (i32, i32) {
    %c0_i32 = arith.constant 0 : i32
    %c0_i32_0 = arith.constant 0 : i32
    %c0_i32_1 = arith.constant 0 : i32
    return %c0_i32, %c0_i32_0 : i32, i32
  }
  func.func @transform_3(%arg0: i32, %arg1: i32) -> (i32, i32) {
    %c0_i32 = arith.constant 0 : i32
    %c0_i32_0 = arith.constant 0 : i32
    return %arg0, %c0_i32 : i32, i32
  }
}

module attributes {stable_mosaic.version = 11 : i64} {
  func.func @_mm_bias_act_kernel(%arg0: i32, %arg1: i32, %arg2: memref<64x24xbf16, #tpu.memory_space<vmem>>, %arg3: memref<24x16xbf16, #tpu.memory_space<vmem>>, %arg4: memref<1x16xf32, #tpu.memory_space<vmem>>, %arg5: memref<64x16xbf16, #tpu.memory_space<vmem>>, %arg6: memref<64x16xf32, #tpu.memory_space<vmem>>) attributes {dimension_semantics = [#tpu.dimension_semantics<parallel>, #tpu.dimension_semantics<arbitrary>], iteration_bounds = array<i64: 2, 1>, scalar_prefetch = 0 : i64, scratch_operands = 1 : i64, tpu.core_type = #tpu.core_type<tc>, window_params = [{transform_indices = @transform_0, window_bounds = array<i64: 64, 24>}, {transform_indices = @transform_1, window_bounds = array<i64: 24, 16>}, {pipeline_mode = #tpu.pipeline_mode<synchronous>, transform_indices = @transform_2, window_bounds = array<i64: 1, 16>}, {transform_indices = @transform_3, window_bounds = array<i64: 64, 16>}]} {
    %c0_i32 = arith.constant 0 : i32
    %0 = arith.cmpi eq, %arg1, %c0_i32 : i32
    %1 = arith.extui %0 : i1 to i32
    %c0_i32_0 = arith.constant 0 : i32
    %2 = arith.cmpi ne, %1, %c0_i32_0 : i32
    scf.if %2 {
      %cst_10 = arith.constant 0.000000e+00 : f32
      %12 = vector.broadcast %cst_10 : f32 to vector<64x16xf32>
      %c0_11 = arith.constant 0 : index
      %c0_12 = arith.constant 0 : index
      %13 = vector.load %arg6[%c0_11, %c0_12] : memref<64x16xf32, #tpu.memory_space<vmem>>, vector<64x16xf32>
      tpu.vector_store %arg6[%c0_11, %c0_12], %12 {strides = array<i32>} : memref<64x16xf32, #tpu.memory_space<vmem>>, vector<64x16xf32>,
    } else {
    }
    %c0 = arith.constant 0 : index
    %c0_1 = arith.constant 0 : index
    %3 = vector.load %arg6[%c0, %c0_1] : memref<64x16xf32, #tpu.memory_space<vmem>>, vector<64x16xf32>
    %c0_2 = arith.constant 0 : index
    %c0_3 = arith.constant 0 : index
    %4 = vector.load %arg2[%c0_2, %c0_3] : memref<64x24xbf16, #tpu.memory_space<vmem>>, vector<64x24xbf16>
    %c0_4 = arith.constant 0 : index
    %c0_5 = arith.constant 0 : index
    %5 = vector.load %arg3[%c0_4, %c0_5] : memref<24x16xbf16, #tpu.memory_space<vmem>>, vector<24x16xbf16>
    %cst = arith.constant dense<0.000000e+00> : vector<64x16xf32>
    %6 = tpu.matmul %4, %5, %cst {dimension_numbers = #tpu.dot_dimension_numbers<[1], [0], [0], [1], [0, 0, 1, 1], [], []>} : vector<64x24xbf16>, vector<24x16xbf16>, vector<64x16xf32> -> vector<64x16xf32>
    %7 = arith.addf %3, %6 : vector<64x16xf32>
    %c0_6 = arith.constant 0 : index
    %c0_7 = arith.constant 0 : index
    %8 = vector.load %arg6[%c0_6, %c0_7] : memref<64x16xf32, #tpu.memory_space<vmem>>, vector<64x16xf32>
    tpu.vector_store %arg6[%c0_6, %c0_7], %7 {strides = array<i32>} : memref<64x16xf32, #tpu.memory_space<vmem>>, vector<64x16xf32>,
    %c0_i32_8 = arith.constant 0 : i32
    %9 = arith.cmpi eq, %arg1, %c0_i32_8 : i32
    %10 = arith.extui %9 : i1 to i32
    %c0_i32_9 = arith.constant 0 : i32
    %11 = arith.cmpi ne, %10, %c0_i32_9 : i32
    scf.if %11 {
      %c0_10 = arith.constant 0 : index
      %c0_11 = arith.constant 0 : index
      %12 = vector.load %arg6[%c0_10, %c0_11] : memref<64x16xf32, #tpu.memory_space<vmem>>, vector<64x16xf32>
      %c0_12 = arith.constant 0 : index
      %c0_13 = arith.constant 0 : index
      %13 = vector.load %arg4[%c0_12, %c0_13] : memref<1x16xf32, #tpu.memory_space<vmem>>, vector<1x16xf32>
      %14 = vector.broadcast %13 : vector<1x16xf32> to vector<64x16xf32>
      %15 = arith.addf %12, %14 : vector<64x16xf32>
      %cst_14 = arith.constant 0.000000e+00 : f32
      %16 = vector.broadcast %cst_14 : f32 to vector<64x16xf32>
      %17 = arith.maximumf %15, %16 : vector<64x16xf32>
      %18 = arith.truncf %17 : vector<64x16xf32> to vector<64x16xbf16>
      %c0_15 = arith.constant 0 : index
      %c0_16 = arith.constant 0 : index
      %19 = vector.load %arg5[%c0_15, %c0_16] : memref<64x16xbf16, #tpu.memory_space<vmem>>, vector<64x16xbf16>
      tpu.vector_store %arg5[%c0_15, %c0_16], %18 {strides = array<i32>} : memref<64x16xbf16, #tpu.memory_space<vmem>>, vector<64x16xbf16>,
    } else {
    }
    return
  }
  func.func @transform_0(%arg0: i32, %arg1: i32) -> (i32, i32) {
    %c0_i32 = arith.constant 0 : i32
    return %arg0, %arg1 : i32, i32
  }
  func.func @transform_1(%arg0: i32, %arg1: i32) -> (i32, i32) {
    %c0_i32 = arith.constant 0 : i32
    %c0_i32_0 = arith.constant 0 : i32
    return %arg1, %c0_i32 : i32, i32
  }
  func.func @transform_2(%arg0: i32, %arg1: i32) -> (i32, i32) {
    %c0_i32 = arith.constant 0 : i32
    %c0_i32_0 = arith.constant 0 : i32
    %c0_i32_1 = arith.constant 0 : i32
    return %c0_i32, %c0_i32_0 : i32, i32
  }
  func.func @transform_3(%arg0: i32, %arg1: i32) -> (i32, i32) {
    %c0_i32 = arith.constant 0 : i32
    %c0_i32_0 = arith.constant 0 : i32
    return %arg0, %c0_i32 : i32, i32
  }
}

module attributes {stable_mosaic.version = 11 : i64} {
  func.func @_mm_bias_act_kernel(%arg0: i32, %arg1: i32, %arg2: memref<64x432xbf16, #tpu.memory_space<vmem>>, %arg3: memref<432x32xbf16, #tpu.memory_space<vmem>>, %arg4: memref<1x32xf32, #tpu.memory_space<vmem>>, %arg5: memref<64x32xbf16, #tpu.memory_space<vmem>>, %arg6: memref<64x32xf32, #tpu.memory_space<vmem>>) attributes {dimension_semantics = [#tpu.dimension_semantics<parallel>, #tpu.dimension_semantics<arbitrary>], iteration_bounds = array<i64: 2, 1>, scalar_prefetch = 0 : i64, scratch_operands = 1 : i64, tpu.core_type = #tpu.core_type<tc>, window_params = [{transform_indices = @transform_0, window_bounds = array<i64: 64, 432>}, {transform_indices = @transform_1, window_bounds = array<i64: 432, 32>}, {pipeline_mode = #tpu.pipeline_mode<synchronous>, transform_indices = @transform_2, window_bounds = array<i64: 1, 32>}, {transform_indices = @transform_3, window_bounds = array<i64: 64, 32>}]} {
    %c0_i32 = arith.constant 0 : i32
    %0 = arith.cmpi eq, %arg1, %c0_i32 : i32
    %1 = arith.extui %0 : i1 to i32
    %c0_i32_0 = arith.constant 0 : i32
    %2 = arith.cmpi ne, %1, %c0_i32_0 : i32
    scf.if %2 {
      %cst_10 = arith.constant 0.000000e+00 : f32
      %12 = vector.broadcast %cst_10 : f32 to vector<64x32xf32>
      %c0_11 = arith.constant 0 : index
      %c0_12 = arith.constant 0 : index
      %13 = vector.load %arg6[%c0_11, %c0_12] : memref<64x32xf32, #tpu.memory_space<vmem>>, vector<64x32xf32>
      tpu.vector_store %arg6[%c0_11, %c0_12], %12 {strides = array<i32>} : memref<64x32xf32, #tpu.memory_space<vmem>>, vector<64x32xf32>,
    } else {
    }
    %c0 = arith.constant 0 : index
    %c0_1 = arith.constant 0 : index
    %3 = vector.load %arg6[%c0, %c0_1] : memref<64x32xf32, #tpu.memory_space<vmem>>, vector<64x32xf32>
    %c0_2 = arith.constant 0 : index
    %c0_3 = arith.constant 0 : index
    %4 = vector.load %arg2[%c0_2, %c0_3] : memref<64x432xbf16, #tpu.memory_space<vmem>>, vector<64x432xbf16>
    %c0_4 = arith.constant 0 : index
    %c0_5 = arith.constant 0 : index
    %5 = vector.load %arg3[%c0_4, %c0_5] : memref<432x32xbf16, #tpu.memory_space<vmem>>, vector<432x32xbf16>
    %cst = arith.constant dense<0.000000e+00> : vector<64x32xf32>
    %6 = tpu.matmul %4, %5, %cst {dimension_numbers = #tpu.dot_dimension_numbers<[1], [0], [0], [1], [0, 0, 1, 1], [], []>} : vector<64x432xbf16>, vector<432x32xbf16>, vector<64x32xf32> -> vector<64x32xf32>
    %7 = arith.addf %3, %6 : vector<64x32xf32>
    %c0_6 = arith.constant 0 : index
    %c0_7 = arith.constant 0 : index
    %8 = vector.load %arg6[%c0_6, %c0_7] : memref<64x32xf32, #tpu.memory_space<vmem>>, vector<64x32xf32>
    tpu.vector_store %arg6[%c0_6, %c0_7], %7 {strides = array<i32>} : memref<64x32xf32, #tpu.memory_space<vmem>>, vector<64x32xf32>,
    %c0_i32_8 = arith.constant 0 : i32
    %9 = arith.cmpi eq, %arg1, %c0_i32_8 : i32
    %10 = arith.extui %9 : i1 to i32
    %c0_i32_9 = arith.constant 0 : i32
    %11 = arith.cmpi ne, %10, %c0_i32_9 : i32
    scf.if %11 {
      %c0_10 = arith.constant 0 : index
      %c0_11 = arith.constant 0 : index
      %12 = vector.load %arg6[%c0_10, %c0_11] : memref<64x32xf32, #tpu.memory_space<vmem>>, vector<64x32xf32>
      %c0_12 = arith.constant 0 : index
      %c0_13 = arith.constant 0 : index
      %13 = vector.load %arg4[%c0_12, %c0_13] : memref<1x32xf32, #tpu.memory_space<vmem>>, vector<1x32xf32>
      %14 = vector.broadcast %13 : vector<1x32xf32> to vector<64x32xf32>
      %15 = arith.addf %12, %14 : vector<64x32xf32>
      %cst_14 = arith.constant 0.000000e+00 : f32
      %16 = vector.broadcast %cst_14 : f32 to vector<64x32xf32>
      %17 = arith.maximumf %15, %16 : vector<64x32xf32>
      %18 = arith.truncf %17 : vector<64x32xf32> to vector<64x32xbf16>
      %c0_15 = arith.constant 0 : index
      %c0_16 = arith.constant 0 : index
      %19 = vector.load %arg5[%c0_15, %c0_16] : memref<64x32xbf16, #tpu.memory_space<vmem>>, vector<64x32xbf16>
      tpu.vector_store %arg5[%c0_15, %c0_16], %18 {strides = array<i32>} : memref<64x32xbf16, #tpu.memory_space<vmem>>, vector<64x32xbf16>,
    } else {
    }
    return
  }
  func.func @transform_0(%arg0: i32, %arg1: i32) -> (i32, i32) {
    %c0_i32 = arith.constant 0 : i32
    return %arg0, %arg1 : i32, i32
  }
  func.func @transform_1(%arg0: i32, %arg1: i32) -> (i32, i32) {
    %c0_i32 = arith.constant 0 : i32
    %c0_i32_0 = arith.constant 0 : i32
    return %arg1, %c0_i32 : i32, i32
  }
  func.func @transform_2(%arg0: i32, %arg1: i32) -> (i32, i32) {
    %c0_i32 = arith.constant 0 : i32
    %c0_i32_0 = arith.constant 0 : i32
    %c0_i32_1 = arith.constant 0 : i32
    return %c0_i32, %c0_i32_0 : i32, i32
  }
  func.func @transform_3(%arg0: i32, %arg1: i32) -> (i32, i32) {
    %c0_i32 = arith.constant 0 : i32
    %c0_i32_0 = arith.constant 0 : i32
    return %arg0, %c0_i32 : i32, i32
  }
}

module attributes {stable_mosaic.version = 11 : i64} {
  func.func @_mm_bias_act_kernel(%arg0: i32, %arg1: i32, %arg2: memref<64x288xbf16, #tpu.memory_space<vmem>>, %arg3: memref<288x32xbf16, #tpu.memory_space<vmem>>, %arg4: memref<1x32xf32, #tpu.memory_space<vmem>>, %arg5: memref<64x32xbf16, #tpu.memory_space<vmem>>, %arg6: memref<64x32xf32, #tpu.memory_space<vmem>>) attributes {dimension_semantics = [#tpu.dimension_semantics<parallel>, #tpu.dimension_semantics<arbitrary>], iteration_bounds = array<i64: 2, 1>, scalar_prefetch = 0 : i64, scratch_operands = 1 : i64, tpu.core_type = #tpu.core_type<tc>, window_params = [{transform_indices = @transform_0, window_bounds = array<i64: 64, 288>}, {transform_indices = @transform_1, window_bounds = array<i64: 288, 32>}, {pipeline_mode = #tpu.pipeline_mode<synchronous>, transform_indices = @transform_2, window_bounds = array<i64: 1, 32>}, {transform_indices = @transform_3, window_bounds = array<i64: 64, 32>}]} {
    %c0_i32 = arith.constant 0 : i32
    %0 = arith.cmpi eq, %arg1, %c0_i32 : i32
    %1 = arith.extui %0 : i1 to i32
    %c0_i32_0 = arith.constant 0 : i32
    %2 = arith.cmpi ne, %1, %c0_i32_0 : i32
    scf.if %2 {
      %cst_10 = arith.constant 0.000000e+00 : f32
      %12 = vector.broadcast %cst_10 : f32 to vector<64x32xf32>
      %c0_11 = arith.constant 0 : index
      %c0_12 = arith.constant 0 : index
      %13 = vector.load %arg6[%c0_11, %c0_12] : memref<64x32xf32, #tpu.memory_space<vmem>>, vector<64x32xf32>
      tpu.vector_store %arg6[%c0_11, %c0_12], %12 {strides = array<i32>} : memref<64x32xf32, #tpu.memory_space<vmem>>, vector<64x32xf32>,
    } else {
    }
    %c0 = arith.constant 0 : index
    %c0_1 = arith.constant 0 : index
    %3 = vector.load %arg6[%c0, %c0_1] : memref<64x32xf32, #tpu.memory_space<vmem>>, vector<64x32xf32>
    %c0_2 = arith.constant 0 : index
    %c0_3 = arith.constant 0 : index
    %4 = vector.load %arg2[%c0_2, %c0_3] : memref<64x288xbf16, #tpu.memory_space<vmem>>, vector<64x288xbf16>
    %c0_4 = arith.constant 0 : index
    %c0_5 = arith.constant 0 : index
    %5 = vector.load %arg3[%c0_4, %c0_5] : memref<288x32xbf16, #tpu.memory_space<vmem>>, vector<288x32xbf16>
    %cst = arith.constant dense<0.000000e+00> : vector<64x32xf32>
    %6 = tpu.matmul %4, %5, %cst {dimension_numbers = #tpu.dot_dimension_numbers<[1], [0], [0], [1], [0, 0, 1, 1], [], []>} : vector<64x288xbf16>, vector<288x32xbf16>, vector<64x32xf32> -> vector<64x32xf32>
    %7 = arith.addf %3, %6 : vector<64x32xf32>
    %c0_6 = arith.constant 0 : index
    %c0_7 = arith.constant 0 : index
    %8 = vector.load %arg6[%c0_6, %c0_7] : memref<64x32xf32, #tpu.memory_space<vmem>>, vector<64x32xf32>
    tpu.vector_store %arg6[%c0_6, %c0_7], %7 {strides = array<i32>} : memref<64x32xf32, #tpu.memory_space<vmem>>, vector<64x32xf32>,
    %c0_i32_8 = arith.constant 0 : i32
    %9 = arith.cmpi eq, %arg1, %c0_i32_8 : i32
    %10 = arith.extui %9 : i1 to i32
    %c0_i32_9 = arith.constant 0 : i32
    %11 = arith.cmpi ne, %10, %c0_i32_9 : i32
    scf.if %11 {
      %c0_10 = arith.constant 0 : index
      %c0_11 = arith.constant 0 : index
      %12 = vector.load %arg6[%c0_10, %c0_11] : memref<64x32xf32, #tpu.memory_space<vmem>>, vector<64x32xf32>
      %c0_12 = arith.constant 0 : index
      %c0_13 = arith.constant 0 : index
      %13 = vector.load %arg4[%c0_12, %c0_13] : memref<1x32xf32, #tpu.memory_space<vmem>>, vector<1x32xf32>
      %14 = vector.broadcast %13 : vector<1x32xf32> to vector<64x32xf32>
      %15 = arith.addf %12, %14 : vector<64x32xf32>
      %cst_14 = arith.constant 0.000000e+00 : f32
      %16 = vector.broadcast %cst_14 : f32 to vector<64x32xf32>
      %17 = arith.maximumf %15, %16 : vector<64x32xf32>
      %18 = arith.truncf %17 : vector<64x32xf32> to vector<64x32xbf16>
      %c0_15 = arith.constant 0 : index
      %c0_16 = arith.constant 0 : index
      %19 = vector.load %arg5[%c0_15, %c0_16] : memref<64x32xbf16, #tpu.memory_space<vmem>>, vector<64x32xbf16>
      tpu.vector_store %arg5[%c0_15, %c0_16], %18 {strides = array<i32>} : memref<64x32xbf16, #tpu.memory_space<vmem>>, vector<64x32xbf16>,
    } else {
    }
    return
  }
  func.func @transform_0(%arg0: i32, %arg1: i32) -> (i32, i32) {
    %c0_i32 = arith.constant 0 : i32
    return %arg0, %arg1 : i32, i32
  }
  func.func @transform_1(%arg0: i32, %arg1: i32) -> (i32, i32) {
    %c0_i32 = arith.constant 0 : i32
    %c0_i32_0 = arith.constant 0 : i32
    return %arg1, %c0_i32 : i32, i32
  }
  func.func @transform_2(%arg0: i32, %arg1: i32) -> (i32, i32) {
    %c0_i32 = arith.constant 0 : i32
    %c0_i32_0 = arith.constant 0 : i32
    %c0_i32_1 = arith.constant 0 : i32
    return %c0_i32, %c0_i32_0 : i32, i32
  }
  func.func @transform_3(%arg0: i32, %arg1: i32) -> (i32, i32) {
    %c0_i32 = arith.constant 0 : i32
    %c0_i32_0 = arith.constant 0 : i32
    return %arg0, %c0_i32 : i32, i32
  }
}

module attributes {stable_mosaic.version = 11 : i64} {
  func.func @_mm_bias_act_kernel(%arg0: i32, %arg1: i32, %arg2: memref<64x32xbf16, #tpu.memory_space<vmem>>, %arg3: memref<32x4xbf16, #tpu.memory_space<vmem>>, %arg4: memref<1x4xf32, #tpu.memory_space<vmem>>, %arg5: memref<64x4xf32, #tpu.memory_space<vmem>>, %arg6: memref<64x4xf32, #tpu.memory_space<vmem>>) attributes {dimension_semantics = [#tpu.dimension_semantics<parallel>, #tpu.dimension_semantics<arbitrary>], iteration_bounds = array<i64: 2, 1>, scalar_prefetch = 0 : i64, scratch_operands = 1 : i64, tpu.core_type = #tpu.core_type<tc>, window_params = [{transform_indices = @transform_0, window_bounds = array<i64: 64, 32>}, {transform_indices = @transform_1, window_bounds = array<i64: 32, 4>}, {pipeline_mode = #tpu.pipeline_mode<synchronous>, transform_indices = @transform_2, window_bounds = array<i64: 1, 4>}, {transform_indices = @transform_3, window_bounds = array<i64: 64, 4>}]} {
    %c0_i32 = arith.constant 0 : i32
    %0 = arith.cmpi eq, %arg1, %c0_i32 : i32
    %1 = arith.extui %0 : i1 to i32
    %c0_i32_0 = arith.constant 0 : i32
    %2 = arith.cmpi ne, %1, %c0_i32_0 : i32
    scf.if %2 {
      %cst_10 = arith.constant 0.000000e+00 : f32
      %12 = vector.broadcast %cst_10 : f32 to vector<64x4xf32>
      %c0_11 = arith.constant 0 : index
      %c0_12 = arith.constant 0 : index
      %13 = vector.load %arg6[%c0_11, %c0_12] : memref<64x4xf32, #tpu.memory_space<vmem>>, vector<64x4xf32>
      tpu.vector_store %arg6[%c0_11, %c0_12], %12 {strides = array<i32>} : memref<64x4xf32, #tpu.memory_space<vmem>>, vector<64x4xf32>,
    } else {
    }
    %c0 = arith.constant 0 : index
    %c0_1 = arith.constant 0 : index
    %3 = vector.load %arg6[%c0, %c0_1] : memref<64x4xf32, #tpu.memory_space<vmem>>, vector<64x4xf32>
    %c0_2 = arith.constant 0 : index
    %c0_3 = arith.constant 0 : index
    %4 = vector.load %arg2[%c0_2, %c0_3] : memref<64x32xbf16, #tpu.memory_space<vmem>>, vector<64x32xbf16>
    %c0_4 = arith.constant 0 : index
    %c0_5 = arith.constant 0 : index
    %5 = vector.load %arg3[%c0_4, %c0_5] : memref<32x4xbf16, #tpu.memory_space<vmem>>, vector<32x4xbf16>
    %cst = arith.constant dense<0.000000e+00> : vector<64x4xf32>
    %6 = tpu.matmul %4, %5, %cst {dimension_numbers = #tpu.dot_dimension_numbers<[1], [0], [0], [1], [0, 0, 1, 1], [], []>} : vector<64x32xbf16>, vector<32x4xbf16>, vector<64x4xf32> -> vector<64x4xf32>
    %7 = arith.addf %3, %6 : vector<64x4xf32>
    %c0_6 = arith.constant 0 : index
    %c0_7 = arith.constant 0 : index
    %8 = vector.load %arg6[%c0_6, %c0_7] : memref<64x4xf32, #tpu.memory_space<vmem>>, vector<64x4xf32>
    tpu.vector_store %arg6[%c0_6, %c0_7], %7 {strides = array<i32>} : memref<64x4xf32, #tpu.memory_space<vmem>>, vector<64x4xf32>,
    %c0_i32_8 = arith.constant 0 : i32
    %9 = arith.cmpi eq, %arg1, %c0_i32_8 : i32
    %10 = arith.extui %9 : i1 to i32
    %c0_i32_9 = arith.constant 0 : i32
    %11 = arith.cmpi ne, %10, %c0_i32_9 : i32
    scf.if %11 {
      %c0_10 = arith.constant 0 : index
      %c0_11 = arith.constant 0 : index
      %12 = vector.load %arg6[%c0_10, %c0_11] : memref<64x4xf32, #tpu.memory_space<vmem>>, vector<64x4xf32>
      %c0_12 = arith.constant 0 : index
      %c0_13 = arith.constant 0 : index
      %13 = vector.load %arg4[%c0_12, %c0_13] : memref<1x4xf32, #tpu.memory_space<vmem>>, vector<1x4xf32>
      %14 = vector.broadcast %13 : vector<1x4xf32> to vector<64x4xf32>
      %15 = arith.addf %12, %14 : vector<64x4xf32>
      %c0_14 = arith.constant 0 : index
      %c0_15 = arith.constant 0 : index
      %16 = vector.load %arg5[%c0_14, %c0_15] : memref<64x4xf32, #tpu.memory_space<vmem>>, vector<64x4xf32>
      tpu.vector_store %arg5[%c0_14, %c0_15], %15 {strides = array<i32>} : memref<64x4xf32, #tpu.memory_space<vmem>>, vector<64x4xf32>,
    } else {
    }
    return
  }
  func.func @transform_0(%arg0: i32, %arg1: i32) -> (i32, i32) {
    %c0_i32 = arith.constant 0 : i32
    return %arg0, %arg1 : i32, i32
  }
  func.func @transform_1(%arg0: i32, %arg1: i32) -> (i32, i32) {
    %c0_i32 = arith.constant 0 : i32
    %c0_i32_0 = arith.constant 0 : i32
    return %arg1, %c0_i32 : i32, i32
  }
  func.func @transform_2(%arg0: i32, %arg1: i32) -> (i32, i32) {
    %c0_i32 = arith.constant 0 : i32
    %c0_i32_0 = arith.constant 0 : i32
    %c0_i32_1 = arith.constant 0 : i32
    return %c0_i32, %c0_i32_0 : i32, i32
  }
  func.func @transform_3(%arg0: i32, %arg1: i32) -> (i32, i32) {
    %c0_i32 = arith.constant 0 : i32
    %c0_i32_0 = arith.constant 0 : i32
    return %arg0, %c0_i32 : i32, i32
  }
}

</mosaic_0001>

<llo_original>
// kernel: deeplab_forward.7
$region0: #{deeplab_forward.7}
  #allocation0 [shape = 'u32[]', space=smem, size = 0x4, offset = 0x4, fixed_abs, tag = 'smem constant byte address 0x4 - core index']
  #allocation1 [shape = 'u32[144,128]{1,0:T(1,128)}', space=vmem, size = 0x12000, scoped, tag = 'internal scratch']
  #allocation2 [shape = 'f32[128,16]{1,0:T(8,128)}', space=vmem, size = 0x10000, scoped, tag = 'scratch operand']
  %s0 = inlined_call_operand.vmem [shape: bf16[512,27], index: 0, kind: input, shape index: {}]
  %s1 = inlined_call_operand.vmem [shape: bf16[27,16], index: 1, kind: input, shape index: {}]
  %s2 = inlined_call_operand.vmem [shape: f32[1,16], index: 2, kind: input, shape index: {}]
  %s3 = inlined_call_operand.vmem [shape: bf16[512,16], index: 3, kind: output, shape index: {}]
  %s4 = sld [smem:[#allocation0]]
  $region53: #{deeplab_forward.7} parent=0
    _
  %s6 = ssub.s32 1, %s4
  %s7 = scalar_select 0, %s6, %s4
  loop: start=0, step=1, limit=6
  $region2: #{deeplab_forward.7} parent=0 // loop_pre_header
    _
  $region3: #{deeplab_forward.7} parent=0 // loop_header
    %s9 = sphi 0, %s13
    %p10 = scmp.ge.s32.totalorder %s9, 6
    %s16 = sphi 0, %s28
    %s17 = sphi 0, %s24
    %s18 = sphi 0, %s16
    %s19 = sphi 0, %s17
    %s20 = sphi 0, %s18
    %s21 = sphi 0, %s19
    %s33 = sphi 0, %s35
    %s36 = sphi 0, %s33
    %s37 = sphi 0, %s36
    %s53 = sphi 0, %s37
    %s59 = sphi 0, %s61
    %s62 = sphi 0, %s59
    %s63 = sphi 0, %s62
    %s79 = sphi 0, %s63
    %s83 = sphi 0, %s83
    %s85 = sphi 0, %s83
    %s86 = sphi 0, %s85
    %s100 = sphi 0, %s86
    %s106 = sphi 0, %s108
    %s109 = sphi 0, %s106
    %s110 = sphi 0, %s109
    %s126 = sphi 0, %s110
  $region4: #{deeplab_forward.7} parent=0 // loop_header_branch
    %12 = sbr.rel (%p10) target = $region8
  $region5: #{deeplab_forward.7} parent=0 // loop_body
    %s14 = ssub.s32 %s9, 1
    %s15 = ssub.s32 %s9, 2
    %s22 = sadd.s32 1, %s17
    %p23 = scmp.ge.s32.totalorder %s22, 1
    %s24 = scalar_select %p23, 0, %s22
    %s25 = sadd.s32 1, %s16
    %s26 = scalar_select %p23, %s25, %s16
    %p27 = scmp.ge.s32.totalorder %s26, 4
    %s28 = scalar_select %p27, 0, %s26
    %s29 = ssub.s32 %s16, %s28
    %s30 = ssub.s32 %s17, %s24
    %s31 = sor.u32 %s29, %s30
    %p32 = scmp.eq.s32.totalorder %s31, 0
    %s34 = sadd.s32 %s33, 1
    %s35 = scalar_select %p32, %s33, %s34
    %p38 = pneg %p32
    %p39 = scmp.eq.s32.totalorder %s9, 3
    %p40 = por %p38, %p39
    %p41 = scmp.ne.s32.totalorder %s33, %s36
    %p42 = scmp.eq.s32.totalorder %s9, 0
    %p43 = por %p41, %p42
    %p44 = scmp.ne.s32.totalorder %s33, %s36
    %p45 = scmp.eq.s32.totalorder %s14, 3
    %p46 = por %p44, %p45
    %p47 = scmp.ne.s32.totalorder %s36, %s37
    %p48 = scmp.eq.s32.totalorder %s14, 0
    %p49 = por %p47, %p48
    %p50 = scmp.ne.s32.totalorder %s36, %s37
    %p51 = scmp.eq.s32.totalorder %s15, 3
    %p52 = por %p50, %p51
    %p54 = scmp.ne.s32.totalorder %s37, %s53
    %p55 = scmp.eq.s32.totalorder %s15, 0
    %p56 = por %p54, %p55
    %s57 = ssub.s32 %s17, %s24
    %p58 = scmp.eq.s32.totalorder %s57, 0
    %s60 = sadd.s32 %s59, 1
    %s61 = scalar_select %p58, %s59, %s60
    %p64 = pneg %p58
    %p65 = scmp.eq.s32.totalorder %s9, 3
    %p66 = por %p64, %p65
    %p67 = scmp.ne.s32.totalorder %s59, %s62
    %p68 = scmp.eq.s32.totalorder %s9, 0
    %p69 = por %p67, %p68
    %p70 = scmp.ne.s32.totalorder %s59, %s62
    %p71 = scmp.eq.s32.totalorder %s14, 3
    %p72 = por %p70, %p71
    %p73 = scmp.ne.s32.totalorder %s62, %s63
    %p74 = scmp.eq.s32.totalorder %s14, 0
    %p75 = por %p73, %p74
    %p76 = scmp.ne.s32.totalorder %s62, %s63
    %p77 = scmp.eq.s32.totalorder %s15, 3
    %p78 = por %p76, %p77
    %p80 = scmp.ne.s32.totalorder %s63, %s79
    %p81 = scmp.eq.s32.totalorder %s15, 0
    %p82 = por %p80, %p81
    %s84 = sadd.s32 %s83, 1
    %p87 = scmp.eq.s32.totalorder %s9, 3
    %p88 = scmp.ne.s32.totalorder %s83, %s85
    %p89 = scmp.eq.s32.totalorder %s9, 0
    %p90 = por %p88, %p89
    %p91 = scmp.ne.s32.totalorder %s83, %s85
    %p92 = scmp.eq.s32.totalorder %s14, 3
    %p93 = por %p91, %p92
    %p94 = scmp.ne.s32.totalorder %s85, %s86
    %p95 = scmp.eq.s32.totalorder %s14, 0
    %p96 = por %p94, %p95
    %p97 = scmp.ne.s32.totalorder %s85, %s86
    %p98 = scmp.eq.s32.totalorder %s15, 3
    %p99 = por %p97, %p98
    %p101 = scmp.ne.s32.totalorder %s86, %s100
    %p102 = scmp.eq.s32.totalorder %s15, 0
    %p103 = por %p101, %p102
    %s104 = ssub.s32 %s16, %s28
    %p105 = scmp.eq.s32.totalorder %s104, 0
    %s107 = sadd.s32 %s106, 1
    %s108 = scalar_select %p105, %s106, %s107
    %p111 = pneg %p105
    %p112 = scmp.eq.s32.totalorder %s9, 3
    %p113 = por %p111, %p112
    %p114 = scmp.ne.s32.totalorder %s106, %s109
    %p115 = scmp.eq.s32.totalorder %s9, 0
    %p116 = por %p114, %p115
    %p117 = scmp.ne.s32.totalorder %s106, %s109
    %p118 = scmp.eq.s32.totalorder %s14, 3
    %p119 = por %p117, %p118
    %p120 = scmp.ne.s32.totalorder %s109, %s110
    %p121 = scmp.eq.s32.totalorder %s14, 0
    %p122 = por %p120, %p121
    %p123 = scmp.ne.s32.totalorder %s109, %s110
    %p124 = scmp.eq.s32.totalorder %s15, 3
    %p125 = por %p123, %p124
    %p127 = scmp.ne.s32.totalorder %s110, %s126
    %p128 = scmp.eq.s32.totalorder %s15, 0
    %p129 = por %p127, %p128
    %p130 = scmp.le.s32.totalorder 1, %s9
    %p131 = scmp.lt.s32.totalorder %s9, 5
    %p132 = pnand %p130, %p131
    %p133 = pneg %p132
    // Predicated region
    $region9: #{deeplab_forward.7} parent=5 // pred_check
      _
    $region10: #{deeplab_forward.7} parent=5 // pred_check_branch
      %135 = sbr.rel (%p132) target = $region12
    $region11: #{deeplab_forward.7} parent=5 // pred_region
      %s136 = ssub.s32 %s9, 1
      // Predicated region
      $region13: #{deeplab_forward.7} parent=11 // pred_check
        %p137 = pneg %p75
      $region14: #{deeplab_forward.7} parent=11 // pred_check_branch
        %139 = sbr.rel (%p137) target = $region16
      $region15: #{deeplab_forward.7} parent=11 // pred_region
        %s140 = smul.u32 4, %s19
        %p141 = scmp.lt.s32.totalorder %s140, 3
        %s142 = scalar_select %p141, %s140, 3
        %s143 = smul.addr %s142, 4
        %s144 = scalar_lea.vmem %s1, %s143
        %s145 = smul.u32 4, %s19
      $region16: #{deeplab_forward.7} parent=11 // pred_fallthru
        _
      // Predicated region
      $region17: #{deeplab_forward.7} parent=11 // pred_check
        %p146 = pneg %p96
      $region18: #{deeplab_forward.7} parent=11 // pred_check_branch
        %148 = sbr.rel (%p146) target = $region20
      $region19: #{deeplab_forward.7} parent=11 // pred_region
        _
      $region20: #{deeplab_forward.7} parent=11 // pred_fallthru
        _
    $region12: #{deeplab_forward.7} parent=5 // pred_fallthru
      _
    %p149 = scmp.lt.s32.totalorder %s9, 4
    // Predicated region
    $region21: #{deeplab_forward.7} parent=5 // pred_check
      %p150 = pneg %p149
    $region22: #{deeplab_forward.7} parent=5 // pred_check_branch
      %152 = sbr.rel (%p150) target = $region24
    $region23: #{deeplab_forward.7} parent=5 // pred_region
      // Predicated region
      $region25: #{deeplab_forward.7} parent=23 // pred_check
        %p153 = pneg %p43
      $region26: #{deeplab_forward.7} parent=23 // pred_check_branch
        %155 = sbr.rel (%p153) target = $region28
      $region27: #{deeplab_forward.7} parent=23 // pred_region
        %s156 = smul.u32 16, %s16
        %p157 = scmp.lt.s32.totalorder %s156, 63
        %s158 = scalar_select %p157, %s156, 63
        %p159 = scmp.lt.s32.totalorder %s17, 0
        %s160 = scalar_select %p159, %s17, 0
        %s161 = sadd.s32 %s160, %s158
        %s162 = smul.addr %s161, 4
        %s163 = scalar_lea.vmem %s0, %s162
        %s164 = smul.u32 16, %s16
      $region28: #{deeplab_forward.7} parent=23 // pred_fallthru
        _
    $region24: #{deeplab_forward.7} parent=5 // pred_fallthru
      _
    %p165 = scmp.le.s32.totalorder 1, %s9
    %p166 = scmp.lt.s32.totalorder %s9, 5
    %p167 = pnand %p165, %p166
    %p168 = pneg %p167
    // Predicated region
    $region29: #{deeplab_forward.7} parent=5 // pred_check
      _
    $region30: #{deeplab_forward.7} parent=5 // pred_check_branch
      %170 = sbr.rel (%p167) target = $region32
    $region31: #{deeplab_forward.7} parent=5 // pred_region
      %s171 = ssub.s32 %s9, 1
      %s172 = smul.u32 16, %s18
      %p173 = scmp.lt.s32.totalorder %s172, 63
      %s174 = scalar_select %p173, %s172, 63
      %p175 = scmp.lt.s32.totalorder %s19, 0
      %s176 = scalar_select %p175, %s19, 0
      %s177 = sadd.s32 %s176, %s174
      %s178 = smul.addr %s177, 4
      %s179 = scalar_lea.vmem %s0, %s178
      %p180 = pneg %p49
      %p181 = pneg %p46
      %s182 = smul.u32 4, %s19
      %p183 = scmp.lt.s32.totalorder %s182, 3
      %s184 = scalar_select %p183, %s182, 3
      %s185 = smul.addr %s184, 4
      %s186 = scalar_lea.vmem %s1, %s185
      %p187 = pneg %p75
      %p188 = pneg %p72
      %p189 = pneg %p96
      %p190 = pneg %p93
      %p191 = pneg %p122
      %p192 = pneg %p119
      %s193 = smul.u32 16, %s18
      %p194 = scmp.lt.s32.totalorder %s193, 63
      %s195 = scalar_select %p194, %s193, 63
      %s196 = smul.addr %s195, 4
      %s197 = scalar_lea.vmem %s3, %s196
      %s198 = smul.u32 16, %s18
      %p199 = scmp.lt.s32.totalorder %s198, 63
      %s200 = scalar_select %p199, %s198, 63
      %p201 = scmp.lt.s32.totalorder %s19, 0
      %s202 = scalar_select %p201, %s19, 0
      %s203 = sadd.s32 %s202, %s200
      %s204 = smul.addr %s203, 4
      %s205 = scalar_lea.vmem %s0, %s204
      %s206 = smul.u32 16, %s18
      %s207 = smul.u32 4, %s19
      %p208 = scmp.lt.s32.totalorder %s207, 3
      %s209 = scalar_select %p208, %s207, 3
      %s210 = smul.addr %s209, 4
      %s211 = scalar_lea.vmem %s1, %s210
      %s212 = smul.u32 4, %s19
      %s213 = smul.u32 16, %s18
      %p214 = scmp.lt.s32.totalorder %s213, 63
      %s215 = scalar_select %p214, %s213, 63
      %s216 = smul.addr %s215, 4
      %s217 = scalar_lea.vmem %s3, %s216
      %s218 = smul.u32 16, %s18
      %p220 = scmp.eq.s32.totalorder %s19, 0
      // Predicated region
      $region33: #{deeplab_forward.7} parent=31 // pred_check
        %p221 = pneg %p220
      $region34: #{deeplab_forward.7} parent=31 // pred_check_branch
        %223 = sbr.rel (%p221) target = $region36
      $region35: #{deeplab_forward.7} parent=31 // pred_region
        %vm224 = vcmask 130048
        %225 = vst.msk [vmem:[#allocation2] sm:$0xff] %vm224, 0.0
        %226 = vst.msk [vmem:[#allocation2 + $0x8] sm:$0xff] %vm224, 0.0
        %227 = vst.msk [vmem:[#allocation2 + $0x10] sm:$0xff] %vm224, 0.0
        %228 = vst.msk [vmem:[#allocation2 + $0x18] sm:$0xff] %vm224, 0.0
        %229 = vst.msk [vmem:[#allocation2 + $0x20] sm:$0xff] %vm224, 0.0
        %230 = vst.msk [vmem:[#allocation2 + $0x28] sm:$0xff] %vm224, 0.0
        %231 = vst.msk [vmem:[#allocation2 + $0x30] sm:$0xff] %vm224, 0.0
        %232 = vst.msk [vmem:[#allocation2 + $0x38] sm:$0xff] %vm224, 0.0
        %233 = vst.msk [vmem:[#allocation2 + $0x40] sm:$0xff] %vm224, 0.0
        %234 = vst.msk [vmem:[#allocation2 + $0x48] sm:$0xff] %vm224, 0.0
        %235 = vst.msk [vmem:[#allocation2 + $0x50] sm:$0xff] %vm224, 0.0
        %236 = vst.msk [vmem:[#allocation2 + $0x58] sm:$0xff] %vm224, 0.0
        %237 = vst.msk [vmem:[#allocation2 + $0x60] sm:$0xff] %vm224, 0.0
        %238 = vst.msk [vmem:[#allocation2 + $0x68] sm:$0xff] %vm224, 0.0
        %239 = vst.msk [vmem:[#allocation2 + $0x70] sm:$0xff] %vm224, 0.0
        %240 = vst.msk [vmem:[#allocation2 + $0x78] sm:$0xff] %vm224, 0.0
      $region36: #{deeplab_forward.7} parent=31 // pred_fallthru
        _
      %v241 = vld [vmem:[#allocation2] sm:$0xff]
      %v242 = vld [vmem:[#allocation2 + $0x8] sm:$0xff]
      %v243 = vld [vmem:[#allocation2 + $0x10] sm:$0xff]
      %v244 = vld [vmem:[#allocation2 + $0x18] sm:$0xff]
      %v245 = vld [vmem:[#allocation2 + $0x20] sm:$0xff]
      %v246 = vld [vmem:[#allocation2 + $0x28] sm:$0xff]
      %v247 = vld [vmem:[#allocation2 + $0x30] sm:$0xff]
      %v248 = vld [vmem:[#allocation2 + $0x38] sm:$0xff]
      %v249 = vld [vmem:[#allocation2 + $0x40] sm:$0xff]
      %v250 = vld [vmem:[#allocation2 + $0x48] sm:$0xff]
      %v251 = vld [vmem:[#allocation2 + $0x50] sm:$0xff]
      %v252 = vld [vmem:[#allocation2 + $0x58] sm:$0xff]
      %v253 = vld [vmem:[#allocation2 + $0x60] sm:$0xff]
      %v254 = vld [vmem:[#allocation2 + $0x68] sm:$0xff]
      %v255 = vld [vmem:[#allocation2 + $0x70] sm:$0xff]
      %v256 = vld [vmem:[#allocation2 + $0x78] sm:$0xff]
      %v257 = vld [vmem:[%s205] sm:$0xf]
      %v258 = vld [vmem:[%s205 + $0x4] sm:$0xf]
      %v259 = vld [vmem:[%s205 + $0x8] sm:$0xf]
      %v260 = vld [vmem:[%s205 + $0xc] sm:$0xf]
      %v261 = vld [vmem:[%s205 + $0x10] sm:$0xf]
      %v262 = vld [vmem:[%s205 + $0x14] sm:$0xf]
      %v263 = vld [vmem:[%s205 + $0x18] sm:$0xf]
      %v264 = vld [vmem:[%s205 + $0x1c] sm:$0xf]
      %v265 = vld [vmem:[%s205 + $0x20] sm:$0xf]
      %v266 = vld [vmem:[%s205 + $0x24] sm:$0xf]
      %v267 = vld [vmem:[%s205 + $0x28] sm:$0xf]
      %v268 = vld [vmem:[%s205 + $0x2c] sm:$0xf]
      %v269 = vld [vmem:[%s205 + $0x30] sm:$0xf]
      %v270 = vld [vmem:[%s205 + $0x34] sm:$0xf]
      %v271 = vld [vmem:[%s205 + $0x38] sm:$0xf]
      %v272 = vld [vmem:[%s205 + $0x3c] sm:$0xf]
      %v273 = vld [vmem:[%s211] sm:$0xf]
      %v274 = vld [vmem:[%s211 + $0x4] sm:$0xf]
      %v275 = vld [vmem:[%s211 + $0x8] sm:$0xf]
      %v276 = vld [vmem:[%s211 + $0xc] sm:$0x3]
      %v293 = vunpack.c.l.b16 %v257
      %v294 = vunpack.c.l.b16 %v258
      %v295 = vunpack.c.l.b16 %v259
      %v296 = vunpack.c.l.b16 %v260
      %v297 = vunpack.c.l.b16 %v261
      %v298 = vunpack.c.l.b16 %v262
      %v299 = vunpack.c.l.b16 %v263
      %v300 = vunpack.c.l.b16 %v264
      %v301 = vunpack.c.l.b16 %v265
      %v302 = vunpack.c.l.b16 %v266
      %v303 = vunpack.c.l.b16 %v267
      %v304 = vunpack.c.l.b16 %v268
      %v305 = vunpack.c.l.b16 %v269
      %v306 = vunpack.c.l.b16 %v270
      %v307 = vunpack.c.l.b16 %v271
      %v308 = vunpack.c.l.b16 %v272
      %v309 = vpack.c.b16 %v294, %v293
      %v310 = vpack.c.b16 %v296, %v295
      %v311 = vpack.c.b16 %v298, %v297
      %v312 = vpack.c.b16 %v300, %v299
      %v313 = vpack.c.b16 %v302, %v301
      %v314 = vpack.c.b16 %v304, %v303
      %v315 = vpack.c.b16 %v306, %v305
      %v316 = vpack.c.b16 %v308, %v307
      %v321 = vunpack.c.l.b16 %v273
      %v322 = vunpack.c.l.b16 %v274
      %v323 = vunpack.c.l.b16 %v275
      %v324 = vunpack.c.l.b16 %v276
      %v325 = vpack.c.b16 %v322, %v321
      %v326 = vpack.c.b16 %v324, %v323
      %vm328 = vcmask 220160
      %v330 = vsel %vm328, %v309, 0
      %v333 = vsel %vm328, %v310, 0
      %v336 = vsel %vm328, %v311, 0
      %v339 = vsel %vm328, %v312, 0
      %v342 = vsel %vm328, %v313, 0
      %v345 = vsel %vm328, %v314, 0
      %v348 = vsel %vm328, %v315, 0
      %v351 = vsel %vm328, %v316, 0
      %vm353 = vcmask 1044480
      %vm354 = vcmask 1045504
      %v355 = vsel %vm353, 4294967295, 65535
      %v356 = vsel %vm354, %v355, 0
      %v358 = vand.u32 %v326, %v356
      %360 = vmatprep.subr.bf16.mxu0 0
      %361 = vmatpush1.bf16.msra.mxu0 0
      %362 = vmatprep.subr.bf16.mxu0 0
      %363 = vmatpush1.bf16.msra.mxu0 0
      %364 = vmatprep.subr.bf16.mxu0 0
      %365 = vmatpush1.bf16.msra.mxu0 0
      %366 = vmatprep.subr.bf16.mxu0 0
      %367 = vmatpush1.bf16.msra.mxu0 0
      %368 = vmatprep.subr.bf16.mxu0 0
      %369 = vmatpush1.bf16.msra.mxu0 0
      %370 = vmatprep.subr.bf16.mxu0 0
      %371 = vmatpush1.bf16.msra.mxu0 0
      %372 = vmatprep.subr.bf16.mxu0 0
      %373 = vmatpush1.bf16.msra.mxu0 %v358
      %374 = vmatprep.subr.bf16.mxu0 0
      %375 = vmatpush1.bf16.msra.mxu0 %v325
      %376 = vmatprep.subr.bf16.mxu0 0
      %377 = vmatpush2.bf16.msra.mxu0 0
      %378 = vmatprep.subr.bf16.mxu0 0
      %379 = vmatpush2.bf16.msra.mxu0 0
      %380 = vmatprep.subr.bf16.mxu0 0
      %381 = vmatpush2.bf16.msra.mxu0 0
      %382 = vmatprep.subr.bf16.mxu0 0
      %383 = vmatpush2.bf16.msra.mxu0 0
      %384 = vmatprep.subr.bf16.mxu0 0
      %385 = vmatpush2.bf16.msra.mxu0 0
      %386 = vmatprep.subr.bf16.mxu0 0
      %387 = vmatpush2.bf16.msra.mxu0 0
      %388 = vmatprep.subr.bf16.mxu0 0
      %389 = vmatpush2.bf16.msra.mxu0 0
      %390 = vmatprep.subr.bf16.mxu0 0
      %391 = vmatpush2.bf16.msra.mxu0 0
      %392 = vmatprep.mubr.bf16.mxu0 0
      %393 = vmatmul.mubr.bf16.gmra.mxu0 %v330
      %v394 = vpop.f32.mrf.mxu0
      %v395 = vadd.f32 0.0, %v394
      %v396 = vpop.f32.mrf.mxu0
      %v397 = vpop.f32.mrf.mxu0
      %v398 = vadd.f32 0.0, %v397
      %v399 = vpop.f32.mrf.mxu0
      %400 = vmatprep.mubr.bf16.mxu0 0
      %401 = vmatmul.mubr.bf16.gmra.mxu0 %v333
      %v402 = vpop.f32.mrf.mxu0
      %v403 = vadd.f32 0.0, %v402
      %v404 = vpop.f32.mrf.mxu0
      %v405 = vpop.f32.mrf.mxu0
      %v406 = vadd.f32 0.0, %v405
      %v407 = vpop.f32.mrf.mxu0
      %408 = vmatprep.mubr.bf16.mxu0 0
      %409 = vmatmul.mubr.bf16.gmra.mxu0 %v336
      %v410 = vpop.f32.mrf.mxu0
      %v411 = vadd.f32 0.0, %v410
      %v412 = vpop.f32.mrf.mxu0
      %v413 = vpop.f32.mrf.mxu0
      %v414 = vadd.f32 0.0, %v413
      %v415 = vpop.f32.mrf.mxu0
      %416 = vmatprep.mubr.bf16.mxu0 0
      %417 = vmatmul.mubr.bf16.gmra.mxu0 %v339
      %v418 = vpop.f32.mrf.mxu0
      %v419 = vadd.f32 0.0, %v418
      %v420 = vpop.f32.mrf.mxu0
      %v421 = vpop.f32.mrf.mxu0
      %v422 = vadd.f32 0.0, %v421
      %v423 = vpop.f32.mrf.mxu0
      %424 = vmatprep.mubr.bf16.mxu0 0
      %425 = vmatmul.mubr.bf16.gmra.mxu0 %v342
      %v426 = vpop.f32.mrf.mxu0
      %v427 = vadd.f32 0.0, %v426
      %v428 = vpop.f32.mrf.mxu0
      %v429 = vpop.f32.mrf.mxu0
      %v430 = vadd.f32 0.0, %v429
      %v431 = vpop.f32.mrf.mxu0
      %432 = vmatprep.mubr.bf16.mxu0 0
      %433 = vmatmul.mubr.bf16.gmra.mxu0 %v345
      %v434 = vpop.f32.mrf.mxu0
      %v435 = vadd.f32 0.0, %v434
      %v436 = vpop.f32.mrf.mxu0
      %v437 = vpop.f32.mrf.mxu0
      %v438 = vadd.f32 0.0, %v437
      %v439 = vpop.f32.mrf.mxu0
      %440 = vmatprep.mubr.bf16.mxu0 0
      %441 = vmatmul.mubr.bf16.gmra.mxu0 %v348
      %v442 = vpop.f32.mrf.mxu0
      %v443 = vadd.f32 0.0, %v442
      %v444 = vpop.f32.mrf.mxu0
      %v445 = vpop.f32.mrf.mxu0
      %v446 = vadd.f32 0.0, %v445
      %v447 = vpop.f32.mrf.mxu0
      %448 = vmatprep.mubr.bf16.mxu0 0
      %449 = vmatmul.mubr.bf16.gmra.mxu0 %v351
      %v450 = vpop.f32.mrf.mxu0
      %v451 = vadd.f32 0.0, %v450
      %v452 = vpop.f32.mrf.mxu0
      %v453 = vpop.f32.mrf.mxu0
      %v454 = vadd.f32 0.0, %v453
      %v455 = vpop.f32.mrf.mxu0
      %456 = vdwg.mxu0
      %v457 = vadd.f32 %v241, %v395
      %v458 = vadd.f32 %v242, %v398
      %v459 = vadd.f32 %v243, %v403
      %v460 = vadd.f32 %v244, %v406
      %v461 = vadd.f32 %v245, %v411
      %v462 = vadd.f32 %v246, %v414
      %v463 = vadd.f32 %v247, %v419
      %v464 = vadd.f32 %v248, %v422
      %v465 = vadd.f32 %v249, %v427
      %v466 = vadd.f32 %v250, %v430
      %v467 = vadd.f32 %v251, %v435
      %v468 = vadd.f32 %v252, %v438
      %v469 = vadd.f32 %v253, %v443
      %v470 = vadd.f32 %v254, %v446
      %v471 = vadd.f32 %v255, %v451
      %v472 = vadd.f32 %v256, %v454
      %vm473 = vcmask 130048
      %474 = vst.msk [vmem:[#allocation2] sm:$0xff] %vm473, %v457
      %475 = vst.msk [vmem:[#allocation2 + $0x8] sm:$0xff] %vm473, %v458
      %476 = vst.msk [vmem:[#allocation2 + $0x10] sm:$0xff] %vm473, %v459
      %477 = vst.msk [vmem:[#allocation2 + $0x18] sm:$0xff] %vm473, %v460
      %478 = vst.msk [vmem:[#allocation2 + $0x20] sm:$0xff] %vm473, %v461
      %479 = vst.msk [vmem:[#allocation2 + $0x28] sm:$0xff] %vm473, %v462
      %480 = vst.msk [vmem:[#allocation2 + $0x30] sm:$0xff] %vm473, %v463
      %481 = vst.msk [vmem:[#allocation2 + $0x38] sm:$0xff] %vm473, %v464
      %482 = vst.msk [vmem:[#allocation2 + $0x40] sm:$0xff] %vm473, %v465
      %483 = vst.msk [vmem:[#allocation2 + $0x48] sm:$0xff] %vm473, %v466
      %484 = vst.msk [vmem:[#allocation2 + $0x50] sm:$0xff] %vm473, %v467
      %485 = vst.msk [vmem:[#allocation2 + $0x58] sm:$0xff] %vm473, %v468
      %486 = vst.msk [vmem:[#allocation2 + $0x60] sm:$0xff] %vm473, %v469
      %487 = vst.msk [vmem:[#allocation2 + $0x68] sm:$0xff] %vm473, %v470
      %488 = vst.msk [vmem:[#allocation2 + $0x70] sm:$0xff] %vm473, %v471
      %489 = vst.msk [vmem:[#allocation2 + $0x78] sm:$0xff] %vm473, %v472
      // Predicated region
      $region37: #{deeplab_forward.7} parent=31 // pred_check
        %p490 = pneg %p220
      $region38: #{deeplab_forward.7} parent=31 // pred_check_branch
        %492 = sbr.rel (%p490) target = $region40
      $region39: #{deeplab_forward.7} parent=31 // pred_region
        %v493 = vld [vmem:[#allocation2] sm:$0xff]
        %v494 = vld [vmem:[#allocation2 + $0x8] sm:$0xff]
        %v495 = vld [vmem:[#allocation2 + $0x10] sm:$0xff]
        %v496 = vld [vmem:[#allocation2 + $0x18] sm:$0xff]
        %v497 = vld [vmem:[#allocation2 + $0x20] sm:$0xff]
        %v498 = vld [vmem:[#allocation2 + $0x28] sm:$0xff]
        %v499 = vld [vmem:[#allocation2 + $0x30] sm:$0xff]
        %v500 = vld [vmem:[#allocation2 + $0x38] sm:$0xff]
        %v501 = vld [vmem:[#allocation2 + $0x40] sm:$0xff]
        %v502 = vld [vmem:[#allocation2 + $0x48] sm:$0xff]
        %v503 = vld [vmem:[#allocation2 + $0x50] sm:$0xff]
        %v504 = vld [vmem:[#allocation2 + $0x58] sm:$0xff]
        %v505 = vld [vmem:[#allocation2 + $0x60] sm:$0xff]
        %v506 = vld [vmem:[#allocation2 + $0x68] sm:$0xff]
        %v507 = vld [vmem:[#allocation2 + $0x70] sm:$0xff]
        %v508 = vld [vmem:[#allocation2 + $0x78] sm:$0xff]
        %v509 = vld [vmem:[%s2] sm:$0x1]
        %v511 = vlaneseq
        %v512 = vshrl.u32 %v511, 7
        %v513 = vsub.s32 0, %v512
        %v514 = vrot.slane %v509, %v513
        %v516 = vadd.f32 %v493, %v514
        %v517 = vadd.f32 %v494, %v514
        %v518 = vadd.f32 %v495, %v514
        %v519 = vadd.f32 %v496, %v514
        %v520 = vadd.f32 %v497, %v514
        %v521 = vadd.f32 %v498, %v514
        %v522 = vadd.f32 %v499, %v514
        %v523 = vadd.f32 %v500, %v514
        %v524 = vadd.f32 %v501, %v514
        %v525 = vadd.f32 %v502, %v514
        %v526 = vadd.f32 %v503, %v514
        %v527 = vadd.f32 %v504, %v514
        %v528 = vadd.f32 %v505, %v514
        %v529 = vadd.f32 %v506, %v514
        %v530 = vadd.f32 %v507, %v514
        %v531 = vadd.f32 %v508, %v514
        %v532 = vmax.f32 %v516, 0.0
        %v533 = vmax.f32 %v517, 0.0
        %v534 = vmax.f32 %v518, 0.0
        %v535 = vmax.f32 %v519, 0.0
        %v536 = vmax.f32 %v520, 0.0
        %v537 = vmax.f32 %v521, 0.0
        %v538 = vmax.f32 %v522, 0.0
        %v539 = vmax.f32 %v523, 0.0
        %v540 = vmax.f32 %v524, 0.0
        %v541 = vmax.f32 %v525, 0.0
        %v542 = vmax.f32 %v526, 0.0
        %v543 = vmax.f32 %v527, 0.0
        %v544 = vmax.f32 %v528, 0.0
        %v545 = vmax.f32 %v529, 0.0
        %v546 = vmax.f32 %v530, 0.0
        %v547 = vmax.f32 %v531, 0.0
        %v548 = vpack.c.bf16 %v533, %v532
        %v549 = vpack.c.bf16 %v535, %v534
        %v550 = vpack.c.bf16 %v537, %v536
        %v551 = vpack.c.bf16 %v539, %v538
        %v552 = vpack.c.bf16 %v541, %v540
        %v553 = vpack.c.bf16 %v543, %v542
        %v554 = vpack.c.bf16 %v545, %v544
        %v555 = vpack.c.bf16 %v547, %v546
        %v564 = vunpack.c.l.b16 %v548
        %v565 = vunpack.c.h.b16 %v548
        %v566 = vunpack.c.l.b16 %v549
        %v567 = vunpack.c.h.b16 %v549
        %v568 = vunpack.c.l.b16 %v550
        %v569 = vunpack.c.h.b16 %v550
        %v570 = vunpack.c.l.b16 %v551
        %v571 = vunpack.c.h.b16 %v551
        %v572 = vunpack.c.l.b16 %v552
        %v573 = vunpack.c.h.b16 %v552
        %v574 = vunpack.c.l.b16 %v553
        %v575 = vunpack.c.h.b16 %v553
        %v576 = vunpack.c.l.b16 %v554
        %v577 = vunpack.c.h.b16 %v554
        %v578 = vunpack.c.l.b16 %v555
        %v579 = vunpack.c.h.b16 %v555
        %v580 = vpack.c.b16 %v564, %v564
        %v581 = vpack.c.b16 %v565, %v565
        %v582 = vpack.c.b16 %v566, %v566
        %v583 = vpack.c.b16 %v567, %v567
        %v584 = vpack.c.b16 %v568, %v568
        %v585 = vpack.c.b16 %v569, %v569
        %v586 = vpack.c.b16 %v570, %v570
        %v587 = vpack.c.b16 %v571, %v571
        %v588 = vpack.c.b16 %v572, %v572
        %v589 = vpack.c.b16 %v573, %v573
        %v590 = vpack.c.b16 %v574, %v574
        %v591 = vpack.c.b16 %v575, %v575
        %v592 = vpack.c.b16 %v576, %v576
        %v593 = vpack.c.b16 %v577, %v577
        %v594 = vpack.c.b16 %v578, %v578
        %v595 = vpack.c.b16 %v579, %v579
        %vm612 = vcmask 125952
        %613 = vst.msk [vmem:[%s217] sm:$0xf] %vm612, %v580
        %614 = vst.msk [vmem:[%s217 + $0x4] sm:$0xf] %vm612, %v581
        %615 = vst.msk [vmem:[%s217 + $0x8] sm:$0xf] %vm612, %v582
        %616 = vst.msk [vmem:[%s217 + $0xc] sm:$0xf] %vm612, %v583
        %617 = vst.msk [vmem:[%s217 + $0x10] sm:$0xf] %vm612, %v584
        %618 = vst.msk [vmem:[%s217 + $0x14] sm:$0xf] %vm612, %v585
        %619 = vst.msk [vmem:[%s217 + $0x18] sm:$0xf] %vm612, %v586
        %620 = vst.msk [vmem:[%s217 + $0x1c] sm:$0xf] %vm612, %v587
        %621 = vst.msk [vmem:[%s217 + $0x20] sm:$0xf] %vm612, %v588
        %622 = vst.msk [vmem:[%s217 + $0x24] sm:$0xf] %vm612, %v589
        %623 = vst.msk [vmem:[%s217 + $0x28] sm:$0xf] %vm612, %v590
        %624 = vst.msk [vmem:[%s217 + $0x2c] sm:$0xf] %vm612, %v591
        %625 = vst.msk [vmem:[%s217 + $0x30] sm:$0xf] %vm612, %v592
        %626 = vst.msk [vmem:[%s217 + $0x34] sm:$0xf] %vm612, %v593
        %627 = vst.msk [vmem:[%s217 + $0x38] sm:$0xf] %vm612, %v594
        %628 = vst.msk [vmem:[%s217 + $0x3c] sm:$0xf] %vm612, %v595
      $region40: #{deeplab_forward.7} parent=31 // pred_fallthru
        _
      %s629 = smul.u32 16, %s18
      %p630 = scmp.lt.s32.totalorder %s629, 63
      %s631 = scalar_select %p630, %s629, 63
      %s632 = smul.addr %s631, 4
      %s633 = scalar_lea.vmem %s3, %s632
      // Predicated region
      $region41: #{deeplab_forward.7} parent=31 // pred_check
        %p634 = pneg %p119
      $region42: #{deeplab_forward.7} parent=31 // pred_check_branch
        %636 = sbr.rel (%p634) target = $region44
      $region43: #{deeplab_forward.7} parent=31 // pred_region
        %s637 = smul.u32 16, %s18
      $region44: #{deeplab_forward.7} parent=31 // pred_fallthru
        _
    $region32: #{deeplab_forward.7} parent=5 // pred_fallthru
      _
    %p638 = scmp.le.s32.totalorder 2, %s9
    // Predicated region
    $region45: #{deeplab_forward.7} parent=5 // pred_check
      %p639 = pneg %p638
    $region46: #{deeplab_forward.7} parent=5 // pred_check_branch
      %641 = sbr.rel (%p639) target = $region48
    $region47: #{deeplab_forward.7} parent=5 // pred_region
      %s642 = ssub.s32 %s9, 2
      // Predicated region
      $region49: #{deeplab_forward.7} parent=47 // pred_check
        %p643 = pneg %p125
      $region50: #{deeplab_forward.7} parent=47 // pred_check_branch
        %645 = sbr.rel (%p643) target = $region52
      $region51: #{deeplab_forward.7} parent=47 // pred_region
        %s646 = smul.u32 16, %s20
        %p647 = scmp.lt.s32.totalorder %s646, 63
        %s648 = scalar_select %p647, %s646, 63
        %s649 = smul.addr %s648, 4
        %s650 = scalar_lea.vmem %s3, %s649
      $region52: #{deeplab_forward.7} parent=47 // pred_fallthru
        _
    $region48: #{deeplab_forward.7} parent=5 // pred_fallthru
      _
  $region6: #{deeplab_forward.7} parent=0 // loop_footer
    %s13 = sadd.s32 1, %s9
  $region7: #{deeplab_forward.7} parent=0 // loop_footer_branch
    %8 = sbr.rel target = $region3
  $region8: #{deeplab_forward.7} parent=0 // loop_exit
    _

// kernel: deeplab_forward.8
$region0: #{deeplab_forward.8}
  #allocation0 [shape = 'u32[]', space=smem, size = 0x4, offset = 0x4, fixed_abs, tag = 'smem constant byte address 0x4 - core index']
  #allocation1 [shape = 'u32[144,128]{1,0:T(1,128)}', space=vmem, size = 0x12000, scoped, tag = 'internal scratch']
  #allocation2 [shape = 'f32[64,24]{1,0:T(8,128)}', space=vmem, size = 0x8000, scoped, tag = 'scratch operand']
  %s0 = inlined_call_operand.vmem [shape: bf16[128,144], index: 0, kind: input, shape index: {}]
  %s1 = inlined_call_operand.vmem [shape: bf16[144,24], index: 1, kind: input, shape index: {}]
  %s2 = inlined_call_operand.vmem [shape: f32[1,24], index: 2, kind: input, shape index: {}]
  %s3 = inlined_call_operand.vmem [shape: bf16[128,24], index: 3, kind: output, shape index: {}]
  %s4 = sld [smem:[#allocation0]]
  $region53: #{deeplab_forward.8} parent=0
    _
  %s6 = ssub.s32 1, %s4
  %s7 = scalar_select 0, %s6, %s4
  loop: start=0, step=1, limit=4
  $region2: #{deeplab_forward.8} parent=0 // loop_pre_header
    _
  $region3: #{deeplab_forward.8} parent=0 // loop_header
    %s9 = sphi 0, %s13
    %p10 = scmp.ge.s32.totalorder %s9, 4
    %s16 = sphi 0, %s28
    %s17 = sphi 0, %s24
    %s18 = sphi 0, %s16
    %s19 = sphi 0, %s17
    %s20 = sphi 0, %s18
    %s21 = sphi 0, %s19
    %s33 = sphi 0, %s35
    %s36 = sphi 0, %s33
    %s37 = sphi 0, %s36
    %s53 = sphi 0, %s37
    %s59 = sphi 0, %s61
    %s62 = sphi 0, %s59
    %s63 = sphi 0, %s62
    %s79 = sphi 0, %s63
    %s83 = sphi 0, %s83
    %s85 = sphi 0, %s83
    %s86 = sphi 0, %s85
    %s100 = sphi 0, %s86
    %s106 = sphi 0, %s108
    %s109 = sphi 0, %s106
    %s110 = sphi 0, %s109
    %s126 = sphi 0, %s110
  $region4: #{deeplab_forward.8} parent=0 // loop_header_branch
    %12 = sbr.rel (%p10) target = $region8
  $region5: #{deeplab_forward.8} parent=0 // loop_body
    %s14 = ssub.s32 %s9, 1
    %s15 = ssub.s32 %s9, 2
    %s22 = sadd.s32 1, %s17
    %p23 = scmp.ge.s32.totalorder %s22, 1
    %s24 = scalar_select %p23, 0, %s22
    %s25 = sadd.s32 1, %s16
    %s26 = scalar_select %p23, %s25, %s16
    %p27 = scmp.ge.s32.totalorder %s26, 2
    %s28 = scalar_select %p27, 0, %s26
    %s29 = ssub.s32 %s16, %s28
    %s30 = ssub.s32 %s17, %s24
    %s31 = sor.u32 %s29, %s30
    %p32 = scmp.eq.s32.totalorder %s31, 0
    %s34 = sadd.s32 %s33, 1
    %s35 = scalar_select %p32, %s33, %s34
    %p38 = pneg %p32
    %p39 = scmp.eq.s32.totalorder %s9, 1
    %p40 = por %p38, %p39
    %p41 = scmp.ne.s32.totalorder %s33, %s36
    %p42 = scmp.eq.s32.totalorder %s9, 0
    %p43 = por %p41, %p42
    %p44 = scmp.ne.s32.totalorder %s33, %s36
    %p45 = scmp.eq.s32.totalorder %s14, 1
    %p46 = por %p44, %p45
    %p47 = scmp.ne.s32.totalorder %s36, %s37
    %p48 = scmp.eq.s32.totalorder %s14, 0
    %p49 = por %p47, %p48
    %p50 = scmp.ne.s32.totalorder %s36, %s37
    %p51 = scmp.eq.s32.totalorder %s15, 1
    %p52 = por %p50, %p51
    %p54 = scmp.ne.s32.totalorder %s37, %s53
    %p55 = scmp.eq.s32.totalorder %s15, 0
    %p56 = por %p54, %p55
    %s57 = ssub.s32 %s17, %s24
    %p58 = scmp.eq.s32.totalorder %s57, 0
    %s60 = sadd.s32 %s59, 1
    %s61 = scalar_select %p58, %s59, %s60
    %p64 = pneg %p58
    %p65 = scmp.eq.s32.totalorder %s9, 1
    %p66 = por %p64, %p65
    %p67 = scmp.ne.s32.totalorder %s59, %s62
    %p68 = scmp.eq.s32.totalorder %s9, 0
    %p69 = por %p67, %p68
    %p70 = scmp.ne.s32.totalorder %s59, %s62
    %p71 = scmp.eq.s32.totalorder %s14, 1
    %p72 = por %p70, %p71
    %p73 = scmp.ne.s32.totalorder %s62, %s63
    %p74 = scmp.eq.s32.totalorder %s14, 0
    %p75 = por %p73, %p74
    %p76 = scmp.ne.s32.totalorder %s62, %s63
    %p77 = scmp.eq.s32.totalorder %s15, 1
    %p78 = por %p76, %p77
    %p80 = scmp.ne.s32.totalorder %s63, %s79
    %p81 = scmp.eq.s32.totalorder %s15, 0
    %p82 = por %p80, %p81
    %s84 = sadd.s32 %s83, 1
    %p87 = scmp.eq.s32.totalorder %s9, 1
    %p88 = scmp.ne.s32.totalorder %s83, %s85
    %p89 = scmp.eq.s32.totalorder %s9, 0
    %p90 = por %p88, %p89
    %p91 = scmp.ne.s32.totalorder %s83, %s85
    %p92 = scmp.eq.s32.totalorder %s14, 1
    %p93 = por %p91, %p92
    %p94 = scmp.ne.s32.totalorder %s85, %s86
    %p95 = scmp.eq.s32.totalorder %s14, 0
    %p96 = por %p94, %p95
    %p97 = scmp.ne.s32.totalorder %s85, %s86
    %p98 = scmp.eq.s32.totalorder %s15, 1
    %p99 = por %p97, %p98
    %p101 = scmp.ne.s32.totalorder %s86, %s100
    %p102 = scmp.eq.s32.totalorder %s15, 0
    %p103 = por %p101, %p102
    %s104 = ssub.s32 %s16, %s28
    %p105 = scmp.eq.s32.totalorder %s104, 0
    %s107 = sadd.s32 %s106, 1
    %s108 = scalar_select %p105, %s106, %s107
    %p111 = pneg %p105
    %p112 = scmp.eq.s32.totalorder %s9, 1
    %p113 = por %p111, %p112
    %p114 = scmp.ne.s32.totalorder %s106, %s109
    %p115 = scmp.eq.s32.totalorder %s9, 0
    %p116 = por %p114, %p115
    %p117 = scmp.ne.s32.totalorder %s106, %s109
    %p118 = scmp.eq.s32.totalorder %s14, 1
    %p119 = por %p117, %p118
    %p120 = scmp.ne.s32.totalorder %s109, %s110
    %p121 = scmp.eq.s32.totalorder %s14, 0
    %p122 = por %p120, %p121
    %p123 = scmp.ne.s32.totalorder %s109, %s110
    %p124 = scmp.eq.s32.totalorder %s15, 1
    %p125 = por %p123, %p124
    %p127 = scmp.ne.s32.totalorder %s110, %s126
    %p128 = scmp.eq.s32.totalorder %s15, 0
    %p129 = por %p127, %p128
    %p130 = scmp.le.s32.totalorder 1, %s9
    %p131 = scmp.lt.s32.totalorder %s9, 3
    %p132 = pnand %p130, %p131
    %p133 = pneg %p132
    // Predicated region
    $region9: #{deeplab_forward.8} parent=5 // pred_check
      _
    $region10: #{deeplab_forward.8} parent=5 // pred_check_branch
      %135 = sbr.rel (%p132) target = $region12
    $region11: #{deeplab_forward.8} parent=5 // pred_region
      %s136 = ssub.s32 %s9, 1
      // Predicated region
      $region13: #{deeplab_forward.8} parent=11 // pred_check
        %p137 = pneg %p75
      $region14: #{deeplab_forward.8} parent=11 // pred_check_branch
        %139 = sbr.rel (%p137) target = $region16
      $region15: #{deeplab_forward.8} parent=11 // pred_region
        %s140 = smul.u32 18, %s19
        %p141 = scmp.lt.s32.totalorder %s140, 17
        %s142 = scalar_select %p141, %s140, 17
        %s143 = smul.addr %s142, 4
        %s144 = scalar_lea.vmem %s1, %s143
        %s145 = smul.u32 18, %s19
      $region16: #{deeplab_forward.8} parent=11 // pred_fallthru
        _
      // Predicated region
      $region17: #{deeplab_forward.8} parent=11 // pred_check
        %p146 = pneg %p96
      $region18: #{deeplab_forward.8} parent=11 // pred_check_branch
        %148 = sbr.rel (%p146) target = $region20
      $region19: #{deeplab_forward.8} parent=11 // pred_region
        _
      $region20: #{deeplab_forward.8} parent=11 // pred_fallthru
        _
    $region12: #{deeplab_forward.8} parent=5 // pred_fallthru
      _
    %p149 = scmp.lt.s32.totalorder %s9, 2
    // Predicated region
    $region21: #{deeplab_forward.8} parent=5 // pred_check
      %p150 = pneg %p149
    $region22: #{deeplab_forward.8} parent=5 // pred_check_branch
      %152 = sbr.rel (%p150) target = $region24
    $region23: #{deeplab_forward.8} parent=5 // pred_region
      // Predicated region
      $region25: #{deeplab_forward.8} parent=23 // pred_check
        %p153 = pneg %p43
      $region26: #{deeplab_forward.8} parent=23 // pred_check_branch
        %155 = sbr.rel (%p153) target = $region28
      $region27: #{deeplab_forward.8} parent=23 // pred_region
        %s156 = smul.u32 8, %s16
        %s157 = smul.u32 2, %s17
        %p158 = scmp.lt.s32.totalorder %s156, 15
        %s159 = scalar_select %p158, %s156, 15
        %p160 = scmp.lt.s32.totalorder %s157, 1
        %s161 = scalar_select %p160, %s157, 1
        %s162 = smul.addr %s159, 2
        %s163 = sadd.s32 %s161, %s162
        %s164 = smul.addr %s163, 4
        %s165 = scalar_lea.vmem %s0, %s164
        %s166 = smul.u32 8, %s16
        %s167 = smul.u32 2, %s17
      $region28: #{deeplab_forward.8} parent=23 // pred_fallthru
        _
    $region24: #{deeplab_forward.8} parent=5 // pred_fallthru
      _
    %p168 = scmp.le.s32.totalorder 1, %s9
    %p169 = scmp.lt.s32.totalorder %s9, 3
    %p170 = pnand %p168, %p169
    %p171 = pneg %p170
    // Predicated region
    $region29: #{deeplab_forward.8} parent=5 // pred_check
      _
    $region30: #{deeplab_forward.8} parent=5 // pred_check_branch
      %173 = sbr.rel (%p170) target = $region32
    $region31: #{deeplab_forward.8} parent=5 // pred_region
      %s174 = ssub.s32 %s9, 1
      %s175 = smul.u32 8, %s18
      %s176 = smul.u32 2, %s19
      %p177 = scmp.lt.s32.totalorder %s175, 15
      %s178 = scalar_select %p177, %s175, 15
      %p179 = scmp.lt.s32.totalorder %s176, 1
      %s180 = scalar_select %p179, %s176, 1
      %s181 = smul.addr %s178, 2
      %s182 = sadd.s32 %s180, %s181
      %s183 = smul.addr %s182, 4
      %s184 = scalar_lea.vmem %s0, %s183
      %p185 = pneg %p49
      %p186 = pneg %p46
      %s187 = smul.u32 18, %s19
      %p188 = scmp.lt.s32.totalorder %s187, 17
      %s189 = scalar_select %p188, %s187, 17
      %s190 = smul.addr %s189, 4
      %s191 = scalar_lea.vmem %s1, %s190
      %p192 = pneg %p75
      %p193 = pneg %p72
      %p194 = pneg %p96
      %p195 = pneg %p93
      %p196 = pneg %p122
      %p197 = pneg %p119
      %s198 = smul.u32 8, %s18
      %p199 = scmp.lt.s32.totalorder %s198, 15
      %s200 = scalar_select %p199, %s198, 15
      %s201 = smul.addr %s200, 4
      %s202 = scalar_lea.vmem %s3, %s201
      %s203 = smul.u32 8, %s18
      %s204 = smul.u32 2, %s19
      %p205 = scmp.lt.s32.totalorder %s203, 15
      %s206 = scalar_select %p205, %s203, 15
      %p207 = scmp.lt.s32.totalorder %s204, 1
      %s208 = scalar_select %p207, %s204, 1
      %s209 = smul.addr %s206, 2
      %s210 = sadd.s32 %s208, %s209
      %s211 = smul.addr %s210, 4
      %s212 = scalar_lea.vmem %s0, %s211
      %s213 = smul.u32 8, %s18
      %s214 = smul.u32 2, %s19
      %s215 = smul.u32 18, %s19
      %p216 = scmp.lt.s32.totalorder %s215, 17
      %s217 = scalar_select %p216, %s215, 17
      %s218 = smul.addr %s217, 4
      %s219 = scalar_lea.vmem %s1, %s218
      %s220 = smul.u32 18, %s19
      %s221 = smul.u32 8, %s18
      %p222 = scmp.lt.s32.totalorder %s221, 15
      %s223 = scalar_select %p222, %s221, 15
      %s224 = smul.addr %s223, 4
      %s225 = scalar_lea.vmem %s3, %s224
      %s226 = smul.u32 8, %s18
      %p228 = scmp.eq.s32.totalorder %s19, 0
      // Predicated region
      $region33: #{deeplab_forward.8} parent=31 // pred_check
        %p229 = pneg %p228
      $region34: #{deeplab_forward.8} parent=31 // pred_check_branch
        %231 = sbr.rel (%p229) target = $region36
      $region35: #{deeplab_forward.8} parent=31 // pred_region
        %vm232 = vcmask 195584
        %233 = vst.msk [vmem:[#allocation2] sm:$0xff] %vm232, 0.0
        %234 = vst.msk [vmem:[#allocation2 + $0x8] sm:$0xff] %vm232, 0.0
        %235 = vst.msk [vmem:[#allocation2 + $0x10] sm:$0xff] %vm232, 0.0
        %236 = vst.msk [vmem:[#allocation2 + $0x18] sm:$0xff] %vm232, 0.0
        %237 = vst.msk [vmem:[#allocation2 + $0x20] sm:$0xff] %vm232, 0.0
        %238 = vst.msk [vmem:[#allocation2 + $0x28] sm:$0xff] %vm232, 0.0
        %239 = vst.msk [vmem:[#allocation2 + $0x30] sm:$0xff] %vm232, 0.0
        %240 = vst.msk [vmem:[#allocation2 + $0x38] sm:$0xff] %vm232, 0.0
      $region36: #{deeplab_forward.8} parent=31 // pred_fallthru
        _
      %v241 = vld [vmem:[#allocation2] sm:$0xff]
      %v242 = vld [vmem:[#allocation2 + $0x8] sm:$0xff]
      %v243 = vld [vmem:[#allocation2 + $0x10] sm:$0xff]
      %v244 = vld [vmem:[#allocation2 + $0x18] sm:$0xff]
      %v245 = vld [vmem:[#allocation2 + $0x20] sm:$0xff]
      %v246 = vld [vmem:[#allocation2 + $0x28] sm:$0xff]
      %v247 = vld [vmem:[#allocation2 + $0x30] sm:$0xff]
      %v248 = vld [vmem:[#allocation2 + $0x38] sm:$0xff]
      %v249 = vld [vmem:[%s212] sm:$0xff]
      %v250 = vld [vmem:[%s212 + $0x8] sm:$0xff]
      %v251 = vld [vmem:[%s212 + $0x10] sm:$0xff]
      %v252 = vld [vmem:[%s212 + $0x18] sm:$0xff]
      %v253 = vld [vmem:[%s212 + $0x20] sm:$0xff]
      %v254 = vld [vmem:[%s212 + $0x28] sm:$0xff]
      %v255 = vld [vmem:[%s212 + $0x30] sm:$0xff]
      %v256 = vld [vmem:[%s212 + $0x38] sm:$0xff]
      %v257 = vld [vmem:[%s219] sm:$0xf]
      %v258 = vld [vmem:[%s219 + $0x4] sm:$0xf]
      %v259 = vld [vmem:[%s219 + $0x8] sm:$0xf]
      %v260 = vld [vmem:[%s219 + $0xc] sm:$0xf]
      %v261 = vld [vmem:[%s219 + $0x10] sm:$0xf]
      %v262 = vld [vmem:[%s219 + $0x14] sm:$0xf]
      %v263 = vld [vmem:[%s219 + $0x18] sm:$0xf]
      %v264 = vld [vmem:[%s219 + $0x1c] sm:$0xf]
      %v265 = vld [vmem:[%s219 + $0x20] sm:$0xf]
      %v266 = vld [vmem:[%s219 + $0x24] sm:$0xf]
      %v267 = vld [vmem:[%s219 + $0x28] sm:$0xf]
      %v268 = vld [vmem:[%s219 + $0x2c] sm:$0xf]
      %v269 = vld [vmem:[%s219 + $0x30] sm:$0xf]
      %v270 = vld [vmem:[%s219 + $0x34] sm:$0xf]
      %v271 = vld [vmem:[%s219 + $0x38] sm:$0xf]
      %v272 = vld [vmem:[%s219 + $0x3c] sm:$0xf]
      %v273 = vld [vmem:[%s219 + $0x40] sm:$0xf]
      %v274 = vld [vmem:[%s219 + $0x44] sm:$0xf]
      %v283 = vunpack.c.l.b16 %v249
      %v284 = vunpack.c.h.b16 %v249
      %v285 = vunpack.c.l.b16 %v250
      %v286 = vunpack.c.h.b16 %v250
      %v287 = vunpack.c.l.b16 %v251
      %v288 = vunpack.c.h.b16 %v251
      %v289 = vunpack.c.l.b16 %v252
      %v290 = vunpack.c.h.b16 %v252
      %v291 = vunpack.c.l.b16 %v253
      %v292 = vunpack.c.h.b16 %v253
      %v293 = vunpack.c.l.b16 %v254
      %v294 = vunpack.c.h.b16 %v254
      %v295 = vunpack.c.l.b16 %v255
      %v296 = vunpack.c.h.b16 %v255
      %v297 = vunpack.c.l.b16 %v256
      %v298 = vunpack.c.h.b16 %v256
      %v299 = vpack.c.b16 %v285, %v283
      %v300 = vpack.c.b16 %v286, %v284
      %v301 = vpack.c.b16 %v289, %v287
      %v302 = vpack.c.b16 %v290, %v288
      %v303 = vpack.c.b16 %v293, %v291
      %v304 = vpack.c.b16 %v294, %v292
      %v305 = vpack.c.b16 %v297, %v295
      %v306 = vpack.c.b16 %v298, %v296
      %v329 = vunpack.c.l.b16 %v257
      %v330 = vunpack.c.l.b16 %v258
      %v331 = vunpack.c.l.b16 %v259
      %v332 = vunpack.c.l.b16 %v260
      %v333 = vunpack.c.l.b16 %v261
      %v334 = vunpack.c.l.b16 %v262
      %v335 = vunpack.c.l.b16 %v263
      %v336 = vunpack.c.l.b16 %v264
      %v337 = vunpack.c.l.b16 %v265
      %v338 = vunpack.c.l.b16 %v266
      %v339 = vunpack.c.l.b16 %v267
      %v340 = vunpack.c.l.b16 %v268
      %v341 = vunpack.c.l.b16 %v269
      %v342 = vunpack.c.l.b16 %v270
      %v343 = vunpack.c.l.b16 %v271
      %v344 = vunpack.c.l.b16 %v272
      %v345 = vunpack.c.l.b16 %v273
      %v346 = vunpack.c.l.b16 %v274
      %v347 = vpack.c.b16 %v330, %v329
      %v348 = vpack.c.b16 %v332, %v331
      %v349 = vpack.c.b16 %v334, %v333
      %v350 = vpack.c.b16 %v336, %v335
      %v351 = vpack.c.b16 %v338, %v337
      %v352 = vpack.c.b16 %v340, %v339
      %v353 = vpack.c.b16 %v342, %v341
      %v354 = vpack.c.b16 %v344, %v343
      %v355 = vpack.c.b16 %v346, %v345
      %vm365 = vcmask 130048
      %v367 = vsel %vm365, %v300, 0
      %v370 = vsel %vm365, %v302, 0
      %v373 = vsel %vm365, %v304, 0
      %v376 = vsel %vm365, %v306, 0
      %378 = vmatprep.subr.bf16.mxu0 0
      %379 = vmatpush1.bf16.msra.mxu0 %v354
      %380 = vmatprep.subr.bf16.mxu0 0
      %381 = vmatpush1.bf16.msra.mxu0 %v353
      %382 = vmatprep.subr.bf16.mxu0 0
      %383 = vmatpush1.bf16.msra.mxu0 %v352
      %384 = vmatprep.subr.bf16.mxu0 0
      %385 = vmatpush1.bf16.msra.mxu0 %v351
      %386 = vmatprep.subr.bf16.mxu0 0
      %387 = vmatpush1.bf16.msra.mxu0 %v350
      %388 = vmatprep.subr.bf16.mxu0 0
      %389 = vmatpush1.bf16.msra.mxu0 %v349
      %390 = vmatprep.subr.bf16.mxu0 0
      %391 = vmatpush1.bf16.msra.mxu0 %v348
      %392 = vmatprep.subr.bf16.mxu0 0
      %393 = vmatpush1.bf16.msra.mxu0 %v347
      %394 = vmatprep.subr.bf16.mxu0 0
      %395 = vmatpush2.bf16.msra.mxu0 0
      %396 = vmatprep.subr.bf16.mxu0 0
      %397 = vmatpush2.bf16.msra.mxu0 0
      %398 = vmatprep.subr.bf16.mxu0 0
      %399 = vmatpush2.bf16.msra.mxu0 0
      %400 = vmatprep.subr.bf16.mxu0 0
      %401 = vmatpush2.bf16.msra.mxu0 0
      %402 = vmatprep.subr.bf16.mxu0 0
      %403 = vmatpush2.bf16.msra.mxu0 0
      %404 = vmatprep.subr.bf16.mxu0 0
      %405 = vmatpush2.bf16.msra.mxu0 0
      %406 = vmatprep.subr.bf16.mxu0 0
      %407 = vmatpush2.bf16.msra.mxu0 0
      %408 = vmatprep.subr.bf16.mxu0 0
      %409 = vmatpush2.bf16.msra.mxu0 %v355
      %410 = vmatprep.mubr.bf16.mxu0 %v367
      %411 = vmatmul.mubr.bf16.gmra.mxu0 %v299
      %v412 = vpop.f32.mrf.mxu0
      %v413 = vadd.f32 0.0, %v412
      %v414 = vpop.f32.mrf.mxu0
      %v415 = vpop.f32.mrf.mxu0
      %v416 = vadd.f32 0.0, %v415
      %v417 = vpop.f32.mrf.mxu0
      %418 = vmatprep.mubr.bf16.mxu0 %v370
      %419 = vmatmul.mubr.bf16.gmra.mxu0 %v301
      %v420 = vpop.f32.mrf.mxu0
      %v421 = vadd.f32 0.0, %v420
      %v422 = vpop.f32.mrf.mxu0
      %v423 = vpop.f32.mrf.mxu0
      %v424 = vadd.f32 0.0, %v423
      %v425 = vpop.f32.mrf.mxu0
      %426 = vmatprep.mubr.bf16.mxu0 %v373
      %427 = vmatmul.mubr.bf16.gmra.mxu0 %v303
      %v428 = vpop.f32.mrf.mxu0
      %v429 = vadd.f32 0.0, %v428
      %v430 = vpop.f32.mrf.mxu0
      %v431 = vpop.f32.mrf.mxu0
      %v432 = vadd.f32 0.0, %v431
      %v433 = vpop.f32.mrf.mxu0
      %434 = vmatprep.mubr.bf16.mxu0 %v376
      %435 = vmatmul.mubr.bf16.gmra.mxu0 %v305
      %v436 = vpop.f32.mrf.mxu0
      %v437 = vadd.f32 0.0, %v436
      %v438 = vpop.f32.mrf.mxu0
      %v439 = vpop.f32.mrf.mxu0
      %v440 = vadd.f32 0.0, %v439
      %v441 = vpop.f32.mrf.mxu0
      %442 = vdwg.mxu0
      %v443 = vadd.f32 %v241, %v413
      %v444 = vadd.f32 %v242, %v416
      %v445 = vadd.f32 %v243, %v421
      %v446 = vadd.f32 %v244, %v424
      %v447 = vadd.f32 %v245, %v429
      %v448 = vadd.f32 %v246, %v432
      %v449 = vadd.f32 %v247, %v437
      %v450 = vadd.f32 %v248, %v440
      %vm451 = vcmask 195584
      %452 = vst.msk [vmem:[#allocation2] sm:$0xff] %vm451, %v443
      %453 = vst.msk [vmem:[#allocation2 + $0x8] sm:$0xff] %vm451, %v444
      %454 = vst.msk [vmem:[#allocation2 + $0x10] sm:$0xff] %vm451, %v445
      %455 = vst.msk [vmem:[#allocation2 + $0x18] sm:$0xff] %vm451, %v446
      %456 = vst.msk [vmem:[#allocation2 + $0x20] sm:$0xff] %vm451, %v447
      %457 = vst.msk [vmem:[#allocation2 + $0x28] sm:$0xff] %vm451, %v448
      %458 = vst.msk [vmem:[#allocation2 + $0x30] sm:$0xff] %vm451, %v449
      %459 = vst.msk [vmem:[#allocation2 + $0x38] sm:$0xff] %vm451, %v450
      // Predicated region
      $region37: #{deeplab_forward.8} parent=31 // pred_check
        %p460 = pneg %p228
      $region38: #{deeplab_forward.8} parent=31 // pred_check_branch
        %462 = sbr.rel (%p460) target = $region40
      $region39: #{deeplab_forward.8} parent=31 // pred_region
        %v463 = vld [vmem:[#allocation2] sm:$0xff]
        %v464 = vld [vmem:[#allocation2 + $0x8] sm:$0xff]
        %v465 = vld [vmem:[#allocation2 + $0x10] sm:$0xff]
        %v466 = vld [vmem:[#allocation2 + $0x18] sm:$0xff]
        %v467 = vld [vmem:[#allocation2 + $0x20] sm:$0xff]
        %v468 = vld [vmem:[#allocation2 + $0x28] sm:$0xff]
        %v469 = vld [vmem:[#allocation2 + $0x30] sm:$0xff]
        %v470 = vld [vmem:[#allocation2 + $0x38] sm:$0xff]
        %v471 = vld [vmem:[%s2] sm:$0x1]
        %v473 = vlaneseq
        %v474 = vshrl.u32 %v473, 7
        %v475 = vsub.s32 0, %v474
        %v476 = vrot.slane %v471, %v475
        %v478 = vadd.f32 %v463, %v476
        %v479 = vadd.f32 %v464, %v476
        %v480 = vadd.f32 %v465, %v476
        %v481 = vadd.f32 %v466, %v476
        %v482 = vadd.f32 %v467, %v476
        %v483 = vadd.f32 %v468, %v476
        %v484 = vadd.f32 %v469, %v476
        %v485 = vadd.f32 %v470, %v476
        %v486 = vmax.f32 %v478, 0.0
        %v487 = vmax.f32 %v479, 0.0
        %v488 = vmax.f32 %v480, 0.0
        %v489 = vmax.f32 %v481, 0.0
        %v490 = vmax.f32 %v482, 0.0
        %v491 = vmax.f32 %v483, 0.0
        %v492 = vmax.f32 %v484, 0.0
        %v493 = vmax.f32 %v485, 0.0
        %v494 = vpack.c.bf16 %v487, %v486
        %v495 = vpack.c.bf16 %v489, %v488
        %v496 = vpack.c.bf16 %v491, %v490
        %v497 = vpack.c.bf16 %v493, %v492
        %v502 = vunpack.c.l.b16 %v494
        %v503 = vunpack.c.h.b16 %v494
        %v504 = vunpack.c.l.b16 %v495
        %v505 = vunpack.c.h.b16 %v495
        %v506 = vunpack.c.l.b16 %v496
        %v507 = vunpack.c.h.b16 %v496
        %v508 = vunpack.c.l.b16 %v497
        %v509 = vunpack.c.h.b16 %v497
        %v510 = vpack.c.b16 %v502, %v502
        %v511 = vpack.c.b16 %v503, %v503
        %v512 = vpack.c.b16 %v504, %v504
        %v513 = vpack.c.b16 %v505, %v505
        %v514 = vpack.c.b16 %v506, %v506
        %v515 = vpack.c.b16 %v507, %v507
        %v516 = vpack.c.b16 %v508, %v508
        %v517 = vpack.c.b16 %v509, %v509
        %vm526 = vcmask 191488
        %527 = vst.msk [vmem:[%s225] sm:$0xf] %vm526, %v510
        %528 = vst.msk [vmem:[%s225 + $0x4] sm:$0xf] %vm526, %v511
        %529 = vst.msk [vmem:[%s225 + $0x8] sm:$0xf] %vm526, %v512
        %530 = vst.msk [vmem:[%s225 + $0xc] sm:$0xf] %vm526, %v513
        %531 = vst.msk [vmem:[%s225 + $0x10] sm:$0xf] %vm526, %v514
        %532 = vst.msk [vmem:[%s225 + $0x14] sm:$0xf] %vm526, %v515
        %533 = vst.msk [vmem:[%s225 + $0x18] sm:$0xf] %vm526, %v516
        %534 = vst.msk [vmem:[%s225 + $0x1c] sm:$0xf] %vm526, %v517
      $region40: #{deeplab_forward.8} parent=31 // pred_fallthru
        _
      %s535 = smul.u32 8, %s18
      %p536 = scmp.lt.s32.totalorder %s535, 15
      %s537 = scalar_select %p536, %s535, 15
      %s538 = smul.addr %s537, 4
      %s539 = scalar_lea.vmem %s3, %s538
      // Predicated region
      $region41: #{deeplab_forward.8} parent=31 // pred_check
        %p540 = pneg %p119
      $region42: #{deeplab_forward.8} parent=31 // pred_check_branch
        %542 = sbr.rel (%p540) target = $region44
      $region43: #{deeplab_forward.8} parent=31 // pred_region
        %s543 = smul.u32 8, %s18
      $region44: #{deeplab_forward.8} parent=31 // pred_fallthru
        _
    $region32: #{deeplab_forward.8} parent=5 // pred_fallthru
      _
    %p544 = scmp.le.s32.totalorder 2, %s9
    // Predicated region
    $region45: #{deeplab_forward.8} parent=5 // pred_check
      %p545 = pneg %p544
    $region46: #{deeplab_forward.8} parent=5 // pred_check_branch
      %547 = sbr.rel (%p545) target = $region48
    $region47: #{deeplab_forward.8} parent=5 // pred_region
      %s548 = ssub.s32 %s9, 2
      // Predicated region
      $region49: #{deeplab_forward.8} parent=47 // pred_check
        %p549 = pneg %p125
      $region50: #{deeplab_forward.8} parent=47 // pred_check_branch
        %551 = sbr.rel (%p549) target = $region52
      $region51: #{deeplab_forward.8} parent=47 // pred_region
        %s552 = smul.u32 8, %s20
        %p553 = scmp.lt.s32.totalorder %s552, 15
        %s554 = scalar_select %p553, %s552, 15
        %s555 = smul.addr %s554, 4
        %s556 = scalar_lea.vmem %s3, %s555
      $region52: #{deeplab_forward.8} parent=47 // pred_fallthru
        _
    $region48: #{deeplab_forward.8} parent=5 // pred_fallthru
      _
  $region6: #{deeplab_forward.8} parent=0 // loop_footer
    %s13 = sadd.s32 1, %s9
  $region7: #{deeplab_forward.8} parent=0 // loop_footer_branch
    %8 = sbr.rel target = $region3
  $region8: #{deeplab_forward.8} parent=0 // loop_exit
    _

// kernel: deeplab_forward.9
$region0: #{deeplab_forward.9}
  #allocation0 [shape = 'u32[]', space=smem, size = 0x4, offset = 0x4, fixed_abs, tag = 'smem constant byte address 0x4 - core index']
  #allocation1 [shape = 'u32[144,128]{1,0:T(1,128)}', space=vmem, size = 0x12000, scoped, tag = 'internal scratch']
  #allocation2 [shape = 'f32[16,32]{1,0:T(8,128)}', space=vmem, size = 0x2000, scoped, tag = 'scratch operand']
  %s0 = inlined_call_operand.vmem [shape: bf16[32,216], index: 0, kind: input, shape index: {}]
  %s1 = inlined_call_operand.vmem [shape: bf16[216,32], index: 1, kind: input, shape index: {}]
  %s2 = inlined_call_operand.vmem [shape: f32[1,32], index: 2, kind: input, shape index: {}]
  %s3 = inlined_call_operand.vmem [shape: bf16[32,32], index: 3, kind: output, shape index: {}]
  %s4 = sld [smem:[#allocation0]]
  $region53: #{deeplab_forward.9} parent=0
    _
  %s6 = ssub.s32 1, %s4
  %s7 = scalar_select 0, %s6, %s4
  loop: start=0, step=1, limit=4
  $region2: #{deeplab_forward.9} parent=0 // loop_pre_header
    _
  $region3: #{deeplab_forward.9} parent=0 // loop_header
    %s9 = sphi 0, %s13
    %p10 = scmp.ge.s32.totalorder %s9, 4
    %s16 = sphi 0, %s28
    %s17 = sphi 0, %s24
    %s18 = sphi 0, %s16
    %s19 = sphi 0, %s17
    %s20 = sphi 0, %s18
    %s21 = sphi 0, %s19
    %s33 = sphi 0, %s35
    %s36 = sphi 0, %s33
    %s37 = sphi 0, %s36
    %s53 = sphi 0, %s37
    %s59 = sphi 0, %s61
    %s62 = sphi 0, %s59
    %s63 = sphi 0, %s62
    %s79 = sphi 0, %s63
    %s83 = sphi 0, %s83
    %s85 = sphi 0, %s83
    %s86 = sphi 0, %s85
    %s100 = sphi 0, %s86
    %s106 = sphi 0, %s108
    %s109 = sphi 0, %s106
    %s110 = sphi 0, %s109
    %s126 = sphi 0, %s110
  $region4: #{deeplab_forward.9} parent=0 // loop_header_branch
    %12 = sbr.rel (%p10) target = $region8
  $region5: #{deeplab_forward.9} parent=0 // loop_body
    %s14 = ssub.s32 %s9, 1
    %s15 = ssub.s32 %s9, 2
    %s22 = sadd.s32 1, %s17
    %p23 = scmp.ge.s32.totalorder %s22, 1
    %s24 = scalar_select %p23, 0, %s22
    %s25 = sadd.s32 1, %s16
    %s26 = scalar_select %p23, %s25, %s16
    %p27 = scmp.ge.s32.totalorder %s26, 2
    %s28 = scalar_select %p27, 0, %s26
    %s29 = ssub.s32 %s16, %s28
    %s30 = ssub.s32 %s17, %s24
    %s31 = sor.u32 %s29, %s30
    %p32 = scmp.eq.s32.totalorder %s31, 0
    %s34 = sadd.s32 %s33, 1
    %s35 = scalar_select %p32, %s33, %s34
    %p38 = pneg %p32
    %p39 = scmp.eq.s32.totalorder %s9, 1
    %p40 = por %p38, %p39
    %p41 = scmp.ne.s32.totalorder %s33, %s36
    %p42 = scmp.eq.s32.totalorder %s9, 0
    %p43 = por %p41, %p42
    %p44 = scmp.ne.s32.totalorder %s33, %s36
    %p45 = scmp.eq.s32.totalorder %s14, 1
    %p46 = por %p44, %p45
    %p47 = scmp.ne.s32.totalorder %s36, %s37
    %p48 = scmp.eq.s32.totalorder %s14, 0
    %p49 = por %p47, %p48
    %p50 = scmp.ne.s32.totalorder %s36, %s37
    %p51 = scmp.eq.s32.totalorder %s15, 1
    %p52 = por %p50, %p51
    %p54 = scmp.ne.s32.totalorder %s37, %s53
    %p55 = scmp.eq.s32.totalorder %s15, 0
    %p56 = por %p54, %p55
    %s57 = ssub.s32 %s17, %s24
    %p58 = scmp.eq.s32.totalorder %s57, 0
    %s60 = sadd.s32 %s59, 1
    %s61 = scalar_select %p58, %s59, %s60
    %p64 = pneg %p58
    %p65 = scmp.eq.s32.totalorder %s9, 1
    %p66 = por %p64, %p65
    %p67 = scmp.ne.s32.totalorder %s59, %s62
    %p68 = scmp.eq.s32.totalorder %s9, 0
    %p69 = por %p67, %p68
    %p70 = scmp.ne.s32.totalorder %s59, %s62
    %p71 = scmp.eq.s32.totalorder %s14, 1
    %p72 = por %p70, %p71
    %p73 = scmp.ne.s32.totalorder %s62, %s63
    %p74 = scmp.eq.s32.totalorder %s14, 0
    %p75 = por %p73, %p74
    %p76 = scmp.ne.s32.totalorder %s62, %s63
    %p77 = scmp.eq.s32.totalorder %s15, 1
    %p78 = por %p76, %p77
    %p80 = scmp.ne.s32.totalorder %s63, %s79
    %p81 = scmp.eq.s32.totalorder %s15, 0
    %p82 = por %p80, %p81
    %s84 = sadd.s32 %s83, 1
    %p87 = scmp.eq.s32.totalorder %s9, 1
    %p88 = scmp.ne.s32.totalorder %s83, %s85
    %p89 = scmp.eq.s32.totalorder %s9, 0
    %p90 = por %p88, %p89
    %p91 = scmp.ne.s32.totalorder %s83, %s85
    %p92 = scmp.eq.s32.totalorder %s14, 1
    %p93 = por %p91, %p92
    %p94 = scmp.ne.s32.totalorder %s85, %s86
    %p95 = scmp.eq.s32.totalorder %s14, 0
    %p96 = por %p94, %p95
    %p97 = scmp.ne.s32.totalorder %s85, %s86
    %p98 = scmp.eq.s32.totalorder %s15, 1
    %p99 = por %p97, %p98
    %p101 = scmp.ne.s32.totalorder %s86, %s100
    %p102 = scmp.eq.s32.totalorder %s15, 0
    %p103 = por %p101, %p102
    %s104 = ssub.s32 %s16, %s28
    %p105 = scmp.eq.s32.totalorder %s104, 0
    %s107 = sadd.s32 %s106, 1
    %s108 = scalar_select %p105, %s106, %s107
    %p111 = pneg %p105
    %p112 = scmp.eq.s32.totalorder %s9, 1
    %p113 = por %p111, %p112
    %p114 = scmp.ne.s32.totalorder %s106, %s109
    %p115 = scmp.eq.s32.totalorder %s9, 0
    %p116 = por %p114, %p115
    %p117 = scmp.ne.s32.totalorder %s106, %s109
    %p118 = scmp.eq.s32.totalorder %s14, 1
    %p119 = por %p117, %p118
    %p120 = scmp.ne.s32.totalorder %s109, %s110
    %p121 = scmp.eq.s32.totalorder %s14, 0
    %p122 = por %p120, %p121
    %p123 = scmp.ne.s32.totalorder %s109, %s110
    %p124 = scmp.eq.s32.totalorder %s15, 1
    %p125 = por %p123, %p124
    %p127 = scmp.ne.s32.totalorder %s110, %s126
    %p128 = scmp.eq.s32.totalorder %s15, 0
    %p129 = por %p127, %p128
    %p130 = scmp.le.s32.totalorder 1, %s9
    %p131 = scmp.lt.s32.totalorder %s9, 3
    %p132 = pnand %p130, %p131
    %p133 = pneg %p132
    // Predicated region
    $region9: #{deeplab_forward.9} parent=5 // pred_check
      _
    $region10: #{deeplab_forward.9} parent=5 // pred_check_branch
      %135 = sbr.rel (%p132) target = $region12
    $region11: #{deeplab_forward.9} parent=5 // pred_region
      %s136 = ssub.s32 %s9, 1
      // Predicated region
      $region13: #{deeplab_forward.9} parent=11 // pred_check
        %p137 = pneg %p75
      $region14: #{deeplab_forward.9} parent=11 // pred_check_branch
        %139 = sbr.rel (%p137) target = $region16
      $region15: #{deeplab_forward.9} parent=11 // pred_region
        %s140 = smul.u32 27, %s19
        %p141 = scmp.lt.s32.totalorder %s140, 26
        %s142 = scalar_select %p141, %s140, 26
        %s143 = smul.addr %s142, 4
        %s144 = scalar_lea.vmem %s1, %s143
        %s145 = smul.u32 27, %s19
      $region16: #{deeplab_forward.9} parent=11 // pred_fallthru
        _
      // Predicated region
      $region17: #{deeplab_forward.9} parent=11 // pred_check
        %p146 = pneg %p96
      $region18: #{deeplab_forward.9} parent=11 // pred_check_branch
        %148 = sbr.rel (%p146) target = $region20
      $region19: #{deeplab_forward.9} parent=11 // pred_region
        _
      $region20: #{deeplab_forward.9} parent=11 // pred_fallthru
        _
    $region12: #{deeplab_forward.9} parent=5 // pred_fallthru
      _
    %p149 = scmp.lt.s32.totalorder %s9, 2
    // Predicated region
    $region21: #{deeplab_forward.9} parent=5 // pred_check
      %p150 = pneg %p149
    $region22: #{deeplab_forward.9} parent=5 // pred_check_branch
      %152 = sbr.rel (%p150) target = $region24
    $region23: #{deeplab_forward.9} parent=5 // pred_region
      // Predicated region
      $region25: #{deeplab_forward.9} parent=23 // pred_check
        %p153 = pneg %p43
      $region26: #{deeplab_forward.9} parent=23 // pred_check_branch
        %155 = sbr.rel (%p153) target = $region28
      $region27: #{deeplab_forward.9} parent=23 // pred_region
        %s156 = smul.u32 2, %s16
        %s157 = smul.u32 2, %s17
        %p158 = scmp.lt.s32.totalorder %s156, 3
        %s159 = scalar_select %p158, %s156, 3
        %p160 = scmp.lt.s32.totalorder %s157, 1
        %s161 = scalar_select %p160, %s157, 1
        %s162 = smul.addr %s159, 2
        %s163 = sadd.s32 %s161, %s162
        %s164 = smul.addr %s163, 4
        %s165 = scalar_lea.vmem %s0, %s164
        %s166 = smul.u32 2, %s16
        %s167 = smul.u32 2, %s17
      $region28: #{deeplab_forward.9} parent=23 // pred_fallthru
        _
    $region24: #{deeplab_forward.9} parent=5 // pred_fallthru
      _
    %p168 = scmp.le.s32.totalorder 1, %s9
    %p169 = scmp.lt.s32.totalorder %s9, 3
    %p170 = pnand %p168, %p169
    %p171 = pneg %p170
    // Predicated region
    $region29: #{deeplab_forward.9} parent=5 // pred_check
      _
    $region30: #{deeplab_forward.9} parent=5 // pred_check_branch
      %173 = sbr.rel (%p170) target = $region32
    $region31: #{deeplab_forward.9} parent=5 // pred_region
      %s174 = ssub.s32 %s9, 1
      %s175 = smul.u32 2, %s18
      %s176 = smul.u32 2, %s19
      %p177 = scmp.lt.s32.totalorder %s175, 3
      %s178 = scalar_select %p177, %s175, 3
      %p179 = scmp.lt.s32.totalorder %s176, 1
      %s180 = scalar_select %p179, %s176, 1
      %s181 = smul.addr %s178, 2
      %s182 = sadd.s32 %s180, %s181
      %s183 = smul.addr %s182, 4
      %s184 = scalar_lea.vmem %s0, %s183
      %p185 = pneg %p49
      %p186 = pneg %p46
      %s187 = smul.u32 27, %s19
      %p188 = scmp.lt.s32.totalorder %s187, 26
      %s189 = scalar_select %p188, %s187, 26
      %s190 = smul.addr %s189, 4
      %s191 = scalar_lea.vmem %s1, %s190
      %p192 = pneg %p75
      %p193 = pneg %p72
      %p194 = pneg %p96
      %p195 = pneg %p93
      %p196 = pneg %p122
      %p197 = pneg %p119
      %s198 = smul.u32 2, %s18
      %p199 = scmp.lt.s32.totalorder %s198, 3
      %s200 = scalar_select %p199, %s198, 3
      %s201 = smul.addr %s200, 4
      %s202 = scalar_lea.vmem %s3, %s201
      %s203 = smul.u32 2, %s18
      %s204 = smul.u32 2, %s19
      %p205 = scmp.lt.s32.totalorder %s203, 3
      %s206 = scalar_select %p205, %s203, 3
      %p207 = scmp.lt.s32.totalorder %s204, 1
      %s208 = scalar_select %p207, %s204, 1
      %s209 = smul.addr %s206, 2
      %s210 = sadd.s32 %s208, %s209
      %s211 = smul.addr %s210, 4
      %s212 = scalar_lea.vmem %s0, %s211
      %s213 = smul.u32 2, %s18
      %s214 = smul.u32 2, %s19
      %s215 = smul.u32 27, %s19
      %p216 = scmp.lt.s32.totalorder %s215, 26
      %s217 = scalar_select %p216, %s215, 26
      %s218 = smul.addr %s217, 4
      %s219 = scalar_lea.vmem %s1, %s218
      %s220 = smul.u32 27, %s19
      %s221 = smul.u32 2, %s18
      %p222 = scmp.lt.s32.totalorder %s221, 3
      %s223 = scalar_select %p222, %s221, 3
      %s224 = smul.addr %s223, 4
      %s225 = scalar_lea.vmem %s3, %s224
      %s226 = smul.u32 2, %s18
      %p228 = scmp.eq.s32.totalorder %s19, 0
      // Predicated region
      $region33: #{deeplab_forward.9} parent=31 // pred_check
        %p229 = pneg %p228
      $region34: #{deeplab_forward.9} parent=31 // pred_check_branch
        %231 = sbr.rel (%p229) target = $region36
      $region35: #{deeplab_forward.9} parent=31 // pred_region
        %vm232 = vcmask 261120
        %233 = vst.msk [vmem:[#allocation2] sm:$0xff] %vm232, 0.0
        %234 = vst.msk [vmem:[#allocation2 + $0x8] sm:$0xff] %vm232, 0.0
      $region36: #{deeplab_forward.9} parent=31 // pred_fallthru
        _
      %v235 = vld [vmem:[#allocation2] sm:$0xff]
      %v236 = vld [vmem:[#allocation2 + $0x8] sm:$0xff]
      %v237 = vld [vmem:[%s212] sm:$0xff]
      %v238 = vld [vmem:[%s212 + $0x8] sm:$0xff]
      %v239 = vld [vmem:[%s219] sm:$0xf]
      %v240 = vld [vmem:[%s219 + $0x4] sm:$0xf]
      %v241 = vld [vmem:[%s219 + $0x8] sm:$0xf]
      %v242 = vld [vmem:[%s219 + $0xc] sm:$0xf]
      %v243 = vld [vmem:[%s219 + $0x10] sm:$0xf]
      %v244 = vld [vmem:[%s219 + $0x14] sm:$0xf]
      %v245 = vld [vmem:[%s219 + $0x18] sm:$0xf]
      %v246 = vld [vmem:[%s219 + $0x1c] sm:$0xf]
      %v247 = vld [vmem:[%s219 + $0x20] sm:$0xf]
      %v248 = vld [vmem:[%s219 + $0x24] sm:$0xf]
      %v249 = vld [vmem:[%s219 + $0x28] sm:$0xf]
      %v250 = vld [vmem:[%s219 + $0x2c] sm:$0xf]
      %v251 = vld [vmem:[%s219 + $0x30] sm:$0xf]
      %v252 = vld [vmem:[%s219 + $0x34] sm:$0xf]
      %v253 = vld [vmem:[%s219 + $0x38] sm:$0xf]
      %v254 = vld [vmem:[%s219 + $0x3c] sm:$0xf]
      %v255 = vld [vmem:[%s219 + $0x40] sm:$0xf]
      %v256 = vld [vmem:[%s219 + $0x44] sm:$0xf]
      %v257 = vld [vmem:[%s219 + $0x48] sm:$0xf]
      %v258 = vld [vmem:[%s219 + $0x4c] sm:$0xf]
      %v259 = vld [vmem:[%s219 + $0x50] sm:$0xf]
      %v260 = vld [vmem:[%s219 + $0x54] sm:$0xf]
      %v261 = vld [vmem:[%s219 + $0x58] sm:$0xf]
      %v262 = vld [vmem:[%s219 + $0x5c] sm:$0xf]
      %v263 = vld [vmem:[%s219 + $0x60] sm:$0xf]
      %v264 = vld [vmem:[%s219 + $0x64] sm:$0xf]
      %v265 = vld [vmem:[%s219 + $0x68] sm:$0xf]
      %v268 = vunpack.c.l.b16 %v237
      %v269 = vunpack.c.h.b16 %v237
      %v270 = vunpack.c.l.b16 %v238
      %v271 = vunpack.c.h.b16 %v238
      %v272 = vpack.c.b16 %v270, %v268
      %v273 = vpack.c.b16 %v271, %v269
      %v302 = vunpack.c.l.b16 %v239
      %v303 = vunpack.c.l.b16 %v240
      %v304 = vunpack.c.l.b16 %v241
      %v305 = vunpack.c.l.b16 %v242
      %v306 = vunpack.c.l.b16 %v243
      %v307 = vunpack.c.l.b16 %v244
      %v308 = vunpack.c.l.b16 %v245
      %v309 = vunpack.c.l.b16 %v246
      %v310 = vunpack.c.l.b16 %v247
      %v311 = vunpack.c.l.b16 %v248
      %v312 = vunpack.c.l.b16 %v249
      %v313 = vunpack.c.l.b16 %v250
      %v314 = vunpack.c.l.b16 %v251
      %v315 = vunpack.c.l.b16 %v252
      %v316 = vunpack.c.l.b16 %v253
      %v317 = vunpack.c.l.b16 %v254
      %v318 = vunpack.c.l.b16 %v255
      %v319 = vunpack.c.l.b16 %v256
      %v320 = vunpack.c.l.b16 %v257
      %v321 = vunpack.c.l.b16 %v258
      %v322 = vunpack.c.l.b16 %v259
      %v323 = vunpack.c.l.b16 %v260
      %v324 = vunpack.c.l.b16 %v261
      %v325 = vunpack.c.l.b16 %v262
      %v326 = vunpack.c.l.b16 %v263
      %v327 = vunpack.c.l.b16 %v264
      %v328 = vunpack.c.l.b16 %v265
      %v329 = vpack.c.b16 %v303, %v302
      %v330 = vpack.c.b16 %v305, %v304
      %v331 = vpack.c.b16 %v307, %v306
      %v332 = vpack.c.b16 %v309, %v308
      %v333 = vpack.c.b16 %v311, %v310
      %v334 = vpack.c.b16 %v313, %v312
      %v335 = vpack.c.b16 %v315, %v314
      %v336 = vpack.c.b16 %v317, %v316
      %v337 = vpack.c.b16 %v319, %v318
      %v338 = vpack.c.b16 %v321, %v320
      %v339 = vpack.c.b16 %v323, %v322
      %v340 = vpack.c.b16 %v325, %v324
      %v341 = vpack.c.b16 %v327, %v326
      %v342 = vpack.c.b16 %v328, %v328
      %vm356 = vcmask 719872
      %v358 = vsel %vm356, %v273, 0
      %vm360 = vcmask 1043456
      %v362 = vsel %vm360, %v342, 0
      %364 = vmatprep.subr.bf16.mxu0 0
      %365 = vmatpush1.bf16.msra.mxu0 %v336
      %366 = vmatprep.subr.bf16.mxu0 0
      %367 = vmatpush1.bf16.msra.mxu0 %v335
      %368 = vmatprep.subr.bf16.mxu0 0
      %369 = vmatpush1.bf16.msra.mxu0 %v334
      %370 = vmatprep.subr.bf16.mxu0 0
      %371 = vmatpush1.bf16.msra.mxu0 %v333
      %372 = vmatprep.subr.bf16.mxu0 0
      %373 = vmatpush1.bf16.msra.mxu0 %v332
      %374 = vmatprep.subr.bf16.mxu0 0
      %375 = vmatpush1.bf16.msra.mxu0 %v331
      %376 = vmatprep.subr.bf16.mxu0 0
      %377 = vmatpush1.bf16.msra.mxu0 %v330
      %378 = vmatprep.subr.bf16.mxu0 0
      %379 = vmatpush1.bf16.msra.mxu0 %v329
      %380 = vmatprep.subr.bf16.mxu0 0
      %381 = vmatpush2.bf16.msra.mxu0 0
      %382 = vmatprep.subr.bf16.mxu0 0
      %383 = vmatpush2.bf16.msra.mxu0 0
      %384 = vmatprep.subr.bf16.mxu0 0
      %385 = vmatpush2.bf16.msra.mxu0 %v362
      %386 = vmatprep.subr.bf16.mxu0 0
      %387 = vmatpush2.bf16.msra.mxu0 %v341
      %388 = vmatprep.subr.bf16.mxu0 0
      %389 = vmatpush2.bf16.msra.mxu0 %v340
      %390 = vmatprep.subr.bf16.mxu0 0
      %391 = vmatpush2.bf16.msra.mxu0 %v339
      %392 = vmatprep.subr.bf16.mxu0 0
      %393 = vmatpush2.bf16.msra.mxu0 %v338
      %394 = vmatprep.subr.bf16.mxu0 0
      %395 = vmatpush2.bf16.msra.mxu0 %v337
      %396 = vmatprep.mubr.bf16.mxu0 %v358
      %397 = vmatmul.mubr.bf16.gmra.mxu0 %v272
      %v398 = vpop.f32.mrf.mxu0
      %v399 = vadd.f32 0.0, %v398
      %v400 = vpop.f32.mrf.mxu0
      %v401 = vpop.f32.mrf.mxu0
      %v402 = vadd.f32 0.0, %v401
      %v403 = vpop.f32.mrf.mxu0
      %404 = vdwg.mxu0
      %v405 = vadd.f32 %v235, %v399
      %v406 = vadd.f32 %v236, %v402
      %vm407 = vcmask 261120
      %408 = vst.msk [vmem:[#allocation2] sm:$0xff] %vm407, %v405
      %409 = vst.msk [vmem:[#allocation2 + $0x8] sm:$0xff] %vm407, %v406
      // Predicated region
      $region37: #{deeplab_forward.9} parent=31 // pred_check
        %p410 = pneg %p228
      $region38: #{deeplab_forward.9} parent=31 // pred_check_branch
        %412 = sbr.rel (%p410) target = $region40
      $region39: #{deeplab_forward.9} parent=31 // pred_region
        %v413 = vld [vmem:[#allocation2] sm:$0xff]
        %v414 = vld [vmem:[#allocation2 + $0x8] sm:$0xff]
        %v415 = vld [vmem:[%s2] sm:$0x1]
        %v417 = vlaneseq
        %v418 = vshrl.u32 %v417, 7
        %v419 = vsub.s32 0, %v418
        %v420 = vrot.slane %v415, %v419
        %v422 = vadd.f32 %v413, %v420
        %v423 = vadd.f32 %v414, %v420
        %v424 = vmax.f32 %v422, 0.0
        %v425 = vmax.f32 %v423, 0.0
        %v426 = vpack.c.bf16 %v425, %v424
        %v428 = vunpack.c.l.b16 %v426
        %v429 = vunpack.c.h.b16 %v426
        %v430 = vpack.c.b16 %v428, %v428
        %v431 = vpack.c.b16 %v429, %v429
        %vm434 = vcmask 257024
        %435 = vst.msk [vmem:[%s225] sm:$0xf] %vm434, %v430
        %436 = vst.msk [vmem:[%s225 + $0x4] sm:$0xf] %vm434, %v431
      $region40: #{deeplab_forward.9} parent=31 // pred_fallthru
        _
      %s437 = smul.u32 2, %s18
      %p438 = scmp.lt.s32.totalorder %s437, 3
      %s439 = scalar_select %p438, %s437, 3
      %s440 = smul.addr %s439, 4
      %s441 = scalar_lea.vmem %s3, %s440
      // Predicated region
      $region41: #{deeplab_forward.9} parent=31 // pred_check
        %p442 = pneg %p119
      $region42: #{deeplab_forward.9} parent=31 // pred_check_branch
        %444 = sbr.rel (%p442) target = $region44
      $region43: #{deeplab_forward.9} parent=31 // pred_region
        %s445 = smul.u32 2, %s18
      $region44: #{deeplab_forward.9} parent=31 // pred_fallthru
        _
    $region32: #{deeplab_forward.9} parent=5 // pred_fallthru
      _
    %p446 = scmp.le.s32.totalorder 2, %s9
    // Predicated region
    $region45: #{deeplab_forward.9} parent=5 // pred_check
      %p447 = pneg %p446
    $region46: #{deeplab_forward.9} parent=5 // pred_check_branch
      %449 = sbr.rel (%p447) target = $region48
    $region47: #{deeplab_forward.9} parent=5 // pred_region
      %s450 = ssub.s32 %s9, 2
      // Predicated region
      $region49: #{deeplab_forward.9} parent=47 // pred_check
        %p451 = pneg %p125
      $region50: #{deeplab_forward.9} parent=47 // pred_check_branch
        %453 = sbr.rel (%p451) target = $region52
      $region51: #{deeplab_forward.9} parent=47 // pred_region
        %s454 = smul.u32 2, %s20
        %p455 = scmp.lt.s32.totalorder %s454, 3
        %s456 = scalar_select %p455, %s454, 3
        %s457 = smul.addr %s456, 4
        %s458 = scalar_lea.vmem %s3, %s457
      $region52: #{deeplab_forward.9} parent=47 // pred_fallthru
        _
    $region48: #{deeplab_forward.9} parent=5 // pred_fallthru
      _
  $region6: #{deeplab_forward.9} parent=0 // loop_footer
    %s13 = sadd.s32 1, %s9
  $region7: #{deeplab_forward.9} parent=0 // loop_footer_branch
    %8 = sbr.rel target = $region3
  $region8: #{deeplab_forward.9} parent=0 // loop_exit
    _

// kernel: reverse
$region0: #{reverse}
  #allocation0 [shape = 's32[1]{0}', space=sflag, size = 0x4, scoped, tag = 'scoped memory for reverse']
  %s0 = inlined_call_operand.vmem [shape: bf16[3,3,64,576], index: 0, kind: input, shape index: {}]
  %s1 = inlined_call_operand.vmem [shape: bf16[3,3,64,576], index: 1, kind: output, shape index: {}]
  %s2 = scalar_lea.vmem %s0, 1280
  %v3 = vld [vmem:[%s2] sm:$0xf]
  %v4 = vunpack.c.l.bf16 %v3
  %v5 = vunpack.c.h.bf16 %v3
  %s6 = scalar_lea.vmem %s0, 800
  %v7 = vld [vmem:[%s6] sm:$0xf]
  %v8 = vunpack.c.l.bf16 %v7
  %v9 = vunpack.c.h.bf16 %v7
  %s10 = scalar_lea.vmem %s1, 480
  %s11 = scalar_lea.vmem %s0, 320
  %v12 = vld [vmem:[%s11] sm:$0xf]
  %v13 = vunpack.c.l.bf16 %v12
  %v14 = vunpack.c.h.bf16 %v12
  %s15 = scalar_lea.vmem %s1, 960
  %s16 = scalar_lea.vmem %s0, 1120
  %v17 = vld [vmem:[%s16] sm:$0xf]
  %v18 = vunpack.c.l.bf16 %v17
  %v19 = vunpack.c.h.bf16 %v17
  %s20 = scalar_lea.vmem %s1, 160
  %s21 = scalar_lea.vmem %s0, 640
  %v22 = vld [vmem:[%s21] sm:$0xf]
  %v23 = vunpack.c.l.bf16 %v22
  %v24 = vunpack.c.h.bf16 %v22
  %s25 = scalar_lea.vmem %s1, 640
  %s26 = scalar_lea.vmem %s0, 160
  %v27 = vld [vmem:[%s26] sm:$0xf]
  %v28 = vunpack.c.l.bf16 %v27
  %v29 = vunpack.c.h.bf16 %v27
  %s30 = scalar_lea.vmem %s1, 1120
  %s31 = scalar_lea.vmem %s0, 960
  %v32 = vld [vmem:[%s31] sm:$0xf]
  %v33 = vunpack.c.l.bf16 %v32
  %v34 = vunpack.c.h.bf16 %v32
  %s35 = scalar_lea.vmem %s1, 320
  %s36 = scalar_lea.vmem %s0, 480
  %v37 = vld [vmem:[%s36] sm:$0xf]
  %v38 = vunpack.c.l.bf16 %v37
  %v39 = vunpack.c.h.bf16 %v37
  %s40 = scalar_lea.vmem %s1, 800
  %v41 = vld [vmem:[%s0] sm:$0xf]
  %v42 = vunpack.c.l.bf16 %v41
  %v43 = vunpack.c.h.bf16 %v41
  %s44 = scalar_lea.vmem %s1, 1280
  %s45 = scalar_lea.vmem %s0, 1300
  %v46 = vld [vmem:[%s45] sm:$0xf]
  %v47 = vunpack.c.l.bf16 %v46
  %v48 = vunpack.c.h.bf16 %v46
  %s49 = scalar_lea.vmem %s1, 20
  %s50 = scalar_lea.vmem %s0, 820
  %v51 = vld [vmem:[%s50] sm:$0xf]
  %v52 = vunpack.c.l.bf16 %v51
  %v53 = vunpack.c.h.bf16 %v51
  %s54 = scalar_lea.vmem %s1, 500
  %s55 = scalar_lea.vmem %s0, 340
  %v56 = vld [vmem:[%s55] sm:$0xf]
  %v57 = vunpack.c.l.bf16 %v56
  %v58 = vunpack.c.h.bf16 %v56
  %s59 = scalar_lea.vmem %s1, 980
  %s60 = scalar_lea.vmem %s0, 1140
  %v61 = vld [vmem:[%s60] sm:$0xf]
  %v62 = vunpack.c.l.bf16 %v61
  %v63 = vunpack.c.h.bf16 %v61
  %s64 = scalar_lea.vmem %s1, 180
  %s65 = scalar_lea.vmem %s0, 660
  %v66 = vld [vmem:[%s65] sm:$0xf]
  %v67 = vunpack.c.l.bf16 %v66
  %v68 = vunpack.c.h.bf16 %v66
  %s69 = scalar_lea.vmem %s1, 660
  %s70 = scalar_lea.vmem %s0, 180
  %v71 = vld [vmem:[%s70] sm:$0xf]
  %v72 = vunpack.c.l.bf16 %v71
  %v73 = vunpack.c.h.bf16 %v71
  %s74 = scalar_lea.vmem %s1, 1140
  %s75 = scalar_lea.vmem %s0, 980
  %v76 = vld [vmem:[%s75] sm:$0xf]
  %v77 = vunpack.c.l.bf16 %v76
  %v78 = vunpack.c.h.bf16 %v76
  %s79 = scalar_lea.vmem %s1, 340
  %s80 = scalar_lea.vmem %s0, 500
  %v81 = vld [vmem:[%s80] sm:$0xf]
  %v82 = vunpack.c.l.bf16 %v81
  %v83 = vunpack.c.h.bf16 %v81
  %s84 = scalar_lea.vmem %s1, 820
  %s85 = scalar_lea.vmem %s0, 20
  %v86 = vld [vmem:[%s85] sm:$0xf]
  %v87 = vunpack.c.l.bf16 %v86
  %v88 = vunpack.c.h.bf16 %v86
  %s89 = scalar_lea.vmem %s1, 1300
  %s90 = scalar_lea.vmem %s0, 1320
  %v91 = vld [vmem:[%s90] sm:$0xf]
  %v92 = vunpack.c.l.bf16 %v91
  %v93 = vunpack.c.h.bf16 %v91
  %s94 = scalar_lea.vmem %s1, 40
  %s95 = scalar_lea.vmem %s0, 840
  %v96 = vld [vmem:[%s95] sm:$0xf]
  %v97 = vunpack.c.l.bf16 %v96
  %v98 = vunpack.c.h.bf16 %v96
  %s99 = scalar_lea.vmem %s1, 520
  %s100 = scalar_lea.vmem %s0, 360
  %v101 = vld [vmem:[%s100] sm:$0xf]
  %v102 = vunpack.c.l.bf16 %v101
  %v103 = vunpack.c.h.bf16 %v101
  %s104 = scalar_lea.vmem %s1, 1000
  %s105 = scalar_lea.vmem %s0, 1160
  %v106 = vld [vmem:[%s105] sm:$0xf]
  %v107 = vunpack.c.l.bf16 %v106
  %v108 = vunpack.c.h.bf16 %v106
  %s109 = scalar_lea.vmem %s1, 200
  %s110 = scalar_lea.vmem %s0, 680
  %v111 = vld [vmem:[%s110] sm:$0xf]
  %v112 = vunpack.c.l.bf16 %v111
  %v113 = vunpack.c.h.bf16 %v111
  %s114 = scalar_lea.vmem %s1, 680
  %s115 = scalar_lea.vmem %s0, 200
  %v116 = vld [vmem:[%s115] sm:$0xf]
  %v117 = vunpack.c.l.bf16 %v116
  %v118 = vunpack.c.h.bf16 %v116
  %s119 = scalar_lea.vmem %s1, 1160
  %s120 = scalar_lea.vmem %s0, 1000
  %v121 = vld [vmem:[%s120] sm:$0xf]
  %v122 = vunpack.c.l.bf16 %v121
  %v123 = vunpack.c.h.bf16 %v121
  %s124 = scalar_lea.vmem %s1, 360
  %s125 = scalar_lea.vmem %s0, 520
  %v126 = vld [vmem:[%s125] sm:$0xf]
  %v127 = vunpack.c.l.bf16 %v126
  %v128 = vunpack.c.h.bf16 %v126
  %s129 = scalar_lea.vmem %s1, 840
  %s130 = scalar_lea.vmem %s0, 40
  %v131 = vld [vmem:[%s130] sm:$0xf]
  %v132 = vunpack.c.l.bf16 %v131
  %v133 = vunpack.c.h.bf16 %v131
  %s134 = scalar_lea.vmem %s1, 1320
  %s135 = scalar_lea.vmem %s0, 1340
  %v136 = vld [vmem:[%s135] sm:$0xf]
  %v137 = vunpack.c.l.bf16 %v136
  %v138 = vunpack.c.h.bf16 %v136
  %s139 = scalar_lea.vmem %s1, 60
  %s140 = scalar_lea.vmem %s0, 860
  %v141 = vld [vmem:[%s140] sm:$0xf]
  %v142 = vunpack.c.l.bf16 %v141
  %v143 = vunpack.c.h.bf16 %v141
  %s144 = scalar_lea.vmem %s1, 540
  %s145 = scalar_lea.vmem %s0, 380
  %v146 = vld [vmem:[%s145] sm:$0xf]
  %v147 = vunpack.c.l.bf16 %v146
  %v148 = vunpack.c.h.bf16 %v146
  %s149 = scalar_lea.vmem %s1, 1020
  %s150 = scalar_lea.vmem %s0, 1180
  %v151 = vld [vmem:[%s150] sm:$0xf]
  %v152 = vunpack.c.l.bf16 %v151
  %v153 = vunpack.c.h.bf16 %v151
  %s154 = scalar_lea.vmem %s1, 220
  %s155 = scalar_lea.vmem %s0, 700
  %v156 = vld [vmem:[%s155] sm:$0xf]
  %v157 = vunpack.c.l.bf16 %v156
  %v158 = vunpack.c.h.bf16 %v156
  %s159 = scalar_lea.vmem %s1, 700
  %s160 = scalar_lea.vmem %s0, 220
  %v161 = vld [vmem:[%s160] sm:$0xf]
  %v162 = vunpack.c.l.bf16 %v161
  %v163 = vunpack.c.h.bf16 %v161
  %s164 = scalar_lea.vmem %s1, 1180
  %s165 = scalar_lea.vmem %s0, 1020
  %v166 = vld [vmem:[%s165] sm:$0xf]
  %v167 = vunpack.c.l.bf16 %v166
  %v168 = vunpack.c.h.bf16 %v166
  %s169 = scalar_lea.vmem %s1, 380
  %s170 = scalar_lea.vmem %s0, 540
  %v171 = vld [vmem:[%s170] sm:$0xf]
  %v172 = vunpack.c.l.bf16 %v171
  %v173 = vunpack.c.h.bf16 %v171
  %s174 = scalar_lea.vmem %s1, 860
  %s175 = scalar_lea.vmem %s0, 60
  %v176 = vld [vmem:[%s175] sm:$0xf]
  %v177 = vunpack.c.l.bf16 %v176
  %v178 = vunpack.c.h.bf16 %v176
  %s179 = scalar_lea.vmem %s1, 1340
  %s180 = scalar_lea.vmem %s0, 1360
  %v181 = vld [vmem:[%s180] sm:$0xf]
  %v182 = vunpack.c.l.bf16 %v181
  %v183 = vunpack.c.h.bf16 %v181
  %s184 = scalar_lea.vmem %s1, 80
  %s185 = scalar_lea.vmem %s0, 880
  %v186 = vld [vmem:[%s185] sm:$0xf]
  %v187 = vunpack.c.l.bf16 %v186
  %v188 = vunpack.c.h.bf16 %v186
  %s189 = scalar_lea.vmem %s1, 560
  %s190 = scalar_lea.vmem %s0, 400
  %v191 = vld [vmem:[%s190] sm:$0xf]
  %v192 = vunpack.c.l.bf16 %v191
  %v193 = vunpack.c.h.bf16 %v191
  %s194 = scalar_lea.vmem %s1, 1040
  %s195 = scalar_lea.vmem %s0, 1200
  %v196 = vld [vmem:[%s195] sm:$0xf]
  %v197 = vunpack.c.l.bf16 %v196
  %v198 = vunpack.c.h.bf16 %v196
  %s199 = scalar_lea.vmem %s1, 240
  %s200 = scalar_lea.vmem %s0, 720
  %v201 = vld [vmem:[%s200] sm:$0xf]
  %v202 = vunpack.c.l.bf16 %v201
  %v203 = vunpack.c.h.bf16 %v201
  %s204 = scalar_lea.vmem %s1, 720
  %s205 = scalar_lea.vmem %s0, 240
  %v206 = vld [vmem:[%s205] sm:$0xf]
  %v207 = vunpack.c.l.bf16 %v206
  %v208 = vunpack.c.h.bf16 %v206
  %s209 = scalar_lea.vmem %s1, 1200
  %s210 = scalar_lea.vmem %s0, 1040
  %v211 = vld [vmem:[%s210] sm:$0xf]
  %v212 = vunpack.c.l.bf16 %v211
  %v213 = vunpack.c.h.bf16 %v211
  %s214 = scalar_lea.vmem %s1, 400
  %s215 = scalar_lea.vmem %s0, 560
  %v216 = vld [vmem:[%s215] sm:$0xf]
  %v217 = vunpack.c.l.bf16 %v216
  %v218 = vunpack.c.h.bf16 %v216
  %s219 = scalar_lea.vmem %s1, 880
  %s220 = scalar_lea.vmem %s0, 80
  %v221 = vld [vmem:[%s220] sm:$0xf]
  %v222 = vunpack.c.l.bf16 %v221
  %v223 = vunpack.c.h.bf16 %v221
  %s224 = scalar_lea.vmem %s1, 1360
  %s225 = scalar_lea.vmem %s0, 1380
  %v226 = vld [vmem:[%s225] sm:$0xf]
  %v227 = vunpack.c.l.bf16 %v226
  %v228 = vunpack.c.h.bf16 %v226
  %s229 = scalar_lea.vmem %s1, 100
  %s230 = scalar_lea.vmem %s0, 900
  %v231 = vld [vmem:[%s230] sm:$0xf]
  %v232 = vunpack.c.l.bf16 %v231
  %v233 = vunpack.c.h.bf16 %v231
  %s234 = scalar_lea.vmem %s1, 580
  %s235 = scalar_lea.vmem %s0, 420
  %v236 = vld [vmem:[%s235] sm:$0xf]
  %v237 = vunpack.c.l.bf16 %v236
  %v238 = vunpack.c.h.bf16 %v236
  %s239 = scalar_lea.vmem %s1, 1060
  %s240 = scalar_lea.vmem %s0, 1220
  %v241 = vld [vmem:[%s240] sm:$0xf]
  %v242 = vunpack.c.l.bf16 %v241
  %v243 = vunpack.c.h.bf16 %v241
  %s244 = scalar_lea.vmem %s1, 260
  %s245 = scalar_lea.vmem %s0, 740
  %v246 = vld [vmem:[%s245] sm:$0xf]
  %v247 = vunpack.c.l.bf16 %v246
  %v248 = vunpack.c.h.bf16 %v246
  %s249 = scalar_lea.vmem %s1, 740
  %s250 = scalar_lea.vmem %s0, 260
  %v251 = vld [vmem:[%s250] sm:$0xf]
  %v252 = vunpack.c.l.bf16 %v251
  %v253 = vunpack.c.h.bf16 %v251
  %s254 = scalar_lea.vmem %s1, 1220
  %s255 = scalar_lea.vmem %s0, 1060
  %v256 = vld [vmem:[%s255] sm:$0xf]
  %v257 = vunpack.c.l.bf16 %v256
  %v258 = vunpack.c.h.bf16 %v256
  %s259 = scalar_lea.vmem %s1, 420
  %s260 = scalar_lea.vmem %s0, 580
  %v261 = vld [vmem:[%s260] sm:$0xf]
  %v262 = vunpack.c.l.bf16 %v261
  %v263 = vunpack.c.h.bf16 %v261
  %s264 = scalar_lea.vmem %s1, 900
  %s265 = scalar_lea.vmem %s0, 100
  %v266 = vld [vmem:[%s265] sm:$0xf]
  %v267 = vunpack.c.l.bf16 %v266
  %v268 = vunpack.c.h.bf16 %v266
  %s269 = scalar_lea.vmem %s1, 1380
  %s270 = scalar_lea.vmem %s0, 1400
  %v271 = vld [vmem:[%s270] sm:$0xf]
  %v272 = vunpack.c.l.bf16 %v271
  %v273 = vunpack.c.h.bf16 %v271
  %s274 = scalar_lea.vmem %s1, 120
  %s275 = scalar_lea.vmem %s0, 920
  %v276 = vld [vmem:[%s275] sm:$0xf]
  %v277 = vunpack.c.l.bf16 %v276
  %v278 = vunpack.c.h.bf16 %v276
  %s279 = scalar_lea.vmem %s1, 600
  %s280 = scalar_lea.vmem %s0, 440
  %v281 = vld [vmem:[%s280] sm:$0xf]
  %v282 = vunpack.c.l.bf16 %v281
  %v283 = vunpack.c.h.bf16 %v281
  %s284 = scalar_lea.vmem %s1, 1080
  %s285 = scalar_lea.vmem %s0, 1240
  %v286 = vld [vmem:[%s285] sm:$0xf]
  %v287 = vunpack.c.l.bf16 %v286
  %v288 = vunpack.c.h.bf16 %v286
  %s289 = scalar_lea.vmem %s1, 280
  %s290 = scalar_lea.vmem %s0, 760
  %v291 = vld [vmem:[%s290] sm:$0xf]
  %v292 = vunpack.c.l.bf16 %v291
  %v293 = vunpack.c.h.bf16 %v291
  %s294 = scalar_lea.vmem %s1, 760
  %s295 = scalar_lea.vmem %s0, 280
  %v296 = vld [vmem:[%s295] sm:$0xf]
  %v297 = vunpack.c.l.bf16 %v296
  %v298 = vunpack.c.h.bf16 %v296
  %s299 = scalar_lea.vmem %s1, 1240
  %s300 = scalar_lea.vmem %s0, 1080
  %v301 = vld [vmem:[%s300] sm:$0xf]
  %v302 = vunpack.c.l.bf16 %v301
  %v303 = vunpack.c.h.bf16 %v301
  %s304 = scalar_lea.vmem %s1, 440
  %s305 = scalar_lea.vmem %s0, 600
  %v306 = vld [vmem:[%s305] sm:$0xf]
  %v307 = vunpack.c.l.bf16 %v306
  %v308 = vunpack.c.h.bf16 %v306
  %s309 = scalar_lea.vmem %s1, 920
  %s310 = scalar_lea.vmem %s0, 120
  %v311 = vld [vmem:[%s310] sm:$0xf]
  %v312 = vunpack.c.l.bf16 %v311
  %v313 = vunpack.c.h.bf16 %v311
  %s314 = scalar_lea.vmem %s1, 1400
  %s315 = scalar_lea.vmem %s0, 1420
  %v316 = vld [vmem:[%s315] sm:$0xf]
  %v317 = vunpack.c.l.bf16 %v316
  %v318 = vunpack.c.h.bf16 %v316
  %s319 = scalar_lea.vmem %s1, 140
  %s320 = scalar_lea.vmem %s0, 940
  %v321 = vld [vmem:[%s320] sm:$0xf]
  %v322 = vunpack.c.l.bf16 %v321
  %v323 = vunpack.c.h.bf16 %v321
  %s324 = scalar_lea.vmem %s1, 620
  %s325 = scalar_lea.vmem %s0, 460
  %v326 = vld [vmem:[%s325] sm:$0xf]
  %v327 = vunpack.c.l.bf16 %v326
  %v328 = vunpack.c.h.bf16 %v326
  %s329 = scalar_lea.vmem %s1, 1100
  %s330 = scalar_lea.vmem %s0, 1260
  %v331 = vld [vmem:[%s330] sm:$0xf]
  %v332 = vunpack.c.l.bf16 %v331
  %v333 = vunpack.c.h.bf16 %v331
  %s334 = scalar_lea.vmem %s1, 300
  %s335 = scalar_lea.vmem %s0, 780
  %v336 = vld [vmem:[%s335] sm:$0xf]
  %v337 = vunpack.c.l.bf16 %v336
  %v338 = vunpack.c.h.bf16 %v336
  %s339 = scalar_lea.vmem %s1, 780
  %s340 = scalar_lea.vmem %s0, 300
  %v341 = vld [vmem:[%s340] sm:$0xf]
  %v342 = vunpack.c.l.bf16 %v341
  %v343 = vunpack.c.h.bf16 %v341
  %s344 = scalar_lea.vmem %s1, 1260
  %s345 = scalar_lea.vmem %s0, 1100
  %v346 = vld [vmem:[%s345] sm:$0xf]
  %v347 = vunpack.c.l.bf16 %v346
  %v348 = vunpack.c.h.bf16 %v346
  %s349 = scalar_lea.vmem %s1, 460
  %s350 = scalar_lea.vmem %s0, 620
  %v351 = vld [vmem:[%s350] sm:$0xf]
  %v352 = vunpack.c.l.bf16 %v351
  %v353 = vunpack.c.h.bf16 %v351
  %s354 = scalar_lea.vmem %s1, 940
  %s355 = scalar_lea.vmem %s0, 140
  %v356 = vld [vmem:[%s355] sm:$0xf]
  %v357 = vunpack.c.l.bf16 %v356
  %v358 = vunpack.c.h.bf16 %v356
  %s359 = scalar_lea.vmem %s1, 1420
  %s360 = scalar_lea.vmem %s0, 1284
  %v361 = vld [vmem:[%s360] sm:$0xf]
  %v362 = vunpack.c.l.bf16 %v361
  %v363 = vunpack.c.h.bf16 %v361
  %s364 = scalar_lea.vmem %s1, 4
  %s366 = ssub.s32 0, 4
  %s367 = scalar_lea.vmem %s364, %s366
  %v368 = vpack.c.bf16 %v362, %v4
  %369 = vst [vmem:[%s367] sm:$0xff] %v368
  %s370 = scalar_lea.vmem %s0, 804
  %v371 = vld [vmem:[%s370] sm:$0xf]
  %v372 = vunpack.c.l.bf16 %v371
  %v373 = vunpack.c.h.bf16 %v371
  %s374 = scalar_lea.vmem %s1, 484
  %s376 = ssub.s32 0, 4
  %s377 = scalar_lea.vmem %s374, %s376
  %v378 = vpack.c.bf16 %v372, %v8
  %379 = vst [vmem:[%s377] sm:$0xff] %v378
  %s380 = scalar_lea.vmem %s0, 324
  %v381 = vld [vmem:[%s380] sm:$0xf]
  %v382 = vunpack.c.l.bf16 %v381
  %v383 = vunpack.c.h.bf16 %v381
  %s384 = scalar_lea.vmem %s1, 964
  %s386 = ssub.s32 0, 4
  %s387 = scalar_lea.vmem %s384, %s386
  %v388 = vpack.c.bf16 %v382, %v13
  %389 = vst [vmem:[%s387] sm:$0xff] %v388
  %s390 = scalar_lea.vmem %s0, 1124
  %v391 = vld [vmem:[%s390] sm:$0xf]
  %v392 = vunpack.c.l.bf16 %v391
  %v393 = vunpack.c.h.bf16 %v391
  %s394 = scalar_lea.vmem %s1, 164
  %s396 = ssub.s32 0, 4
  %s397 = scalar_lea.vmem %s394, %s396
  %v398 = vpack.c.bf16 %v392, %v18
  %399 = vst [vmem:[%s397] sm:$0xff] %v398
  %s400 = scalar_lea.vmem %s0, 644
  %v401 = vld [vmem:[%s400] sm:$0xf]
  %v402 = vunpack.c.l.bf16 %v401
  %v403 = vunpack.c.h.bf16 %v401
  %s404 = scalar_lea.vmem %s1, 644
  %s406 = ssub.s32 0, 4
  %s407 = scalar_lea.vmem %s404, %s406
  %v408 = vpack.c.bf16 %v402, %v23
  %409 = vst [vmem:[%s407] sm:$0xff] %v408
  %s410 = scalar_lea.vmem %s0, 164
  %v411 = vld [vmem:[%s410] sm:$0xf]
  %v412 = vunpack.c.l.bf16 %v411
  %v413 = vunpack.c.h.bf16 %v411
  %s414 = scalar_lea.vmem %s1, 1124
  %s416 = ssub.s32 0, 4
  %s417 = scalar_lea.vmem %s414, %s416
  %v418 = vpack.c.bf16 %v412, %v28
  %419 = vst [vmem:[%s417] sm:$0xff] %v418
  %s420 = scalar_lea.vmem %s0, 964
  %v421 = vld [vmem:[%s420] sm:$0xf]
  %v422 = vunpack.c.l.bf16 %v421
  %v423 = vunpack.c.h.bf16 %v421
  %s424 = scalar_lea.vmem %s1, 324
  %s426 = ssub.s32 0, 4
  %s427 = scalar_lea.vmem %s424, %s426
  %v428 = vpack.c.bf16 %v422, %v33
  %429 = vst [vmem:[%s427] sm:$0xff] %v428
  %s430 = scalar_lea.vmem %s0, 484
  %v431 = vld [vmem:[%s430] sm:$0xf]
  %v432 = vunpack.c.l.bf16 %v431
  %v433 = vunpack.c.h.bf16 %v431
  %s434 = scalar_lea.vmem %s1, 804
  %s436 = ssub.s32 0, 4
  %s437 = scalar_lea.vmem %s434, %s436
  %v438 = vpack.c.bf16 %v432, %v38
  %439 = vst [vmem:[%s437] sm:$0xff] %v438
  %s440 = scalar_lea.vmem %s0, 4
  %v441 = vld [vmem:[%s440] sm:$0xf]
  %v442 = vunpack.c.l.bf16 %v441
  %v443 = vunpack.c.h.bf16 %v441
  %s444 = scalar_lea.vmem %s1, 1284
  %s446 = ssub.s32 0, 4
  %s447 = scalar_lea.vmem %s444, %s446
  %v448 = vpack.c.bf16 %v442, %v42
  %449 = vst [vmem:[%s447] sm:$0xff] %v448
  %s450 = scalar_lea.vmem %s0, 1304
  %v451 = vld [vmem:[%s450] sm:$0xf]
  %v452 = vunpack.c.l.bf16 %v451
  %v453 = vunpack.c.h.bf16 %v451
  %s454 = scalar_lea.vmem %s1, 24
  %s456 = ssub.s32 0, 4
  %s457 = scalar_lea.vmem %s454, %s456
  %v458 = vpack.c.bf16 %v452, %v47
  %459 = vst [vmem:[%s457] sm:$0xff] %v458
  %s460 = scalar_lea.vmem %s0, 824
  %v461 = vld [vmem:[%s460] sm:$0xf]
  %v462 = vunpack.c.l.bf16 %v461
  %v463 = vunpack.c.h.bf16 %v461
  %s464 = scalar_lea.vmem %s1, 504
  %s466 = ssub.s32 0, 4
  %s467 = scalar_lea.vmem %s464, %s466
  %v468 = vpack.c.bf16 %v462, %v52
  %469 = vst [vmem:[%s467] sm:$0xff] %v468
  %s470 = scalar_lea.vmem %s0, 344
  %v471 = vld [vmem:[%s470] sm:$0xf]
  %v472 = vunpack.c.l.bf16 %v471
  %v473 = vunpack.c.h.bf16 %v471
  %s474 = scalar_lea.vmem %s1, 984
  %s476 = ssub.s32 0, 4
  %s477 = scalar_lea.vmem %s474, %s476
  %v478 = vpack.c.bf16 %v472, %v57
  %479 = vst [vmem:[%s477] sm:$0xff] %v478
  %s480 = scalar_lea.vmem %s0, 1144
  %v481 = vld [vmem:[%s480] sm:$0xf]
  %v482 = vunpack.c.l.bf16 %v481
  %v483 = vunpack.c.h.bf16 %v481
  %s484 = scalar_lea.vmem %s1, 184
  %s486 = ssub.s32 0, 4
  %s487 = scalar_lea.vmem %s484, %s486
  %v488 = vpack.c.bf16 %v482, %v62
  %489 = vst [vmem:[%s487] sm:$0xff] %v488
  %s490 = scalar_lea.vmem %s0, 664
  %v491 = vld [vmem:[%s490] sm:$0xf]
  %v492 = vunpack.c.l.bf16 %v491
  %v493 = vunpack.c.h.bf16 %v491
  %s494 = scalar_lea.vmem %s1, 664
  %s496 = ssub.s32 0, 4
  %s497 = scalar_lea.vmem %s494, %s496
  %v498 = vpack.c.bf16 %v492, %v67
  %499 = vst [vmem:[%s497] sm:$0xff] %v498
  %s500 = scalar_lea.vmem %s0, 184
  %v501 = vld [vmem:[%s500] sm:$0xf]
  %v502 = vunpack.c.l.bf16 %v501
  %v503 = vunpack.c.h.bf16 %v501
  %s504 = scalar_lea.vmem %s1, 1144
  %s506 = ssub.s32 0, 4
  %s507 = scalar_lea.vmem %s504, %s506
  %v508 = vpack.c.bf16 %v502, %v72
  %509 = vst [vmem:[%s507] sm:$0xff] %v508
  %s510 = scalar_lea.vmem %s0, 984
  %v511 = vld [vmem:[%s510] sm:$0xf]
  %v512 = vunpack.c.l.bf16 %v511
  %v513 = vunpack.c.h.bf16 %v511
  %s514 = scalar_lea.vmem %s1, 344
  %s516 = ssub.s32 0, 4
  %s517 = scalar_lea.vmem %s514, %s516
  %v518 = vpack.c.bf16 %v512, %v77
  %519 = vst [vmem:[%s517] sm:$0xff] %v518
  %s520 = scalar_lea.vmem %s0, 504
  %v521 = vld [vmem:[%s520] sm:$0xf]
  %v522 = vunpack.c.l.bf16 %v521
  %v523 = vunpack.c.h.bf16 %v521
  %s524 = scalar_lea.vmem %s1, 824
  %s526 = ssub.s32 0, 4
  %s527 = scalar_lea.vmem %s524, %s526
  %v528 = vpack.c.bf16 %v522, %v82
  %529 = vst [vmem:[%s527] sm:$0xff] %v528
  %s530 = scalar_lea.vmem %s0, 24
  %v531 = vld [vmem:[%s530] sm:$0xf]
  %v532 = vunpack.c.l.bf16 %v531
  %v533 = vunpack.c.h.bf16 %v531
  %s534 = scalar_lea.vmem %s1, 1304
  %s536 = ssub.s32 0, 4
  %s537 = scalar_lea.vmem %s534, %s536
  %v538 = vpack.c.bf16 %v532, %v87
  %539 = vst [vmem:[%s537] sm:$0xff] %v538
  %s540 = scalar_lea.vmem %s0, 1324
  %v541 = vld [vmem:[%s540] sm:$0xf]
  %v542 = vunpack.c.l.bf16 %v541
  %v543 = vunpack.c.h.bf16 %v541
  %s544 = scalar_lea.vmem %s1, 44
  %s546 = ssub.s32 0, 4
  %s547 = scalar_lea.vmem %s544, %s546
  %v548 = vpack.c.bf16 %v542, %v92
  %549 = vst [vmem:[%s547] sm:$0xff] %v548
  %s550 = scalar_lea.vmem %s0, 844
  %v551 = vld [vmem:[%s550] sm:$0xf]
  %v552 = vunpack.c.l.bf16 %v551
  %v553 = vunpack.c.h.bf16 %v551
  %s554 = scalar_lea.vmem %s1, 524
  %s556 = ssub.s32 0, 4
  %s557 = scalar_lea.vmem %s554, %s556
  %v558 = vpack.c.bf16 %v552, %v97
  %559 = vst [vmem:[%s557] sm:$0xff] %v558
  %s560 = scalar_lea.vmem %s0, 364
  %v561 = vld [vmem:[%s560] sm:$0xf]
  %v562 = vunpack.c.l.bf16 %v561
  %v563 = vunpack.c.h.bf16 %v561
  %s564 = scalar_lea.vmem %s1, 1004
  %s566 = ssub.s32 0, 4
  %s567 = scalar_lea.vmem %s564, %s566
  %v568 = vpack.c.bf16 %v562, %v102
  %569 = vst [vmem:[%s567] sm:$0xff] %v568
  %s570 = scalar_lea.vmem %s0, 1164
  %v571 = vld [vmem:[%s570] sm:$0xf]
  %v572 = vunpack.c.l.bf16 %v571
  %v573 = vunpack.c.h.bf16 %v571
  %s574 = scalar_lea.vmem %s1, 204
  %s576 = ssub.s32 0, 4
  %s577 = scalar_lea.vmem %s574, %s576
  %v578 = vpack.c.bf16 %v572, %v107
  %579 = vst [vmem:[%s577] sm:$0xff] %v578
  %s580 = scalar_lea.vmem %s0, 684
  %v581 = vld [vmem:[%s580] sm:$0xf]
  %v582 = vunpack.c.l.bf16 %v581
  %v583 = vunpack.c.h.bf16 %v581
  %s584 = scalar_lea.vmem %s1, 684
  %s586 = ssub.s32 0, 4
  %s587 = scalar_lea.vmem %s584, %s586
  %v588 = vpack.c.bf16 %v582, %v112
  %589 = vst [vmem:[%s587] sm:$0xff] %v588
  %s590 = scalar_lea.vmem %s0, 204
  %v591 = vld [vmem:[%s590] sm:$0xf]
  %v592 = vunpack.c.l.bf16 %v591
  %v593 = vunpack.c.h.bf16 %v591
  %s594 = scalar_lea.vmem %s1, 1164
  %s596 = ssub.s32 0, 4
  %s597 = scalar_lea.vmem %s594, %s596
  %v598 = vpack.c.bf16 %v592, %v117
  %599 = vst [vmem:[%s597] sm:$0xff] %v598
  %s600 = scalar_lea.vmem %s0, 1004
  %v601 = vld [vmem:[%s600] sm:$0xf]
  %v602 = vunpack.c.l.bf16 %v601
  %v603 = vunpack.c.h.bf16 %v601
  %s604 = scalar_lea.vmem %s1, 364
  %s606 = ssub.s32 0, 4
  %s607 = scalar_lea.vmem %s604, %s606
  %v608 = vpack.c.bf16 %v602, %v122
  %609 = vst [vmem:[%s607] sm:$0xff] %v608
  %s610 = scalar_lea.vmem %s0, 524
  %v611 = vld [vmem:[%s610] sm:$0xf]
  %v612 = vunpack.c.l.bf16 %v611
  %v613 = vunpack.c.h.bf16 %v611
  %s614 = scalar_lea.vmem %s1, 844
  %s616 = ssub.s32 0, 4
  %s617 = scalar_lea.vmem %s614, %s616
  %v618 = vpack.c.bf16 %v612, %v127
  %619 = vst [vmem:[%s617] sm:$0xff] %v618
  %s620 = scalar_lea.vmem %s0, 44
  %v621 = vld [vmem:[%s620] sm:$0xf]
  %v622 = vunpack.c.l.bf16 %v621
  %v623 = vunpack.c.h.bf16 %v621
  %s624 = scalar_lea.vmem %s1, 1324
  %s626 = ssub.s32 0, 4
  %s627 = scalar_lea.vmem %s624, %s626
  %v628 = vpack.c.bf16 %v622, %v132
  %629 = vst [vmem:[%s627] sm:$0xff] %v628
  %s630 = scalar_lea.vmem %s0, 1344
  %v631 = vld [vmem:[%s630] sm:$0xf]
  %v632 = vunpack.c.l.bf16 %v631
  %v633 = vunpack.c.h.bf16 %v631
  %s634 = scalar_lea.vmem %s1, 64
  %s636 = ssub.s32 0, 4
  %s637 = scalar_lea.vmem %s634, %s636
  %v638 = vpack.c.bf16 %v632, %v137
  %639 = vst [vmem:[%s637] sm:$0xff] %v638
  %s640 = scalar_lea.vmem %s0, 864
  %v641 = vld [vmem:[%s640] sm:$0xf]
  %v642 = vunpack.c.l.bf16 %v641
  %v643 = vunpack.c.h.bf16 %v641
  %s644 = scalar_lea.vmem %s1, 544
  %s646 = ssub.s32 0, 4
  %s647 = scalar_lea.vmem %s644, %s646
  %v648 = vpack.c.bf16 %v642, %v142
  %649 = vst [vmem:[%s647] sm:$0xff] %v648
  %s650 = scalar_lea.vmem %s0, 384
  %v651 = vld [vmem:[%s650] sm:$0xf]
  %v652 = vunpack.c.l.bf16 %v651
  %v653 = vunpack.c.h.bf16 %v651
  %s654 = scalar_lea.vmem %s1, 1024
  %s656 = ssub.s32 0, 4
  %s657 = scalar_lea.vmem %s654, %s656
  %v658 = vpack.c.bf16 %v652, %v147
  %659 = vst [vmem:[%s657] sm:$0xff] %v658
  %s660 = scalar_lea.vmem %s0, 1184
  %v661 = vld [vmem:[%s660] sm:$0xf]
  %v662 = vunpack.c.l.bf16 %v661
  %v663 = vunpack.c.h.bf16 %v661
  %s664 = scalar_lea.vmem %s1, 224
  %s666 = ssub.s32 0, 4
  %s667 = scalar_lea.vmem %s664, %s666
  %v668 = vpack.c.bf16 %v662, %v152
  %669 = vst [vmem:[%s667] sm:$0xff] %v668
  %s670 = scalar_lea.vmem %s0, 704
  %v671 = vld [vmem:[%s670] sm:$0xf]
  %v672 = vunpack.c.l.bf16 %v671
  %v673 = vunpack.c.h.bf16 %v671
  %s674 = scalar_lea.vmem %s1, 704
  %s676 = ssub.s32 0, 4
  %s677 = scalar_lea.vmem %s674, %s676
  %v678 = vpack.c.bf16 %v672, %v157
  %679 = vst [vmem:[%s677] sm:$0xff] %v678
  %s680 = scalar_lea.vmem %s0, 224
  %v681 = vld [vmem:[%s680] sm:$0xf]
  %v682 = vunpack.c.l.bf16 %v681
  %v683 = vunpack.c.h.bf16 %v681
  %s684 = scalar_lea.vmem %s1, 1184
  %s686 = ssub.s32 0, 4
  %s687 = scalar_lea.vmem %s684, %s686
  %v688 = vpack.c.bf16 %v682, %v162
  %689 = vst [vmem:[%s687] sm:$0xff] %v688
  %s690 = scalar_lea.vmem %s0, 1024
  %v691 = vld [vmem:[%s690] sm:$0xf]
  %v692 = vunpack.c.l.bf16 %v691
  %v693 = vunpack.c.h.bf16 %v691
  %s694 = scalar_lea.vmem %s1, 384
  %s696 = ssub.s32 0, 4
  %s697 = scalar_lea.vmem %s694, %s696
  %v698 = vpack.c.bf16 %v692, %v167
  %699 = vst [vmem:[%s697] sm:$0xff] %v698
  %s700 = scalar_lea.vmem %s0, 544
  %v701 = vld [vmem:[%s700] sm:$0xf]
  %v702 = vunpack.c.l.bf16 %v701
  %v703 = vunpack.c.h.bf16 %v701
  %s704 = scalar_lea.vmem %s1, 864
  %s706 = ssub.s32 0, 4
  %s707 = scalar_lea.vmem %s704, %s706
  %v708 = vpack.c.bf16 %v702, %v172
  %709 = vst [vmem:[%s707] sm:$0xff] %v708
  %s710 = scalar_lea.vmem %s0, 64
  %v711 = vld [vmem:[%s710] sm:$0xf]
  %v712 = vunpack.c.l.bf16 %v711
  %v713 = vunpack.c.h.bf16 %v711
  %s714 = scalar_lea.vmem %s1, 1344
  %s716 = ssub.s32 0, 4
  %s717 = scalar_lea.vmem %s714, %s716
  %v718 = vpack.c.bf16 %v712, %v177
  %719 = vst [vmem:[%s717] sm:$0xff] %v718
  %s720 = scalar_lea.vmem %s0, 1364
  %v721 = vld [vmem:[%s720] sm:$0xf]
  %v722 = vunpack.c.l.bf16 %v721
  %v723 = vunpack.c.h.bf16 %v721
  %s724 = scalar_lea.vmem %s1, 84
  %s726 = ssub.s32 0, 4
  %s727 = scalar_lea.vmem %s724, %s726
  %v728 = vpack.c.bf16 %v722, %v182
  %729 = vst [vmem:[%s727] sm:$0xff] %v728
  %s730 = scalar_lea.vmem %s0, 884
  %v731 = vld [vmem:[%s730] sm:$0xf]
  %v732 = vunpack.c.l.bf16 %v731
  %v733 = vunpack.c.h.bf16 %v731
  %s734 = scalar_lea.vmem %s1, 564
  %s736 = ssub.s32 0, 4
  %s737 = scalar_lea.vmem %s734, %s736
  %v738 = vpack.c.bf16 %v732, %v187
  %739 = vst [vmem:[%s737] sm:$0xff] %v738
  %s740 = scalar_lea.vmem %s0, 404
  %v741 = vld [vmem:[%s740] sm:$0xf]
  %v742 = vunpack.c.l.bf16 %v741
  %v743 = vunpack.c.h.bf16 %v741
  %s744 = scalar_lea.vmem %s1, 1044
  %s746 = ssub.s32 0, 4
  %s747 = scalar_lea.vmem %s744, %s746
  %v748 = vpack.c.bf16 %v742, %v192
  %749 = vst [vmem:[%s747] sm:$0xff] %v748
  %s750 = scalar_lea.vmem %s0, 1204
  %v751 = vld [vmem:[%s750] sm:$0xf]
  %v752 = vunpack.c.l.bf16 %v751
  %v753 = vunpack.c.h.bf16 %v751
  %s754 = scalar_lea.vmem %s1, 244
  %s756 = ssub.s32 0, 4
  %s757 = scalar_lea.vmem %s754, %s756
  %v758 = vpack.c.bf16 %v752, %v197
  %759 = vst [vmem:[%s757] sm:$0xff] %v758
  %s760 = scalar_lea.vmem %s0, 724
  %v761 = vld [vmem:[%s760] sm:$0xf]
  %v762 = vunpack.c.l.bf16 %v761
  %v763 = vunpack.c.h.bf16 %v761
  %s764 = scalar_lea.vmem %s1, 724
  %s766 = ssub.s32 0, 4
  %s767 = scalar_lea.vmem %s764, %s766
  %v768 = vpack.c.bf16 %v762, %v202
  %769 = vst [vmem:[%s767] sm:$0xff] %v768
  %s770 = scalar_lea.vmem %s0, 244
  %v771 = vld [vmem:[%s770] sm:$0xf]
  %v772 = vunpack.c.l.bf16 %v771
  %v773 = vunpack.c.h.bf16 %v771
  %s774 = scalar_lea.vmem %s1, 1204
  %s776 = ssub.s32 0, 4
  %s777 = scalar_lea.vmem %s774, %s776
  %v778 = vpack.c.bf16 %v772, %v207
  %779 = vst [vmem:[%s777] sm:$0xff] %v778
  %s780 = scalar_lea.vmem %s0, 1044
  %v781 = vld [vmem:[%s780] sm:$0xf]
  %v782 = vunpack.c.l.bf16 %v781
  %v783 = vunpack.c.h.bf16 %v781
  %s784 = scalar_lea.vmem %s1, 404
  %s786 = ssub.s32 0, 4
  %s787 = scalar_lea.vmem %s784, %s786
  %v788 = vpack.c.bf16 %v782, %v212
  %789 = vst [vmem:[%s787] sm:$0xff] %v788
  %s790 = scalar_lea.vmem %s0, 564
  %v791 = vld [vmem:[%s790] sm:$0xf]
  %v792 = vunpack.c.l.bf16 %v791
  %v793 = vunpack.c.h.bf16 %v791
  %s794 = scalar_lea.vmem %s1, 884
  %s796 = ssub.s32 0, 4
  %s797 = scalar_lea.vmem %s794, %s796
  %v798 = vpack.c.bf16 %v792, %v217
  %799 = vst [vmem:[%s797] sm:$0xff] %v798
  %s800 = scalar_lea.vmem %s0, 84
  %v801 = vld [vmem:[%s800] sm:$0xf]
  %v802 = vunpack.c.l.bf16 %v801
  %v803 = vunpack.c.h.bf16 %v801
  %s804 = scalar_lea.vmem %s1, 1364
  %s806 = ssub.s32 0, 4
  %s807 = scalar_lea.vmem %s804, %s806
  %v808 = vpack.c.bf16 %v802, %v222
  %809 = vst [vmem:[%s807] sm:$0xff] %v808
  %s810 = scalar_lea.vmem %s0, 1384
  %v811 = vld [vmem:[%s810] sm:$0xf]
  %v812 = vunpack.c.l.bf16 %v811
  %v813 = vunpack.c.h.bf16 %v811
  %s814 = scalar_lea.vmem %s1, 104
  %s816 = ssub.s32 0, 4
  %s817 = scalar_lea.vmem %s814, %s816
  %v818 = vpack.c.bf16 %v812, %v227
  %819 = vst [vmem:[%s817] sm:$0xff] %v818
  %s820 = scalar_lea.vmem %s0, 904
  %v821 = vld [vmem:[%s820] sm:$0xf]
  %v822 = vunpack.c.l.bf16 %v821
  %v823 = vunpack.c.h.bf16 %v821
  %s824 = scalar_lea.vmem %s1, 584
  %s826 = ssub.s32 0, 4
  %s827 = scalar_lea.vmem %s824, %s826
  %v828 = vpack.c.bf16 %v822, %v232
  %829 = vst [vmem:[%s827] sm:$0xff] %v828
  %s830 = scalar_lea.vmem %s0, 424
  %v831 = vld [vmem:[%s830] sm:$0xf]
  %v832 = vunpack.c.l.bf16 %v831
  %v833 = vunpack.c.h.bf16 %v831
  %s834 = scalar_lea.vmem %s1, 1064
  %s836 = ssub.s32 0, 4
  %s837 = scalar_lea.vmem %s834, %s836
  %v838 = vpack.c.bf16 %v832, %v237
  %839 = vst [vmem:[%s837] sm:$0xff] %v838
  %s840 = scalar_lea.vmem %s0, 1224
  %v841 = vld [vmem:[%s840] sm:$0xf]
  %v842 = vunpack.c.l.bf16 %v841
  %v843 = vunpack.c.h.bf16 %v841
  %s844 = scalar_lea.vmem %s1, 264
  %s846 = ssub.s32 0, 4
  %s847 = scalar_lea.vmem %s844, %s846
  %v848 = vpack.c.bf16 %v842, %v242
  %849 = vst [vmem:[%s847] sm:$0xff] %v848
  %s850 = scalar_lea.vmem %s0, 744
  %v851 = vld [vmem:[%s850] sm:$0xf]
  %v852 = vunpack.c.l.bf16 %v851
  %v853 = vunpack.c.h.bf16 %v851
  %s854 = scalar_lea.vmem %s1, 744
  %s856 = ssub.s32 0, 4
  %s857 = scalar_lea.vmem %s854, %s856
  %v858 = vpack.c.bf16 %v852, %v247
  %859 = vst [vmem:[%s857] sm:$0xff] %v858
  %s860 = scalar_lea.vmem %s0, 264
  %v861 = vld [vmem:[%s860] sm:$0xf]
  %v862 = vunpack.c.l.bf16 %v861
  %v863 = vunpack.c.h.bf16 %v861
  %s864 = scalar_lea.vmem %s1, 1224
  %s866 = ssub.s32 0, 4
  %s867 = scalar_lea.vmem %s864, %s866
  %v868 = vpack.c.bf16 %v862, %v252
  %869 = vst [vmem:[%s867] sm:$0xff] %v868
  %s870 = scalar_lea.vmem %s0, 1064
  %v871 = vld [vmem:[%s870] sm:$0xf]
  %v872 = vunpack.c.l.bf16 %v871
  %v873 = vunpack.c.h.bf16 %v871
  %s874 = scalar_lea.vmem %s1, 424
  %s876 = ssub.s32 0, 4
  %s877 = scalar_lea.vmem %s874, %s876
  %v878 = vpack.c.bf16 %v872, %v257
  %879 = vst [vmem:[%s877] sm:$0xff] %v878
  %s880 = scalar_lea.vmem %s0, 584
  %v881 = vld [vmem:[%s880] sm:$0xf]
  %v882 = vunpack.c.l.bf16 %v881
  %v883 = vunpack.c.h.bf16 %v881
  %s884 = scalar_lea.vmem %s1, 904
  %s886 = ssub.s32 0, 4
  %s887 = scalar_lea.vmem %s884, %s886
  %v888 = vpack.c.bf16 %v882, %v262
  %889 = vst [vmem:[%s887] sm:$0xff] %v888
  %s890 = scalar_lea.vmem %s0, 104
  %v891 = vld [vmem:[%s890] sm:$0xf]
  %v892 = vunpack.c.l.bf16 %v891
  %v893 = vunpack.c.h.bf16 %v891
  %s894 = scalar_lea.vmem %s1, 1384
  %s896 = ssub.s32 0, 4
  %s897 = scalar_lea.vmem %s894, %s896
  %v898 = vpack.c.bf16 %v892, %v267
  %899 = vst [vmem:[%s897] sm:$0xff] %v898
  %s900 = scalar_lea.vmem %s0, 1404
  %v901 = vld [vmem:[%s900] sm:$0xf]
  %v902 = vunpack.c.l.bf16 %v901
  %v903 = vunpack.c.h.bf16 %v901
  %s904 = scalar_lea.vmem %s1, 124
  %s906 = ssub.s32 0, 4
  %s907 = scalar_lea.vmem %s904, %s906
  %v908 = vpack.c.bf16 %v902, %v272
  %909 = vst [vmem:[%s907] sm:$0xff] %v908
  %s910 = scalar_lea.vmem %s0, 924
  %v911 = vld [vmem:[%s910] sm:$0xf]
  %v912 = vunpack.c.l.bf16 %v911
  %v913 = vunpack.c.h.bf16 %v911
  %s914 = scalar_lea.vmem %s1, 604
  %s916 = ssub.s32 0, 4
  %s917 = scalar_lea.vmem %s914, %s916
  %v918 = vpack.c.bf16 %v912, %v277
  %919 = vst [vmem:[%s917] sm:$0xff] %v918
  %s920 = scalar_lea.vmem %s0, 444
  %v921 = vld [vmem:[%s920] sm:$0xf]
  %v922 = vunpack.c.l.bf16 %v921
  %v923 = vunpack.c.h.bf16 %v921
  %s924 = scalar_lea.vmem %s1, 1084
  %s926 = ssub.s32 0, 4
  %s927 = scalar_lea.vmem %s924, %s926
  %v928 = vpack.c.bf16 %v922, %v282
  %929 = vst [vmem:[%s927] sm:$0xff] %v928
  %s930 = scalar_lea.vmem %s0, 1244
  %v931 = vld [vmem:[%s930] sm:$0xf]
  %v932 = vunpack.c.l.bf16 %v931
  %v933 = vunpack.c.h.bf16 %v931
  %s934 = scalar_lea.vmem %s1, 284
  %s936 = ssub.s32 0, 4
  %s937 = scalar_lea.vmem %s934, %s936
  %v938 = vpack.c.bf16 %v932, %v287
  %939 = vst [vmem:[%s937] sm:$0xff] %v938
  %s940 = scalar_lea.vmem %s0, 764
  %v941 = vld [vmem:[%s940] sm:$0xf]
  %v942 = vunpack.c.l.bf16 %v941
  %v943 = vunpack.c.h.bf16 %v941
  %s944 = scalar_lea.vmem %s1, 764
  %s946 = ssub.s32 0, 4
  %s947 = scalar_lea.vmem %s944, %s946
  %v948 = vpack.c.bf16 %v942, %v292
  %949 = vst [vmem:[%s947] sm:$0xff] %v948
  %s950 = scalar_lea.vmem %s0, 284
  %v951 = vld [vmem:[%s950] sm:$0xf]
  %v952 = vunpack.c.l.bf16 %v951
  %v953 = vunpack.c.h.bf16 %v951
  %s954 = scalar_lea.vmem %s1, 1244
  %s956 = ssub.s32 0, 4
  %s957 = scalar_lea.vmem %s954, %s956
  %v958 = vpack.c.bf16 %v952, %v297
  %959 = vst [vmem:[%s957] sm:$0xff] %v958
  %s960 = scalar_lea.vmem %s0, 1084
  %v961 = vld [vmem:[%s960] sm:$0xf]
  %v962 = vunpack.c.l.bf16 %v961
  %v963 = vunpack.c.h.bf16 %v961
  %s964 = scalar_lea.vmem %s1, 444
  %s966 = ssub.s32 0, 4
  %s967 = scalar_lea.vmem %s964, %s966
  %v968 = vpack.c.bf16 %v962, %v302
  %969 = vst [vmem:[%s967] sm:$0xff] %v968
  %s970 = scalar_lea.vmem %s0, 604
  %v971 = vld [vmem:[%s970] sm:$0xf]
  %v972 = vunpack.c.l.bf16 %v971
  %v973 = vunpack.c.h.bf16 %v971
  %s974 = scalar_lea.vmem %s1, 924
  %s976 = ssub.s32 0, 4
  %s977 = scalar_lea.vmem %s974, %s976
  %v978 = vpack.c.bf16 %v972, %v307
  %979 = vst [vmem:[%s977] sm:$0xff] %v978
  %s980 = scalar_lea.vmem %s0, 124
  %v981 = vld [vmem:[%s980] sm:$0xf]
  %v982 = vunpack.c.l.bf16 %v981
  %v983 = vunpack.c.h.bf16 %v981
  %s984 = scalar_lea.vmem %s1, 1404
  %s986 = ssub.s32 0, 4
  %s987 = scalar_lea.vmem %s984, %s986
  %v988 = vpack.c.bf16 %v982, %v312
  %989 = vst [vmem:[%s987] sm:$0xff] %v988
  %s990 = scalar_lea.vmem %s0, 1424
  %v991 = vld [vmem:[%s990] sm:$0xf]
  %v992 = vunpack.c.l.bf16 %v991
  %v993 = vunpack.c.h.bf16 %v991
  %s994 = scalar_lea.vmem %s1, 144
  %s996 = ssub.s32 0, 4
  %s997 = scalar_lea.vmem %s994, %s996
  %v998 = vpack.c.bf16 %v992, %v317
  %999 = vst [vmem:[%s997] sm:$0xff] %v998
  %s1000 = scalar_lea.vmem %s0, 944
  %v1001 = vld [vmem:[%s1000] sm:$0xf]
  %v1002 = vunpack.c.l.bf16 %v1001
  %v1003 = vunpack.c.h.bf16 %v1001
  %s1004 = scalar_lea.vmem %s1, 624
  %s1006 = ssub.s32 0, 4
  %s1007 = scalar_lea.vmem %s1004, %s1006
  %v1008 = vpack.c.bf16 %v1002, %v322
  %1009 = vst [vmem:[%s1007] sm:$0xff] %v1008
  %s1010 = scalar_lea.vmem %s0, 464
  %v1011 = vld [vmem:[%s1010] sm:$0xf]
  %v1012 = vunpack.c.l.bf16 %v1011
  %v1013 = vunpack.c.h.bf16 %v1011
  %s1014 = scalar_lea.vmem %s1, 1104
  %s1016 = ssub.s32 0, 4
  %s1017 = scalar_lea.vmem %s1014, %s1016
  %v1018 = vpack.c.bf16 %v1012, %v327
  %1019 = vst [vmem:[%s1017] sm:$0xff] %v1018
  %s1020 = scalar_lea.vmem %s0, 1264
  %v1021 = vld [vmem:[%s1020] sm:$0xf]
  %v1022 = vunpack.c.l.bf16 %v1021
  %v1023 = vunpack.c.h.bf16 %v1021
  %s1024 = scalar_lea.vmem %s1, 304
  %s1026 = ssub.s32 0, 4
  %s1027 = scalar_lea.vmem %s1024, %s1026
  %v1028 = vpack.c.bf16 %v1022, %v332
  %1029 = vst [vmem:[%s1027] sm:$0xff] %v1028
  %s1030 = scalar_lea.vmem %s0, 784
  %v1031 = vld [vmem:[%s1030] sm:$0xf]
  %v1032 = vunpack.c.l.bf16 %v1031
  %v1033 = vunpack.c.h.bf16 %v1031
  %s1034 = scalar_lea.vmem %s1, 784
  %s1036 = ssub.s32 0, 4
  %s1037 = scalar_lea.vmem %s1034, %s1036
  %v1038 = vpack.c.bf16 %v1032, %v337
  %1039 = vst [vmem:[%s1037] sm:$0xff] %v1038
  %s1040 = scalar_lea.vmem %s0, 304
  %v1041 = vld [vmem:[%s1040] sm:$0xf]
  %v1042 = vunpack.c.l.bf16 %v1041
  %v1043 = vunpack.c.h.bf16 %v1041
  %s1044 = scalar_lea.vmem %s1, 1264
  %s1046 = ssub.s32 0, 4
  %s1047 = scalar_lea.vmem %s1044, %s1046
  %v1048 = vpack.c.bf16 %v1042, %v342
  %1049 = vst [vmem:[%s1047] sm:$0xff] %v1048
  %s1050 = scalar_lea.vmem %s0, 1104
  %v1051 = vld [vmem:[%s1050] sm:$0xf]
  %v1052 = vunpack.c.l.bf16 %v1051
  %v1053 = vunpack.c.h.bf16 %v1051
  %s1054 = scalar_lea.vmem %s1, 464
  %s1056 = ssub.s32 0, 4
  %s1057 = scalar_lea.vmem %s1054, %s1056
  %v1058 = vpack.c.bf16 %v1052, %v347
  %1059 = vst [vmem:[%s1057] sm:$0xff] %v1058
  %s1060 = scalar_lea.vmem %s0, 624
  %v1061 = vld [vmem:[%s1060] sm:$0xf]
  %v1062 = vunpack.c.l.bf16 %v1061
  %v1063 = vunpack.c.h.bf16 %v1061
  %s1064 = scalar_lea.vmem %s1, 944
  %s1066 = ssub.s32 0, 4
  %s1067 = scalar_lea.vmem %s1064, %s1066
  %v1068 = vpack.c.bf16 %v1062, %v352
  %1069 = vst [vmem:[%s1067] sm:$0xff] %v1068
  %s1070 = scalar_lea.vmem %s0, 144
  %v1071 = vld [vmem:[%s1070] sm:$0xf]
  %v1072 = vunpack.c.l.bf16 %v1071
  %v1073 = vunpack.c.h.bf16 %v1071
  %s1074 = scalar_lea.vmem %s1, 1424
  %s1076 = ssub.s32 0, 4
  %s1077 = scalar_lea.vmem %s1074, %s1076
  %v1078 = vpack.c.bf16 %v1072, %v357
  %1079 = vst [vmem:[%s1077] sm:$0xff] %v1078
  %s1080 = scalar_lea.vmem %s0, 1288
  %v1081 = vld [vmem:[%s1080] sm:$0xf]
  %v1082 = vunpack.c.l.bf16 %v1081
  %v1083 = vunpack.c.h.bf16 %v1081
  %s1084 = scalar_lea.vmem %s1, 8
  %s1085 = scalar_lea.vmem %s0, 808
  %v1086 = vld [vmem:[%s1085] sm:$0xf]
  %v1087 = vunpack.c.l.bf16 %v1086
  %v1088 = vunpack.c.h.bf16 %v1086
  %s1089 = scalar_lea.vmem %s1, 488
  %s1090 = scalar_lea.vmem %s0, 328
  %v1091 = vld [vmem:[%s1090] sm:$0xf]
  %v1092 = vunpack.c.l.bf16 %v1091
  %v1093 = vunpack.c.h.bf16 %v1091
  %s1094 = scalar_lea.vmem %s1, 968
  %s1095 = scalar_lea.vmem %s0, 1128
  %v1096 = vld [vmem:[%s1095] sm:$0xf]
  %v1097 = vunpack.c.l.bf16 %v1096
  %v1098 = vunpack.c.h.bf16 %v1096
  %s1099 = scalar_lea.vmem %s1, 168
  %s1100 = scalar_lea.vmem %s0, 648
  %v1101 = vld [vmem:[%s1100] sm:$0xf]
  %v1102 = vunpack.c.l.bf16 %v1101
  %v1103 = vunpack.c.h.bf16 %v1101
  %s1104 = scalar_lea.vmem %s1, 648
  %s1105 = scalar_lea.vmem %s0, 168
  %v1106 = vld [vmem:[%s1105] sm:$0xf]
  %v1107 = vunpack.c.l.bf16 %v1106
  %v1108 = vunpack.c.h.bf16 %v1106
  %s1109 = scalar_lea.vmem %s1, 1128
  %s1110 = scalar_lea.vmem %s0, 968
  %v1111 = vld [vmem:[%s1110] sm:$0xf]
  %v1112 = vunpack.c.l.bf16 %v1111
  %v1113 = vunpack.c.h.bf16 %v1111
  %s1114 = scalar_lea.vmem %s1, 328
  %s1115 = scalar_lea.vmem %s0, 488
  %v1116 = vld [vmem:[%s1115] sm:$0xf]
  %v1117 = vunpack.c.l.bf16 %v1116
  %v1118 = vunpack.c.h.bf16 %v1116
  %s1119 = scalar_lea.vmem %s1, 808
  %s1120 = scalar_lea.vmem %s0, 8
  %v1121 = vld [vmem:[%s1120] sm:$0xf]
  %v1122 = vunpack.c.l.bf16 %v1121
  %v1123 = vunpack.c.h.bf16 %v1121
  %s1124 = scalar_lea.vmem %s1, 1288
  %s1125 = scalar_lea.vmem %s0, 1308
  %v1126 = vld [vmem:[%s1125] sm:$0xf]
  %v1127 = vunpack.c.l.bf16 %v1126
  %v1128 = vunpack.c.h.bf16 %v1126
  %s1129 = scalar_lea.vmem %s1, 28
  %s1130 = scalar_lea.vmem %s0, 828
  %v1131 = vld [vmem:[%s1130] sm:$0xf]
  %v1132 = vunpack.c.l.bf16 %v1131
  %v1133 = vunpack.c.h.bf16 %v1131
  %s1134 = scalar_lea.vmem %s1, 508
  %s1135 = scalar_lea.vmem %s0, 348
  %v1136 = vld [vmem:[%s1135] sm:$0xf]
  %v1137 = vunpack.c.l.bf16 %v1136
  %v1138 = vunpack.c.h.bf16 %v1136
  %s1139 = scalar_lea.vmem %s1, 988
  %s1140 = scalar_lea.vmem %s0, 1148
  %v1141 = vld [vmem:[%s1140] sm:$0xf]
  %v1142 = vunpack.c.l.bf16 %v1141
  %v1143 = vunpack.c.h.bf16 %v1141
  %s1144 = scalar_lea.vmem %s1, 188
  %s1145 = scalar_lea.vmem %s0, 668
  %v1146 = vld [vmem:[%s1145] sm:$0xf]
  %v1147 = vunpack.c.l.bf16 %v1146
  %v1148 = vunpack.c.h.bf16 %v1146
  %s1149 = scalar_lea.vmem %s1, 668
  %s1150 = scalar_lea.vmem %s0, 188
  %v1151 = vld [vmem:[%s1150] sm:$0xf]
  %v1152 = vunpack.c.l.bf16 %v1151
  %v1153 = vunpack.c.h.bf16 %v1151
  %s1154 = scalar_lea.vmem %s1, 1148
  %s1155 = scalar_lea.vmem %s0, 988
  %v1156 = vld [vmem:[%s1155] sm:$0xf]
  %v1157 = vunpack.c.l.bf16 %v1156
  %v1158 = vunpack.c.h.bf16 %v1156
  %s1159 = scalar_lea.vmem %s1, 348
  %s1160 = scalar_lea.vmem %s0, 508
  %v1161 = vld [vmem:[%s1160] sm:$0xf]
  %v1162 = vunpack.c.l.bf16 %v1161
  %v1163 = vunpack.c.h.bf16 %v1161
  %s1164 = scalar_lea.vmem %s1, 828
  %s1165 = scalar_lea.vmem %s0, 28
  %v1166 = vld [vmem:[%s1165] sm:$0xf]
  %v1167 = vunpack.c.l.bf16 %v1166
  %v1168 = vunpack.c.h.bf16 %v1166
  %s1169 = scalar_lea.vmem %s1, 1308
  %s1170 = scalar_lea.vmem %s0, 1328
  %v1171 = vld [vmem:[%s1170] sm:$0xf]
  %v1172 = vunpack.c.l.bf16 %v1171
  %v1173 = vunpack.c.h.bf16 %v1171
  %s1174 = scalar_lea.vmem %s1, 48
  %s1175 = scalar_lea.vmem %s0, 848
  %v1176 = vld [vmem:[%s1175] sm:$0xf]
  %v1177 = vunpack.c.l.bf16 %v1176
  %v1178 = vunpack.c.h.bf16 %v1176
  %s1179 = scalar_lea.vmem %s1, 528
  %s1180 = scalar_lea.vmem %s0, 368
  %v1181 = vld [vmem:[%s1180] sm:$0xf]
  %v1182 = vunpack.c.l.bf16 %v1181
  %v1183 = vunpack.c.h.bf16 %v1181
  %s1184 = scalar_lea.vmem %s1, 1008
  %s1185 = scalar_lea.vmem %s0, 1168
  %v1186 = vld [vmem:[%s1185] sm:$0xf]
  %v1187 = vunpack.c.l.bf16 %v1186
  %v1188 = vunpack.c.h.bf16 %v1186
  %s1189 = scalar_lea.vmem %s1, 208
  %s1190 = scalar_lea.vmem %s0, 688
  %v1191 = vld [vmem:[%s1190] sm:$0xf]
  %v1192 = vunpack.c.l.bf16 %v1191
  %v1193 = vunpack.c.h.bf16 %v1191
  %s1194 = scalar_lea.vmem %s1, 688
  %s1195 = scalar_lea.vmem %s0, 208
  %v1196 = vld [vmem:[%s1195] sm:$0xf]
  %v1197 = vunpack.c.l.bf16 %v1196
  %v1198 = vunpack.c.h.bf16 %v1196
  %s1199 = scalar_lea.vmem %s1, 1168
  %s1200 = scalar_lea.vmem %s0, 1008
  %v1201 = vld [vmem:[%s1200] sm:$0xf]
  %v1202 = vunpack.c.l.bf16 %v1201
  %v1203 = vunpack.c.h.bf16 %v1201
  %s1204 = scalar_lea.vmem %s1, 368
  %s1205 = scalar_lea.vmem %s0, 528
  %v1206 = vld [vmem:[%s1205] sm:$0xf]
  %v1207 = vunpack.c.l.bf16 %v1206
  %v1208 = vunpack.c.h.bf16 %v1206
  %s1209 = scalar_lea.vmem %s1, 848
  %s1210 = scalar_lea.vmem %s0, 48
  %v1211 = vld [vmem:[%s1210] sm:$0xf]
  %v1212 = vunpack.c.l.bf16 %v1211
  %v1213 = vunpack.c.h.bf16 %v1211
  %s1214 = scalar_lea.vmem %s1, 1328
  %s1215 = scalar_lea.vmem %s0, 1348
  %v1216 = vld [vmem:[%s1215] sm:$0xf]
  %v1217 = vunpack.c.l.bf16 %v1216
  %v1218 = vunpack.c.h.bf16 %v1216
  %s1219 = scalar_lea.vmem %s1, 68
  %s1220 = scalar_lea.vmem %s0, 868
  %v1221 = vld [vmem:[%s1220] sm:$0xf]
  %v1222 = vunpack.c.l.bf16 %v1221
  %v1223 = vunpack.c.h.bf16 %v1221
  %s1224 = scalar_lea.vmem %s1, 548
  %s1225 = scalar_lea.vmem %s0, 388
  %v1226 = vld [vmem:[%s1225] sm:$0xf]
  %v1227 = vunpack.c.l.bf16 %v1226
  %v1228 = vunpack.c.h.bf16 %v1226
  %s1229 = scalar_lea.vmem %s1, 1028
  %s1230 = scalar_lea.vmem %s0, 1188
  %v1231 = vld [vmem:[%s1230] sm:$0xf]
  %v1232 = vunpack.c.l.bf16 %v1231
  %v1233 = vunpack.c.h.bf16 %v1231
  %s1234 = scalar_lea.vmem %s1, 228
  %s1235 = scalar_lea.vmem %s0, 708
  %v1236 = vld [vmem:[%s1235] sm:$0xf]
  %v1237 = vunpack.c.l.bf16 %v1236
  %v1238 = vunpack.c.h.bf16 %v1236
  %s1239 = scalar_lea.vmem %s1, 708
  %s1240 = scalar_lea.vmem %s0, 228
  %v1241 = vld [vmem:[%s1240] sm:$0xf]
  %v1242 = vunpack.c.l.bf16 %v1241
  %v1243 = vunpack.c.h.bf16 %v1241
  %s1244 = scalar_lea.vmem %s1, 1188
  %s1245 = scalar_lea.vmem %s0, 1028
  %v1246 = vld [vmem:[%s1245] sm:$0xf]
  %v1247 = vunpack.c.l.bf16 %v1246
  %v1248 = vunpack.c.h.bf16 %v1246
  %s1249 = scalar_lea.vmem %s1, 388
  %s1250 = scalar_lea.vmem %s0, 548
  %v1251 = vld [vmem:[%s1250] sm:$0xf]
  %v1252 = vunpack.c.l.bf16 %v1251
  %v1253 = vunpack.c.h.bf16 %v1251
  %s1254 = scalar_lea.vmem %s1, 868
  %s1255 = scalar_lea.vmem %s0, 68
  %v1256 = vld [vmem:[%s1255] sm:$0xf]
  %v1257 = vunpack.c.l.bf16 %v1256
  %v1258 = vunpack.c.h.bf16 %v1256
  %s1259 = scalar_lea.vmem %s1, 1348
  %s1260 = scalar_lea.vmem %s0, 1368
  %v1261 = vld [vmem:[%s1260] sm:$0xf]
  %v1262 = vunpack.c.l.bf16 %v1261
  %v1263 = vunpack.c.h.bf16 %v1261
  %s1264 = scalar_lea.vmem %s1, 88
  %s1265 = scalar_lea.vmem %s0, 888
  %v1266 = vld [vmem:[%s1265] sm:$0xf]
  %v1267 = vunpack.c.l.bf16 %v1266
  %v1268 = vunpack.c.h.bf16 %v1266
  %s1269 = scalar_lea.vmem %s1, 568
  %s1270 = scalar_lea.vmem %s0, 408
  %v1271 = vld [vmem:[%s1270] sm:$0xf]
  %v1272 = vunpack.c.l.bf16 %v1271
  %v1273 = vunpack.c.h.bf16 %v1271
  %s1274 = scalar_lea.vmem %s1, 1048
  %s1275 = scalar_lea.vmem %s0, 1208
  %v1276 = vld [vmem:[%s1275] sm:$0xf]
  %v1277 = vunpack.c.l.bf16 %v1276
  %v1278 = vunpack.c.h.bf16 %v1276
  %s1279 = scalar_lea.vmem %s1, 248
  %s1280 = scalar_lea.vmem %s0, 728
  %v1281 = vld [vmem:[%s1280] sm:$0xf]
  %v1282 = vunpack.c.l.bf16 %v1281
  %v1283 = vunpack.c.h.bf16 %v1281
  %s1284 = scalar_lea.vmem %s1, 728
  %s1285 = scalar_lea.vmem %s0, 248
  %v1286 = vld [vmem:[%s1285] sm:$0xf]
  %v1287 = vunpack.c.l.bf16 %v1286
  %v1288 = vunpack.c.h.bf16 %v1286
  %s1289 = scalar_lea.vmem %s1, 1208
  %s1290 = scalar_lea.vmem %s0, 1048
  %v1291 = vld [vmem:[%s1290] sm:$0xf]
  %v1292 = vunpack.c.l.bf16 %v1291
  %v1293 = vunpack.c.h.bf16 %v1291
  %s1294 = scalar_lea.vmem %s1, 408
  %s1295 = scalar_lea.vmem %s0, 568
  %v1296 = vld [vmem:[%s1295] sm:$0xf]
  %v1297 = vunpack.c.l.bf16 %v1296
  %v1298 = vunpack.c.h.bf16 %v1296
  %s1299 = scalar_lea.vmem %s1, 888
  %s1300 = scalar_lea.vmem %s0, 88
  %v1301 = vld [vmem:[%s1300] sm:$0xf]
  %v1302 = vunpack.c.l.bf16 %v1301
  %v1303 = vunpack.c.h.bf16 %v1301
  %s1304 = scalar_lea.vmem %s1, 1368
  %s1305 = scalar_lea.vmem %s0, 1388
  %v1306 = vld [vmem:[%s1305] sm:$0xf]
  %v1307 = vunpack.c.l.bf16 %v1306
  %v1308 = vunpack.c.h.bf16 %v1306
  %s1309 = scalar_lea.vmem %s1, 108
  %s1310 = scalar_lea.vmem %s0, 908
  %v1311 = vld [vmem:[%s1310] sm:$0xf]
  %v1312 = vunpack.c.l.bf16 %v1311
  %v1313 = vunpack.c.h.bf16 %v1311
  %s1314 = scalar_lea.vmem %s1, 588
  %s1315 = scalar_lea.vmem %s0, 428
  %v1316 = vld [vmem:[%s1315] sm:$0xf]
  %v1317 = vunpack.c.l.bf16 %v1316
  %v1318 = vunpack.c.h.bf16 %v1316
  %s1319 = scalar_lea.vmem %s1, 1068
  %s1320 = scalar_lea.vmem %s0, 1228
  %v1321 = vld [vmem:[%s1320] sm:$0xf]
  %v1322 = vunpack.c.l.bf16 %v1321
  %v1323 = vunpack.c.h.bf16 %v1321
  %s1324 = scalar_lea.vmem %s1, 268
  %s1325 = scalar_lea.vmem %s0, 748
  %v1326 = vld [vmem:[%s1325] sm:$0xf]
  %v1327 = vunpack.c.l.bf16 %v1326
  %v1328 = vunpack.c.h.bf16 %v1326
  %s1329 = scalar_lea.vmem %s1, 748
  %s1330 = scalar_lea.vmem %s0, 268
  %v1331 = vld [vmem:[%s1330] sm:$0xf]
  %v1332 = vunpack.c.l.bf16 %v1331
  %v1333 = vunpack.c.h.bf16 %v1331
  %s1334 = scalar_lea.vmem %s1, 1228
  %s1335 = scalar_lea.vmem %s0, 1068
  %v1336 = vld [vmem:[%s1335] sm:$0xf]
  %v1337 = vunpack.c.l.bf16 %v1336
  %v1338 = vunpack.c.h.bf16 %v1336
  %s1339 = scalar_lea.vmem %s1, 428
  %s1340 = scalar_lea.vmem %s0, 588
  %v1341 = vld [vmem:[%s1340] sm:$0xf]
  %v1342 = vunpack.c.l.bf16 %v1341
  %v1343 = vunpack.c.h.bf16 %v1341
  %s1344 = scalar_lea.vmem %s1, 908
  %s1345 = scalar_lea.vmem %s0, 108
  %v1346 = vld [vmem:[%s1345] sm:$0xf]
  %v1347 = vunpack.c.l.bf16 %v1346
  %v1348 = vunpack.c.h.bf16 %v1346
  %s1349 = scalar_lea.vmem %s1, 1388
  %s1350 = scalar_lea.vmem %s0, 1408
  %v1351 = vld [vmem:[%s1350] sm:$0xf]
  %v1352 = vunpack.c.l.bf16 %v1351
  %v1353 = vunpack.c.h.bf16 %v1351
  %s1354 = scalar_lea.vmem %s1, 128
  %s1355 = scalar_lea.vmem %s0, 928
  %v1356 = vld [vmem:[%s1355] sm:$0xf]
  %v1357 = vunpack.c.l.bf16 %v1356
  %v1358 = vunpack.c.h.bf16 %v1356
  %s1359 = scalar_lea.vmem %s1, 608
  %s1360 = scalar_lea.vmem %s0, 448
  %v1361 = vld [vmem:[%s1360] sm:$0xf]
  %v1362 = vunpack.c.l.bf16 %v1361
  %v1363 = vunpack.c.h.bf16 %v1361
  %s1364 = scalar_lea.vmem %s1, 1088
  %s1365 = scalar_lea.vmem %s0, 1248
  %v1366 = vld [vmem:[%s1365] sm:$0xf]
  %v1367 = vunpack.c.l.bf16 %v1366
  %v1368 = vunpack.c.h.bf16 %v1366
  %s1369 = scalar_lea.vmem %s1, 288
  %s1370 = scalar_lea.vmem %s0, 768
  %v1371 = vld [vmem:[%s1370] sm:$0xf]
  %v1372 = vunpack.c.l.bf16 %v1371
  %v1373 = vunpack.c.h.bf16 %v1371
  %s1374 = scalar_lea.vmem %s1, 768
  %s1375 = scalar_lea.vmem %s0, 288
  %v1376 = vld [vmem:[%s1375] sm:$0xf]
  %v1377 = vunpack.c.l.bf16 %v1376
  %v1378 = vunpack.c.h.bf16 %v1376
  %s1379 = scalar_lea.vmem %s1, 1248
  %s1380 = scalar_lea.vmem %s0, 1088
  %v1381 = vld [vmem:[%s1380] sm:$0xf]
  %v1382 = vunpack.c.l.bf16 %v1381
  %v1383 = vunpack.c.h.bf16 %v1381
  %s1384 = scalar_lea.vmem %s1, 448
  %s1385 = scalar_lea.vmem %s0, 608
  %v1386 = vld [vmem:[%s1385] sm:$0xf]
  %v1387 = vunpack.c.l.bf16 %v1386
  %v1388 = vunpack.c.h.bf16 %v1386
  %s1389 = scalar_lea.vmem %s1, 928
  %s1390 = scalar_lea.vmem %s0, 128
  %v1391 = vld [vmem:[%s1390] sm:$0xf]
  %v1392 = vunpack.c.l.bf16 %v1391
  %v1393 = vunpack.c.h.bf16 %v1391
  %s1394 = scalar_lea.vmem %s1, 1408
  %s1395 = scalar_lea.vmem %s0, 1428
  %v1396 = vld [vmem:[%s1395] sm:$0xf]
  %v1397 = vunpack.c.l.bf16 %v1396
  %v1398 = vunpack.c.h.bf16 %v1396
  %s1399 = scalar_lea.vmem %s1, 148
  %s1400 = scalar_lea.vmem %s0, 948
  %v1401 = vld [vmem:[%s1400] sm:$0xf]
  %v1402 = vunpack.c.l.bf16 %v1401
  %v1403 = vunpack.c.h.bf16 %v1401
  %s1404 = scalar_lea.vmem %s1, 628
  %s1405 = scalar_lea.vmem %s0, 468
  %v1406 = vld [vmem:[%s1405] sm:$0xf]
  %v1407 = vunpack.c.l.bf16 %v1406
  %v1408 = vunpack.c.h.bf16 %v1406
  %s1409 = scalar_lea.vmem %s1, 1108
  %s1410 = scalar_lea.vmem %s0, 1268
  %v1411 = vld [vmem:[%s1410] sm:$0xf]
  %v1412 = vunpack.c.l.bf16 %v1411
  %v1413 = vunpack.c.h.bf16 %v1411
  %s1414 = scalar_lea.vmem %s1, 308
  %s1415 = scalar_lea.vmem %s0, 788
  %v1416 = vld [vmem:[%s1415] sm:$0xf]
  %v1417 = vunpack.c.l.bf16 %v1416
  %v1418 = vunpack.c.h.bf16 %v1416
  %s1419 = scalar_lea.vmem %s1, 788
  %s1420 = scalar_lea.vmem %s0, 308
  %v1421 = vld [vmem:[%s1420] sm:$0xf]
  %v1422 = vunpack.c.l.bf16 %v1421
  %v1423 = vunpack.c.h.bf16 %v1421
  %s1424 = scalar_lea.vmem %s1, 1268
  %s1425 = scalar_lea.vmem %s0, 1108
  %v1426 = vld [vmem:[%s1425] sm:$0xf]
  %v1427 = vunpack.c.l.bf16 %v1426
  %v1428 = vunpack.c.h.bf16 %v1426
  %s1429 = scalar_lea.vmem %s1, 468
  %s1430 = scalar_lea.vmem %s0, 628
  %v1431 = vld [vmem:[%s1430] sm:$0xf]
  %v1432 = vunpack.c.l.bf16 %v1431
  %v1433 = vunpack.c.h.bf16 %v1431
  %s1434 = scalar_lea.vmem %s1, 948
  %s1435 = scalar_lea.vmem %s0, 148
  %v1436 = vld [vmem:[%s1435] sm:$0xf]
  %v1437 = vunpack.c.l.bf16 %v1436
  %v1438 = vunpack.c.h.bf16 %v1436
  %s1439 = scalar_lea.vmem %s1, 1428
  %s1440 = scalar_lea.vmem %s0, 1292
  %v1441 = vld [vmem:[%s1440] sm:$0xf]
  %v1442 = vunpack.c.l.bf16 %v1441
  %v1443 = vunpack.c.h.bf16 %v1441
  %s1444 = scalar_lea.vmem %s1, 12
  %s1446 = ssub.s32 0, 4
  %s1447 = scalar_lea.vmem %s1444, %s1446
  %v1448 = vpack.c.bf16 %v1442, %v1082
  %1449 = vst [vmem:[%s1447] sm:$0xff] %v1448
  %s1450 = scalar_lea.vmem %s0, 812
  %v1451 = vld [vmem:[%s1450] sm:$0xf]
  %v1452 = vunpack.c.l.bf16 %v1451
  %v1453 = vunpack.c.h.bf16 %v1451
  %s1454 = scalar_lea.vmem %s1, 492
  %s1456 = ssub.s32 0, 4
  %s1457 = scalar_lea.vmem %s1454, %s1456
  %v1458 = vpack.c.bf16 %v1452, %v1087
  %1459 = vst [vmem:[%s1457] sm:$0xff] %v1458
  %s1460 = scalar_lea.vmem %s0, 332
  %v1461 = vld [vmem:[%s1460] sm:$0xf]
  %v1462 = vunpack.c.l.bf16 %v1461
  %v1463 = vunpack.c.h.bf16 %v1461
  %s1464 = scalar_lea.vmem %s1, 972
  %s1466 = ssub.s32 0, 4
  %s1467 = scalar_lea.vmem %s1464, %s1466
  %v1468 = vpack.c.bf16 %v1462, %v1092
  %1469 = vst [vmem:[%s1467] sm:$0xff] %v1468
  %s1470 = scalar_lea.vmem %s0, 1132
  %v1471 = vld [vmem:[%s1470] sm:$0xf]
  %v1472 = vunpack.c.l.bf16 %v1471
  %v1473 = vunpack.c.h.bf16 %v1471
  %s1474 = scalar_lea.vmem %s1, 172
  %s1476 = ssub.s32 0, 4
  %s1477 = scalar_lea.vmem %s1474, %s1476
  %v1478 = vpack.c.bf16 %v1472, %v1097
  %1479 = vst [vmem:[%s1477] sm:$0xff] %v1478
  %s1480 = scalar_lea.vmem %s0, 652
  %v1481 = vld [vmem:[%s1480] sm:$0xf]
  %v1482 = vunpack.c.l.bf16 %v1481
  %v1483 = vunpack.c.h.bf16 %v1481
  %s1484 = scalar_lea.vmem %s1, 652
  %s1486 = ssub.s32 0, 4
  %s1487 = scalar_lea.vmem %s1484, %s1486
  %v1488 = vpack.c.bf16 %v1482, %v1102
  %1489 = vst [vmem:[%s1487] sm:$0xff] %v1488
  %s1490 = scalar_lea.vmem %s0, 172
  %v1491 = vld [vmem:[%s1490] sm:$0xf]
  %v1492 = vunpack.c.l.bf16 %v1491
  %v1493 = vunpack.c.h.bf16 %v1491
  %s1494 = scalar_lea.vmem %s1, 1132
  %s1496 = ssub.s32 0, 4
  %s1497 = scalar_lea.vmem %s1494, %s1496
  %v1498 = vpack.c.bf16 %v1492, %v1107
  %1499 = vst [vmem:[%s1497] sm:$0xff] %v1498
  %s1500 = scalar_lea.vmem %s0, 972
  %v1501 = vld [vmem:[%s1500] sm:$0xf]
  %v1502 = vunpack.c.l.bf16 %v1501
  %v1503 = vunpack.c.h.bf16 %v1501
  %s1504 = scalar_lea.vmem %s1, 332
  %s1506 = ssub.s32 0, 4
  %s1507 = scalar_lea.vmem %s1504, %s1506
  %v1508 = vpack.c.bf16 %v1502, %v1112
  %1509 = vst [vmem:[%s1507] sm:$0xff] %v1508
  %s1510 = scalar_lea.vmem %s0, 492
  %v1511 = vld [vmem:[%s1510] sm:$0xf]
  %v1512 = vunpack.c.l.bf16 %v1511
  %v1513 = vunpack.c.h.bf16 %v1511
  %s1514 = scalar_lea.vmem %s1, 812
  %s1516 = ssub.s32 0, 4
  %s1517 = scalar_lea.vmem %s1514, %s1516
  %v1518 = vpack.c.bf16 %v1512, %v1117
  %1519 = vst [vmem:[%s1517] sm:$0xff] %v1518
  %s1520 = scalar_lea.vmem %s0, 12
  %v1521 = vld [vmem:[%s1520] sm:$0xf]
  %v1522 = vunpack.c.l.bf16 %v1521
  %v1523 = vunpack.c.h.bf16 %v1521
  %s1524 = scalar_lea.vmem %s1, 1292
  %s1526 = ssub.s32 0, 4
  %s1527 = scalar_lea.vmem %s1524, %s1526
  %v1528 = vpack.c.bf16 %v1522, %v1122
  %1529 = vst [vmem:[%s1527] sm:$0xff] %v1528
  %s1530 = scalar_lea.vmem %s0, 1312
  %v1531 = vld [vmem:[%s1530] sm:$0xf]
  %v1532 = vunpack.c.l.bf16 %v1531
  %v1533 = vunpack.c.h.bf16 %v1531
  %s1534 = scalar_lea.vmem %s1, 32
  %s1536 = ssub.s32 0, 4
  %s1537 = scalar_lea.vmem %s1534, %s1536
  %v1538 = vpack.c.bf16 %v1532, %v1127
  %1539 = vst [vmem:[%s1537] sm:$0xff] %v1538
  %s1540 = scalar_lea.vmem %s0, 832
  %v1541 = vld [vmem:[%s1540] sm:$0xf]
  %v1542 = vunpack.c.l.bf16 %v1541
  %v1543 = vunpack.c.h.bf16 %v1541
  %s1544 = scalar_lea.vmem %s1, 512
  %s1546 = ssub.s32 0, 4
  %s1547 = scalar_lea.vmem %s1544, %s1546
  %v1548 = vpack.c.bf16 %v1542, %v1132
  %1549 = vst [vmem:[%s1547] sm:$0xff] %v1548
  %s1550 = scalar_lea.vmem %s0, 352
  %v1551 = vld [vmem:[%s1550] sm:$0xf]
  %v1552 = vunpack.c.l.bf16 %v1551
  %v1553 = vunpack.c.h.bf16 %v1551
  %s1554 = scalar_lea.vmem %s1, 992
  %s1556 = ssub.s32 0, 4
  %s1557 = scalar_lea.vmem %s1554, %s1556
  %v1558 = vpack.c.bf16 %v1552, %v1137
  %1559 = vst [vmem:[%s1557] sm:$0xff] %v1558
  %s1560 = scalar_lea.vmem %s0, 1152
  %v1561 = vld [vmem:[%s1560] sm:$0xf]
  %v1562 = vunpack.c.l.bf16 %v1561
  %v1563 = vunpack.c.h.bf16 %v1561
  %s1564 = scalar_lea.vmem %s1, 192
  %s1566 = ssub.s32 0, 4
  %s1567 = scalar_lea.vmem %s1564, %s1566
  %v1568 = vpack.c.bf16 %v1562, %v1142
  %1569 = vst [vmem:[%s1567] sm:$0xff] %v1568
  %s1570 = scalar_lea.vmem %s0, 672
  %v1571 = vld [vmem:[%s1570] sm:$0xf]
  %v1572 = vunpack.c.l.bf16 %v1571
  %v1573 = vunpack.c.h.bf16 %v1571
  %s1574 = scalar_lea.vmem %s1, 672
  %s1576 = ssub.s32 0, 4
  %s1577 = scalar_lea.vmem %s1574, %s1576
  %v1578 = vpack.c.bf16 %v1572, %v1147
  %1579 = vst [vmem:[%s1577] sm:$0xff] %v1578
  %s1580 = scalar_lea.vmem %s0, 192
  %v1581 = vld [vmem:[%s1580] sm:$0xf]
  %v1582 = vunpack.c.l.bf16 %v1581
  %v1583 = vunpack.c.h.bf16 %v1581
  %s1584 = scalar_lea.vmem %s1, 1152
  %s1586 = ssub.s32 0, 4
  %s1587 = scalar_lea.vmem %s1584, %s1586
  %v1588 = vpack.c.bf16 %v1582, %v1152
  %1589 = vst [vmem:[%s1587] sm:$0xff] %v1588
  %s1590 = scalar_lea.vmem %s0, 992
  %v1591 = vld [vmem:[%s1590] sm:$0xf]
  %v1592 = vunpack.c.l.bf16 %v1591
  %v1593 = vunpack.c.h.bf16 %v1591
  %s1594 = scalar_lea.vmem %s1, 352
  %s1596 = ssub.s32 0, 4
  %s1597 = scalar_lea.vmem %s1594, %s1596
  %v1598 = vpack.c.bf16 %v1592, %v1157
  %1599 = vst [vmem:[%s1597] sm:$0xff] %v1598
  %s1600 = scalar_lea.vmem %s0, 512
  %v1601 = vld [vmem:[%s1600] sm:$0xf]
  %v1602 = vunpack.c.l.bf16 %v1601
  %v1603 = vunpack.c.h.bf16 %v1601
  %s1604 = scalar_lea.vmem %s1, 832
  %s1606 = ssub.s32 0, 4
  %s1607 = scalar_lea.vmem %s1604, %s1606
  %v1608 = vpack.c.bf16 %v1602, %v1162
  %1609 = vst [vmem:[%s1607] sm:$0xff] %v1608
  %s1610 = scalar_lea.vmem %s0, 32
  %v1611 = vld [vmem:[%s1610] sm:$0xf]
  %v1612 = vunpack.c.l.bf16 %v1611
  %v1613 = vunpack.c.h.bf16 %v1611
  %s1614 = scalar_lea.vmem %s1, 1312
  %s1616 = ssub.s32 0, 4
  %s1617 = scalar_lea.vmem %s1614, %s1616
  %v1618 = vpack.c.bf16 %v1612, %v1167
  %1619 = vst [vmem:[%s1617] sm:$0xff] %v1618
  %s1620 = scalar_lea.vmem %s0, 1332
  %v1621 = vld [vmem:[%s1620] sm:$0xf]
  %v1622 = vunpack.c.l.bf16 %v1621
  %v1623 = vunpack.c.h.bf16 %v1621
  %s1624 = scalar_lea.vmem %s1, 52
  %s1626 = ssub.s32 0, 4
  %s1627 = scalar_lea.vmem %s1624, %s1626
  %v1628 = vpack.c.bf16 %v1622, %v1172
  %1629 = vst [vmem:[%s1627] sm:$0xff] %v1628
  %s1630 = scalar_lea.vmem %s0, 852
  %v1631 = vld [vmem:[%s1630] sm:$0xf]
  %v1632 = vunpack.c.l.bf16 %v1631
  %v1633 = vunpack.c.h.bf16 %v1631
  %s1634 = scalar_lea.vmem %s1, 532
  %s1636 = ssub.s32 0, 4
  %s1637 = scalar_lea.vmem %s1634, %s1636
  %v1638 = vpack.c.bf16 %v1632, %v1177
  %1639 = vst [vmem:[%s1637] sm:$0xff] %v1638
  %s1640 = scalar_lea.vmem %s0, 372
  %v1641 = vld [vmem:[%s1640] sm:$0xf]
  %v1642 = vunpack.c.l.bf16 %v1641
  %v1643 = vunpack.c.h.bf16 %v1641
  %s1644 = scalar_lea.vmem %s1, 1012
  %s1646 = ssub.s32 0, 4
  %s1647 = scalar_lea.vmem %s1644, %s1646
  %v1648 = vpack.c.bf16 %v1642, %v1182
  %1649 = vst [vmem:[%s1647] sm:$0xff] %v1648
  %s1650 = scalar_lea.vmem %s0, 1172
  %v1651 = vld [vmem:[%s1650] sm:$0xf]
  %v1652 = vunpack.c.l.bf16 %v1651
  %v1653 = vunpack.c.h.bf16 %v1651
  %s1654 = scalar_lea.vmem %s1, 212
  %s1656 = ssub.s32 0, 4
  %s1657 = scalar_lea.vmem %s1654, %s1656
  %v1658 = vpack.c.bf16 %v1652, %v1187
  %1659 = vst [vmem:[%s1657] sm:$0xff] %v1658
  %s1660 = scalar_lea.vmem %s0, 692
  %v1661 = vld [vmem:[%s1660] sm:$0xf]
  %v1662 = vunpack.c.l.bf16 %v1661
  %v1663 = vunpack.c.h.bf16 %v1661
  %s1664 = scalar_lea.vmem %s1, 692
  %s1666 = ssub.s32 0, 4
  %s1667 = scalar_lea.vmem %s1664, %s1666
  %v1668 = vpack.c.bf16 %v1662, %v1192
  %1669 = vst [vmem:[%s1667] sm:$0xff] %v1668
  %s1670 = scalar_lea.vmem %s0, 212
  %v1671 = vld [vmem:[%s1670] sm:$0xf]
  %v1672 = vunpack.c.l.bf16 %v1671
  %v1673 = vunpack.c.h.bf16 %v1671
  %s1674 = scalar_lea.vmem %s1, 1172
  %s1676 = ssub.s32 0, 4
  %s1677 = scalar_lea.vmem %s1674, %s1676
  %v1678 = vpack.c.bf16 %v1672, %v1197
  %1679 = vst [vmem:[%s1677] sm:$0xff] %v1678
  %s1680 = scalar_lea.vmem %s0, 1012
  %v1681 = vld [vmem:[%s1680] sm:$0xf]
  %v1682 = vunpack.c.l.bf16 %v1681
  %v1683 = vunpack.c.h.bf16 %v1681
  %s1684 = scalar_lea.vmem %s1, 372
  %s1686 = ssub.s32 0, 4
  %s1687 = scalar_lea.vmem %s1684, %s1686
  %v1688 = vpack.c.bf16 %v1682, %v1202
  %1689 = vst [vmem:[%s1687] sm:$0xff] %v1688
  %s1690 = scalar_lea.vmem %s0, 532
  %v1691 = vld [vmem:[%s1690] sm:$0xf]
  %v1692 = vunpack.c.l.bf16 %v1691
  %v1693 = vunpack.c.h.bf16 %v1691
  %s1694 = scalar_lea.vmem %s1, 852
  %s1696 = ssub.s32 0, 4
  %s1697 = scalar_lea.vmem %s1694, %s1696
  %v1698 = vpack.c.bf16 %v1692, %v1207
  %1699 = vst [vmem:[%s1697] sm:$0xff] %v1698
  %s1700 = scalar_lea.vmem %s0, 52
  %v1701 = vld [vmem:[%s1700] sm:$0xf]
  %v1702 = vunpack.c.l.bf16 %v1701
  %v1703 = vunpack.c.h.bf16 %v1701
  %s1704 = scalar_lea.vmem %s1, 1332
  %s1706 = ssub.s32 0, 4
  %s1707 = scalar_lea.vmem %s1704, %s1706
  %v1708 = vpack.c.bf16 %v1702, %v1212
  %1709 = vst [vmem:[%s1707] sm:$0xff] %v1708
  %s1710 = scalar_lea.vmem %s0, 1352
  %v1711 = vld [vmem:[%s1710] sm:$0xf]
  %v1712 = vunpack.c.l.bf16 %v1711
  %v1713 = vunpack.c.h.bf16 %v1711
  %s1714 = scalar_lea.vmem %s1, 72
  %s1716 = ssub.s32 0, 4
  %s1717 = scalar_lea.vmem %s1714, %s1716
  %v1718 = vpack.c.bf16 %v1712, %v1217
  %1719 = vst [vmem:[%s1717] sm:$0xff] %v1718
  %s1720 = scalar_lea.vmem %s0, 872
  %v1721 = vld [vmem:[%s1720] sm:$0xf]
  %v1722 = vunpack.c.l.bf16 %v1721
  %v1723 = vunpack.c.h.bf16 %v1721
  %s1724 = scalar_lea.vmem %s1, 552
  %s1726 = ssub.s32 0, 4
  %s1727 = scalar_lea.vmem %s1724, %s1726
  %v1728 = vpack.c.bf16 %v1722, %v1222
  %1729 = vst [vmem:[%s1727] sm:$0xff] %v1728
  %s1730 = scalar_lea.vmem %s0, 392
  %v1731 = vld [vmem:[%s1730] sm:$0xf]
  %v1732 = vunpack.c.l.bf16 %v1731
  %v1733 = vunpack.c.h.bf16 %v1731
  %s1734 = scalar_lea.vmem %s1, 1032
  %s1736 = ssub.s32 0, 4
  %s1737 = scalar_lea.vmem %s1734, %s1736
  %v1738 = vpack.c.bf16 %v1732, %v1227
  %1739 = vst [vmem:[%s1737] sm:$0xff] %v1738
  %s1740 = scalar_lea.vmem %s0, 1192
  %v1741 = vld [vmem:[%s1740] sm:$0xf]
  %v1742 = vunpack.c.l.bf16 %v1741
  %v1743 = vunpack.c.h.bf16 %v1741
  %s1744 = scalar_lea.vmem %s1, 232
  %s1746 = ssub.s32 0, 4
  %s1747 = scalar_lea.vmem %s1744, %s1746
  %v1748 = vpack.c.bf16 %v1742, %v1232
  %1749 = vst [vmem:[%s1747] sm:$0xff] %v1748
  %s1750 = scalar_lea.vmem %s0, 712
  %v1751 = vld [vmem:[%s1750] sm:$0xf]
  %v1752 = vunpack.c.l.bf16 %v1751
  %v1753 = vunpack.c.h.bf16 %v1751
  %s1754 = scalar_lea.vmem %s1, 712
  %s1756 = ssub.s32 0, 4
  %s1757 = scalar_lea.vmem %s1754, %s1756
  %v1758 = vpack.c.bf16 %v1752, %v1237
  %1759 = vst [vmem:[%s1757] sm:$0xff] %v1758
  %s1760 = scalar_lea.vmem %s0, 232
  %v1761 = vld [vmem:[%s1760] sm:$0xf]
  %v1762 = vunpack.c.l.bf16 %v1761
  %v1763 = vunpack.c.h.bf16 %v1761
  %s1764 = scalar_lea.vmem %s1, 1192
  %s1766 = ssub.s32 0, 4
  %s1767 = scalar_lea.vmem %s1764, %s1766
  %v1768 = vpack.c.bf16 %v1762, %v1242
  %1769 = vst [vmem:[%s1767] sm:$0xff] %v1768
  %s1770 = scalar_lea.vmem %s0, 1032
  %v1771 = vld [vmem:[%s1770] sm:$0xf]
  %v1772 = vunpack.c.l.bf16 %v1771
  %v1773 = vunpack.c.h.bf16 %v1771
  %s1774 = scalar_lea.vmem %s1, 392
  %s1776 = ssub.s32 0, 4
  %s1777 = scalar_lea.vmem %s1774, %s1776
  %v1778 = vpack.c.bf16 %v1772, %v1247
  %1779 = vst [vmem:[%s1777] sm:$0xff] %v1778
  %s1780 = scalar_lea.vmem %s0, 552
  %v1781 = vld [vmem:[%s1780] sm:$0xf]
  %v1782 = vunpack.c.l.bf16 %v1781
  %v1783 = vunpack.c.h.bf16 %v1781
  %s1784 = scalar_lea.vmem %s1, 872
  %s1786 = ssub.s32 0, 4
  %s1787 = scalar_lea.vmem %s1784, %s1786
  %v1788 = vpack.c.bf16 %v1782, %v1252
  %1789 = vst [vmem:[%s1787] sm:$0xff] %v1788
  %s1790 = scalar_lea.vmem %s0, 72
  %v1791 = vld [vmem:[%s1790] sm:$0xf]
  %v1792 = vunpack.c.l.bf16 %v1791
  %v1793 = vunpack.c.h.bf16 %v1791
  %s1794 = scalar_lea.vmem %s1, 1352
  %s1796 = ssub.s32 0, 4
  %s1797 = scalar_lea.vmem %s1794, %s1796
  %v1798 = vpack.c.bf16 %v1792, %v1257
  %1799 = vst [vmem:[%s1797] sm:$0xff] %v1798
  %s1800 = scalar_lea.vmem %s0, 1372
  %v1801 = vld [vmem:[%s1800] sm:$0xf]
  %v1802 = vunpack.c.l.bf16 %v1801
  %v1803 = vunpack.c.h.bf16 %v1801
  %s1804 = scalar_lea.vmem %s1, 92
  %s1806 = ssub.s32 0, 4
  %s1807 = scalar_lea.vmem %s1804, %s1806
  %v1808 = vpack.c.bf16 %v1802, %v1262
  %1809 = vst [vmem:[%s1807] sm:$0xff] %v1808
  %s1810 = scalar_lea.vmem %s0, 892
  %v1811 = vld [vmem:[%s1810] sm:$0xf]
  %v1812 = vunpack.c.l.bf16 %v1811
  %v1813 = vunpack.c.h.bf16 %v1811
  %s1814 = scalar_lea.vmem %s1, 572
  %s1816 = ssub.s32 0, 4
  %s1817 = scalar_lea.vmem %s1814, %s1816
  %v1818 = vpack.c.bf16 %v1812, %v1267
  %1819 = vst [vmem:[%s1817] sm:$0xff] %v1818
  %s1820 = scalar_lea.vmem %s0, 412
  %v1821 = vld [vmem:[%s1820] sm:$0xf]
  %v1822 = vunpack.c.l.bf16 %v1821
  %v1823 = vunpack.c.h.bf16 %v1821
  %s1824 = scalar_lea.vmem %s1, 1052
  %s1826 = ssub.s32 0, 4
  %s1827 = scalar_lea.vmem %s1824, %s1826
  %v1828 = vpack.c.bf16 %v1822, %v1272
  %1829 = vst [vmem:[%s1827] sm:$0xff] %v1828
  %s1830 = scalar_lea.vmem %s0, 1212
  %v1831 = vld [vmem:[%s1830] sm:$0xf]
  %v1832 = vunpack.c.l.bf16 %v1831
  %v1833 = vunpack.c.h.bf16 %v1831
  %s1834 = scalar_lea.vmem %s1, 252
  %s1836 = ssub.s32 0, 4
  %s1837 = scalar_lea.vmem %s1834, %s1836
  %v1838 = vpack.c.bf16 %v1832, %v1277
  %1839 = vst [vmem:[%s1837] sm:$0xff] %v1838
  %s1840 = scalar_lea.vmem %s0, 732
  %v1841 = vld [vmem:[%s1840] sm:$0xf]
  %v1842 = vunpack.c.l.bf16 %v1841
  %v1843 = vunpack.c.h.bf16 %v1841
  %s1844 = scalar_lea.vmem %s1, 732
  %s1846 = ssub.s32 0, 4
  %s1847 = scalar_lea.vmem %s1844, %s1846
  %v1848 = vpack.c.bf16 %v1842, %v1282
  %1849 = vst [vmem:[%s1847] sm:$0xff] %v1848
  %s1850 = scalar_lea.vmem %s0, 252
  %v1851 = vld [vmem:[%s1850] sm:$0xf]
  %v1852 = vunpack.c.l.bf16 %v1851
  %v1853 = vunpack.c.h.bf16 %v1851
  %s1854 = scalar_lea.vmem %s1, 1212
  %s1856 = ssub.s32 0, 4
  %s1857 = scalar_lea.vmem %s1854, %s1856
  %v1858 = vpack.c.bf16 %v1852, %v1287
  %1859 = vst [vmem:[%s1857] sm:$0xff] %v1858
  %s1860 = scalar_lea.vmem %s0, 1052
  %v1861 = vld [vmem:[%s1860] sm:$0xf]
  %v1862 = vunpack.c.l.bf16 %v1861
  %v1863 = vunpack.c.h.bf16 %v1861
  %s1864 = scalar_lea.vmem %s1, 412
  %s1866 = ssub.s32 0, 4
  %s1867 = scalar_lea.vmem %s1864, %s1866
  %v1868 = vpack.c.bf16 %v1862, %v1292
  %1869 = vst [vmem:[%s1867] sm:$0xff] %v1868
  %s1870 = scalar_lea.vmem %s0, 572
  %v1871 = vld [vmem:[%s1870] sm:$0xf]
  %v1872 = vunpack.c.l.bf16 %v1871
  %v1873 = vunpack.c.h.bf16 %v1871
  %s1874 = scalar_lea.vmem %s1, 892
  %s1876 = ssub.s32 0, 4
  %s1877 = scalar_lea.vmem %s1874, %s1876
  %v1878 = vpack.c.bf16 %v1872, %v1297
  %1879 = vst [vmem:[%s1877] sm:$0xff] %v1878
  %s1880 = scalar_lea.vmem %s0, 92
  %v1881 = vld [vmem:[%s1880] sm:$0xf]
  %v1882 = vunpack.c.l.bf16 %v1881
  %v1883 = vunpack.c.h.bf16 %v1881
  %s1884 = scalar_lea.vmem %s1, 1372
  %s1886 = ssub.s32 0, 4
  %s1887 = scalar_lea.vmem %s1884, %s1886
  %v1888 = vpack.c.bf16 %v1882, %v1302
  %1889 = vst [vmem:[%s1887] sm:$0xff] %v1888
  %s1890 = scalar_lea.vmem %s0, 1392
  %v1891 = vld [vmem:[%s1890] sm:$0xf]
  %v1892 = vunpack.c.l.bf16 %v1891
  %v1893 = vunpack.c.h.bf16 %v1891
  %s1894 = scalar_lea.vmem %s1, 112
  %s1896 = ssub.s32 0, 4
  %s1897 = scalar_lea.vmem %s1894, %s1896
  %v1898 = vpack.c.bf16 %v1892, %v1307
  %1899 = vst [vmem:[%s1897] sm:$0xff] %v1898
  %s1900 = scalar_lea.vmem %s0, 912
  %v1901 = vld [vmem:[%s1900] sm:$0xf]
  %v1902 = vunpack.c.l.bf16 %v1901
  %v1903 = vunpack.c.h.bf16 %v1901
  %s1904 = scalar_lea.vmem %s1, 592
  %s1906 = ssub.s32 0, 4
  %s1907 = scalar_lea.vmem %s1904, %s1906
  %v1908 = vpack.c.bf16 %v1902, %v1312
  %1909 = vst [vmem:[%s1907] sm:$0xff] %v1908
  %s1910 = scalar_lea.vmem %s0, 432
  %v1911 = vld [vmem:[%s1910] sm:$0xf]
  %v1912 = vunpack.c.l.bf16 %v1911
  %v1913 = vunpack.c.h.bf16 %v1911
  %s1914 = scalar_lea.vmem %s1, 1072
  %s1916 = ssub.s32 0, 4
  %s1917 = scalar_lea.vmem %s1914, %s1916
  %v1918 = vpack.c.bf16 %v1912, %v1317
  %1919 = vst [vmem:[%s1917] sm:$0xff] %v1918
  %s1920 = scalar_lea.vmem %s0, 1232
  %v1921 = vld [vmem:[%s1920] sm:$0xf]
  %v1922 = vunpack.c.l.bf16 %v1921
  %v1923 = vunpack.c.h.bf16 %v1921
  %s1924 = scalar_lea.vmem %s1, 272
  %s1926 = ssub.s32 0, 4
  %s1927 = scalar_lea.vmem %s1924, %s1926
  %v1928 = vpack.c.bf16 %v1922, %v1322
  %1929 = vst [vmem:[%s1927] sm:$0xff] %v1928
  %s1930 = scalar_lea.vmem %s0, 752
  %v1931 = vld [vmem:[%s1930] sm:$0xf]
  %v1932 = vunpack.c.l.bf16 %v1931
  %v1933 = vunpack.c.h.bf16 %v1931
  %s1934 = scalar_lea.vmem %s1, 752
  %s1936 = ssub.s32 0, 4
  %s1937 = scalar_lea.vmem %s1934, %s1936
  %v1938 = vpack.c.bf16 %v1932, %v1327
  %1939 = vst [vmem:[%s1937] sm:$0xff] %v1938
  %s1940 = scalar_lea.vmem %s0, 272
  %v1941 = vld [vmem:[%s1940] sm:$0xf]
  %v1942 = vunpack.c.l.bf16 %v1941
  %v1943 = vunpack.c.h.bf16 %v1941
  %s1944 = scalar_lea.vmem %s1, 1232
  %s1946 = ssub.s32 0, 4
  %s1947 = scalar_lea.vmem %s1944, %s1946
  %v1948 = vpack.c.bf16 %v1942, %v1332
  %1949 = vst [vmem:[%s1947] sm:$0xff] %v1948
  %s1950 = scalar_lea.vmem %s0, 1072
  %v1951 = vld [vmem:[%s1950] sm:$0xf]
  %v1952 = vunpack.c.l.bf16 %v1951
  %v1953 = vunpack.c.h.bf16 %v1951
  %s1954 = scalar_lea.vmem %s1, 432
  %s1956 = ssub.s32 0, 4
  %s1957 = scalar_lea.vmem %s1954, %s1956
  %v1958 = vpack.c.bf16 %v1952, %v1337
  %1959 = vst [vmem:[%s1957] sm:$0xff] %v1958
  %s1960 = scalar_lea.vmem %s0, 592
  %v1961 = vld [vmem:[%s1960] sm:$0xf]
  %v1962 = vunpack.c.l.bf16 %v1961
  %v1963 = vunpack.c.h.bf16 %v1961
  %s1964 = scalar_lea.vmem %s1, 912
  %s1966 = ssub.s32 0, 4
  %s1967 = scalar_lea.vmem %s1964, %s1966
  %v1968 = vpack.c.bf16 %v1962, %v1342
  %1969 = vst [vmem:[%s1967] sm:$0xff] %v1968
  %s1970 = scalar_lea.vmem %s0, 112
  %v1971 = vld [vmem:[%s1970] sm:$0xf]
  %v1972 = vunpack.c.l.bf16 %v1971
  %v1973 = vunpack.c.h.bf16 %v1971
  %s1974 = scalar_lea.vmem %s1, 1392
  %s1976 = ssub.s32 0, 4
  %s1977 = scalar_lea.vmem %s1974, %s1976
  %v1978 = vpack.c.bf16 %v1972, %v1347
  %1979 = vst [vmem:[%s1977] sm:$0xff] %v1978
  %s1980 = scalar_lea.vmem %s0, 1412
  %v1981 = vld [vmem:[%s1980] sm:$0xf]
  %v1982 = vunpack.c.l.bf16 %v1981
  %v1983 = vunpack.c.h.bf16 %v1981
  %s1984 = scalar_lea.vmem %s1, 132
  %s1986 = ssub.s32 0, 4
  %s1987 = scalar_lea.vmem %s1984, %s1986
  %v1988 = vpack.c.bf16 %v1982, %v1352
  %1989 = vst [vmem:[%s1987] sm:$0xff] %v1988
  %s1990 = scalar_lea.vmem %s0, 932
  %v1991 = vld [vmem:[%s1990] sm:$0xf]
  %v1992 = vunpack.c.l.bf16 %v1991
  %v1993 = vunpack.c.h.bf16 %v1991
  %s1994 = scalar_lea.vmem %s1, 612
  %s1996 = ssub.s32 0, 4
  %s1997 = scalar_lea.vmem %s1994, %s1996
  %v1998 = vpack.c.bf16 %v1992, %v1357
  %1999 = vst [vmem:[%s1997] sm:$0xff] %v1998
  %s2000 = scalar_lea.vmem %s0, 452
  %v2001 = vld [vmem:[%s2000] sm:$0xf]
  %v2002 = vunpack.c.l.bf16 %v2001
  %v2003 = vunpack.c.h.bf16 %v2001
  %s2004 = scalar_lea.vmem %s1, 1092
  %s2006 = ssub.s32 0, 4
  %s2007 = scalar_lea.vmem %s2004, %s2006
  %v2008 = vpack.c.bf16 %v2002, %v1362
  %2009 = vst [vmem:[%s2007] sm:$0xff] %v2008
  %s2010 = scalar_lea.vmem %s0, 1252
  %v2011 = vld [vmem:[%s2010] sm:$0xf]
  %v2012 = vunpack.c.l.bf16 %v2011
  %v2013 = vunpack.c.h.bf16 %v2011
  %s2014 = scalar_lea.vmem %s1, 292
  %s2016 = ssub.s32 0, 4
  %s2017 = scalar_lea.vmem %s2014, %s2016
  %v2018 = vpack.c.bf16 %v2012, %v1367
  %2019 = vst [vmem:[%s2017] sm:$0xff] %v2018
  %s2020 = scalar_lea.vmem %s0, 772
  %v2021 = vld [vmem:[%s2020] sm:$0xf]
  %v2022 = vunpack.c.l.bf16 %v2021
  %v2023 = vunpack.c.h.bf16 %v2021
  %s2024 = scalar_lea.vmem %s1, 772
  %s2026 = ssub.s32 0, 4
  %s2027 = scalar_lea.vmem %s2024, %s2026
  %v2028 = vpack.c.bf16 %v2022, %v1372
  %2029 = vst [vmem:[%s2027] sm:$0xff] %v2028
  %s2030 = scalar_lea.vmem %s0, 292
  %v2031 = vld [vmem:[%s2030] sm:$0xf]
  %v2032 = vunpack.c.l.bf16 %v2031
  %v2033 = vunpack.c.h.bf16 %v2031
  %s2034 = scalar_lea.vmem %s1, 1252
  %s2036 = ssub.s32 0, 4
  %s2037 = scalar_lea.vmem %s2034, %s2036
  %v2038 = vpack.c.bf16 %v2032, %v1377
  %2039 = vst [vmem:[%s2037] sm:$0xff] %v2038
  %s2040 = scalar_lea.vmem %s0, 1092
  %v2041 = vld [vmem:[%s2040] sm:$0xf]
  %v2042 = vunpack.c.l.bf16 %v2041
  %v2043 = vunpack.c.h.bf16 %v2041
  %s2044 = scalar_lea.vmem %s1, 452
  %s2046 = ssub.s32 0, 4
  %s2047 = scalar_lea.vmem %s2044, %s2046
  %v2048 = vpack.c.bf16 %v2042, %v1382
  %2049 = vst [vmem:[%s2047] sm:$0xff] %v2048
  %s2050 = scalar_lea.vmem %s0, 612
  %v2051 = vld [vmem:[%s2050] sm:$0xf]
  %v2052 = vunpack.c.l.bf16 %v2051
  %v2053 = vunpack.c.h.bf16 %v2051
  %s2054 = scalar_lea.vmem %s1, 932
  %s2056 = ssub.s32 0, 4
  %s2057 = scalar_lea.vmem %s2054, %s2056
  %v2058 = vpack.c.bf16 %v2052, %v1387
  %2059 = vst [vmem:[%s2057] sm:$0xff] %v2058
  %s2060 = scalar_lea.vmem %s0, 132
  %v2061 = vld [vmem:[%s2060] sm:$0xf]
  %v2062 = vunpack.c.l.bf16 %v2061
  %v2063 = vunpack.c.h.bf16 %v2061
  %s2064 = scalar_lea.vmem %s1, 1412
  %s2066 = ssub.s32 0, 4
  %s2067 = scalar_lea.vmem %s2064, %s2066
  %v2068 = vpack.c.bf16 %v2062, %v1392
  %2069 = vst [vmem:[%s2067] sm:$0xff] %v2068
  %s2070 = scalar_lea.vmem %s0, 1432
  %v2071 = vld [vmem:[%s2070] sm:$0xf]
  %v2072 = vunpack.c.l.bf16 %v2071
  %v2073 = vunpack.c.h.bf16 %v2071
  %s2074 = scalar_lea.vmem %s1, 152
  %s2076 = ssub.s32 0, 4
  %s2077 = scalar_lea.vmem %s2074, %s2076
  %v2078 = vpack.c.bf16 %v2072, %v1397
  %2079 = vst [vmem:[%s2077] sm:$0xff] %v2078
  %s2080 = scalar_lea.vmem %s0, 952
  %v2081 = vld [vmem:[%s2080] sm:$0xf]
  %v2082 = vunpack.c.l.bf16 %v2081
  %v2083 = vunpack.c.h.bf16 %v2081
  %s2084 = scalar_lea.vmem %s1, 632
  %s2086 = ssub.s32 0, 4
  %s2087 = scalar_lea.vmem %s2084, %s2086
  %v2088 = vpack.c.bf16 %v2082, %v1402
  %2089 = vst [vmem:[%s2087] sm:$0xff] %v2088
  %s2090 = scalar_lea.vmem %s0, 472
  %v2091 = vld [vmem:[%s2090] sm:$0xf]
  %v2092 = vunpack.c.l.bf16 %v2091
  %v2093 = vunpack.c.h.bf16 %v2091
  %s2094 = scalar_lea.vmem %s1, 1112
  %s2096 = ssub.s32 0, 4
  %s2097 = scalar_lea.vmem %s2094, %s2096
  %v2098 = vpack.c.bf16 %v2092, %v1407
  %2099 = vst [vmem:[%s2097] sm:$0xff] %v2098
  %s2100 = scalar_lea.vmem %s0, 1272
  %v2101 = vld [vmem:[%s2100] sm:$0xf]
  %v2102 = vunpack.c.l.bf16 %v2101
  %v2103 = vunpack.c.h.bf16 %v2101
  %s2104 = scalar_lea.vmem %s1, 312
  %s2106 = ssub.s32 0, 4
  %s2107 = scalar_lea.vmem %s2104, %s2106
  %v2108 = vpack.c.bf16 %v2102, %v1412
  %2109 = vst [vmem:[%s2107] sm:$0xff] %v2108
  %s2110 = scalar_lea.vmem %s0, 792
  %v2111 = vld [vmem:[%s2110] sm:$0xf]
  %v2112 = vunpack.c.l.bf16 %v2111
  %v2113 = vunpack.c.h.bf16 %v2111
  %s2114 = scalar_lea.vmem %s1, 792
  %s2116 = ssub.s32 0, 4
  %s2117 = scalar_lea.vmem %s2114, %s2116
  %v2118 = vpack.c.bf16 %v2112, %v1417
  %2119 = vst [vmem:[%s2117] sm:$0xff] %v2118
  %s2120 = scalar_lea.vmem %s0, 312
  %v2121 = vld [vmem:[%s2120] sm:$0xf]
  %v2122 = vunpack.c.l.bf16 %v2121
  %v2123 = vunpack.c.h.bf16 %v2121
  %s2124 = scalar_lea.vmem %s1, 1272
  %s2126 = ssub.s32 0, 4
  %s2127 = scalar_lea.vmem %s2124, %s2126
  %v2128 = vpack.c.bf16 %v2122, %v1422
  %2129 = vst [vmem:[%s2127] sm:$0xff] %v2128
  %s2130 = scalar_lea.vmem %s0, 1112
  %v2131 = vld [vmem:[%s2130] sm:$0xf]
  %v2132 = vunpack.c.l.bf16 %v2131
  %v2133 = vunpack.c.h.bf16 %v2131
  %s2134 = scalar_lea.vmem %s1, 472
  %s2136 = ssub.s32 0, 4
  %s2137 = scalar_lea.vmem %s2134, %s2136
  %v2138 = vpack.c.bf16 %v2132, %v1427
  %2139 = vst [vmem:[%s2137] sm:$0xff] %v2138
  %s2140 = scalar_lea.vmem %s0, 632
  %v2141 = vld [vmem:[%s2140] sm:$0xf]
  %v2142 = vunpack.c.l.bf16 %v2141
  %v2143 = vunpack.c.h.bf16 %v2141
  %s2144 = scalar_lea.vmem %s1, 952
  %s2146 = ssub.s32 0, 4
  %s2147 = scalar_lea.vmem %s2144, %s2146
  %v2148 = vpack.c.bf16 %v2142, %v1432
  %2149 = vst [vmem:[%s2147] sm:$0xff] %v2148
  %s2150 = scalar_lea.vmem %s0, 152
  %v2151 = vld [vmem:[%s2150] sm:$0xf]
  %v2152 = vunpack.c.l.bf16 %v2151
  %v2153 = vunpack.c.h.bf16 %v2151
  %s2154 = scalar_lea.vmem %s1, 1432
  %s2156 = ssub.s32 0, 4
  %s2157 = scalar_lea.vmem %s2154, %s2156
  %v2158 = vpack.c.bf16 %v2152, %v1437
  %2159 = vst [vmem:[%s2157] sm:$0xff] %v2158
  %s2160 = scalar_lea.vmem %s0, 1296
  %v2161 = vld [vmem:[%s2160] sm:$0xf]
  %v2162 = vunpack.c.l.bf16 %v2161
  %v2163 = vunpack.c.h.bf16 %v2161
  %s2164 = scalar_lea.vmem %s1, 16
  %v2165 = vpack.c.bf16 0.0, %v2162
  %2166 = vst [vmem:[%s2164] sm:$0xf] %v2165
  %s2167 = scalar_lea.vmem %s0, 816
  %v2168 = vld [vmem:[%s2167] sm:$0xf]
  %v2169 = vunpack.c.l.bf16 %v2168
  %v2170 = vunpack.c.h.bf16 %v2168
  %s2171 = scalar_lea.vmem %s1, 496
  %v2172 = vpack.c.bf16 0.0, %v2169
  %2173 = vst [vmem:[%s2171] sm:$0xf] %v2172
  %s2174 = scalar_lea.vmem %s0, 336
  %v2175 = vld [vmem:[%s2174] sm:$0xf]
  %v2176 = vunpack.c.l.bf16 %v2175
  %v2177 = vunpack.c.h.bf16 %v2175
  %s2178 = scalar_lea.vmem %s1, 976
  %v2179 = vpack.c.bf16 0.0, %v2176
  %2180 = vst [vmem:[%s2178] sm:$0xf] %v2179
  %s2181 = scalar_lea.vmem %s0, 1136
  %v2182 = vld [vmem:[%s2181] sm:$0xf]
  %v2183 = vunpack.c.l.bf16 %v2182
  %v2184 = vunpack.c.h.bf16 %v2182
  %s2185 = scalar_lea.vmem %s1, 176
  %v2186 = vpack.c.bf16 0.0, %v2183
  %2187 = vst [vmem:[%s2185] sm:$0xf] %v2186
  %s2188 = scalar_lea.vmem %s0, 656
  %v2189 = vld [vmem:[%s2188] sm:$0xf]
  %v2190 = vunpack.c.l.bf16 %v2189
  %v2191 = vunpack.c.h.bf16 %v2189
  %s2192 = scalar_lea.vmem %s1, 656
  %v2193 = vpack.c.bf16 0.0, %v2190
  %2194 = vst [vmem:[%s2192] sm:$0xf] %v2193
  %s2195 = scalar_lea.vmem %s0, 176
  %v2196 = vld [vmem:[%s2195] sm:$0xf]
  %v2197 = vunpack.c.l.bf16 %v2196
  %v2198 = vunpack.c.h.bf16 %v2196
  %s2199 = scalar_lea.vmem %s1, 1136
  %v2200 = vpack.c.bf16 0.0, %v2197
  %2201 = vst [vmem:[%s2199] sm:$0xf] %v2200
  %s2202 = scalar_lea.vmem %s0, 976
  %v2203 = vld [vmem:[%s2202] sm:$0xf]
  %v2204 = vunpack.c.l.bf16 %v2203
  %v2205 = vunpack.c.h.bf16 %v2203
  %s2206 = scalar_lea.vmem %s1, 336
  %v2207 = vpack.c.bf16 0.0, %v2204
  %2208 = vst [vmem:[%s2206] sm:$0xf] %v2207
  %s2209 = scalar_lea.vmem %s0, 496
  %v2210 = vld [vmem:[%s2209] sm:$0xf]
  %v2211 = vunpack.c.l.bf16 %v2210
  %v2212 = vunpack.c.h.bf16 %v2210
  %s2213 = scalar_lea.vmem %s1, 816
  %v2214 = vpack.c.bf16 0.0, %v2211
  %2215 = vst [vmem:[%s2213] sm:$0xf] %v2214
  %s2216 = scalar_lea.vmem %s0, 16
  %v2217 = vld [vmem:[%s2216] sm:$0xf]
  %v2218 = vunpack.c.l.bf16 %v2217
  %v2219 = vunpack.c.h.bf16 %v2217
  %s2220 = scalar_lea.vmem %s1, 1296
  %v2221 = vpack.c.bf16 0.0, %v2218
  %2222 = vst [vmem:[%s2220] sm:$0xf] %v2221
  %s2223 = scalar_lea.vmem %s0, 1316
  %v2224 = vld [vmem:[%s2223] sm:$0xf]
  %v2225 = vunpack.c.l.bf16 %v2224
  %v2226 = vunpack.c.h.bf16 %v2224
  %s2227 = scalar_lea.vmem %s1, 36
  %v2228 = vpack.c.bf16 0.0, %v2225
  %2229 = vst [vmem:[%s2227] sm:$0xf] %v2228
  %s2230 = scalar_lea.vmem %s0, 836
  %v2231 = vld [vmem:[%s2230] sm:$0xf]
  %v2232 = vunpack.c.l.bf16 %v2231
  %v2233 = vunpack.c.h.bf16 %v2231
  %s2234 = scalar_lea.vmem %s1, 516
  %v2235 = vpack.c.bf16 0.0, %v2232
  %2236 = vst [vmem:[%s2234] sm:$0xf] %v2235
  %s2237 = scalar_lea.vmem %s0, 356
  %v2238 = vld [vmem:[%s2237] sm:$0xf]
  %v2239 = vunpack.c.l.bf16 %v2238
  %v2240 = vunpack.c.h.bf16 %v2238
  %s2241 = scalar_lea.vmem %s1, 996
  %v2242 = vpack.c.bf16 0.0, %v2239
  %2243 = vst [vmem:[%s2241] sm:$0xf] %v2242
  %s2244 = scalar_lea.vmem %s0, 1156
  %v2245 = vld [vmem:[%s2244] sm:$0xf]
  %v2246 = vunpack.c.l.bf16 %v2245
  %v2247 = vunpack.c.h.bf16 %v2245
  %s2248 = scalar_lea.vmem %s1, 196
  %v2249 = vpack.c.bf16 0.0, %v2246
  %2250 = vst [vmem:[%s2248] sm:$0xf] %v2249
  %s2251 = scalar_lea.vmem %s0, 676
  %v2252 = vld [vmem:[%s2251] sm:$0xf]
  %v2253 = vunpack.c.l.bf16 %v2252
  %v2254 = vunpack.c.h.bf16 %v2252
  %s2255 = scalar_lea.vmem %s1, 676
  %v2256 = vpack.c.bf16 0.0, %v2253
  %2257 = vst [vmem:[%s2255] sm:$0xf] %v2256
  %s2258 = scalar_lea.vmem %s0, 196
  %v2259 = vld [vmem:[%s2258] sm:$0xf]
  %v2260 = vunpack.c.l.bf16 %v2259
  %v2261 = vunpack.c.h.bf16 %v2259
  %s2262 = scalar_lea.vmem %s1, 1156
  %v2263 = vpack.c.bf16 0.0, %v2260
  %2264 = vst [vmem:[%s2262] sm:$0xf] %v2263
  %s2265 = scalar_lea.vmem %s0, 996
  %v2266 = vld [vmem:[%s2265] sm:$0xf]
  %v2267 = vunpack.c.l.bf16 %v2266
  %v2268 = vunpack.c.h.bf16 %v2266
  %s2269 = scalar_lea.vmem %s1, 356
  %v2270 = vpack.c.bf16 0.0, %v2267
  %2271 = vst [vmem:[%s2269] sm:$0xf] %v2270
  %s2272 = scalar_lea.vmem %s0, 516
  %v2273 = vld [vmem:[%s2272] sm:$0xf]
  %v2274 = vunpack.c.l.bf16 %v2273
  %v2275 = vunpack.c.h.bf16 %v2273
  %s2276 = scalar_lea.vmem %s1, 836
  %v2277 = vpack.c.bf16 0.0, %v2274
  %2278 = vst [vmem:[%s2276] sm:$0xf] %v2277
  %s2279 = scalar_lea.vmem %s0, 36
  %v2280 = vld [vmem:[%s2279] sm:$0xf]
  %v2281 = vunpack.c.l.bf16 %v2280
  %v2282 = vunpack.c.h.bf16 %v2280
  %s2283 = scalar_lea.vmem %s1, 1316
  %v2284 = vpack.c.bf16 0.0, %v2281
  %2285 = vst [vmem:[%s2283] sm:$0xf] %v2284
  %s2286 = scalar_lea.vmem %s0, 1336
  %v2287 = vld [vmem:[%s2286] sm:$0xf]
  %v2288 = vunpack.c.l.bf16 %v2287
  %v2289 = vunpack.c.h.bf16 %v2287
  %s2290 = scalar_lea.vmem %s1, 56
  %v2291 = vpack.c.bf16 0.0, %v2288
  %2292 = vst [vmem:[%s2290] sm:$0xf] %v2291
  %s2293 = scalar_lea.vmem %s0, 856
  %v2294 = vld [vmem:[%s2293] sm:$0xf]
  %v2295 = vunpack.c.l.bf16 %v2294
  %v2296 = vunpack.c.h.bf16 %v2294
  %s2297 = scalar_lea.vmem %s1, 536
  %v2298 = vpack.c.bf16 0.0, %v2295
  %2299 = vst [vmem:[%s2297] sm:$0xf] %v2298
  %s2300 = scalar_lea.vmem %s0, 376
  %v2301 = vld [vmem:[%s2300] sm:$0xf]
  %v2302 = vunpack.c.l.bf16 %v2301
  %v2303 = vunpack.c.h.bf16 %v2301
  %s2304 = scalar_lea.vmem %s1, 1016
  %v2305 = vpack.c.bf16 0.0, %v2302
  %2306 = vst [vmem:[%s2304] sm:$0xf] %v2305
  %s2307 = scalar_lea.vmem %s0, 1176
  %v2308 = vld [vmem:[%s2307] sm:$0xf]
  %v2309 = vunpack.c.l.bf16 %v2308
  %v2310 = vunpack.c.h.bf16 %v2308
  %s2311 = scalar_lea.vmem %s1, 216
  %v2312 = vpack.c.bf16 0.0, %v2309
  %2313 = vst [vmem:[%s2311] sm:$0xf] %v2312
  %s2314 = scalar_lea.vmem %s0, 696
  %v2315 = vld [vmem:[%s2314] sm:$0xf]
  %v2316 = vunpack.c.l.bf16 %v2315
  %v2317 = vunpack.c.h.bf16 %v2315
  %s2318 = scalar_lea.vmem %s1, 696
  %v2319 = vpack.c.bf16 0.0, %v2316
  %2320 = vst [vmem:[%s2318] sm:$0xf] %v2319
  %s2321 = scalar_lea.vmem %s0, 216
  %v2322 = vld [vmem:[%s2321] sm:$0xf]
  %v2323 = vunpack.c.l.bf16 %v2322
  %v2324 = vunpack.c.h.bf16 %v2322
  %s2325 = scalar_lea.vmem %s1, 1176
  %v2326 = vpack.c.bf16 0.0, %v2323
  %2327 = vst [vmem:[%s2325] sm:$0xf] %v2326
  %s2328 = scalar_lea.vmem %s0, 1016
  %v2329 = vld [vmem:[%s2328] sm:$0xf]
  %v2330 = vunpack.c.l.bf16 %v2329
  %v2331 = vunpack.c.h.bf16 %v2329
  %s2332 = scalar_lea.vmem %s1, 376
  %v2333 = vpack.c.bf16 0.0, %v2330
  %2334 = vst [vmem:[%s2332] sm:$0xf] %v2333
  %s2335 = scalar_lea.vmem %s0, 536
  %v2336 = vld [vmem:[%s2335] sm:$0xf]
  %v2337 = vunpack.c.l.bf16 %v2336
  %v2338 = vunpack.c.h.bf16 %v2336
  %s2339 = scalar_lea.vmem %s1, 856
  %v2340 = vpack.c.bf16 0.0, %v2337
  %2341 = vst [vmem:[%s2339] sm:$0xf] %v2340
  %s2342 = scalar_lea.vmem %s0, 56
  %v2343 = vld [vmem:[%s2342] sm:$0xf]
  %v2344 = vunpack.c.l.bf16 %v2343
  %v2345 = vunpack.c.h.bf16 %v2343
  %s2346 = scalar_lea.vmem %s1, 1336
  %v2347 = vpack.c.bf16 0.0, %v2344
  %2348 = vst [vmem:[%s2346] sm:$0xf] %v2347
  %s2349 = scalar_lea.vmem %s0, 1356
  %v2350 = vld [vmem:[%s2349] sm:$0xf]
  %v2351 = vunpack.c.l.bf16 %v2350
  %v2352 = vunpack.c.h.bf16 %v2350
  %s2353 = scalar_lea.vmem %s1, 76
  %v2354 = vpack.c.bf16 0.0, %v2351
  %2355 = vst [vmem:[%s2353] sm:$0xf] %v2354
  %s2356 = scalar_lea.vmem %s0, 876
  %v2357 = vld [vmem:[%s2356] sm:$0xf]
  %v2358 = vunpack.c.l.bf16 %v2357
  %v2359 = vunpack.c.h.bf16 %v2357
  %s2360 = scalar_lea.vmem %s1, 556
  %v2361 = vpack.c.bf16 0.0, %v2358
  %2362 = vst [vmem:[%s2360] sm:$0xf] %v2361
  %s2363 = scalar_lea.vmem %s0, 396
  %v2364 = vld [vmem:[%s2363] sm:$0xf]
  %v2365 = vunpack.c.l.bf16 %v2364
  %v2366 = vunpack.c.h.bf16 %v2364
  %s2367 = scalar_lea.vmem %s1, 1036
  %v2368 = vpack.c.bf16 0.0, %v2365
  %2369 = vst [vmem:[%s2367] sm:$0xf] %v2368
  %s2370 = scalar_lea.vmem %s0, 1196
  %v2371 = vld [vmem:[%s2370] sm:$0xf]
  %v2372 = vunpack.c.l.bf16 %v2371
  %v2373 = vunpack.c.h.bf16 %v2371
  %s2374 = scalar_lea.vmem %s1, 236
  %v2375 = vpack.c.bf16 0.0, %v2372
  %2376 = vst [vmem:[%s2374] sm:$0xf] %v2375
  %s2377 = scalar_lea.vmem %s0, 716
  %v2378 = vld [vmem:[%s2377] sm:$0xf]
  %v2379 = vunpack.c.l.bf16 %v2378
  %v2380 = vunpack.c.h.bf16 %v2378
  %s2381 = scalar_lea.vmem %s1, 716
  %v2382 = vpack.c.bf16 0.0, %v2379
  %2383 = vst [vmem:[%s2381] sm:$0xf] %v2382
  %s2384 = scalar_lea.vmem %s0, 236
  %v2385 = vld [vmem:[%s2384] sm:$0xf]
  %v2386 = vunpack.c.l.bf16 %v2385
  %v2387 = vunpack.c.h.bf16 %v2385
  %s2388 = scalar_lea.vmem %s1, 1196
  %v2389 = vpack.c.bf16 0.0, %v2386
  %2390 = vst [vmem:[%s2388] sm:$0xf] %v2389
  %s2391 = scalar_lea.vmem %s0, 1036
  %v2392 = vld [vmem:[%s2391] sm:$0xf]
  %v2393 = vunpack.c.l.bf16 %v2392
  %v2394 = vunpack.c.h.bf16 %v2392
  %s2395 = scalar_lea.vmem %s1, 396
  %v2396 = vpack.c.bf16 0.0, %v2393
  %2397 = vst [vmem:[%s2395] sm:$0xf] %v2396
  %s2398 = scalar_lea.vmem %s0, 556
  %v2399 = vld [vmem:[%s2398] sm:$0xf]
  %v2400 = vunpack.c.l.bf16 %v2399
  %v2401 = vunpack.c.h.bf16 %v2399
  %s2402 = scalar_lea.vmem %s1, 876
  %v2403 = vpack.c.bf16 0.0, %v2400
  %2404 = vst [vmem:[%s2402] sm:$0xf] %v2403
  %s2405 = scalar_lea.vmem %s0, 76
  %v2406 = vld [vmem:[%s2405] sm:$0xf]
  %v2407 = vunpack.c.l.bf16 %v2406
  %v2408 = vunpack.c.h.bf16 %v2406
  %s2409 = scalar_lea.vmem %s1, 1356
  %v2410 = vpack.c.bf16 0.0, %v2407
  %2411 = vst [vmem:[%s2409] sm:$0xf] %v2410
  %s2412 = scalar_lea.vmem %s0, 1376
  %v2413 = vld [vmem:[%s2412] sm:$0xf]
  %v2414 = vunpack.c.l.bf16 %v2413
  %v2415 = vunpack.c.h.bf16 %v2413
  %s2416 = scalar_lea.vmem %s1, 96
  %v2417 = vpack.c.bf16 0.0, %v2414
  %2418 = vst [vmem:[%s2416] sm:$0xf] %v2417
  %s2419 = scalar_lea.vmem %s0, 896
  %v2420 = vld [vmem:[%s2419] sm:$0xf]
  %v2421 = vunpack.c.l.bf16 %v2420
  %v2422 = vunpack.c.h.bf16 %v2420
  %s2423 = scalar_lea.vmem %s1, 576
  %v2424 = vpack.c.bf16 0.0, %v2421
  %2425 = vst [vmem:[%s2423] sm:$0xf] %v2424
  %s2426 = scalar_lea.vmem %s0, 416
  %v2427 = vld [vmem:[%s2426] sm:$0xf]
  %v2428 = vunpack.c.l.bf16 %v2427
  %v2429 = vunpack.c.h.bf16 %v2427
  %s2430 = scalar_lea.vmem %s1, 1056
  %v2431 = vpack.c.bf16 0.0, %v2428
  %2432 = vst [vmem:[%s2430] sm:$0xf] %v2431
  %s2433 = scalar_lea.vmem %s0, 1216
  %v2434 = vld [vmem:[%s2433] sm:$0xf]
  %v2435 = vunpack.c.l.bf16 %v2434
  %v2436 = vunpack.c.h.bf16 %v2434
  %s2437 = scalar_lea.vmem %s1, 256
  %v2438 = vpack.c.bf16 0.0, %v2435
  %2439 = vst [vmem:[%s2437] sm:$0xf] %v2438
  %s2440 = scalar_lea.vmem %s0, 736
  %v2441 = vld [vmem:[%s2440] sm:$0xf]
  %v2442 = vunpack.c.l.bf16 %v2441
  %v2443 = vunpack.c.h.bf16 %v2441
  %s2444 = scalar_lea.vmem %s1, 736
  %v2445 = vpack.c.bf16 0.0, %v2442
  %2446 = vst [vmem:[%s2444] sm:$0xf] %v2445
  %s2447 = scalar_lea.vmem %s0, 256
  %v2448 = vld [vmem:[%s2447] sm:$0xf]
  %v2449 = vunpack.c.l.bf16 %v2448
  %v2450 = vunpack.c.h.bf16 %v2448
  %s2451 = scalar_lea.vmem %s1, 1216
  %v2452 = vpack.c.bf16 0.0, %v2449
  %2453 = vst [vmem:[%s2451] sm:$0xf] %v2452
  %s2454 = scalar_lea.vmem %s0, 1056
  %v2455 = vld [vmem:[%s2454] sm:$0xf]
  %v2456 = vunpack.c.l.bf16 %v2455
  %v2457 = vunpack.c.h.bf16 %v2455
  %s2458 = scalar_lea.vmem %s1, 416
  %v2459 = vpack.c.bf16 0.0, %v2456
  %2460 = vst [vmem:[%s2458] sm:$0xf] %v2459
  %s2461 = scalar_lea.vmem %s0, 576
  %v2462 = vld [vmem:[%s2461] sm:$0xf]
  %v2463 = vunpack.c.l.bf16 %v2462
  %v2464 = vunpack.c.h.bf16 %v2462
  %s2465 = scalar_lea.vmem %s1, 896
  %v2466 = vpack.c.bf16 0.0, %v2463
  %2467 = vst [vmem:[%s2465] sm:$0xf] %v2466
  %s2468 = scalar_lea.vmem %s0, 96
  %v2469 = vld [vmem:[%s2468] sm:$0xf]
  %v2470 = vunpack.c.l.bf16 %v2469
  %v2471 = vunpack.c.h.bf16 %v2469
  %s2472 = scalar_lea.vmem %s1, 1376
  %v2473 = vpack.c.bf16 0.0, %v2470
  %2474 = vst [vmem:[%s2472] sm:$0xf] %v2473
  %s2475 = scalar_lea.vmem %s0, 1396
  %v2476 = vld [vmem:[%s2475] sm:$0xf]
  %v2477 = vunpack.c.l.bf16 %v2476
  %v2478 = vunpack.c.h.bf16 %v2476
  %s2479 = scalar_lea.vmem %s1, 116
  %v2480 = vpack.c.bf16 0.0, %v2477
  %2481 = vst [vmem:[%s2479] sm:$0xf] %v2480
  %s2482 = scalar_lea.vmem %s0, 916
  %v2483 = vld [vmem:[%s2482] sm:$0xf]
  %v2484 = vunpack.c.l.bf16 %v2483
  %v2485 = vunpack.c.h.bf16 %v2483
  %s2486 = scalar_lea.vmem %s1, 596
  %v2487 = vpack.c.bf16 0.0, %v2484
  %2488 = vst [vmem:[%s2486] sm:$0xf] %v2487
  %s2489 = scalar_lea.vmem %s0, 436
  %v2490 = vld [vmem:[%s2489] sm:$0xf]
  %v2491 = vunpack.c.l.bf16 %v2490
  %v2492 = vunpack.c.h.bf16 %v2490
  %s2493 = scalar_lea.vmem %s1, 1076
  %v2494 = vpack.c.bf16 0.0, %v2491
  %2495 = vst [vmem:[%s2493] sm:$0xf] %v2494
  %s2496 = scalar_lea.vmem %s0, 1236
  %v2497 = vld [vmem:[%s2496] sm:$0xf]
  %v2498 = vunpack.c.l.bf16 %v2497
  %v2499 = vunpack.c.h.bf16 %v2497
  %s2500 = scalar_lea.vmem %s1, 276
  %v2501 = vpack.c.bf16 0.0, %v2498
  %2502 = vst [vmem:[%s2500] sm:$0xf] %v2501
  %s2503 = scalar_lea.vmem %s0, 756
  %v2504 = vld [vmem:[%s2503] sm:$0xf]
  %v2505 = vunpack.c.l.bf16 %v2504
  %v2506 = vunpack.c.h.bf16 %v2504
  %s2507 = scalar_lea.vmem %s1, 756
  %v2508 = vpack.c.bf16 0.0, %v2505
  %2509 = vst [vmem:[%s2507] sm:$0xf] %v2508
  %s2510 = scalar_lea.vmem %s0, 276
  %v2511 = vld [vmem:[%s2510] sm:$0xf]
  %v2512 = vunpack.c.l.bf16 %v2511
  %v2513 = vunpack.c.h.bf16 %v2511
  %s2514 = scalar_lea.vmem %s1, 1236
  %v2515 = vpack.c.bf16 0.0, %v2512
  %2516 = vst [vmem:[%s2514] sm:$0xf] %v2515
  %s2517 = scalar_lea.vmem %s0, 1076
  %v2518 = vld [vmem:[%s2517] sm:$0xf]
  %v2519 = vunpack.c.l.bf16 %v2518
  %v2520 = vunpack.c.h.bf16 %v2518
  %s2521 = scalar_lea.vmem %s1, 436
  %v2522 = vpack.c.bf16 0.0, %v2519
  %2523 = vst [vmem:[%s2521] sm:$0xf] %v2522
  %s2524 = scalar_lea.vmem %s0, 596
  %v2525 = vld [vmem:[%s2524] sm:$0xf]
  %v2526 = vunpack.c.l.bf16 %v2525
  %v2527 = vunpack.c.h.bf16 %v2525
  %s2528 = scalar_lea.vmem %s1, 916
  %v2529 = vpack.c.bf16 0.0, %v2526
  %2530 = vst [vmem:[%s2528] sm:$0xf] %v2529
  %s2531 = scalar_lea.vmem %s0, 116
  %v2532 = vld [vmem:[%s2531] sm:$0xf]
  %v2533 = vunpack.c.l.bf16 %v2532
  %v2534 = vunpack.c.h.bf16 %v2532
  %s2535 = scalar_lea.vmem %s1, 1396
  %v2536 = vpack.c.bf16 0.0, %v2533
  %2537 = vst [vmem:[%s2535] sm:$0xf] %v2536
  %s2538 = scalar_lea.vmem %s0, 1416
  %v2539 = vld [vmem:[%s2538] sm:$0xf]
  %v2540 = vunpack.c.l.bf16 %v2539
  %v2541 = vunpack.c.h.bf16 %v2539
  %s2542 = scalar_lea.vmem %s1, 136
  %v2543 = vpack.c.bf16 0.0, %v2540
  %2544 = vst [vmem:[%s2542] sm:$0xf] %v2543
  %s2545 = scalar_lea.vmem %s0, 936
  %v2546 = vld [vmem:[%s2545] sm:$0xf]
  %v2547 = vunpack.c.l.bf16 %v2546
  %v2548 = vunpack.c.h.bf16 %v2546
  %s2549 = scalar_lea.vmem %s1, 616
  %v2550 = vpack.c.bf16 0.0, %v2547
  %2551 = vst [vmem:[%s2549] sm:$0xf] %v2550
  %s2552 = scalar_lea.vmem %s0, 456
  %v2553 = vld [vmem:[%s2552] sm:$0xf]
  %v2554 = vunpack.c.l.bf16 %v2553
  %v2555 = vunpack.c.h.bf16 %v2553
  %s2556 = scalar_lea.vmem %s1, 1096
  %v2557 = vpack.c.bf16 0.0, %v2554
  %2558 = vst [vmem:[%s2556] sm:$0xf] %v2557
  %s2559 = scalar_lea.vmem %s0, 1256
  %v2560 = vld [vmem:[%s2559] sm:$0xf]
  %v2561 = vunpack.c.l.bf16 %v2560
  %v2562 = vunpack.c.h.bf16 %v2560
  %s2563 = scalar_lea.vmem %s1, 296
  %v2564 = vpack.c.bf16 0.0, %v2561
  %2565 = vst [vmem:[%s2563] sm:$0xf] %v2564
  %s2566 = scalar_lea.vmem %s0, 776
  %v2567 = vld [vmem:[%s2566] sm:$0xf]
  %v2568 = vunpack.c.l.bf16 %v2567
  %v2569 = vunpack.c.h.bf16 %v2567
  %s2570 = scalar_lea.vmem %s1, 776
  %v2571 = vpack.c.bf16 0.0, %v2568
  %2572 = vst [vmem:[%s2570] sm:$0xf] %v2571
  %s2573 = scalar_lea.vmem %s0, 296
  %v2574 = vld [vmem:[%s2573] sm:$0xf]
  %v2575 = vunpack.c.l.bf16 %v2574
  %v2576 = vunpack.c.h.bf16 %v2574
  %s2577 = scalar_lea.vmem %s1, 1256
  %v2578 = vpack.c.bf16 0.0, %v2575
  %2579 = vst [vmem:[%s2577] sm:$0xf] %v2578
  %s2580 = scalar_lea.vmem %s0, 1096
  %v2581 = vld [vmem:[%s2580] sm:$0xf]
  %v2582 = vunpack.c.l.bf16 %v2581
  %v2583 = vunpack.c.h.bf16 %v2581
  %s2584 = scalar_lea.vmem %s1, 456
  %v2585 = vpack.c.bf16 0.0, %v2582
  %2586 = vst [vmem:[%s2584] sm:$0xf] %v2585
  %s2587 = scalar_lea.vmem %s0, 616
  %v2588 = vld [vmem:[%s2587] sm:$0xf]
  %v2589 = vunpack.c.l.bf16 %v2588
  %v2590 = vunpack.c.h.bf16 %v2588
  %s2591 = scalar_lea.vmem %s1, 936
  %v2592 = vpack.c.bf16 0.0, %v2589
  %2593 = vst [vmem:[%s2591] sm:$0xf] %v2592
  %s2594 = scalar_lea.vmem %s0, 136
  %v2595 = vld [vmem:[%s2594] sm:$0xf]
  %v2596 = vunpack.c.l.bf16 %v2595
  %v2597 = vunpack.c.h.bf16 %v2595
  %s2598 = scalar_lea.vmem %s1, 1416
  %v2599 = vpack.c.bf16 0.0, %v2596
  %2600 = vst [vmem:[%s2598] sm:$0xf] %v2599
  %s2601 = scalar_lea.vmem %s0, 1436
  %v2602 = vld [vmem:[%s2601] sm:$0xf]
  %v2603 = vunpack.c.l.bf16 %v2602
  %v2604 = vunpack.c.h.bf16 %v2602
  %s2605 = scalar_lea.vmem %s1, 156
  %v2606 = vpack.c.bf16 0.0, %v2603
  %2607 = vst [vmem:[%s2605] sm:$0xf] %v2606
  %s2608 = scalar_lea.vmem %s0, 956
  %v2609 = vld [vmem:[%s2608] sm:$0xf]
  %v2610 = vunpack.c.l.bf16 %v2609
  %v2611 = vunpack.c.h.bf16 %v2609
  %s2612 = scalar_lea.vmem %s1, 636
  %v2613 = vpack.c.bf16 0.0, %v2610
  %2614 = vst [vmem:[%s2612] sm:$0xf] %v2613
  %s2615 = scalar_lea.vmem %s0, 476
  %v2616 = vld [vmem:[%s2615] sm:$0xf]
  %v2617 = vunpack.c.l.bf16 %v2616
  %v2618 = vunpack.c.h.bf16 %v2616
  %s2619 = scalar_lea.vmem %s1, 1116
  %v2620 = vpack.c.bf16 0.0, %v2617
  %2621 = vst [vmem:[%s2619] sm:$0xf] %v2620
  %s2622 = scalar_lea.vmem %s0, 1276
  %v2623 = vld [vmem:[%s2622] sm:$0xf]
  %v2624 = vunpack.c.l.bf16 %v2623
  %v2625 = vunpack.c.h.bf16 %v2623
  %s2626 = scalar_lea.vmem %s1, 316
  %v2627 = vpack.c.bf16 0.0, %v2624
  %2628 = vst [vmem:[%s2626] sm:$0xf] %v2627
  %s2629 = scalar_lea.vmem %s0, 796
  %v2630 = vld [vmem:[%s2629] sm:$0xf]
  %v2631 = vunpack.c.l.bf16 %v2630
  %v2632 = vunpack.c.h.bf16 %v2630
  %s2633 = scalar_lea.vmem %s1, 796
  %v2634 = vpack.c.bf16 0.0, %v2631
  %2635 = vst [vmem:[%s2633] sm:$0xf] %v2634
  %s2636 = scalar_lea.vmem %s0, 316
  %v2637 = vld [vmem:[%s2636] sm:$0xf]
  %v2638 = vunpack.c.l.bf16 %v2637
  %v2639 = vunpack.c.h.bf16 %v2637
  %s2640 = scalar_lea.vmem %s1, 1276
  %v2641 = vpack.c.bf16 0.0, %v2638
  %2642 = vst [vmem:[%s2640] sm:$0xf] %v2641
  %s2643 = scalar_lea.vmem %s0, 1116
  %v2644 = vld [vmem:[%s2643] sm:$0xf]
  %v2645 = vunpack.c.l.bf16 %v2644
  %v2646 = vunpack.c.h.bf16 %v2644
  %s2647 = scalar_lea.vmem %s1, 476
  %v2648 = vpack.c.bf16 0.0, %v2645
  %2649 = vst [vmem:[%s2647] sm:$0xf] %v2648
  %s2650 = scalar_lea.vmem %s0, 636
  %v2651 = vld [vmem:[%s2650] sm:$0xf]
  %v2652 = vunpack.c.l.bf16 %v2651
  %v2653 = vunpack.c.h.bf16 %v2651
  %s2654 = scalar_lea.vmem %s1, 956
  %v2655 = vpack.c.bf16 0.0, %v2652
  %2656 = vst [vmem:[%s2654] sm:$0xf] %v2655
  %s2657 = scalar_lea.vmem %s0, 156
  %v2658 = vld [vmem:[%s2657] sm:$0xf]
  %v2659 = vunpack.c.l.bf16 %v2658
  %v2660 = vunpack.c.h.bf16 %v2658
  %s2661 = scalar_lea.vmem %s1, 1436
  %v2662 = vpack.c.bf16 0.0, %v2659
  %2663 = vst [vmem:[%s2661] sm:$0xf] %v2662

// kernel: deeplab_forward.10
$region0: #{deeplab_forward.10}
  #allocation0 [shape = 'u32[]', space=smem, size = 0x4, offset = 0x4, fixed_abs, tag = 'smem constant byte address 0x4 - core index']
  #allocation1 [shape = 'u32[144,128]{1,0:T(1,128)}', space=vmem, size = 0x12000, scoped, tag = 'internal scratch']
  #allocation2 [shape = 'f32[64,16]{1,0:T(8,128)}', space=vmem, size = 0x8000, scoped, tag = 'scratch operand']
  %s0 = inlined_call_operand.vmem [shape: bf16[128,24], index: 0, kind: input, shape index: {}]
  %s1 = inlined_call_operand.vmem [shape: bf16[24,16], index: 1, kind: input, shape index: {}]
  %s2 = inlined_call_operand.vmem [shape: f32[1,16], index: 2, kind: input, shape index: {}]
  %s3 = inlined_call_operand.vmem [shape: bf16[128,16], index: 3, kind: output, shape index: {}]
  %s4 = sld [smem:[#allocation0]]
  $region53: #{deeplab_forward.10} parent=0
    _
  %s6 = ssub.s32 1, %s4
  %s7 = scalar_select 0, %s6, %s4
  loop: start=0, step=1, limit=4
  $region2: #{deeplab_forward.10} parent=0 // loop_pre_header
    _
  $region3: #{deeplab_forward.10} parent=0 // loop_header
    %s9 = sphi 0, %s13
    %p10 = scmp.ge.s32.totalorder %s9, 4
    %s16 = sphi 0, %s28
    %s17 = sphi 0, %s24
    %s18 = sphi 0, %s16
    %s19 = sphi 0, %s17
    %s20 = sphi 0, %s18
    %s21 = sphi 0, %s19
    %s33 = sphi 0, %s35
    %s36 = sphi 0, %s33
    %s37 = sphi 0, %s36
    %s53 = sphi 0, %s37
    %s59 = sphi 0, %s61
    %s62 = sphi 0, %s59
    %s63 = sphi 0, %s62
    %s79 = sphi 0, %s63
    %s83 = sphi 0, %s83
    %s85 = sphi 0, %s83
    %s86 = sphi 0, %s85
    %s100 = sphi 0, %s86
    %s106 = sphi 0, %s108
    %s109 = sphi 0, %s106
    %s110 = sphi 0, %s109
    %s126 = sphi 0, %s110
  $region4: #{deeplab_forward.10} parent=0 // loop_header_branch
    %12 = sbr.rel (%p10) target = $region8
  $region5: #{deeplab_forward.10} parent=0 // loop_body
    %s14 = ssub.s32 %s9, 1
    %s15 = ssub.s32 %s9, 2
    %s22 = sadd.s32 1, %s17
    %p23 = scmp.ge.s32.totalorder %s22, 1
    %s24 = scalar_select %p23, 0, %s22
    %s25 = sadd.s32 1, %s16
    %s26 = scalar_select %p23, %s25, %s16
    %p27 = scmp.ge.s32.totalorder %s26, 2
    %s28 = scalar_select %p27, 0, %s26
    %s29 = ssub.s32 %s16, %s28
    %s30 = ssub.s32 %s17, %s24
    %s31 = sor.u32 %s29, %s30
    %p32 = scmp.eq.s32.totalorder %s31, 0
    %s34 = sadd.s32 %s33, 1
    %s35 = scalar_select %p32, %s33, %s34
    %p38 = pneg %p32
    %p39 = scmp.eq.s32.totalorder %s9, 1
    %p40 = por %p38, %p39
    %p41 = scmp.ne.s32.totalorder %s33, %s36
    %p42 = scmp.eq.s32.totalorder %s9, 0
    %p43 = por %p41, %p42
    %p44 = scmp.ne.s32.totalorder %s33, %s36
    %p45 = scmp.eq.s32.totalorder %s14, 1
    %p46 = por %p44, %p45
    %p47 = scmp.ne.s32.totalorder %s36, %s37
    %p48 = scmp.eq.s32.totalorder %s14, 0
    %p49 = por %p47, %p48
    %p50 = scmp.ne.s32.totalorder %s36, %s37
    %p51 = scmp.eq.s32.totalorder %s15, 1
    %p52 = por %p50, %p51
    %p54 = scmp.ne.s32.totalorder %s37, %s53
    %p55 = scmp.eq.s32.totalorder %s15, 0
    %p56 = por %p54, %p55
    %s57 = ssub.s32 %s17, %s24
    %p58 = scmp.eq.s32.totalorder %s57, 0
    %s60 = sadd.s32 %s59, 1
    %s61 = scalar_select %p58, %s59, %s60
    %p64 = pneg %p58
    %p65 = scmp.eq.s32.totalorder %s9, 1
    %p66 = por %p64, %p65
    %p67 = scmp.ne.s32.totalorder %s59, %s62
    %p68 = scmp.eq.s32.totalorder %s9, 0
    %p69 = por %p67, %p68
    %p70 = scmp.ne.s32.totalorder %s59, %s62
    %p71 = scmp.eq.s32.totalorder %s14, 1
    %p72 = por %p70, %p71
    %p73 = scmp.ne.s32.totalorder %s62, %s63
    %p74 = scmp.eq.s32.totalorder %s14, 0
    %p75 = por %p73, %p74
    %p76 = scmp.ne.s32.totalorder %s62, %s63
    %p77 = scmp.eq.s32.totalorder %s15, 1
    %p78 = por %p76, %p77
    %p80 = scmp.ne.s32.totalorder %s63, %s79
    %p81 = scmp.eq.s32.totalorder %s15, 0
    %p82 = por %p80, %p81
    %s84 = sadd.s32 %s83, 1
    %p87 = scmp.eq.s32.totalorder %s9, 1
    %p88 = scmp.ne.s32.totalorder %s83, %s85
    %p89 = scmp.eq.s32.totalorder %s9, 0
    %p90 = por %p88, %p89
    %p91 = scmp.ne.s32.totalorder %s83, %s85
    %p92 = scmp.eq.s32.totalorder %s14, 1
    %p93 = por %p91, %p92
    %p94 = scmp.ne.s32.totalorder %s85, %s86
    %p95 = scmp.eq.s32.totalorder %s14, 0
    %p96 = por %p94, %p95
    %p97 = scmp.ne.s32.totalorder %s85, %s86
    %p98 = scmp.eq.s32.totalorder %s15, 1
    %p99 = por %p97, %p98
    %p101 = scmp.ne.s32.totalorder %s86, %s100
    %p102 = scmp.eq.s32.totalorder %s15, 0
    %p103 = por %p101, %p102
    %s104 = ssub.s32 %s16, %s28
    %p105 = scmp.eq.s32.totalorder %s104, 0
    %s107 = sadd.s32 %s106, 1
    %s108 = scalar_select %p105, %s106, %s107
    %p111 = pneg %p105
    %p112 = scmp.eq.s32.totalorder %s9, 1
    %p113 = por %p111, %p112
    %p114 = scmp.ne.s32.totalorder %s106, %s109
    %p115 = scmp.eq.s32.totalorder %s9, 0
    %p116 = por %p114, %p115
    %p117 = scmp.ne.s32.totalorder %s106, %s109
    %p118 = scmp.eq.s32.totalorder %s14, 1
    %p119 = por %p117, %p118
    %p120 = scmp.ne.s32.totalorder %s109, %s110
    %p121 = scmp.eq.s32.totalorder %s14, 0
    %p122 = por %p120, %p121
    %p123 = scmp.ne.s32.totalorder %s109, %s110
    %p124 = scmp.eq.s32.totalorder %s15, 1
    %p125 = por %p123, %p124
    %p127 = scmp.ne.s32.totalorder %s110, %s126
    %p128 = scmp.eq.s32.totalorder %s15, 0
    %p129 = por %p127, %p128
    %p130 = scmp.le.s32.totalorder 1, %s9
    %p131 = scmp.lt.s32.totalorder %s9, 3
    %p132 = pnand %p130, %p131
    %p133 = pneg %p132
    // Predicated region
    $region9: #{deeplab_forward.10} parent=5 // pred_check
      _
    $region10: #{deeplab_forward.10} parent=5 // pred_check_branch
      %135 = sbr.rel (%p132) target = $region12
    $region11: #{deeplab_forward.10} parent=5 // pred_region
      %s136 = ssub.s32 %s9, 1
      // Predicated region
      $region13: #{deeplab_forward.10} parent=11 // pred_check
        %p137 = pneg %p75
      $region14: #{deeplab_forward.10} parent=11 // pred_check_branch
        %139 = sbr.rel (%p137) target = $region16
      $region15: #{deeplab_forward.10} parent=11 // pred_region
        %s140 = smul.u32 3, %s19
        %p141 = scmp.lt.s32.totalorder %s140, 2
        %s142 = scalar_select %p141, %s140, 2
        %s143 = smul.addr %s142, 4
        %s144 = scalar_lea.vmem %s1, %s143
        %s145 = smul.u32 3, %s19
      $region16: #{deeplab_forward.10} parent=11 // pred_fallthru
        _
      // Predicated region
      $region17: #{deeplab_forward.10} parent=11 // pred_check
        %p146 = pneg %p96
      $region18: #{deeplab_forward.10} parent=11 // pred_check_branch
        %148 = sbr.rel (%p146) target = $region20
      $region19: #{deeplab_forward.10} parent=11 // pred_region
        _
      $region20: #{deeplab_forward.10} parent=11 // pred_fallthru
        _
    $region12: #{deeplab_forward.10} parent=5 // pred_fallthru
      _
    %p149 = scmp.lt.s32.totalorder %s9, 2
    // Predicated region
    $region21: #{deeplab_forward.10} parent=5 // pred_check
      %p150 = pneg %p149
    $region22: #{deeplab_forward.10} parent=5 // pred_check_branch
      %152 = sbr.rel (%p150) target = $region24
    $region23: #{deeplab_forward.10} parent=5 // pred_region
      // Predicated region
      $region25: #{deeplab_forward.10} parent=23 // pred_check
        %p153 = pneg %p43
      $region26: #{deeplab_forward.10} parent=23 // pred_check_branch
        %155 = sbr.rel (%p153) target = $region28
      $region27: #{deeplab_forward.10} parent=23 // pred_region
        %s156 = smul.u32 8, %s16
        %p157 = scmp.lt.s32.totalorder %s156, 15
        %s158 = scalar_select %p157, %s156, 15
        %p159 = scmp.lt.s32.totalorder %s17, 0
        %s160 = scalar_select %p159, %s17, 0
        %s161 = sadd.s32 %s160, %s158
        %s162 = smul.addr %s161, 4
        %s163 = scalar_lea.vmem %s0, %s162
        %s164 = smul.u32 8, %s16
      $region28: #{deeplab_forward.10} parent=23 // pred_fallthru
        _
    $region24: #{deeplab_forward.10} parent=5 // pred_fallthru
      _
    %p165 = scmp.le.s32.totalorder 1, %s9
    %p166 = scmp.lt.s32.totalorder %s9, 3
    %p167 = pnand %p165, %p166
    %p168 = pneg %p167
    // Predicated region
    $region29: #{deeplab_forward.10} parent=5 // pred_check
      _
    $region30: #{deeplab_forward.10} parent=5 // pred_check_branch
      %170 = sbr.rel (%p167) target = $region32
    $region31: #{deeplab_forward.10} parent=5 // pred_region
      %s171 = ssub.s32 %s9, 1
      %s172 = smul.u32 8, %s18
      %p173 = scmp.lt.s32.totalorder %s172, 15
      %s174 = scalar_select %p173, %s172, 15
      %p175 = scmp.lt.s32.totalorder %s19, 0
      %s176 = scalar_select %p175, %s19, 0
      %s177 = sadd.s32 %s176, %s174
      %s178 = smul.addr %s177, 4
      %s179 = scalar_lea.vmem %s0, %s178
      %p180 = pneg %p49
      %p181 = pneg %p46
      %s182 = smul.u32 3, %s19
      %p183 = scmp.lt.s32.totalorder %s182, 2
      %s184 = scalar_select %p183, %s182, 2
      %s185 = smul.addr %s184, 4
      %s186 = scalar_lea.vmem %s1, %s185
      %p187 = pneg %p75
      %p188 = pneg %p72
      %p189 = pneg %p96
      %p190 = pneg %p93
      %p191 = pneg %p122
      %p192 = pneg %p119
      %s193 = smul.u32 8, %s18
      %p194 = scmp.lt.s32.totalorder %s193, 15
      %s195 = scalar_select %p194, %s193, 15
      %s196 = smul.addr %s195, 4
      %s197 = scalar_lea.vmem %s3, %s196
      %s198 = smul.u32 8, %s18
      %p199 = scmp.lt.s32.totalorder %s198, 15
      %s200 = scalar_select %p199, %s198, 15
      %p201 = scmp.lt.s32.totalorder %s19, 0
      %s202 = scalar_select %p201, %s19, 0
      %s203 = sadd.s32 %s202, %s200
      %s204 = smul.addr %s203, 4
      %s205 = scalar_lea.vmem %s0, %s204
      %s206 = smul.u32 8, %s18
      %s207 = smul.u32 3, %s19
      %p208 = scmp.lt.s32.totalorder %s207, 2
      %s209 = scalar_select %p208, %s207, 2
      %s210 = smul.addr %s209, 4
      %s211 = scalar_lea.vmem %s1, %s210
      %s212 = smul.u32 3, %s19
      %s213 = smul.u32 8, %s18
      %p214 = scmp.lt.s32.totalorder %s213, 15
      %s215 = scalar_select %p214, %s213, 15
      %s216 = smul.addr %s215, 4
      %s217 = scalar_lea.vmem %s3, %s216
      %s218 = smul.u32 8, %s18
      %p220 = scmp.eq.s32.totalorder %s19, 0
      // Predicated region
      $region33: #{deeplab_forward.10} parent=31 // pred_check
        %p221 = pneg %p220
      $region34: #{deeplab_forward.10} parent=31 // pred_check_branch
        %223 = sbr.rel (%p221) target = $region36
      $region35: #{deeplab_forward.10} parent=31 // pred_region
        %vm224 = vcmask 130048
        %225 = vst.msk [vmem:[#allocation2] sm:$0xff] %vm224, 0.0
        %226 = vst.msk [vmem:[#allocation2 + $0x8] sm:$0xff] %vm224, 0.0
        %227 = vst.msk [vmem:[#allocation2 + $0x10] sm:$0xff] %vm224, 0.0
        %228 = vst.msk [vmem:[#allocation2 + $0x18] sm:$0xff] %vm224, 0.0
        %229 = vst.msk [vmem:[#allocation2 + $0x20] sm:$0xff] %vm224, 0.0
        %230 = vst.msk [vmem:[#allocation2 + $0x28] sm:$0xff] %vm224, 0.0
        %231 = vst.msk [vmem:[#allocation2 + $0x30] sm:$0xff] %vm224, 0.0
        %232 = vst.msk [vmem:[#allocation2 + $0x38] sm:$0xff] %vm224, 0.0
      $region36: #{deeplab_forward.10} parent=31 // pred_fallthru
        _
      %v233 = vld [vmem:[#allocation2] sm:$0xff]
      %v234 = vld [vmem:[#allocation2 + $0x8] sm:$0xff]
      %v235 = vld [vmem:[#allocation2 + $0x10] sm:$0xff]
      %v236 = vld [vmem:[#allocation2 + $0x18] sm:$0xff]
      %v237 = vld [vmem:[#allocation2 + $0x20] sm:$0xff]
      %v238 = vld [vmem:[#allocation2 + $0x28] sm:$0xff]
      %v239 = vld [vmem:[#allocation2 + $0x30] sm:$0xff]
      %v240 = vld [vmem:[#allocation2 + $0x38] sm:$0xff]
      %v241 = vld [vmem:[%s205] sm:$0xf]
      %v242 = vld [vmem:[%s205 + $0x4] sm:$0xf]
      %v243 = vld [vmem:[%s205 + $0x8] sm:$0xf]
      %v244 = vld [vmem:[%s205 + $0xc] sm:$0xf]
      %v245 = vld [vmem:[%s205 + $0x10] sm:$0xf]
      %v246 = vld [vmem:[%s205 + $0x14] sm:$0xf]
      %v247 = vld [vmem:[%s205 + $0x18] sm:$0xf]
      %v248 = vld [vmem:[%s205 + $0x1c] sm:$0xf]
      %v249 = vld [vmem:[%s211] sm:$0xf]
      %v250 = vld [vmem:[%s211 + $0x4] sm:$0xf]
      %v251 = vld [vmem:[%s211 + $0x8] sm:$0xf]
      %v260 = vunpack.c.l.b16 %v241
      %v261 = vunpack.c.l.b16 %v242
      %v262 = vunpack.c.l.b16 %v243
      %v263 = vunpack.c.l.b16 %v244
      %v264 = vunpack.c.l.b16 %v245
      %v265 = vunpack.c.l.b16 %v246
      %v266 = vunpack.c.l.b16 %v247
      %v267 = vunpack.c.l.b16 %v248
      %v268 = vpack.c.b16 %v261, %v260
      %v269 = vpack.c.b16 %v263, %v262
      %v270 = vpack.c.b16 %v265, %v264
      %v271 = vpack.c.b16 %v267, %v266
      %v275 = vunpack.c.l.b16 %v249
      %v276 = vunpack.c.l.b16 %v250
      %v277 = vunpack.c.l.b16 %v251
      %v278 = vpack.c.b16 %v276, %v275
      %v279 = vpack.c.b16 %v277, %v277
      %vm281 = vcmask 195584
      %v283 = vsel %vm281, %v268, 0
      %v286 = vsel %vm281, %v269, 0
      %v289 = vsel %vm281, %v270, 0
      %v292 = vsel %vm281, %v271, 0
      %vm294 = vcmask 1043456
      %v296 = vsel %vm294, %v279, 0
      %298 = vmatprep.subr.bf16.mxu0 0
      %299 = vmatpush1.bf16.msra.mxu0 0
      %300 = vmatprep.subr.bf16.mxu0 0
      %301 = vmatpush1.bf16.msra.mxu0 0
      %302 = vmatprep.subr.bf16.mxu0 0
      %303 = vmatpush1.bf16.msra.mxu0 0
      %304 = vmatprep.subr.bf16.mxu0 0
      %305 = vmatpush1.bf16.msra.mxu0 0
      %306 = vmatprep.subr.bf16.mxu0 0
      %307 = vmatpush1.bf16.msra.mxu0 0
      %308 = vmatprep.subr.bf16.mxu0 0
      %309 = vmatpush1.bf16.msra.mxu0 0
      %310 = vmatprep.subr.bf16.mxu0 0
      %311 = vmatpush1.bf16.msra.mxu0 %v296
      %312 = vmatprep.subr.bf16.mxu0 0
      %313 = vmatpush1.bf16.msra.mxu0 %v278
      %314 = vmatprep.subr.bf16.mxu0 0
      %315 = vmatpush2.bf16.msra.mxu0 0
      %316 = vmatprep.subr.bf16.mxu0 0
      %317 = vmatpush2.bf16.msra.mxu0 0
      %318 = vmatprep.subr.bf16.mxu0 0
      %319 = vmatpush2.bf16.msra.mxu0 0
      %320 = vmatprep.subr.bf16.mxu0 0
      %321 = vmatpush2.bf16.msra.mxu0 0
      %322 = vmatprep.subr.bf16.mxu0 0
      %323 = vmatpush2.bf16.msra.mxu0 0
      %324 = vmatprep.subr.bf16.mxu0 0
      %325 = vmatpush2.bf16.msra.mxu0 0
      %326 = vmatprep.subr.bf16.mxu0 0
      %327 = vmatpush2.bf16.msra.mxu0 0
      %328 = vmatprep.subr.bf16.mxu0 0
      %329 = vmatpush2.bf16.msra.mxu0 0
      %330 = vmatprep.mubr.bf16.mxu0 0
      %331 = vmatmul.mubr.bf16.gmra.mxu0 %v283
      %v332 = vpop.f32.mrf.mxu0
      %v333 = vadd.f32 0.0, %v332
      %v334 = vpop.f32.mrf.mxu0
      %v335 = vpop.f32.mrf.mxu0
      %v336 = vadd.f32 0.0, %v335
      %v337 = vpop.f32.mrf.mxu0
      %338 = vmatprep.mubr.bf16.mxu0 0
      %339 = vmatmul.mubr.bf16.gmra.mxu0 %v286
      %v340 = vpop.f32.mrf.mxu0
      %v341 = vadd.f32 0.0, %v340
      %v342 = vpop.f32.mrf.mxu0
      %v343 = vpop.f32.mrf.mxu0
      %v344 = vadd.f32 0.0, %v343
      %v345 = vpop.f32.mrf.mxu0
      %346 = vmatprep.mubr.bf16.mxu0 0
      %347 = vmatmul.mubr.bf16.gmra.mxu0 %v289
      %v348 = vpop.f32.mrf.mxu0
      %v349 = vadd.f32 0.0, %v348
      %v350 = vpop.f32.mrf.mxu0
      %v351 = vpop.f32.mrf.mxu0
      %v352 = vadd.f32 0.0, %v351
      %v353 = vpop.f32.mrf.mxu0
      %354 = vmatprep.mubr.bf16.mxu0 0
      %355 = vmatmul.mubr.bf16.gmra.mxu0 %v292
      %v356 = vpop.f32.mrf.mxu0
      %v357 = vadd.f32 0.0, %v356
      %v358 = vpop.f32.mrf.mxu0
      %v359 = vpop.f32.mrf.mxu0
      %v360 = vadd.f32 0.0, %v359
      %v361 = vpop.f32.mrf.mxu0
      %362 = vdwg.mxu0
      %v363 = vadd.f32 %v233, %v333
      %v364 = vadd.f32 %v234, %v336
      %v365 = vadd.f32 %v235, %v341
      %v366 = vadd.f32 %v236, %v344
      %v367 = vadd.f32 %v237, %v349
      %v368 = vadd.f32 %v238, %v352
      %v369 = vadd.f32 %v239, %v357
      %v370 = vadd.f32 %v240, %v360
      %vm371 = vcmask 130048
      %372 = vst.msk [vmem:[#allocation2] sm:$0xff] %vm371, %v363
      %373 = vst.msk [vmem:[#allocation2 + $0x8] sm:$0xff] %vm371, %v364
      %374 = vst.msk [vmem:[#allocation2 + $0x10] sm:$0xff] %vm371, %v365
      %375 = vst.msk [vmem:[#allocation2 + $0x18] sm:$0xff] %vm371, %v366
      %376 = vst.msk [vmem:[#allocation2 + $0x20] sm:$0xff] %vm371, %v367
      %377 = vst.msk [vmem:[#allocation2 + $0x28] sm:$0xff] %vm371, %v368
      %378 = vst.msk [vmem:[#allocation2 + $0x30] sm:$0xff] %vm371, %v369
      %379 = vst.msk [vmem:[#allocation2 + $0x38] sm:$0xff] %vm371, %v370
      // Predicated region
      $region37: #{deeplab_forward.10} parent=31 // pred_check
        %p380 = pneg %p220
      $region38: #{deeplab_forward.10} parent=31 // pred_check_branch
        %382 = sbr.rel (%p380) target = $region40
      $region39: #{deeplab_forward.10} parent=31 // pred_region
        %v383 = vld [vmem:[#allocation2] sm:$0xff]
        %v384 = vld [vmem:[#allocation2 + $0x8] sm:$0xff]
        %v385 = vld [vmem:[#allocation2 + $0x10] sm:$0xff]
        %v386 = vld [vmem:[#allocation2 + $0x18] sm:$0xff]
        %v387 = vld [vmem:[#allocation2 + $0x20] sm:$0xff]
        %v388 = vld [vmem:[#allocation2 + $0x28] sm:$0xff]
        %v389 = vld [vmem:[#allocation2 + $0x30] sm:$0xff]
        %v390 = vld [vmem:[#allocation2 + $0x38] sm:$0xff]
        %v391 = vld [vmem:[%s2] sm:$0x1]
        %v393 = vlaneseq
        %v394 = vshrl.u32 %v393, 7
        %v395 = vsub.s32 0, %v394
        %v396 = vrot.slane %v391, %v395
        %v398 = vadd.f32 %v383, %v396
        %v399 = vadd.f32 %v384, %v396
        %v400 = vadd.f32 %v385, %v396
        %v401 = vadd.f32 %v386, %v396
        %v402 = vadd.f32 %v387, %v396
        %v403 = vadd.f32 %v388, %v396
        %v404 = vadd.f32 %v389, %v396
        %v405 = vadd.f32 %v390, %v396
        %v406 = vmax.f32 %v398, 0.0
        %v407 = vmax.f32 %v399, 0.0
        %v408 = vmax.f32 %v400, 0.0
        %v409 = vmax.f32 %v401, 0.0
        %v410 = vmax.f32 %v402, 0.0
        %v411 = vmax.f32 %v403, 0.0
        %v412 = vmax.f32 %v404, 0.0
        %v413 = vmax.f32 %v405, 0.0
        %v414 = vpack.c.bf16 %v407, %v406
        %v415 = vpack.c.bf16 %v409, %v408
        %v416 = vpack.c.bf16 %v411, %v410
        %v417 = vpack.c.bf16 %v413, %v412
        %v422 = vunpack.c.l.b16 %v414
        %v423 = vunpack.c.h.b16 %v414
        %v424 = vunpack.c.l.b16 %v415
        %v425 = vunpack.c.h.b16 %v415
        %v426 = vunpack.c.l.b16 %v416
        %v427 = vunpack.c.h.b16 %v416
        %v428 = vunpack.c.l.b16 %v417
        %v429 = vunpack.c.h.b16 %v417
        %v430 = vpack.c.b16 %v422, %v422
        %v431 = vpack.c.b16 %v423, %v423
        %v432 = vpack.c.b16 %v424, %v424
        %v433 = vpack.c.b16 %v425, %v425
        %v434 = vpack.c.b16 %v426, %v426
        %v435 = vpack.c.b16 %v427, %v427
        %v436 = vpack.c.b16 %v428, %v428
        %v437 = vpack.c.b16 %v429, %v429
        %vm446 = vcmask 125952
        %447 = vst.msk [vmem:[%s217] sm:$0xf] %vm446, %v430
        %448 = vst.msk [vmem:[%s217 + $0x4] sm:$0xf] %vm446, %v431
        %449 = vst.msk [vmem:[%s217 + $0x8] sm:$0xf] %vm446, %v432
        %450 = vst.msk [vmem:[%s217 + $0xc] sm:$0xf] %vm446, %v433
        %451 = vst.msk [vmem:[%s217 + $0x10] sm:$0xf] %vm446, %v434
        %452 = vst.msk [vmem:[%s217 + $0x14] sm:$0xf] %vm446, %v435
        %453 = vst.msk [vmem:[%s217 + $0x18] sm:$0xf] %vm446, %v436
        %454 = vst.msk [vmem:[%s217 + $0x1c] sm:$0xf] %vm446, %v437
      $region40: #{deeplab_forward.10} parent=31 // pred_fallthru
        _
      %s455 = smul.u32 8, %s18
      %p456 = scmp.lt.s32.totalorder %s455, 15
      %s457 = scalar_select %p456, %s455, 15
      %s458 = smul.addr %s457, 4
      %s459 = scalar_lea.vmem %s3, %s458
      // Predicated region
      $region41: #{deeplab_forward.10} parent=31 // pred_check
        %p460 = pneg %p119
      $region42: #{deeplab_forward.10} parent=31 // pred_check_branch
        %462 = sbr.rel (%p460) target = $region44
      $region43: #{deeplab_forward.10} parent=31 // pred_region
        %s463 = smul.u32 8, %s18
      $region44: #{deeplab_forward.10} parent=31 // pred_fallthru
        _
    $region32: #{deeplab_forward.10} parent=5 // pred_fallthru
      _
    %p464 = scmp.le.s32.totalorder 2, %s9
    // Predicated region
    $region45: #{deeplab_forward.10} parent=5 // pred_check
      %p465 = pneg %p464
    $region46: #{deeplab_forward.10} parent=5 // pred_check_branch
      %467 = sbr.rel (%p465) target = $region48
    $region47: #{deeplab_forward.10} parent=5 // pred_region
      %s468 = ssub.s32 %s9, 2
      // Predicated region
      $region49: #{deeplab_forward.10} parent=47 // pred_check
        %p469 = pneg %p125
      $region50: #{deeplab_forward.10} parent=47 // pred_check_branch
        %471 = sbr.rel (%p469) target = $region52
      $region51: #{deeplab_forward.10} parent=47 // pred_region
        %s472 = smul.u32 8, %s20
        %p473 = scmp.lt.s32.totalorder %s472, 15
        %s474 = scalar_select %p473, %s472, 15
        %s475 = smul.addr %s474, 4
        %s476 = scalar_lea.vmem %s3, %s475
      $region52: #{deeplab_forward.10} parent=47 // pred_fallthru
        _
    $region48: #{deeplab_forward.10} parent=5 // pred_fallthru
      _
  $region6: #{deeplab_forward.10} parent=0 // loop_footer
    %s13 = sadd.s32 1, %s9
  $region7: #{deeplab_forward.10} parent=0 // loop_footer_branch
    %8 = sbr.rel target = $region3
  $region8: #{deeplab_forward.10} parent=0 // loop_exit
    _

// kernel: deeplab_forward.11
$region0: #{deeplab_forward.11}
  #allocation0 [shape = 'u32[]', space=smem, size = 0x4, offset = 0x4, fixed_abs, tag = 'smem constant byte address 0x4 - core index']
  #allocation1 [shape = 'u32[144,128]{1,0:T(1,128)}', space=vmem, size = 0x12000, scoped, tag = 'internal scratch']
  #allocation2 [shape = 'f32[64,32]{1,0:T(8,128)}', space=vmem, size = 0x8000, scoped, tag = 'scratch operand']
  %s0 = inlined_call_operand.vmem [shape: bf16[128,432], index: 0, kind: input, shape index: {}]
  %s1 = inlined_call_operand.vmem [shape: bf16[432,32], index: 1, kind: input, shape index: {}]
  %s2 = inlined_call_operand.vmem [shape: f32[1,32], index: 2, kind: input, shape index: {}]
  %s3 = inlined_call_operand.vmem [shape: bf16[128,32], index: 3, kind: output, shape index: {}]
  %s4 = sld [smem:[#allocation0]]
  $region53: #{deeplab_forward.11} parent=0
    _
  %s6 = ssub.s32 1, %s4
  %s7 = scalar_select 0, %s6, %s4
  loop: start=0, step=1, limit=4
  $region2: #{deeplab_forward.11} parent=0 // loop_pre_header
    _
  $region3: #{deeplab_forward.11} parent=0 // loop_header
    %s9 = sphi 0, %s13
    %p10 = scmp.ge.s32.totalorder %s9, 4
    %s16 = sphi 0, %s28
    %s17 = sphi 0, %s24
    %s18 = sphi 0, %s16
    %s19 = sphi 0, %s17
    %s20 = sphi 0, %s18
    %s21 = sphi 0, %s19
    %s33 = sphi 0, %s35
    %s36 = sphi 0, %s33
    %s37 = sphi 0, %s36
    %s53 = sphi 0, %s37
    %s59 = sphi 0, %s61
    %s62 = sphi 0, %s59
    %s63 = sphi 0, %s62
    %s79 = sphi 0, %s63
    %s83 = sphi 0, %s83
    %s85 = sphi 0, %s83
    %s86 = sphi 0, %s85
    %s100 = sphi 0, %s86
    %s106 = sphi 0, %s108
    %s109 = sphi 0, %s106
    %s110 = sphi 0, %s109
    %s126 = sphi 0, %s110
  $region4: #{deeplab_forward.11} parent=0 // loop_header_branch
    %12 = sbr.rel (%p10) target = $region8
  $region5: #{deeplab_forward.11} parent=0 // loop_body
    %s14 = ssub.s32 %s9, 1
    %s15 = ssub.s32 %s9, 2
    %s22 = sadd.s32 1, %s17
    %p23 = scmp.ge.s32.totalorder %s22, 1
    %s24 = scalar_select %p23, 0, %s22
    %s25 = sadd.s32 1, %s16
    %s26 = scalar_select %p23, %s25, %s16
    %p27 = scmp.ge.s32.totalorder %s26, 2
    %s28 = scalar_select %p27, 0, %s26
    %s29 = ssub.s32 %s16, %s28
    %s30 = ssub.s32 %s17, %s24
    %s31 = sor.u32 %s29, %s30
    %p32 = scmp.eq.s32.totalorder %s31, 0
    %s34 = sadd.s32 %s33, 1
    %s35 = scalar_select %p32, %s33, %s34
    %p38 = pneg %p32
    %p39 = scmp.eq.s32.totalorder %s9, 1
    %p40 = por %p38, %p39
    %p41 = scmp.ne.s32.totalorder %s33, %s36
    %p42 = scmp.eq.s32.totalorder %s9, 0
    %p43 = por %p41, %p42
    %p44 = scmp.ne.s32.totalorder %s33, %s36
    %p45 = scmp.eq.s32.totalorder %s14, 1
    %p46 = por %p44, %p45
    %p47 = scmp.ne.s32.totalorder %s36, %s37
    %p48 = scmp.eq.s32.totalorder %s14, 0
    %p49 = por %p47, %p48
    %p50 = scmp.ne.s32.totalorder %s36, %s37
    %p51 = scmp.eq.s32.totalorder %s15, 1
    %p52 = por %p50, %p51
    %p54 = scmp.ne.s32.totalorder %s37, %s53
    %p55 = scmp.eq.s32.totalorder %s15, 0
    %p56 = por %p54, %p55
    %s57 = ssub.s32 %s17, %s24
    %p58 = scmp.eq.s32.totalorder %s57, 0
    %s60 = sadd.s32 %s59, 1
    %s61 = scalar_select %p58, %s59, %s60
    %p64 = pneg %p58
    %p65 = scmp.eq.s32.totalorder %s9, 1
    %p66 = por %p64, %p65
    %p67 = scmp.ne.s32.totalorder %s59, %s62
    %p68 = scmp.eq.s32.totalorder %s9, 0
    %p69 = por %p67, %p68
    %p70 = scmp.ne.s32.totalorder %s59, %s62
    %p71 = scmp.eq.s32.totalorder %s14, 1
    %p72 = por %p70, %p71
    %p73 = scmp.ne.s32.totalorder %s62, %s63
    %p74 = scmp.eq.s32.totalorder %s14, 0
    %p75 = por %p73, %p74
    %p76 = scmp.ne.s32.totalorder %s62, %s63
    %p77 = scmp.eq.s32.totalorder %s15, 1
    %p78 = por %p76, %p77
    %p80 = scmp.ne.s32.totalorder %s63, %s79
    %p81 = scmp.eq.s32.totalorder %s15, 0
    %p82 = por %p80, %p81
    %s84 = sadd.s32 %s83, 1
    %p87 = scmp.eq.s32.totalorder %s9, 1
    %p88 = scmp.ne.s32.totalorder %s83, %s85
    %p89 = scmp.eq.s32.totalorder %s9, 0
    %p90 = por %p88, %p89
    %p91 = scmp.ne.s32.totalorder %s83, %s85
    %p92 = scmp.eq.s32.totalorder %s14, 1
    %p93 = por %p91, %p92
    %p94 = scmp.ne.s32.totalorder %s85, %s86
    %p95 = scmp.eq.s32.totalorder %s14, 0
    %p96 = por %p94, %p95
    %p97 = scmp.ne.s32.totalorder %s85, %s86
    %p98 = scmp.eq.s32.totalorder %s15, 1
    %p99 = por %p97, %p98
    %p101 = scmp.ne.s32.totalorder %s86, %s100
    %p102 = scmp.eq.s32.totalorder %s15, 0
    %p103 = por %p101, %p102
    %s104 = ssub.s32 %s16, %s28
    %p105 = scmp.eq.s32.totalorder %s104, 0
    %s107 = sadd.s32 %s106, 1
    %s108 = scalar_select %p105, %s106, %s107
    %p111 = pneg %p105
    %p112 = scmp.eq.s32.totalorder %s9, 1
    %p113 = por %p111, %p112
    %p114 = scmp.ne.s32.totalorder %s106, %s109
    %p115 = scmp.eq.s32.totalorder %s9, 0
    %p116 = por %p114, %p115
    %p117 = scmp.ne.s32.totalorder %s106, %s109
    %p118 = scmp.eq.s32.totalorder %s14, 1
    %p119 = por %p117, %p118
    %p120 = scmp.ne.s32.totalorder %s109, %s110
    %p121 = scmp.eq.s32.totalorder %s14, 0
    %p122 = por %p120, %p121
    %p123 = scmp.ne.s32.totalorder %s109, %s110
    %p124 = scmp.eq.s32.totalorder %s15, 1
    %p125 = por %p123, %p124
    %p127 = scmp.ne.s32.totalorder %s110, %s126
    %p128 = scmp.eq.s32.totalorder %s15, 0
    %p129 = por %p127, %p128
    %p130 = scmp.le.s32.totalorder 1, %s9
    %p131 = scmp.lt.s32.totalorder %s9, 3
    %p132 = pnand %p130, %p131
    %p133 = pneg %p132
    // Predicated region
    $region9: #{deeplab_forward.11} parent=5 // pred_check
      _
    $region10: #{deeplab_forward.11} parent=5 // pred_check_branch
      %135 = sbr.rel (%p132) target = $region12
    $region11: #{deeplab_forward.11} parent=5 // pred_region
      %s136 = ssub.s32 %s9, 1
      // Predicated region
      $region13: #{deeplab_forward.11} parent=11 // pred_check
        %p137 = pneg %p75
      $region14: #{deeplab_forward.11} parent=11 // pred_check_branch
        %139 = sbr.rel (%p137) target = $region16
      $region15: #{deeplab_forward.11} parent=11 // pred_region
        %s140 = smul.u32 54, %s19
        %p141 = scmp.lt.s32.totalorder %s140, 53
        %s142 = scalar_select %p141, %s140, 53
        %s143 = smul.addr %s142, 4
        %s144 = scalar_lea.vmem %s1, %s143
        %s145 = smul.u32 54, %s19
      $region16: #{deeplab_forward.11} parent=11 // pred_fallthru
        _
      // Predicated region
      $region17: #{deeplab_forward.11} parent=11 // pred_check
        %p146 = pneg %p96
      $region18: #{deeplab_forward.11} parent=11 // pred_check_branch
        %148 = sbr.rel (%p146) target = $region20
      $region19: #{deeplab_forward.11} parent=11 // pred_region
        _
      $region20: #{deeplab_forward.11} parent=11 // pred_fallthru
        _
    $region12: #{deeplab_forward.11} parent=5 // pred_fallthru
      _
    %p149 = scmp.lt.s32.totalorder %s9, 2
    // Predicated region
    $region21: #{deeplab_forward.11} parent=5 // pred_check
      %p150 = pneg %p149
    $region22: #{deeplab_forward.11} parent=5 // pred_check_branch
      %152 = sbr.rel (%p150) target = $region24
    $region23: #{deeplab_forward.11} parent=5 // pred_region
      // Predicated region
      $region25: #{deeplab_forward.11} parent=23 // pred_check
        %p153 = pneg %p43
      $region26: #{deeplab_forward.11} parent=23 // pred_check_branch
        %155 = sbr.rel (%p153) target = $region28
      $region27: #{deeplab_forward.11} parent=23 // pred_region
        %s156 = smul.u32 8, %s16
        %s157 = smul.u32 4, %s17
        %p158 = scmp.lt.s32.totalorder %s156, 15
        %s159 = scalar_select %p158, %s156, 15
        %p160 = scmp.lt.s32.totalorder %s157, 3
        %s161 = scalar_select %p160, %s157, 3
        %s162 = smul.addr %s159, 4
        %s163 = sadd.s32 %s161, %s162
        %s164 = smul.addr %s163, 4
        %s165 = scalar_lea.vmem %s0, %s164
        %s166 = smul.u32 8, %s16
        %s167 = smul.u32 4, %s17
      $region28: #{deeplab_forward.11} parent=23 // pred_fallthru
        _
    $region24: #{deeplab_forward.11} parent=5 // pred_fallthru
      _
    %p168 = scmp.le.s32.totalorder 1, %s9
    %p169 = scmp.lt.s32.totalorder %s9, 3
    %p170 = pnand %p168, %p169
    %p171 = pneg %p170
    // Predicated region
    $region29: #{deeplab_forward.11} parent=5 // pred_check
      _
    $region30: #{deeplab_forward.11} parent=5 // pred_check_branch
      %173 = sbr.rel (%p170) target = $region32
    $region31: #{deeplab_forward.11} parent=5 // pred_region
      %s174 = ssub.s32 %s9, 1
      %s175 = smul.u32 8, %s18
      %s176 = smul.u32 4, %s19
      %p177 = scmp.lt.s32.totalorder %s175, 15
      %s178 = scalar_select %p177, %s175, 15
      %p179 = scmp.lt.s32.totalorder %s176, 3
      %s180 = scalar_select %p179, %s176, 3
      %s181 = smul.addr %s178, 4
      %s182 = sadd.s32 %s180, %s181
      %s183 = smul.addr %s182, 4
      %s184 = scalar_lea.vmem %s0, %s183
      %p185 = pneg %p49
      %p186 = pneg %p46
      %s187 = smul.u32 54, %s19
      %p188 = scmp.lt.s32.totalorder %s187, 53
      %s189 = scalar_select %p188, %s187, 53
      %s190 = smul.addr %s189, 4
      %s191 = scalar_lea.vmem %s1, %s190
      %p192 = pneg %p75
      %p193 = pneg %p72
      %p194 = pneg %p96
      %p195 = pneg %p93
      %p196 = pneg %p122
      %p197 = pneg %p119
      %s198 = smul.u32 8, %s18
      %p199 = scmp.lt.s32.totalorder %s198, 15
      %s200 = scalar_select %p199, %s198, 15
      %s201 = smul.addr %s200, 4
      %s202 = scalar_lea.vmem %s3, %s201
      %s203 = smul.u32 8, %s18
      %s204 = smul.u32 4, %s19
      %p205 = scmp.lt.s32.totalorder %s203, 15
      %s206 = scalar_select %p205, %s203, 15
      %p207 = scmp.lt.s32.totalorder %s204, 3
      %s208 = scalar_select %p207, %s204, 3
      %s209 = smul.addr %s206, 4
      %s210 = sadd.s32 %s208, %s209
      %s211 = smul.addr %s210, 4
      %s212 = scalar_lea.vmem %s0, %s211
      %s213 = smul.u32 8, %s18
      %s214 = smul.u32 4, %s19
      %s215 = smul.u32 54, %s19
      %p216 = scmp.lt.s32.totalorder %s215, 53
      %s217 = scalar_select %p216, %s215, 53
      %s218 = smul.addr %s217, 4
      %s219 = scalar_lea.vmem %s1, %s218
      %s220 = smul.u32 54, %s19
      %s221 = smul.u32 8, %s18
      %p222 = scmp.lt.s32.totalorder %s221, 15
      %s223 = scalar_select %p222, %s221, 15
      %s224 = smul.addr %s223, 4
      %s225 = scalar_lea.vmem %s3, %s224
      %s226 = smul.u32 8, %s18
      %p228 = scmp.eq.s32.totalorder %s19, 0
      // Predicated region
      $region33: #{deeplab_forward.11} parent=31 // pred_check
        %p229 = pneg %p228
      $region34: #{deeplab_forward.11} parent=31 // pred_check_branch
        %231 = sbr.rel (%p229) target = $region36
      $region35: #{deeplab_forward.11} parent=31 // pred_region
        %vm232 = vcmask 261120
        %233 = vst.msk [vmem:[#allocation2] sm:$0xff] %vm232, 0.0
        %234 = vst.msk [vmem:[#allocation2 + $0x8] sm:$0xff] %vm232, 0.0
        %235 = vst.msk [vmem:[#allocation2 + $0x10] sm:$0xff] %vm232, 0.0
        %236 = vst.msk [vmem:[#allocation2 + $0x18] sm:$0xff] %vm232, 0.0
        %237 = vst.msk [vmem:[#allocation2 + $0x20] sm:$0xff] %vm232, 0.0
        %238 = vst.msk [vmem:[#allocation2 + $0x28] sm:$0xff] %vm232, 0.0
        %239 = vst.msk [vmem:[#allocation2 + $0x30] sm:$0xff] %vm232, 0.0
        %240 = vst.msk [vmem:[#allocation2 + $0x38] sm:$0xff] %vm232, 0.0
      $region36: #{deeplab_forward.11} parent=31 // pred_fallthru
        _
      %v241 = vld [vmem:[#allocation2] sm:$0xff]
      %v242 = vld [vmem:[#allocation2 + $0x8] sm:$0xff]
      %v243 = vld [vmem:[#allocation2 + $0x10] sm:$0xff]
      %v244 = vld [vmem:[#allocation2 + $0x18] sm:$0xff]
      %v245 = vld [vmem:[#allocation2 + $0x20] sm:$0xff]
      %v246 = vld [vmem:[#allocation2 + $0x28] sm:$0xff]
      %v247 = vld [vmem:[#allocation2 + $0x30] sm:$0xff]
      %v248 = vld [vmem:[#allocation2 + $0x38] sm:$0xff]
      %v249 = vld [vmem:[%s212] sm:$0xff]
      %v250 = vld [vmem:[%s212 + $0x8] sm:$0xff]
      %v251 = vld [vmem:[%s212 + $0x10] sm:$0xff]
      %v252 = vld [vmem:[%s212 + $0x18] sm:$0xff]
      %v253 = vld [vmem:[%s212 + $0x20] sm:$0xff]
      %v254 = vld [vmem:[%s212 + $0x28] sm:$0xff]
      %v255 = vld [vmem:[%s212 + $0x30] sm:$0xff]
      %v256 = vld [vmem:[%s212 + $0x38] sm:$0xff]
      %v257 = vld [vmem:[%s212 + $0x40] sm:$0xff]
      %v258 = vld [vmem:[%s212 + $0x48] sm:$0xff]
      %v259 = vld [vmem:[%s212 + $0x50] sm:$0xff]
      %v260 = vld [vmem:[%s212 + $0x58] sm:$0xff]
      %v261 = vld [vmem:[%s212 + $0x60] sm:$0xff]
      %v262 = vld [vmem:[%s212 + $0x68] sm:$0xff]
      %v263 = vld [vmem:[%s212 + $0x70] sm:$0xff]
      %v264 = vld [vmem:[%s212 + $0x78] sm:$0xff]
      %v265 = vld [vmem:[%s219] sm:$0xf]
      %v266 = vld [vmem:[%s219 + $0x4] sm:$0xf]
      %v267 = vld [vmem:[%s219 + $0x8] sm:$0xf]
      %v268 = vld [vmem:[%s219 + $0xc] sm:$0xf]
      %v269 = vld [vmem:[%s219 + $0x10] sm:$0xf]
      %v270 = vld [vmem:[%s219 + $0x14] sm:$0xf]
      %v271 = vld [vmem:[%s219 + $0x18] sm:$0xf]
      %v272 = vld [vmem:[%s219 + $0x1c] sm:$0xf]
      %v273 = vld [vmem:[%s219 + $0x20] sm:$0xf]
      %v274 = vld [vmem:[%s219 + $0x24] sm:$0xf]
      %v275 = vld [vmem:[%s219 + $0x28] sm:$0xf]
      %v276 = vld [vmem:[%s219 + $0x2c] sm:$0xf]
      %v277 = vld [vmem:[%s219 + $0x30] sm:$0xf]
      %v278 = vld [vmem:[%s219 + $0x34] sm:$0xf]
      %v279 = vld [vmem:[%s219 + $0x38] sm:$0xf]
      %v280 = vld [vmem:[%s219 + $0x3c] sm:$0xf]
      %v281 = vld [vmem:[%s219 + $0x40] sm:$0xf]
      %v282 = vld [vmem:[%s219 + $0x44] sm:$0xf]
      %v283 = vld [vmem:[%s219 + $0x48] sm:$0xf]
      %v284 = vld [vmem:[%s219 + $0x4c] sm:$0xf]
      %v285 = vld [vmem:[%s219 + $0x50] sm:$0xf]
      %v286 = vld [vmem:[%s219 + $0x54] sm:$0xf]
      %v287 = vld [vmem:[%s219 + $0x58] sm:$0xf]
      %v288 = vld [vmem:[%s219 + $0x5c] sm:$0xf]
      %v289 = vld [vmem:[%s219 + $0x60] sm:$0xf]
      %v290 = vld [vmem:[%s219 + $0x64] sm:$0xf]
      %v291 = vld [vmem:[%s219 + $0x68] sm:$0xf]
      %v292 = vld [vmem:[%s219 + $0x6c] sm:$0xf]
      %v293 = vld [vmem:[%s219 + $0x70] sm:$0xf]
      %v294 = vld [vmem:[%s219 + $0x74] sm:$0xf]
      %v295 = vld [vmem:[%s219 + $0x78] sm:$0xf]
      %v296 = vld [vmem:[%s219 + $0x7c] sm:$0xf]
      %v297 = vld [vmem:[%s219 + $0x80] sm:$0xf]
      %v298 = vld [vmem:[%s219 + $0x84] sm:$0xf]
      %v299 = vld [vmem:[%s219 + $0x88] sm:$0xf]
      %v300 = vld [vmem:[%s219 + $0x8c] sm:$0xf]
      %v301 = vld [vmem:[%s219 + $0x90] sm:$0xf]
      %v302 = vld [vmem:[%s219 + $0x94] sm:$0xf]
      %v303 = vld [vmem:[%s219 + $0x98] sm:$0xf]
      %v304 = vld [vmem:[%s219 + $0x9c] sm:$0xf]
      %v305 = vld [vmem:[%s219 + $0xa0] sm:$0xf]
      %v306 = vld [vmem:[%s219 + $0xa4] sm:$0xf]
      %v307 = vld [vmem:[%s219 + $0xa8] sm:$0xf]
      %v308 = vld [vmem:[%s219 + $0xac] sm:$0xf]
      %v309 = vld [vmem:[%s219 + $0xb0] sm:$0xf]
      %v310 = vld [vmem:[%s219 + $0xb4] sm:$0xf]
      %v311 = vld [vmem:[%s219 + $0xb8] sm:$0xf]
      %v312 = vld [vmem:[%s219 + $0xbc] sm:$0xf]
      %v313 = vld [vmem:[%s219 + $0xc0] sm:$0xf]
      %v314 = vld [vmem:[%s219 + $0xc4] sm:$0xf]
      %v315 = vld [vmem:[%s219 + $0xc8] sm:$0xf]
      %v316 = vld [vmem:[%s219 + $0xcc] sm:$0xf]
      %v317 = vld [vmem:[%s219 + $0xd0] sm:$0xf]
      %v318 = vld [vmem:[%s219 + $0xd4] sm:$0xf]
      %v335 = vunpack.c.l.b16 %v249
      %v336 = vunpack.c.h.b16 %v249
      %v337 = vunpack.c.l.b16 %v250
      %v338 = vunpack.c.h.b16 %v250
      %v339 = vunpack.c.l.b16 %v251
      %v340 = vunpack.c.h.b16 %v251
      %v341 = vunpack.c.l.b16 %v252
      %v342 = vunpack.c.h.b16 %v252
      %v343 = vunpack.c.l.b16 %v253
      %v344 = vunpack.c.h.b16 %v253
      %v345 = vunpack.c.l.b16 %v254
      %v346 = vunpack.c.h.b16 %v254
      %v347 = vunpack.c.l.b16 %v255
      %v348 = vunpack.c.h.b16 %v255
      %v349 = vunpack.c.l.b16 %v256
      %v350 = vunpack.c.h.b16 %v256
      %v351 = vunpack.c.l.b16 %v257
      %v352 = vunpack.c.h.b16 %v257
      %v353 = vunpack.c.l.b16 %v258
      %v354 = vunpack.c.h.b16 %v258
      %v355 = vunpack.c.l.b16 %v259
      %v356 = vunpack.c.h.b16 %v259
      %v357 = vunpack.c.l.b16 %v260
      %v358 = vunpack.c.h.b16 %v260
      %v359 = vunpack.c.l.b16 %v261
      %v360 = vunpack.c.h.b16 %v261
      %v361 = vunpack.c.l.b16 %v262
      %v362 = vunpack.c.h.b16 %v262
      %v363 = vunpack.c.l.b16 %v263
      %v364 = vunpack.c.h.b16 %v263
      %v365 = vunpack.c.l.b16 %v264
      %v366 = vunpack.c.h.b16 %v264
      %v367 = vpack.c.b16 %v339, %v335
      %v368 = vpack.c.b16 %v340, %v336
      %v369 = vpack.c.b16 %v341, %v337
      %v370 = vpack.c.b16 %v342, %v338
      %v371 = vpack.c.b16 %v347, %v343
      %v372 = vpack.c.b16 %v348, %v344
      %v373 = vpack.c.b16 %v349, %v345
      %v374 = vpack.c.b16 %v350, %v346
      %v375 = vpack.c.b16 %v355, %v351
      %v376 = vpack.c.b16 %v356, %v352
      %v377 = vpack.c.b16 %v357, %v353
      %v378 = vpack.c.b16 %v358, %v354
      %v379 = vpack.c.b16 %v363, %v359
      %v380 = vpack.c.b16 %v364, %v360
      %v381 = vpack.c.b16 %v365, %v361
      %v382 = vpack.c.b16 %v366, %v362
      %v449 = vunpack.c.l.b16 %v265
      %v450 = vunpack.c.l.b16 %v266
      %v451 = vunpack.c.l.b16 %v267
      %v452 = vunpack.c.l.b16 %v268
      %v453 = vunpack.c.l.b16 %v269
      %v454 = vunpack.c.l.b16 %v270
      %v455 = vunpack.c.l.b16 %v271
      %v456 = vunpack.c.l.b16 %v272
      %v457 = vunpack.c.l.b16 %v273
      %v458 = vunpack.c.l.b16 %v274
      %v459 = vunpack.c.l.b16 %v275
      %v460 = vunpack.c.l.b16 %v276
      %v461 = vunpack.c.l.b16 %v277
      %v462 = vunpack.c.l.b16 %v278
      %v463 = vunpack.c.l.b16 %v279
      %v464 = vunpack.c.l.b16 %v280
      %v465 = vunpack.c.l.b16 %v281
      %v466 = vunpack.c.l.b16 %v282
      %v467 = vunpack.c.l.b16 %v283
      %v468 = vunpack.c.l.b16 %v284
      %v469 = vunpack.c.l.b16 %v285
      %v470 = vunpack.c.l.b16 %v286
      %v471 = vunpack.c.l.b16 %v287
      %v472 = vunpack.c.l.b16 %v288
      %v473 = vunpack.c.l.b16 %v289
      %v474 = vunpack.c.l.b16 %v290
      %v475 = vunpack.c.l.b16 %v291
      %v476 = vunpack.c.l.b16 %v292
      %v477 = vunpack.c.l.b16 %v293
      %v478 = vunpack.c.l.b16 %v294
      %v479 = vunpack.c.l.b16 %v295
      %v480 = vunpack.c.l.b16 %v296
      %v481 = vunpack.c.l.b16 %v297
      %v482 = vunpack.c.l.b16 %v298
      %v483 = vunpack.c.l.b16 %v299
      %v484 = vunpack.c.l.b16 %v300
      %v485 = vunpack.c.l.b16 %v301
      %v486 = vunpack.c.l.b16 %v302
      %v487 = vunpack.c.l.b16 %v303
      %v488 = vunpack.c.l.b16 %v304
      %v489 = vunpack.c.l.b16 %v305
      %v490 = vunpack.c.l.b16 %v306
      %v491 = vunpack.c.l.b16 %v307
      %v492 = vunpack.c.l.b16 %v308
      %v493 = vunpack.c.l.b16 %v309
      %v494 = vunpack.c.l.b16 %v310
      %v495 = vunpack.c.l.b16 %v311
      %v496 = vunpack.c.l.b16 %v312
      %v497 = vunpack.c.l.b16 %v313
      %v498 = vunpack.c.l.b16 %v314
      %v499 = vunpack.c.l.b16 %v315
      %v500 = vunpack.c.l.b16 %v316
      %v501 = vunpack.c.l.b16 %v317
      %v502 = vunpack.c.l.b16 %v318
      %v503 = vpack.c.b16 %v450, %v449
      %v504 = vpack.c.b16 %v452, %v451
      %v505 = vpack.c.b16 %v454, %v453
      %v506 = vpack.c.b16 %v456, %v455
      %v507 = vpack.c.b16 %v458, %v457
      %v508 = vpack.c.b16 %v460, %v459
      %v509 = vpack.c.b16 %v462, %v461
      %v510 = vpack.c.b16 %v464, %v463
      %v511 = vpack.c.b16 %v466, %v465
      %v512 = vpack.c.b16 %v468, %v467
      %v513 = vpack.c.b16 %v470, %v469
      %v514 = vpack.c.b16 %v472, %v471
      %v515 = vpack.c.b16 %v474, %v473
      %v516 = vpack.c.b16 %v476, %v475
      %v517 = vpack.c.b16 %v478, %v477
      %v518 = vpack.c.b16 %v480, %v479
      %v519 = vpack.c.b16 %v482, %v481
      %v520 = vpack.c.b16 %v484, %v483
      %v521 = vpack.c.b16 %v486, %v485
      %v522 = vpack.c.b16 %v488, %v487
      %v523 = vpack.c.b16 %v490, %v489
      %v524 = vpack.c.b16 %v492, %v491
      %v525 = vpack.c.b16 %v494, %v493
      %v526 = vpack.c.b16 %v496, %v495
      %v527 = vpack.c.b16 %v498, %v497
      %v528 = vpack.c.b16 %v500, %v499
      %v529 = vpack.c.b16 %v502, %v501
      %vm557 = vcmask 392192
      %v559 = vsel %vm557, %v370, 0
      %v562 = vsel %vm557, %v374, 0
      %v565 = vsel %vm557, %v378, 0
      %v568 = vsel %vm557, %v382, 0
      %570 = vmatprep.subr.bf16.mxu0 0
      %571 = vmatpush1.bf16.msra.mxu0 %v510
      %572 = vmatprep.subr.bf16.mxu0 0
      %573 = vmatpush1.bf16.msra.mxu0 %v509
      %574 = vmatprep.subr.bf16.mxu0 0
      %575 = vmatpush1.bf16.msra.mxu0 %v508
      %576 = vmatprep.subr.bf16.mxu0 0
      %577 = vmatpush1.bf16.msra.mxu0 %v507
      %578 = vmatprep.subr.bf16.mxu0 0
      %579 = vmatpush1.bf16.msra.mxu0 %v506
      %580 = vmatprep.subr.bf16.mxu0 0
      %581 = vmatpush1.bf16.msra.mxu0 %v505
      %582 = vmatprep.subr.bf16.mxu0 0
      %583 = vmatpush1.bf16.msra.mxu0 %v504
      %584 = vmatprep.subr.bf16.mxu0 0
      %585 = vmatpush1.bf16.msra.mxu0 %v503
      %586 = vmatprep.subr.bf16.mxu0 0
      %587 = vmatpush2.bf16.msra.mxu0 %v518
      %588 = vmatprep.subr.bf16.mxu0 0
      %589 = vmatpush2.bf16.msra.mxu0 %v517
      %590 = vmatprep.subr.bf16.mxu0 0
      %591 = vmatpush2.bf16.msra.mxu0 %v516
      %592 = vmatprep.subr.bf16.mxu0 0
      %593 = vmatpush2.bf16.msra.mxu0 %v515
      %594 = vmatprep.subr.bf16.mxu0 0
      %595 = vmatpush2.bf16.msra.mxu0 %v514
      %596 = vmatprep.subr.bf16.mxu0 0
      %597 = vmatpush2.bf16.msra.mxu0 %v513
      %598 = vmatprep.subr.bf16.mxu0 0
      %599 = vmatpush2.bf16.msra.mxu0 %v512
      %600 = vmatprep.subr.bf16.mxu0 0
      %601 = vmatpush2.bf16.msra.mxu0 %v511
      %602 = vmatprep.mubr.bf16.mxu0 %v368
      %603 = vmatmul.mubr.bf16.gmra.mxu0 %v367
      %v604 = vpop.f32.mrf.mxu0
      %v605 = vadd.f32 0.0, %v604
      %v606 = vpop.f32.mrf.mxu0
      %v607 = vpop.f32.mrf.mxu0
      %v608 = vadd.f32 0.0, %v607
      %v609 = vpop.f32.mrf.mxu0
      %610 = vmatprep.mubr.bf16.mxu0 %v372
      %611 = vmatmul.mubr.bf16.gmra.mxu0 %v371
      %v612 = vpop.f32.mrf.mxu0
      %v613 = vadd.f32 0.0, %v612
      %v614 = vpop.f32.mrf.mxu0
      %v615 = vpop.f32.mrf.mxu0
      %v616 = vadd.f32 0.0, %v615
      %v617 = vpop.f32.mrf.mxu0
      %618 = vmatprep.mubr.bf16.mxu0 %v376
      %619 = vmatmul.mubr.bf16.gmra.mxu0 %v375
      %v620 = vpop.f32.mrf.mxu0
      %v621 = vadd.f32 0.0, %v620
      %v622 = vpop.f32.mrf.mxu0
      %v623 = vpop.f32.mrf.mxu0
      %v624 = vadd.f32 0.0, %v623
      %v625 = vpop.f32.mrf.mxu0
      %626 = vmatprep.mubr.bf16.mxu0 %v380
      %627 = vmatmul.mubr.bf16.gmra.mxu0 %v379
      %v628 = vpop.f32.mrf.mxu0
      %v629 = vadd.f32 0.0, %v628
      %v630 = vpop.f32.mrf.mxu0
      %v631 = vpop.f32.mrf.mxu0
      %v632 = vadd.f32 0.0, %v631
      %v633 = vpop.f32.mrf.mxu0
      %634 = vdwg.mxu0
      %635 = vmatprep.subr.bf16.mxu0 0
      %636 = vmatpush1.bf16.msra.mxu0 %v526
      %637 = vmatprep.subr.bf16.mxu0 0
      %638 = vmatpush1.bf16.msra.mxu0 %v525
      %639 = vmatprep.subr.bf16.mxu0 0
      %640 = vmatpush1.bf16.msra.mxu0 %v524
      %641 = vmatprep.subr.bf16.mxu0 0
      %642 = vmatpush1.bf16.msra.mxu0 %v523
      %643 = vmatprep.subr.bf16.mxu0 0
      %644 = vmatpush1.bf16.msra.mxu0 %v522
      %645 = vmatprep.subr.bf16.mxu0 0
      %646 = vmatpush1.bf16.msra.mxu0 %v521
      %647 = vmatprep.subr.bf16.mxu0 0
      %648 = vmatpush1.bf16.msra.mxu0 %v520
      %649 = vmatprep.subr.bf16.mxu0 0
      %650 = vmatpush1.bf16.msra.mxu0 %v519
      %651 = vmatprep.subr.bf16.mxu0 0
      %652 = vmatpush2.bf16.msra.mxu0 0
      %653 = vmatprep.subr.bf16.mxu0 0
      %654 = vmatpush2.bf16.msra.mxu0 0
      %655 = vmatprep.subr.bf16.mxu0 0
      %656 = vmatpush2.bf16.msra.mxu0 0
      %657 = vmatprep.subr.bf16.mxu0 0
      %658 = vmatpush2.bf16.msra.mxu0 0
      %659 = vmatprep.subr.bf16.mxu0 0
      %660 = vmatpush2.bf16.msra.mxu0 0
      %661 = vmatprep.subr.bf16.mxu0 0
      %662 = vmatpush2.bf16.msra.mxu0 %v529
      %663 = vmatprep.subr.bf16.mxu0 0
      %664 = vmatpush2.bf16.msra.mxu0 %v528
      %665 = vmatprep.subr.bf16.mxu0 0
      %666 = vmatpush2.bf16.msra.mxu0 %v527
      %667 = vmatprep.mubr.bf16.mxu0 %v559
      %668 = vmatmul.mubr.bf16.gmra.mxu0 %v369
      %v669 = vpop.f32.mrf.mxu0
      %v670 = vadd.f32 %v605, %v669
      %v671 = vpop.f32.mrf.mxu0
      %v672 = vpop.f32.mrf.mxu0
      %v673 = vadd.f32 %v608, %v672
      %v674 = vpop.f32.mrf.mxu0
      %675 = vmatprep.mubr.bf16.mxu0 %v562
      %676 = vmatmul.mubr.bf16.gmra.mxu0 %v373
      %v677 = vpop.f32.mrf.mxu0
      %v678 = vadd.f32 %v613, %v677
      %v679 = vpop.f32.mrf.mxu0
      %v680 = vpop.f32.mrf.mxu0
      %v681 = vadd.f32 %v616, %v680
      %v682 = vpop.f32.mrf.mxu0
      %683 = vmatprep.mubr.bf16.mxu0 %v565
      %684 = vmatmul.mubr.bf16.gmra.mxu0 %v377
      %v685 = vpop.f32.mrf.mxu0
      %v686 = vadd.f32 %v621, %v685
      %v687 = vpop.f32.mrf.mxu0
      %v688 = vpop.f32.mrf.mxu0
      %v689 = vadd.f32 %v624, %v688
      %v690 = vpop.f32.mrf.mxu0
      %691 = vmatprep.mubr.bf16.mxu0 %v568
      %692 = vmatmul.mubr.bf16.gmra.mxu0 %v381
      %v693 = vpop.f32.mrf.mxu0
      %v694 = vadd.f32 %v629, %v693
      %v695 = vpop.f32.mrf.mxu0
      %v696 = vpop.f32.mrf.mxu0
      %v697 = vadd.f32 %v632, %v696
      %v698 = vpop.f32.mrf.mxu0
      %699 = vdwg.mxu0
      %v700 = vadd.f32 %v241, %v670
      %v701 = vadd.f32 %v242, %v673
      %v702 = vadd.f32 %v243, %v678
      %v703 = vadd.f32 %v244, %v681
      %v704 = vadd.f32 %v245, %v686
      %v705 = vadd.f32 %v246, %v689
      %v706 = vadd.f32 %v247, %v694
      %v707 = vadd.f32 %v248, %v697
      %vm708 = vcmask 261120
      %709 = vst.msk [vmem:[#allocation2] sm:$0xff] %vm708, %v700
      %710 = vst.msk [vmem:[#allocation2 + $0x8] sm:$0xff] %vm708, %v701
      %711 = vst.msk [vmem:[#allocation2 + $0x10] sm:$0xff] %vm708, %v702
      %712 = vst.msk [vmem:[#allocation2 + $0x18] sm:$0xff] %vm708, %v703
      %713 = vst.msk [vmem:[#allocation2 + $0x20] sm:$0xff] %vm708, %v704
      %714 = vst.msk [vmem:[#allocation2 + $0x28] sm:$0xff] %vm708, %v705
      %715 = vst.msk [vmem:[#allocation2 + $0x30] sm:$0xff] %vm708, %v706
      %716 = vst.msk [vmem:[#allocation2 + $0x38] sm:$0xff] %vm708, %v707
      // Predicated region
      $region37: #{deeplab_forward.11} parent=31 // pred_check
        %p717 = pneg %p228
      $region38: #{deeplab_forward.11} parent=31 // pred_check_branch
        %719 = sbr.rel (%p717) target = $region40
      $region39: #{deeplab_forward.11} parent=31 // pred_region
        %v720 = vld [vmem:[#allocation2] sm:$0xff]
        %v721 = vld [vmem:[#allocation2 + $0x8] sm:$0xff]
        %v722 = vld [vmem:[#allocation2 + $0x10] sm:$0xff]
        %v723 = vld [vmem:[#allocation2 + $0x18] sm:$0xff]
        %v724 = vld [vmem:[#allocation2 + $0x20] sm:$0xff]
        %v725 = vld [vmem:[#allocation2 + $0x28] sm:$0xff]
        %v726 = vld [vmem:[#allocation2 + $0x30] sm:$0xff]
        %v727 = vld [vmem:[#allocation2 + $0x38] sm:$0xff]
        %v728 = vld [vmem:[%s2] sm:$0x1]
        %v730 = vlaneseq
        %v731 = vshrl.u32 %v730, 7
        %v732 = vsub.s32 0, %v731
        %v733 = vrot.slane %v728, %v732
        %v735 = vadd.f32 %v720, %v733
        %v736 = vadd.f32 %v721, %v733
        %v737 = vadd.f32 %v722, %v733
        %v738 = vadd.f32 %v723, %v733
        %v739 = vadd.f32 %v724, %v733
        %v740 = vadd.f32 %v725, %v733
        %v741 = vadd.f32 %v726, %v733
        %v742 = vadd.f32 %v727, %v733
        %v743 = vmax.f32 %v735, 0.0
        %v744 = vmax.f32 %v736, 0.0
        %v745 = vmax.f32 %v737, 0.0
        %v746 = vmax.f32 %v738, 0.0
        %v747 = vmax.f32 %v739, 0.0
        %v748 = vmax.f32 %v740, 0.0
        %v749 = vmax.f32 %v741, 0.0
        %v750 = vmax.f32 %v742, 0.0
        %v751 = vpack.c.bf16 %v744, %v743
        %v752 = vpack.c.bf16 %v746, %v745
        %v753 = vpack.c.bf16 %v748, %v747
        %v754 = vpack.c.bf16 %v750, %v749
        %v759 = vunpack.c.l.b16 %v751
        %v760 = vunpack.c.h.b16 %v751
        %v761 = vunpack.c.l.b16 %v752
        %v762 = vunpack.c.h.b16 %v752
        %v763 = vunpack.c.l.b16 %v753
        %v764 = vunpack.c.h.b16 %v753
        %v765 = vunpack.c.l.b16 %v754
        %v766 = vunpack.c.h.b16 %v754
        %v767 = vpack.c.b16 %v759, %v759
        %v768 = vpack.c.b16 %v760, %v760
        %v769 = vpack.c.b16 %v761, %v761
        %v770 = vpack.c.b16 %v762, %v762
        %v771 = vpack.c.b16 %v763, %v763
        %v772 = vpack.c.b16 %v764, %v764
        %v773 = vpack.c.b16 %v765, %v765
        %v774 = vpack.c.b16 %v766, %v766
        %vm783 = vcmask 257024
        %784 = vst.msk [vmem:[%s225] sm:$0xf] %vm783, %v767
        %785 = vst.msk [vmem:[%s225 + $0x4] sm:$0xf] %vm783, %v768
        %786 = vst.msk [vmem:[%s225 + $0x8] sm:$0xf] %vm783, %v769
        %787 = vst.msk [vmem:[%s225 + $0xc] sm:$0xf] %vm783, %v770
        %788 = vst.msk [vmem:[%s225 + $0x10] sm:$0xf] %vm783, %v771
        %789 = vst.msk [vmem:[%s225 + $0x14] sm:$0xf] %vm783, %v772
        %790 = vst.msk [vmem:[%s225 + $0x18] sm:$0xf] %vm783, %v773
        %791 = vst.msk [vmem:[%s225 + $0x1c] sm:$0xf] %vm783, %v774
      $region40: #{deeplab_forward.11} parent=31 // pred_fallthru
        _
      %s792 = smul.u32 8, %s18
      %p793 = scmp.lt.s32.totalorder %s792, 15
      %s794 = scalar_select %p793, %s792, 15
      %s795 = smul.addr %s794, 4
      %s796 = scalar_lea.vmem %s3, %s795
      // Predicated region
      $region41: #{deeplab_forward.11} parent=31 // pred_check
        %p797 = pneg %p119
      $region42: #{deeplab_forward.11} parent=31 // pred_check_branch
        %799 = sbr.rel (%p797) target = $region44
      $region43: #{deeplab_forward.11} parent=31 // pred_region
        %s800 = smul.u32 8, %s18
      $region44: #{deeplab_forward.11} parent=31 // pred_fallthru
        _
    $region32: #{deeplab_forward.11} parent=5 // pred_fallthru
      _
    %p801 = scmp.le.s32.totalorder 2, %s9
    // Predicated region
    $region45: #{deeplab_forward.11} parent=5 // pred_check
      %p802 = pneg %p801
    $region46: #{deeplab_forward.11} parent=5 // pred_check_branch
      %804 = sbr.rel (%p802) target = $region48
    $region47: #{deeplab_forward.11} parent=5 // pred_region
      %s805 = ssub.s32 %s9, 2
      // Predicated region
      $region49: #{deeplab_forward.11} parent=47 // pred_check
        %p806 = pneg %p125
      $region50: #{deeplab_forward.11} parent=47 // pred_check_branch
        %808 = sbr.rel (%p806) target = $region52
      $region51: #{deeplab_forward.11} parent=47 // pred_region
        %s809 = smul.u32 8, %s20
        %p810 = scmp.lt.s32.totalorder %s809, 15
        %s811 = scalar_select %p810, %s809, 15
        %s812 = smul.addr %s811, 4
        %s813 = scalar_lea.vmem %s3, %s812
      $region52: #{deeplab_forward.11} parent=47 // pred_fallthru
        _
    $region48: #{deeplab_forward.11} parent=5 // pred_fallthru
      _
  $region6: #{deeplab_forward.11} parent=0 // loop_footer
    %s13 = sadd.s32 1, %s9
  $region7: #{deeplab_forward.11} parent=0 // loop_footer_branch
    %8 = sbr.rel target = $region3
  $region8: #{deeplab_forward.11} parent=0 // loop_exit
    _

// kernel: deeplab_forward.12
$region0: #{deeplab_forward.12}
  #allocation0 [shape = 'u32[]', space=smem, size = 0x4, offset = 0x4, fixed_abs, tag = 'smem constant byte address 0x4 - core index']
  #allocation1 [shape = 'u32[144,128]{1,0:T(1,128)}', space=vmem, size = 0x12000, scoped, tag = 'internal scratch']
  #allocation2 [shape = 'f32[64,32]{1,0:T(8,128)}', space=vmem, size = 0x8000, scoped, tag = 'scratch operand']
  %s0 = inlined_call_operand.vmem [shape: bf16[128,288], index: 0, kind: input, shape index: {}]
  %s1 = inlined_call_operand.vmem [shape: bf16[288,32], index: 1, kind: input, shape index: {}]
  %s2 = inlined_call_operand.vmem [shape: f32[1,32], index: 2, kind: input, shape index: {}]
  %s3 = inlined_call_operand.vmem [shape: bf16[128,32], index: 3, kind: output, shape index: {}]
  %s4 = sld [smem:[#allocation0]]
  $region53: #{deeplab_forward.12} parent=0
    _
  %s6 = ssub.s32 1, %s4
  %s7 = scalar_select 0, %s6, %s4
  loop: start=0, step=1, limit=4
  $region2: #{deeplab_forward.12} parent=0 // loop_pre_header
    _
  $region3: #{deeplab_forward.12} parent=0 // loop_header
    %s9 = sphi 0, %s13
    %p10 = scmp.ge.s32.totalorder %s9, 4
    %s16 = sphi 0, %s28
    %s17 = sphi 0, %s24
    %s18 = sphi 0, %s16
    %s19 = sphi 0, %s17
    %s20 = sphi 0, %s18
    %s21 = sphi 0, %s19
    %s33 = sphi 0, %s35
    %s36 = sphi 0, %s33
    %s37 = sphi 0, %s36
    %s53 = sphi 0, %s37
    %s59 = sphi 0, %s61
    %s62 = sphi 0, %s59
    %s63 = sphi 0, %s62
    %s79 = sphi 0, %s63
    %s83 = sphi 0, %s83
    %s85 = sphi 0, %s83
    %s86 = sphi 0, %s85
    %s100 = sphi 0, %s86
    %s106 = sphi 0, %s108
    %s109 = sphi 0, %s106
    %s110 = sphi 0, %s109
    %s126 = sphi 0, %s110
  $region4: #{deeplab_forward.12} parent=0 // loop_header_branch
    %12 = sbr.rel (%p10) target = $region8
  $region5: #{deeplab_forward.12} parent=0 // loop_body
    %s14 = ssub.s32 %s9, 1
    %s15 = ssub.s32 %s9, 2
    %s22 = sadd.s32 1, %s17
    %p23 = scmp.ge.s32.totalorder %s22, 1
    %s24 = scalar_select %p23, 0, %s22
    %s25 = sadd.s32 1, %s16
    %s26 = scalar_select %p23, %s25, %s16
    %p27 = scmp.ge.s32.totalorder %s26, 2
    %s28 = scalar_select %p27, 0, %s26
    %s29 = ssub.s32 %s16, %s28
    %s30 = ssub.s32 %s17, %s24
    %s31 = sor.u32 %s29, %s30
    %p32 = scmp.eq.s32.totalorder %s31, 0
    %s34 = sadd.s32 %s33, 1
    %s35 = scalar_select %p32, %s33, %s34
    %p38 = pneg %p32
    %p39 = scmp.eq.s32.totalorder %s9, 1
    %p40 = por %p38, %p39
    %p41 = scmp.ne.s32.totalorder %s33, %s36
    %p42 = scmp.eq.s32.totalorder %s9, 0
    %p43 = por %p41, %p42
    %p44 = scmp.ne.s32.totalorder %s33, %s36
    %p45 = scmp.eq.s32.totalorder %s14, 1
    %p46 = por %p44, %p45
    %p47 = scmp.ne.s32.totalorder %s36, %s37
    %p48 = scmp.eq.s32.totalorder %s14, 0
    %p49 = por %p47, %p48
    %p50 = scmp.ne.s32.totalorder %s36, %s37
    %p51 = scmp.eq.s32.totalorder %s15, 1
    %p52 = por %p50, %p51
    %p54 = scmp.ne.s32.totalorder %s37, %s53
    %p55 = scmp.eq.s32.totalorder %s15, 0
    %p56 = por %p54, %p55
    %s57 = ssub.s32 %s17, %s24
    %p58 = scmp.eq.s32.totalorder %s57, 0
    %s60 = sadd.s32 %s59, 1
    %s61 = scalar_select %p58, %s59, %s60
    %p64 = pneg %p58
    %p65 = scmp.eq.s32.totalorder %s9, 1
    %p66 = por %p64, %p65
    %p67 = scmp.ne.s32.totalorder %s59, %s62
    %p68 = scmp.eq.s32.totalorder %s9, 0
    %p69 = por %p67, %p68
    %p70 = scmp.ne.s32.totalorder %s59, %s62
    %p71 = scmp.eq.s32.totalorder %s14, 1
    %p72 = por %p70, %p71
    %p73 = scmp.ne.s32.totalorder %s62, %s63
    %p74 = scmp.eq.s32.totalorder %s14, 0
    %p75 = por %p73, %p74
    %p76 = scmp.ne.s32.totalorder %s62, %s63
    %p77 = scmp.eq.s32.totalorder %s15, 1
    %p78 = por %p76, %p77
    %p80 = scmp.ne.s32.totalorder %s63, %s79
    %p81 = scmp.eq.s32.totalorder %s15, 0
    %p82 = por %p80, %p81
    %s84 = sadd.s32 %s83, 1
    %p87 = scmp.eq.s32.totalorder %s9, 1
    %p88 = scmp.ne.s32.totalorder %s83, %s85
    %p89 = scmp.eq.s32.totalorder %s9, 0
    %p90 = por %p88, %p89
    %p91 = scmp.ne.s32.totalorder %s83, %s85
    %p92 = scmp.eq.s32.totalorder %s14, 1
    %p93 = por %p91, %p92
    %p94 = scmp.ne.s32.totalorder %s85, %s86
    %p95 = scmp.eq.s32.totalorder %s14, 0
    %p96 = por %p94, %p95
    %p97 = scmp.ne.s32.totalorder %s85, %s86
    %p98 = scmp.eq.s32.totalorder %s15, 1
    %p99 = por %p97, %p98
    %p101 = scmp.ne.s32.totalorder %s86, %s100
    %p102 = scmp.eq.s32.totalorder %s15, 0
    %p103 = por %p101, %p102
    %s104 = ssub.s32 %s16, %s28
    %p105 = scmp.eq.s32.totalorder %s104, 0
    %s107 = sadd.s32 %s106, 1
    %s108 = scalar_select %p105, %s106, %s107
    %p111 = pneg %p105
    %p112 = scmp.eq.s32.totalorder %s9, 1
    %p113 = por %p111, %p112
    %p114 = scmp.ne.s32.totalorder %s106, %s109
    %p115 = scmp.eq.s32.totalorder %s9, 0
    %p116 = por %p114, %p115
    %p117 = scmp.ne.s32.totalorder %s106, %s109
    %p118 = scmp.eq.s32.totalorder %s14, 1
    %p119 = por %p117, %p118
    %p120 = scmp.ne.s32.totalorder %s109, %s110
    %p121 = scmp.eq.s32.totalorder %s14, 0
    %p122 = por %p120, %p121
    %p123 = scmp.ne.s32.totalorder %s109, %s110
    %p124 = scmp.eq.s32.totalorder %s15, 1
    %p125 = por %p123, %p124
    %p127 = scmp.ne.s32.totalorder %s110, %s126
    %p128 = scmp.eq.s32.totalorder %s15, 0
    %p129 = por %p127, %p128
    %p130 = scmp.le.s32.totalorder 1, %s9
    %p131 = scmp.lt.s32.totalorder %s9, 3
    %p132 = pnand %p130, %p131
    %p133 = pneg %p132
    // Predicated region
    $region9: #{deeplab_forward.12} parent=5 // pred_check
      _
    $region10: #{deeplab_forward.12} parent=5 // pred_check_branch
      %135 = sbr.rel (%p132) target = $region12
    $region11: #{deeplab_forward.12} parent=5 // pred_region
      %s136 = ssub.s32 %s9, 1
      // Predicated region
      $region13: #{deeplab_forward.12} parent=11 // pred_check
        %p137 = pneg %p75
      $region14: #{deeplab_forward.12} parent=11 // pred_check_branch
        %139 = sbr.rel (%p137) target = $region16
      $region15: #{deeplab_forward.12} parent=11 // pred_region
        %s140 = smul.u32 36, %s19
        %p141 = scmp.lt.s32.totalorder %s140, 35
        %s142 = scalar_select %p141, %s140, 35
        %s143 = smul.addr %s142, 4
        %s144 = scalar_lea.vmem %s1, %s143
        %s145 = smul.u32 36, %s19
      $region16: #{deeplab_forward.12} parent=11 // pred_fallthru
        _
      // Predicated region
      $region17: #{deeplab_forward.12} parent=11 // pred_check
        %p146 = pneg %p96
      $region18: #{deeplab_forward.12} parent=11 // pred_check_branch
        %148 = sbr.rel (%p146) target = $region20
      $region19: #{deeplab_forward.12} parent=11 // pred_region
        _
      $region20: #{deeplab_forward.12} parent=11 // pred_fallthru
        _
    $region12: #{deeplab_forward.12} parent=5 // pred_fallthru
      _
    %p149 = scmp.lt.s32.totalorder %s9, 2
    // Predicated region
    $region21: #{deeplab_forward.12} parent=5 // pred_check
      %p150 = pneg %p149
    $region22: #{deeplab_forward.12} parent=5 // pred_check_branch
      %152 = sbr.rel (%p150) target = $region24
    $region23: #{deeplab_forward.12} parent=5 // pred_region
      // Predicated region
      $region25: #{deeplab_forward.12} parent=23 // pred_check
        %p153 = pneg %p43
      $region26: #{deeplab_forward.12} parent=23 // pred_check_branch
        %155 = sbr.rel (%p153) target = $region28
      $region27: #{deeplab_forward.12} parent=23 // pred_region
        %s156 = smul.u32 8, %s16
        %s157 = smul.u32 3, %s17
        %p158 = scmp.lt.s32.totalorder %s156, 15
        %s159 = scalar_select %p158, %s156, 15
        %p160 = scmp.lt.s32.totalorder %s157, 2
        %s161 = scalar_select %p160, %s157, 2
        %s162 = smul.addr %s159, 3
        %s163 = sadd.s32 %s161, %s162
        %s164 = smul.addr %s163, 4
        %s165 = scalar_lea.vmem %s0, %s164
        %s166 = smul.u32 8, %s16
        %s167 = smul.u32 3, %s17
      $region28: #{deeplab_forward.12} parent=23 // pred_fallthru
        _
    $region24: #{deeplab_forward.12} parent=5 // pred_fallthru
      _
    %p168 = scmp.le.s32.totalorder 1, %s9
    %p169 = scmp.lt.s32.totalorder %s9, 3
    %p170 = pnand %p168, %p169
    %p171 = pneg %p170
    // Predicated region
    $region29: #{deeplab_forward.12} parent=5 // pred_check
      _
    $region30: #{deeplab_forward.12} parent=5 // pred_check_branch
      %173 = sbr.rel (%p170) target = $region32
    $region31: #{deeplab_forward.12} parent=5 // pred_region
      %s174 = ssub.s32 %s9, 1
      %s175 = smul.u32 8, %s18
      %s176 = smul.u32 3, %s19
      %p177 = scmp.lt.s32.totalorder %s175, 15
      %s178 = scalar_select %p177, %s175, 15
      %p179 = scmp.lt.s32.totalorder %s176, 2
      %s180 = scalar_select %p179, %s176, 2
      %s181 = smul.addr %s178, 3
      %s182 = sadd.s32 %s180, %s181
      %s183 = smul.addr %s182, 4
      %s184 = scalar_lea.vmem %s0, %s183
      %p185 = pneg %p49
      %p186 = pneg %p46
      %s187 = smul.u32 36, %s19
      %p188 = scmp.lt.s32.totalorder %s187, 35
      %s189 = scalar_select %p188, %s187, 35
      %s190 = smul.addr %s189, 4
      %s191 = scalar_lea.vmem %s1, %s190
      %p192 = pneg %p75
      %p193 = pneg %p72
      %p194 = pneg %p96
      %p195 = pneg %p93
      %p196 = pneg %p122
      %p197 = pneg %p119
      %s198 = smul.u32 8, %s18
      %p199 = scmp.lt.s32.totalorder %s198, 15
      %s200 = scalar_select %p199, %s198, 15
      %s201 = smul.addr %s200, 4
      %s202 = scalar_lea.vmem %s3, %s201
      %s203 = smul.u32 8, %s18
      %s204 = smul.u32 3, %s19
      %p205 = scmp.lt.s32.totalorder %s203, 15
      %s206 = scalar_select %p205, %s203, 15
      %p207 = scmp.lt.s32.totalorder %s204, 2
      %s208 = scalar_select %p207, %s204, 2
      %s209 = smul.addr %s206, 3
      %s210 = sadd.s32 %s208, %s209
      %s211 = smul.addr %s210, 4
      %s212 = scalar_lea.vmem %s0, %s211
      %s213 = smul.u32 8, %s18
      %s214 = smul.u32 3, %s19
      %s215 = smul.u32 36, %s19
      %p216 = scmp.lt.s32.totalorder %s215, 35
      %s217 = scalar_select %p216, %s215, 35
      %s218 = smul.addr %s217, 4
      %s219 = scalar_lea.vmem %s1, %s218
      %s220 = smul.u32 36, %s19
      %s221 = smul.u32 8, %s18
      %p222 = scmp.lt.s32.totalorder %s221, 15
      %s223 = scalar_select %p222, %s221, 15
      %s224 = smul.addr %s223, 4
      %s225 = scalar_lea.vmem %s3, %s224
      %s226 = smul.u32 8, %s18
      %p228 = scmp.eq.s32.totalorder %s19, 0
      // Predicated region
      $region33: #{deeplab_forward.12} parent=31 // pred_check
        %p229 = pneg %p228
      $region34: #{deeplab_forward.12} parent=31 // pred_check_branch
        %231 = sbr.rel (%p229) target = $region36
      $region35: #{deeplab_forward.12} parent=31 // pred_region
        %vm232 = vcmask 261120
        %233 = vst.msk [vmem:[#allocation2] sm:$0xff] %vm232, 0.0
        %234 = vst.msk [vmem:[#allocation2 + $0x8] sm:$0xff] %vm232, 0.0
        %235 = vst.msk [vmem:[#allocation2 + $0x10] sm:$0xff] %vm232, 0.0
        %236 = vst.msk [vmem:[#allocation2 + $0x18] sm:$0xff] %vm232, 0.0
        %237 = vst.msk [vmem:[#allocation2 + $0x20] sm:$0xff] %vm232, 0.0
        %238 = vst.msk [vmem:[#allocation2 + $0x28] sm:$0xff] %vm232, 0.0
        %239 = vst.msk [vmem:[#allocation2 + $0x30] sm:$0xff] %vm232, 0.0
        %240 = vst.msk [vmem:[#allocation2 + $0x38] sm:$0xff] %vm232, 0.0
      $region36: #{deeplab_forward.12} parent=31 // pred_fallthru
        _
      %v241 = vld [vmem:[#allocation2] sm:$0xff]
      %v242 = vld [vmem:[#allocation2 + $0x8] sm:$0xff]
      %v243 = vld [vmem:[#allocation2 + $0x10] sm:$0xff]
      %v244 = vld [vmem:[#allocation2 + $0x18] sm:$0xff]
      %v245 = vld [vmem:[#allocation2 + $0x20] sm:$0xff]
      %v246 = vld [vmem:[#allocation2 + $0x28] sm:$0xff]
      %v247 = vld [vmem:[#allocation2 + $0x30] sm:$0xff]
      %v248 = vld [vmem:[#allocation2 + $0x38] sm:$0xff]
      %v249 = vld [vmem:[%s212] sm:$0xff]
      %v250 = vld [vmem:[%s212 + $0x8] sm:$0xf]
      %v251 = vld [vmem:[%s212 + $0xc] sm:$0xff]
      %v252 = vld [vmem:[%s212 + $0x14] sm:$0xf]
      %v253 = vld [vmem:[%s212 + $0x18] sm:$0xff]
      %v254 = vld [vmem:[%s212 + $0x20] sm:$0xf]
      %v255 = vld [vmem:[%s212 + $0x24] sm:$0xff]
      %v256 = vld [vmem:[%s212 + $0x2c] sm:$0xf]
      %v257 = vld [vmem:[%s212 + $0x30] sm:$0xff]
      %v258 = vld [vmem:[%s212 + $0x38] sm:$0xf]
      %v259 = vld [vmem:[%s212 + $0x3c] sm:$0xff]
      %v260 = vld [vmem:[%s212 + $0x44] sm:$0xf]
      %v261 = vld [vmem:[%s212 + $0x48] sm:$0xff]
      %v262 = vld [vmem:[%s212 + $0x50] sm:$0xf]
      %v263 = vld [vmem:[%s212 + $0x54] sm:$0xff]
      %v264 = vld [vmem:[%s212 + $0x5c] sm:$0xf]
      %v265 = vld [vmem:[%s219] sm:$0xf]
      %v266 = vld [vmem:[%s219 + $0x4] sm:$0xf]
      %v267 = vld [vmem:[%s219 + $0x8] sm:$0xf]
      %v268 = vld [vmem:[%s219 + $0xc] sm:$0xf]
      %v269 = vld [vmem:[%s219 + $0x10] sm:$0xf]
      %v270 = vld [vmem:[%s219 + $0x14] sm:$0xf]
      %v271 = vld [vmem:[%s219 + $0x18] sm:$0xf]
      %v272 = vld [vmem:[%s219 + $0x1c] sm:$0xf]
      %v273 = vld [vmem:[%s219 + $0x20] sm:$0xf]
      %v274 = vld [vmem:[%s219 + $0x24] sm:$0xf]
      %v275 = vld [vmem:[%s219 + $0x28] sm:$0xf]
      %v276 = vld [vmem:[%s219 + $0x2c] sm:$0xf]
      %v277 = vld [vmem:[%s219 + $0x30] sm:$0xf]
      %v278 = vld [vmem:[%s219 + $0x34] sm:$0xf]
      %v279 = vld [vmem:[%s219 + $0x38] sm:$0xf]
      %v280 = vld [vmem:[%s219 + $0x3c] sm:$0xf]
      %v281 = vld [vmem:[%s219 + $0x40] sm:$0xf]
      %v282 = vld [vmem:[%s219 + $0x44] sm:$0xf]
      %v283 = vld [vmem:[%s219 + $0x48] sm:$0xf]
      %v284 = vld [vmem:[%s219 + $0x4c] sm:$0xf]
      %v285 = vld [vmem:[%s219 + $0x50] sm:$0xf]
      %v286 = vld [vmem:[%s219 + $0x54] sm:$0xf]
      %v287 = vld [vmem:[%s219 + $0x58] sm:$0xf]
      %v288 = vld [vmem:[%s219 + $0x5c] sm:$0xf]
      %v289 = vld [vmem:[%s219 + $0x60] sm:$0xf]
      %v290 = vld [vmem:[%s219 + $0x64] sm:$0xf]
      %v291 = vld [vmem:[%s219 + $0x68] sm:$0xf]
      %v292 = vld [vmem:[%s219 + $0x6c] sm:$0xf]
      %v293 = vld [vmem:[%s219 + $0x70] sm:$0xf]
      %v294 = vld [vmem:[%s219 + $0x74] sm:$0xf]
      %v295 = vld [vmem:[%s219 + $0x78] sm:$0xf]
      %v296 = vld [vmem:[%s219 + $0x7c] sm:$0xf]
      %v297 = vld [vmem:[%s219 + $0x80] sm:$0xf]
      %v298 = vld [vmem:[%s219 + $0x84] sm:$0xf]
      %v299 = vld [vmem:[%s219 + $0x88] sm:$0xf]
      %v300 = vld [vmem:[%s219 + $0x8c] sm:$0xf]
      %v317 = vunpack.c.l.b16 %v249
      %v318 = vunpack.c.h.b16 %v249
      %v319 = vunpack.c.l.b16 %v250
      %v320 = vunpack.c.l.b16 %v251
      %v321 = vunpack.c.h.b16 %v251
      %v322 = vunpack.c.l.b16 %v252
      %v323 = vunpack.c.l.b16 %v253
      %v324 = vunpack.c.h.b16 %v253
      %v325 = vunpack.c.l.b16 %v254
      %v326 = vunpack.c.l.b16 %v255
      %v327 = vunpack.c.h.b16 %v255
      %v328 = vunpack.c.l.b16 %v256
      %v329 = vunpack.c.l.b16 %v257
      %v330 = vunpack.c.h.b16 %v257
      %v331 = vunpack.c.l.b16 %v258
      %v332 = vunpack.c.l.b16 %v259
      %v333 = vunpack.c.h.b16 %v259
      %v334 = vunpack.c.l.b16 %v260
      %v335 = vunpack.c.l.b16 %v261
      %v336 = vunpack.c.h.b16 %v261
      %v337 = vunpack.c.l.b16 %v262
      %v338 = vunpack.c.l.b16 %v263
      %v339 = vunpack.c.h.b16 %v263
      %v340 = vunpack.c.l.b16 %v264
      %v341 = vpack.c.b16 %v320, %v317
      %v342 = vpack.c.b16 %v321, %v318
      %v343 = vpack.c.b16 %v322, %v319
      %v344 = vpack.c.b16 %v326, %v323
      %v345 = vpack.c.b16 %v327, %v324
      %v346 = vpack.c.b16 %v328, %v325
      %v347 = vpack.c.b16 %v332, %v329
      %v348 = vpack.c.b16 %v333, %v330
      %v349 = vpack.c.b16 %v334, %v331
      %v350 = vpack.c.b16 %v338, %v335
      %v351 = vpack.c.b16 %v339, %v336
      %v352 = vpack.c.b16 %v340, %v337
      %v397 = vunpack.c.l.b16 %v265
      %v398 = vunpack.c.l.b16 %v266
      %v399 = vunpack.c.l.b16 %v267
      %v400 = vunpack.c.l.b16 %v268
      %v401 = vunpack.c.l.b16 %v269
      %v402 = vunpack.c.l.b16 %v270
      %v403 = vunpack.c.l.b16 %v271
      %v404 = vunpack.c.l.b16 %v272
      %v405 = vunpack.c.l.b16 %v273
      %v406 = vunpack.c.l.b16 %v274
      %v407 = vunpack.c.l.b16 %v275
      %v408 = vunpack.c.l.b16 %v276
      %v409 = vunpack.c.l.b16 %v277
      %v410 = vunpack.c.l.b16 %v278
      %v411 = vunpack.c.l.b16 %v279
      %v412 = vunpack.c.l.b16 %v280
      %v413 = vunpack.c.l.b16 %v281
      %v414 = vunpack.c.l.b16 %v282
      %v415 = vunpack.c.l.b16 %v283
      %v416 = vunpack.c.l.b16 %v284
      %v417 = vunpack.c.l.b16 %v285
      %v418 = vunpack.c.l.b16 %v286
      %v419 = vunpack.c.l.b16 %v287
      %v420 = vunpack.c.l.b16 %v288
      %v421 = vunpack.c.l.b16 %v289
      %v422 = vunpack.c.l.b16 %v290
      %v423 = vunpack.c.l.b16 %v291
      %v424 = vunpack.c.l.b16 %v292
      %v425 = vunpack.c.l.b16 %v293
      %v426 = vunpack.c.l.b16 %v294
      %v427 = vunpack.c.l.b16 %v295
      %v428 = vunpack.c.l.b16 %v296
      %v429 = vunpack.c.l.b16 %v297
      %v430 = vunpack.c.l.b16 %v298
      %v431 = vunpack.c.l.b16 %v299
      %v432 = vunpack.c.l.b16 %v300
      %v433 = vpack.c.b16 %v398, %v397
      %v434 = vpack.c.b16 %v400, %v399
      %v435 = vpack.c.b16 %v402, %v401
      %v436 = vpack.c.b16 %v404, %v403
      %v437 = vpack.c.b16 %v406, %v405
      %v438 = vpack.c.b16 %v408, %v407
      %v439 = vpack.c.b16 %v410, %v409
      %v440 = vpack.c.b16 %v412, %v411
      %v441 = vpack.c.b16 %v414, %v413
      %v442 = vpack.c.b16 %v416, %v415
      %v443 = vpack.c.b16 %v418, %v417
      %v444 = vpack.c.b16 %v420, %v419
      %v445 = vpack.c.b16 %v422, %v421
      %v446 = vpack.c.b16 %v424, %v423
      %v447 = vpack.c.b16 %v426, %v425
      %v448 = vpack.c.b16 %v428, %v427
      %v449 = vpack.c.b16 %v430, %v429
      %v450 = vpack.c.b16 %v432, %v431
      %vm469 = vcmask 261120
      %v471 = vsel %vm469, %v343, 0
      %v474 = vsel %vm469, %v346, 0
      %v477 = vsel %vm469, %v349, 0
      %v480 = vsel %vm469, %v352, 0
      %482 = vmatprep.subr.bf16.mxu0 0
      %483 = vmatpush1.bf16.msra.mxu0 %v440
      %484 = vmatprep.subr.bf16.mxu0 0
      %485 = vmatpush1.bf16.msra.mxu0 %v439
      %486 = vmatprep.subr.bf16.mxu0 0
      %487 = vmatpush1.bf16.msra.mxu0 %v438
      %488 = vmatprep.subr.bf16.mxu0 0
      %489 = vmatpush1.bf16.msra.mxu0 %v437
      %490 = vmatprep.subr.bf16.mxu0 0
      %491 = vmatpush1.bf16.msra.mxu0 %v436
      %492 = vmatprep.subr.bf16.mxu0 0
      %493 = vmatpush1.bf16.msra.mxu0 %v435
      %494 = vmatprep.subr.bf16.mxu0 0
      %495 = vmatpush1.bf16.msra.mxu0 %v434
      %496 = vmatprep.subr.bf16.mxu0 0
      %497 = vmatpush1.bf16.msra.mxu0 %v433
      %498 = vmatprep.subr.bf16.mxu0 0
      %499 = vmatpush2.bf16.msra.mxu0 %v448
      %500 = vmatprep.subr.bf16.mxu0 0
      %501 = vmatpush2.bf16.msra.mxu0 %v447
      %502 = vmatprep.subr.bf16.mxu0 0
      %503 = vmatpush2.bf16.msra.mxu0 %v446
      %504 = vmatprep.subr.bf16.mxu0 0
      %505 = vmatpush2.bf16.msra.mxu0 %v445
      %506 = vmatprep.subr.bf16.mxu0 0
      %507 = vmatpush2.bf16.msra.mxu0 %v444
      %508 = vmatprep.subr.bf16.mxu0 0
      %509 = vmatpush2.bf16.msra.mxu0 %v443
      %510 = vmatprep.subr.bf16.mxu0 0
      %511 = vmatpush2.bf16.msra.mxu0 %v442
      %512 = vmatprep.subr.bf16.mxu0 0
      %513 = vmatpush2.bf16.msra.mxu0 %v441
      %514 = vmatprep.mubr.bf16.mxu0 %v342
      %515 = vmatmul.mubr.bf16.gmra.mxu0 %v341
      %v516 = vpop.f32.mrf.mxu0
      %v517 = vadd.f32 0.0, %v516
      %v518 = vpop.f32.mrf.mxu0
      %v519 = vpop.f32.mrf.mxu0
      %v520 = vadd.f32 0.0, %v519
      %v521 = vpop.f32.mrf.mxu0
      %522 = vmatprep.mubr.bf16.mxu0 %v345
      %523 = vmatmul.mubr.bf16.gmra.mxu0 %v344
      %v524 = vpop.f32.mrf.mxu0
      %v525 = vadd.f32 0.0, %v524
      %v526 = vpop.f32.mrf.mxu0
      %v527 = vpop.f32.mrf.mxu0
      %v528 = vadd.f32 0.0, %v527
      %v529 = vpop.f32.mrf.mxu0
      %530 = vmatprep.mubr.bf16.mxu0 %v348
      %531 = vmatmul.mubr.bf16.gmra.mxu0 %v347
      %v532 = vpop.f32.mrf.mxu0
      %v533 = vadd.f32 0.0, %v532
      %v534 = vpop.f32.mrf.mxu0
      %v535 = vpop.f32.mrf.mxu0
      %v536 = vadd.f32 0.0, %v535
      %v537 = vpop.f32.mrf.mxu0
      %538 = vmatprep.mubr.bf16.mxu0 %v351
      %539 = vmatmul.mubr.bf16.gmra.mxu0 %v350
      %v540 = vpop.f32.mrf.mxu0
      %v541 = vadd.f32 0.0, %v540
      %v542 = vpop.f32.mrf.mxu0
      %v543 = vpop.f32.mrf.mxu0
      %v544 = vadd.f32 0.0, %v543
      %v545 = vpop.f32.mrf.mxu0
      %546 = vdwg.mxu0
      %547 = vmatprep.subr.bf16.mxu0 0
      %548 = vmatpush1.bf16.msra.mxu0 0
      %549 = vmatprep.subr.bf16.mxu0 0
      %550 = vmatpush1.bf16.msra.mxu0 0
      %551 = vmatprep.subr.bf16.mxu0 0
      %552 = vmatpush1.bf16.msra.mxu0 0
      %553 = vmatprep.subr.bf16.mxu0 0
      %554 = vmatpush1.bf16.msra.mxu0 0
      %555 = vmatprep.subr.bf16.mxu0 0
      %556 = vmatpush1.bf16.msra.mxu0 0
      %557 = vmatprep.subr.bf16.mxu0 0
      %558 = vmatpush1.bf16.msra.mxu0 0
      %559 = vmatprep.subr.bf16.mxu0 0
      %560 = vmatpush1.bf16.msra.mxu0 %v450
      %561 = vmatprep.subr.bf16.mxu0 0
      %562 = vmatpush1.bf16.msra.mxu0 %v449
      %563 = vmatprep.subr.bf16.mxu0 0
      %564 = vmatpush2.bf16.msra.mxu0 0
      %565 = vmatprep.subr.bf16.mxu0 0
      %566 = vmatpush2.bf16.msra.mxu0 0
      %567 = vmatprep.subr.bf16.mxu0 0
      %568 = vmatpush2.bf16.msra.mxu0 0
      %569 = vmatprep.subr.bf16.mxu0 0
      %570 = vmatpush2.bf16.msra.mxu0 0
      %571 = vmatprep.subr.bf16.mxu0 0
      %572 = vmatpush2.bf16.msra.mxu0 0
      %573 = vmatprep.subr.bf16.mxu0 0
      %574 = vmatpush2.bf16.msra.mxu0 0
      %575 = vmatprep.subr.bf16.mxu0 0
      %576 = vmatpush2.bf16.msra.mxu0 0
      %577 = vmatprep.subr.bf16.mxu0 0
      %578 = vmatpush2.bf16.msra.mxu0 0
      %579 = vmatprep.mubr.bf16.mxu0 0
      %580 = vmatmul.mubr.bf16.gmra.mxu0 %v471
      %v581 = vpop.f32.mrf.mxu0
      %v582 = vadd.f32 %v517, %v581
      %v583 = vpop.f32.mrf.mxu0
      %v584 = vpop.f32.mrf.mxu0
      %v585 = vadd.f32 %v520, %v584
      %v586 = vpop.f32.mrf.mxu0
      %587 = vmatprep.mubr.bf16.mxu0 0
      %588 = vmatmul.mubr.bf16.gmra.mxu0 %v474
      %v589 = vpop.f32.mrf.mxu0
      %v590 = vadd.f32 %v525, %v589
      %v591 = vpop.f32.mrf.mxu0
      %v592 = vpop.f32.mrf.mxu0
      %v593 = vadd.f32 %v528, %v592
      %v594 = vpop.f32.mrf.mxu0
      %595 = vmatprep.mubr.bf16.mxu0 0
      %596 = vmatmul.mubr.bf16.gmra.mxu0 %v477
      %v597 = vpop.f32.mrf.mxu0
      %v598 = vadd.f32 %v533, %v597
      %v599 = vpop.f32.mrf.mxu0
      %v600 = vpop.f32.mrf.mxu0
      %v601 = vadd.f32 %v536, %v600
      %v602 = vpop.f32.mrf.mxu0
      %603 = vmatprep.mubr.bf16.mxu0 0
      %604 = vmatmul.mubr.bf16.gmra.mxu0 %v480
      %v605 = vpop.f32.mrf.mxu0
      %v606 = vadd.f32 %v541, %v605
      %v607 = vpop.f32.mrf.mxu0
      %v608 = vpop.f32.mrf.mxu0
      %v609 = vadd.f32 %v544, %v608
      %v610 = vpop.f32.mrf.mxu0
      %611 = vdwg.mxu0
      %v612 = vadd.f32 %v241, %v582
      %v613 = vadd.f32 %v242, %v585
      %v614 = vadd.f32 %v243, %v590
      %v615 = vadd.f32 %v244, %v593
      %v616 = vadd.f32 %v245, %v598
      %v617 = vadd.f32 %v246, %v601
      %v618 = vadd.f32 %v247, %v606
      %v619 = vadd.f32 %v248, %v609
      %620 = vst.msk [vmem:[#allocation2] sm:$0xff] %vm469, %v612
      %621 = vst.msk [vmem:[#allocation2 + $0x8] sm:$0xff] %vm469, %v613
      %622 = vst.msk [vmem:[#allocation2 + $0x10] sm:$0xff] %vm469, %v614
      %623 = vst.msk [vmem:[#allocation2 + $0x18] sm:$0xff] %vm469, %v615
      %624 = vst.msk [vmem:[#allocation2 + $0x20] sm:$0xff] %vm469, %v616
      %625 = vst.msk [vmem:[#allocation2 + $0x28] sm:$0xff] %vm469, %v617
      %626 = vst.msk [vmem:[#allocation2 + $0x30] sm:$0xff] %vm469, %v618
      %627 = vst.msk [vmem:[#allocation2 + $0x38] sm:$0xff] %vm469, %v619
      // Predicated region
      $region37: #{deeplab_forward.12} parent=31 // pred_check
        %p628 = pneg %p228
      $region38: #{deeplab_forward.12} parent=31 // pred_check_branch
        %630 = sbr.rel (%p628) target = $region40
      $region39: #{deeplab_forward.12} parent=31 // pred_region
        %v631 = vld [vmem:[#allocation2] sm:$0xff]
        %v632 = vld [vmem:[#allocation2 + $0x8] sm:$0xff]
        %v633 = vld [vmem:[#allocation2 + $0x10] sm:$0xff]
        %v634 = vld [vmem:[#allocation2 + $0x18] sm:$0xff]
        %v635 = vld [vmem:[#allocation2 + $0x20] sm:$0xff]
        %v636 = vld [vmem:[#allocation2 + $0x28] sm:$0xff]
        %v637 = vld [vmem:[#allocation2 + $0x30] sm:$0xff]
        %v638 = vld [vmem:[#allocation2 + $0x38] sm:$0xff]
        %v639 = vld [vmem:[%s2] sm:$0x1]
        %v641 = vlaneseq
        %v642 = vshrl.u32 %v641, 7
        %v643 = vsub.s32 0, %v642
        %v644 = vrot.slane %v639, %v643
        %v646 = vadd.f32 %v631, %v644
        %v647 = vadd.f32 %v632, %v644
        %v648 = vadd.f32 %v633, %v644
        %v649 = vadd.f32 %v634, %v644
        %v650 = vadd.f32 %v635, %v644
        %v651 = vadd.f32 %v636, %v644
        %v652 = vadd.f32 %v637, %v644
        %v653 = vadd.f32 %v638, %v644
        %v654 = vmax.f32 %v646, 0.0
        %v655 = vmax.f32 %v647, 0.0
        %v656 = vmax.f32 %v648, 0.0
        %v657 = vmax.f32 %v649, 0.0
        %v658 = vmax.f32 %v650, 0.0
        %v659 = vmax.f32 %v651, 0.0
        %v660 = vmax.f32 %v652, 0.0
        %v661 = vmax.f32 %v653, 0.0
        %v662 = vpack.c.bf16 %v655, %v654
        %v663 = vpack.c.bf16 %v657, %v656
        %v664 = vpack.c.bf16 %v659, %v658
        %v665 = vpack.c.bf16 %v661, %v660
        %v670 = vunpack.c.l.b16 %v662
        %v671 = vunpack.c.h.b16 %v662
        %v672 = vunpack.c.l.b16 %v663
        %v673 = vunpack.c.h.b16 %v663
        %v674 = vunpack.c.l.b16 %v664
        %v675 = vunpack.c.h.b16 %v664
        %v676 = vunpack.c.l.b16 %v665
        %v677 = vunpack.c.h.b16 %v665
        %v678 = vpack.c.b16 %v670, %v670
        %v679 = vpack.c.b16 %v671, %v671
        %v680 = vpack.c.b16 %v672, %v672
        %v681 = vpack.c.b16 %v673, %v673
        %v682 = vpack.c.b16 %v674, %v674
        %v683 = vpack.c.b16 %v675, %v675
        %v684 = vpack.c.b16 %v676, %v676
        %v685 = vpack.c.b16 %v677, %v677
        %vm694 = vcmask 257024
        %695 = vst.msk [vmem:[%s225] sm:$0xf] %vm694, %v678
        %696 = vst.msk [vmem:[%s225 + $0x4] sm:$0xf] %vm694, %v679
        %697 = vst.msk [vmem:[%s225 + $0x8] sm:$0xf] %vm694, %v680
        %698 = vst.msk [vmem:[%s225 + $0xc] sm:$0xf] %vm694, %v681
        %699 = vst.msk [vmem:[%s225 + $0x10] sm:$0xf] %vm694, %v682
        %700 = vst.msk [vmem:[%s225 + $0x14] sm:$0xf] %vm694, %v683
        %701 = vst.msk [vmem:[%s225 + $0x18] sm:$0xf] %vm694, %v684
        %702 = vst.msk [vmem:[%s225 + $0x1c] sm:$0xf] %vm694, %v685
      $region40: #{deeplab_forward.12} parent=31 // pred_fallthru
        _
      %s703 = smul.u32 8, %s18
      %p704 = scmp.lt.s32.totalorder %s703, 15
      %s705 = scalar_select %p704, %s703, 15
      %s706 = smul.addr %s705, 4
      %s707 = scalar_lea.vmem %s3, %s706
      // Predicated region
      $region41: #{deeplab_forward.12} parent=31 // pred_check
        %p708 = pneg %p119
      $region42: #{deeplab_forward.12} parent=31 // pred_check_branch
        %710 = sbr.rel (%p708) target = $region44
      $region43: #{deeplab_forward.12} parent=31 // pred_region
        %s711 = smul.u32 8, %s18
      $region44: #{deeplab_forward.12} parent=31 // pred_fallthru
        _
    $region32: #{deeplab_forward.12} parent=5 // pred_fallthru
      _
    %p712 = scmp.le.s32.totalorder 2, %s9
    // Predicated region
    $region45: #{deeplab_forward.12} parent=5 // pred_check
      %p713 = pneg %p712
    $region46: #{deeplab_forward.12} parent=5 // pred_check_branch
      %715 = sbr.rel (%p713) target = $region48
    $region47: #{deeplab_forward.12} parent=5 // pred_region
      %s716 = ssub.s32 %s9, 2
      // Predicated region
      $region49: #{deeplab_forward.12} parent=47 // pred_check
        %p717 = pneg %p125
      $region50: #{deeplab_forward.12} parent=47 // pred_check_branch
        %719 = sbr.rel (%p717) target = $region52
      $region51: #{deeplab_forward.12} parent=47 // pred_region
        %s720 = smul.u32 8, %s20
        %p721 = scmp.lt.s32.totalorder %s720, 15
        %s722 = scalar_select %p721, %s720, 15
        %s723 = smul.addr %s722, 4
        %s724 = scalar_lea.vmem %s3, %s723
      $region52: #{deeplab_forward.12} parent=47 // pred_fallthru
        _
    $region48: #{deeplab_forward.12} parent=5 // pred_fallthru
      _
  $region6: #{deeplab_forward.12} parent=0 // loop_footer
    %s13 = sadd.s32 1, %s9
  $region7: #{deeplab_forward.12} parent=0 // loop_footer_branch
    %8 = sbr.rel target = $region3
  $region8: #{deeplab_forward.12} parent=0 // loop_exit
    _

// kernel: deeplab_forward.13
$region0: #{deeplab_forward.13}
  #allocation0 [shape = 'u32[]', space=smem, size = 0x4, offset = 0x4, fixed_abs, tag = 'smem constant byte address 0x4 - core index']
  #allocation1 [shape = 'u32[144,128]{1,0:T(1,128)}', space=vmem, size = 0x12000, scoped, tag = 'internal scratch']
  #allocation2 [shape = 'f32[64,4]{1,0:T(8,128)}', space=vmem, size = 0x8000, scoped, tag = 'scratch operand']
  %s0 = inlined_call_operand.vmem [shape: bf16[128,32], index: 0, kind: input, shape index: {}]
  %s1 = inlined_call_operand.vmem [shape: bf16[32,4], index: 1, kind: input, shape index: {}]
  %s2 = inlined_call_operand.vmem [shape: f32[1,4], index: 2, kind: input, shape index: {}]
  %s3 = inlined_call_operand.vmem [shape: f32[128,4], index: 3, kind: output, shape index: {}]
  %s4 = sld [smem:[#allocation0]]
  $region53: #{deeplab_forward.13} parent=0
    _
  %s6 = ssub.s32 1, %s4
  %s7 = scalar_select 0, %s6, %s4
  loop: start=0, step=1, limit=4
  $region2: #{deeplab_forward.13} parent=0 // loop_pre_header
    _
  $region3: #{deeplab_forward.13} parent=0 // loop_header
    %s9 = sphi 0, %s13
    %p10 = scmp.ge.s32.totalorder %s9, 4
    %s16 = sphi 0, %s28
    %s17 = sphi 0, %s24
    %s18 = sphi 0, %s16
    %s19 = sphi 0, %s17
    %s20 = sphi 0, %s18
    %s21 = sphi 0, %s19
    %s33 = sphi 0, %s35
    %s36 = sphi 0, %s33
    %s37 = sphi 0, %s36
    %s53 = sphi 0, %s37
    %s59 = sphi 0, %s61
    %s62 = sphi 0, %s59
    %s63 = sphi 0, %s62
    %s79 = sphi 0, %s63
    %s83 = sphi 0, %s83
    %s85 = sphi 0, %s83
    %s86 = sphi 0, %s85
    %s100 = sphi 0, %s86
    %s106 = sphi 0, %s108
    %s109 = sphi 0, %s106
    %s110 = sphi 0, %s109
    %s126 = sphi 0, %s110
  $region4: #{deeplab_forward.13} parent=0 // loop_header_branch
    %12 = sbr.rel (%p10) target = $region8
  $region5: #{deeplab_forward.13} parent=0 // loop_body
    %s14 = ssub.s32 %s9, 1
    %s15 = ssub.s32 %s9, 2
    %s22 = sadd.s32 1, %s17
    %p23 = scmp.ge.s32.totalorder %s22, 1
    %s24 = scalar_select %p23, 0, %s22
    %s25 = sadd.s32 1, %s16
    %s26 = scalar_select %p23, %s25, %s16
    %p27 = scmp.ge.s32.totalorder %s26, 2
    %s28 = scalar_select %p27, 0, %s26
    %s29 = ssub.s32 %s16, %s28
    %s30 = ssub.s32 %s17, %s24
    %s31 = sor.u32 %s29, %s30
    %p32 = scmp.eq.s32.totalorder %s31, 0
    %s34 = sadd.s32 %s33, 1
    %s35 = scalar_select %p32, %s33, %s34
    %p38 = pneg %p32
    %p39 = scmp.eq.s32.totalorder %s9, 1
    %p40 = por %p38, %p39
    %p41 = scmp.ne.s32.totalorder %s33, %s36
    %p42 = scmp.eq.s32.totalorder %s9, 0
    %p43 = por %p41, %p42
    %p44 = scmp.ne.s32.totalorder %s33, %s36
    %p45 = scmp.eq.s32.totalorder %s14, 1
    %p46 = por %p44, %p45
    %p47 = scmp.ne.s32.totalorder %s36, %s37
    %p48 = scmp.eq.s32.totalorder %s14, 0
    %p49 = por %p47, %p48
    %p50 = scmp.ne.s32.totalorder %s36, %s37
    %p51 = scmp.eq.s32.totalorder %s15, 1
    %p52 = por %p50, %p51
    %p54 = scmp.ne.s32.totalorder %s37, %s53
    %p55 = scmp.eq.s32.totalorder %s15, 0
    %p56 = por %p54, %p55
    %s57 = ssub.s32 %s17, %s24
    %p58 = scmp.eq.s32.totalorder %s57, 0
    %s60 = sadd.s32 %s59, 1
    %s61 = scalar_select %p58, %s59, %s60
    %p64 = pneg %p58
    %p65 = scmp.eq.s32.totalorder %s9, 1
    %p66 = por %p64, %p65
    %p67 = scmp.ne.s32.totalorder %s59, %s62
    %p68 = scmp.eq.s32.totalorder %s9, 0
    %p69 = por %p67, %p68
    %p70 = scmp.ne.s32.totalorder %s59, %s62
    %p71 = scmp.eq.s32.totalorder %s14, 1
    %p72 = por %p70, %p71
    %p73 = scmp.ne.s32.totalorder %s62, %s63
    %p74 = scmp.eq.s32.totalorder %s14, 0
    %p75 = por %p73, %p74
    %p76 = scmp.ne.s32.totalorder %s62, %s63
    %p77 = scmp.eq.s32.totalorder %s15, 1
    %p78 = por %p76, %p77
    %p80 = scmp.ne.s32.totalorder %s63, %s79
    %p81 = scmp.eq.s32.totalorder %s15, 0
    %p82 = por %p80, %p81
    %s84 = sadd.s32 %s83, 1
    %p87 = scmp.eq.s32.totalorder %s9, 1
    %p88 = scmp.ne.s32.totalorder %s83, %s85
    %p89 = scmp.eq.s32.totalorder %s9, 0
    %p90 = por %p88, %p89
    %p91 = scmp.ne.s32.totalorder %s83, %s85
    %p92 = scmp.eq.s32.totalorder %s14, 1
    %p93 = por %p91, %p92
    %p94 = scmp.ne.s32.totalorder %s85, %s86
    %p95 = scmp.eq.s32.totalorder %s14, 0
    %p96 = por %p94, %p95
    %p97 = scmp.ne.s32.totalorder %s85, %s86
    %p98 = scmp.eq.s32.totalorder %s15, 1
    %p99 = por %p97, %p98
    %p101 = scmp.ne.s32.totalorder %s86, %s100
    %p102 = scmp.eq.s32.totalorder %s15, 0
    %p103 = por %p101, %p102
    %s104 = ssub.s32 %s16, %s28
    %p105 = scmp.eq.s32.totalorder %s104, 0
    %s107 = sadd.s32 %s106, 1
    %s108 = scalar_select %p105, %s106, %s107
    %p111 = pneg %p105
    %p112 = scmp.eq.s32.totalorder %s9, 1
    %p113 = por %p111, %p112
    %p114 = scmp.ne.s32.totalorder %s106, %s109
    %p115 = scmp.eq.s32.totalorder %s9, 0
    %p116 = por %p114, %p115
    %p117 = scmp.ne.s32.totalorder %s106, %s109
    %p118 = scmp.eq.s32.totalorder %s14, 1
    %p119 = por %p117, %p118
    %p120 = scmp.ne.s32.totalorder %s109, %s110
    %p121 = scmp.eq.s32.totalorder %s14, 0
    %p122 = por %p120, %p121
    %p123 = scmp.ne.s32.totalorder %s109, %s110
    %p124 = scmp.eq.s32.totalorder %s15, 1
    %p125 = por %p123, %p124
    %p127 = scmp.ne.s32.totalorder %s110, %s126
    %p128 = scmp.eq.s32.totalorder %s15, 0
    %p129 = por %p127, %p128
    %p130 = scmp.le.s32.totalorder 1, %s9
    %p131 = scmp.lt.s32.totalorder %s9, 3
    %p132 = pnand %p130, %p131
    %p133 = pneg %p132
    // Predicated region
    $region9: #{deeplab_forward.13} parent=5 // pred_check
      _
    $region10: #{deeplab_forward.13} parent=5 // pred_check_branch
      %135 = sbr.rel (%p132) target = $region12
    $region11: #{deeplab_forward.13} parent=5 // pred_region
      %s136 = ssub.s32 %s9, 1
      // Predicated region
      $region13: #{deeplab_forward.13} parent=11 // pred_check
        %p137 = pneg %p75
      $region14: #{deeplab_forward.13} parent=11 // pred_check_branch
        %139 = sbr.rel (%p137) target = $region16
      $region15: #{deeplab_forward.13} parent=11 // pred_region
        %s140 = smul.u32 4, %s19
        %p141 = scmp.lt.s32.totalorder %s140, 3
        %s142 = scalar_select %p141, %s140, 3
        %s143 = smul.addr %s142, 4
        %s144 = scalar_lea.vmem %s1, %s143
        %s145 = smul.u32 4, %s19
      $region16: #{deeplab_forward.13} parent=11 // pred_fallthru
        _
      // Predicated region
      $region17: #{deeplab_forward.13} parent=11 // pred_check
        %p146 = pneg %p96
      $region18: #{deeplab_forward.13} parent=11 // pred_check_branch
        %148 = sbr.rel (%p146) target = $region20
      $region19: #{deeplab_forward.13} parent=11 // pred_region
        _
      $region20: #{deeplab_forward.13} parent=11 // pred_fallthru
        _
    $region12: #{deeplab_forward.13} parent=5 // pred_fallthru
      _
    %p149 = scmp.lt.s32.totalorder %s9, 2
    // Predicated region
    $region21: #{deeplab_forward.13} parent=5 // pred_check
      %p150 = pneg %p149
    $region22: #{deeplab_forward.13} parent=5 // pred_check_branch
      %152 = sbr.rel (%p150) target = $region24
    $region23: #{deeplab_forward.13} parent=5 // pred_region
      // Predicated region
      $region25: #{deeplab_forward.13} parent=23 // pred_check
        %p153 = pneg %p43
      $region26: #{deeplab_forward.13} parent=23 // pred_check_branch
        %155 = sbr.rel (%p153) target = $region28
      $region27: #{deeplab_forward.13} parent=23 // pred_region
        %s156 = smul.u32 8, %s16
        %p157 = scmp.lt.s32.totalorder %s156, 15
        %s158 = scalar_select %p157, %s156, 15
        %p159 = scmp.lt.s32.totalorder %s17, 0
        %s160 = scalar_select %p159, %s17, 0
        %s161 = sadd.s32 %s160, %s158
        %s162 = smul.addr %s161, 4
        %s163 = scalar_lea.vmem %s0, %s162
        %s164 = smul.u32 8, %s16
      $region28: #{deeplab_forward.13} parent=23 // pred_fallthru
        _
    $region24: #{deeplab_forward.13} parent=5 // pred_fallthru
      _
    %p165 = scmp.le.s32.totalorder 1, %s9
    %p166 = scmp.lt.s32.totalorder %s9, 3
    %p167 = pnand %p165, %p166
    %p168 = pneg %p167
    // Predicated region
    $region29: #{deeplab_forward.13} parent=5 // pred_check
      _
    $region30: #{deeplab_forward.13} parent=5 // pred_check_branch
      %170 = sbr.rel (%p167) target = $region32
    $region31: #{deeplab_forward.13} parent=5 // pred_region
      %s171 = ssub.s32 %s9, 1
      %s172 = smul.u32 8, %s18
      %p173 = scmp.lt.s32.totalorder %s172, 15
      %s174 = scalar_select %p173, %s172, 15
      %p175 = scmp.lt.s32.totalorder %s19, 0
      %s176 = scalar_select %p175, %s19, 0
      %s177 = sadd.s32 %s176, %s174
      %s178 = smul.addr %s177, 4
      %s179 = scalar_lea.vmem %s0, %s178
      %p180 = pneg %p49
      %p181 = pneg %p46
      %s182 = smul.u32 4, %s19
      %p183 = scmp.lt.s32.totalorder %s182, 3
      %s184 = scalar_select %p183, %s182, 3
      %s185 = smul.addr %s184, 4
      %s186 = scalar_lea.vmem %s1, %s185
      %p187 = pneg %p75
      %p188 = pneg %p72
      %p189 = pneg %p96
      %p190 = pneg %p93
      %p191 = pneg %p122
      %p192 = pneg %p119
      %s193 = smul.u32 8, %s18
      %p194 = scmp.lt.s32.totalorder %s193, 15
      %s195 = scalar_select %p194, %s193, 15
      %s196 = smul.addr %s195, 8
      %s197 = scalar_lea.vmem %s3, %s196
      %s198 = smul.u32 8, %s18
      %p199 = scmp.lt.s32.totalorder %s198, 15
      %s200 = scalar_select %p199, %s198, 15
      %p201 = scmp.lt.s32.totalorder %s19, 0
      %s202 = scalar_select %p201, %s19, 0
      %s203 = sadd.s32 %s202, %s200
      %s204 = smul.addr %s203, 4
      %s205 = scalar_lea.vmem %s0, %s204
      %s206 = smul.u32 8, %s18
      %s207 = smul.u32 4, %s19
      %p208 = scmp.lt.s32.totalorder %s207, 3
      %s209 = scalar_select %p208, %s207, 3
      %s210 = smul.addr %s209, 4
      %s211 = scalar_lea.vmem %s1, %s210
      %s212 = smul.u32 4, %s19
      %s213 = smul.u32 8, %s18
      %p214 = scmp.lt.s32.totalorder %s213, 15
      %s215 = scalar_select %p214, %s213, 15
      %s216 = smul.addr %s215, 8
      %s217 = scalar_lea.vmem %s3, %s216
      %s218 = smul.u32 8, %s18
      %p220 = scmp.eq.s32.totalorder %s19, 0
      // Predicated region
      $region33: #{deeplab_forward.13} parent=31 // pred_check
        %p221 = pneg %p220
      $region34: #{deeplab_forward.13} parent=31 // pred_check_branch
        %223 = sbr.rel (%p221) target = $region36
      $region35: #{deeplab_forward.13} parent=31 // pred_region
        %vm224 = vcmask 31744
        %225 = vst.msk [vmem:[#allocation2] sm:$0xff] %vm224, 0.0
        %226 = vst.msk [vmem:[#allocation2 + $0x8] sm:$0xff] %vm224, 0.0
        %227 = vst.msk [vmem:[#allocation2 + $0x10] sm:$0xff] %vm224, 0.0
        %228 = vst.msk [vmem:[#allocation2 + $0x18] sm:$0xff] %vm224, 0.0
        %229 = vst.msk [vmem:[#allocation2 + $0x20] sm:$0xff] %vm224, 0.0
        %230 = vst.msk [vmem:[#allocation2 + $0x28] sm:$0xff] %vm224, 0.0
        %231 = vst.msk [vmem:[#allocation2 + $0x30] sm:$0xff] %vm224, 0.0
        %232 = vst.msk [vmem:[#allocation2 + $0x38] sm:$0xff] %vm224, 0.0
      $region36: #{deeplab_forward.13} parent=31 // pred_fallthru
        _
      %v233 = vld [vmem:[#allocation2] sm:$0xff]
      %v234 = vld [vmem:[#allocation2 + $0x8] sm:$0xff]
      %v235 = vld [vmem:[#allocation2 + $0x10] sm:$0xff]
      %v236 = vld [vmem:[#allocation2 + $0x18] sm:$0xff]
      %v237 = vld [vmem:[#allocation2 + $0x20] sm:$0xff]
      %v238 = vld [vmem:[#allocation2 + $0x28] sm:$0xff]
      %v239 = vld [vmem:[#allocation2 + $0x30] sm:$0xff]
      %v240 = vld [vmem:[#allocation2 + $0x38] sm:$0xff]
      %v241 = vld [vmem:[%s205] sm:$0xf]
      %v242 = vld [vmem:[%s205 + $0x4] sm:$0xf]
      %v243 = vld [vmem:[%s205 + $0x8] sm:$0xf]
      %v244 = vld [vmem:[%s205 + $0xc] sm:$0xf]
      %v245 = vld [vmem:[%s205 + $0x10] sm:$0xf]
      %v246 = vld [vmem:[%s205 + $0x14] sm:$0xf]
      %v247 = vld [vmem:[%s205 + $0x18] sm:$0xf]
      %v248 = vld [vmem:[%s205 + $0x1c] sm:$0xf]
      %v249 = vld [vmem:[%s211] sm:$0xf]
      %v250 = vld [vmem:[%s211 + $0x4] sm:$0xf]
      %v251 = vld [vmem:[%s211 + $0x8] sm:$0xf]
      %v252 = vld [vmem:[%s211 + $0xc] sm:$0xf]
      %v261 = vunpack.c.l.b16 %v241
      %v262 = vunpack.c.l.b16 %v242
      %v263 = vunpack.c.l.b16 %v243
      %v264 = vunpack.c.l.b16 %v244
      %v265 = vunpack.c.l.b16 %v245
      %v266 = vunpack.c.l.b16 %v246
      %v267 = vunpack.c.l.b16 %v247
      %v268 = vunpack.c.l.b16 %v248
      %v269 = vpack.c.b16 %v262, %v261
      %v270 = vpack.c.b16 %v264, %v263
      %v271 = vpack.c.b16 %v266, %v265
      %v272 = vpack.c.b16 %v268, %v267
      %v277 = vunpack.c.l.b16 %v249
      %v278 = vunpack.c.l.b16 %v250
      %v279 = vunpack.c.l.b16 %v251
      %v280 = vunpack.c.l.b16 %v252
      %v281 = vpack.c.b16 %v278, %v277
      %v282 = vpack.c.b16 %v280, %v279
      %vm285 = vcmask 261120
      %v287 = vsel %vm285, %v269, 0
      %v290 = vsel %vm285, %v270, 0
      %v293 = vsel %vm285, %v271, 0
      %v296 = vsel %vm285, %v272, 0
      %298 = vmatprep.subr.bf16.mxu0 0
      %299 = vmatpush1.bf16.msra.mxu0 0
      %300 = vmatprep.subr.bf16.mxu0 0
      %301 = vmatpush1.bf16.msra.mxu0 0
      %302 = vmatprep.subr.bf16.mxu0 0
      %303 = vmatpush1.bf16.msra.mxu0 0
      %304 = vmatprep.subr.bf16.mxu0 0
      %305 = vmatpush1.bf16.msra.mxu0 0
      %306 = vmatprep.subr.bf16.mxu0 0
      %307 = vmatpush1.bf16.msra.mxu0 0
      %308 = vmatprep.subr.bf16.mxu0 0
      %309 = vmatpush1.bf16.msra.mxu0 0
      %310 = vmatprep.subr.bf16.mxu0 0
      %311 = vmatpush1.bf16.msra.mxu0 %v282
      %312 = vmatprep.subr.bf16.mxu0 0
      %313 = vmatpush1.bf16.msra.mxu0 %v281
      %314 = vmatprep.subr.bf16.mxu0 0
      %315 = vmatpush2.bf16.msra.mxu0 0
      %316 = vmatprep.subr.bf16.mxu0 0
      %317 = vmatpush2.bf16.msra.mxu0 0
      %318 = vmatprep.subr.bf16.mxu0 0
      %319 = vmatpush2.bf16.msra.mxu0 0
      %320 = vmatprep.subr.bf16.mxu0 0
      %321 = vmatpush2.bf16.msra.mxu0 0
      %322 = vmatprep.subr.bf16.mxu0 0
      %323 = vmatpush2.bf16.msra.mxu0 0
      %324 = vmatprep.subr.bf16.mxu0 0
      %325 = vmatpush2.bf16.msra.mxu0 0
      %326 = vmatprep.subr.bf16.mxu0 0
      %327 = vmatpush2.bf16.msra.mxu0 0
      %328 = vmatprep.subr.bf16.mxu0 0
      %329 = vmatpush2.bf16.msra.mxu0 0
      %330 = vmatprep.mubr.bf16.mxu0 0
      %331 = vmatmul.mubr.bf16.gmra.mxu0 %v287
      %v332 = vpop.f32.mrf.mxu0
      %v333 = vadd.f32 0.0, %v332
      %v334 = vpop.f32.mrf.mxu0
      %v335 = vpop.f32.mrf.mxu0
      %v336 = vadd.f32 0.0, %v335
      %v337 = vpop.f32.mrf.mxu0
      %338 = vmatprep.mubr.bf16.mxu0 0
      %339 = vmatmul.mubr.bf16.gmra.mxu0 %v290
      %v340 = vpop.f32.mrf.mxu0
      %v341 = vadd.f32 0.0, %v340
      %v342 = vpop.f32.mrf.mxu0
      %v343 = vpop.f32.mrf.mxu0
      %v344 = vadd.f32 0.0, %v343
      %v345 = vpop.f32.mrf.mxu0
      %346 = vmatprep.mubr.bf16.mxu0 0
      %347 = vmatmul.mubr.bf16.gmra.mxu0 %v293
      %v348 = vpop.f32.mrf.mxu0
      %v349 = vadd.f32 0.0, %v348
      %v350 = vpop.f32.mrf.mxu0
      %v351 = vpop.f32.mrf.mxu0
      %v352 = vadd.f32 0.0, %v351
      %v353 = vpop.f32.mrf.mxu0
      %354 = vmatprep.mubr.bf16.mxu0 0
      %355 = vmatmul.mubr.bf16.gmra.mxu0 %v296
      %v356 = vpop.f32.mrf.mxu0
      %v357 = vadd.f32 0.0, %v356
      %v358 = vpop.f32.mrf.mxu0
      %v359 = vpop.f32.mrf.mxu0
      %v360 = vadd.f32 0.0, %v359
      %v361 = vpop.f32.mrf.mxu0
      %362 = vdwg.mxu0
      %v363 = vadd.f32 %v233, %v333
      %v364 = vadd.f32 %v234, %v336
      %v365 = vadd.f32 %v235, %v341
      %v366 = vadd.f32 %v236, %v344
      %v367 = vadd.f32 %v237, %v349
      %v368 = vadd.f32 %v238, %v352
      %v369 = vadd.f32 %v239, %v357
      %v370 = vadd.f32 %v240, %v360
      %vm371 = vcmask 31744
      %372 = vst.msk [vmem:[#allocation2] sm:$0xff] %vm371, %v363
      %373 = vst.msk [vmem:[#allocation2 + $0x8] sm:$0xff] %vm371, %v364
      %374 = vst.msk [vmem:[#allocation2 + $0x10] sm:$0xff] %vm371, %v365
      %375 = vst.msk [vmem:[#allocation2 + $0x18] sm:$0xff] %vm371, %v366
      %376 = vst.msk [vmem:[#allocation2 + $0x20] sm:$0xff] %vm371, %v367
      %377 = vst.msk [vmem:[#allocation2 + $0x28] sm:$0xff] %vm371, %v368
      %378 = vst.msk [vmem:[#allocation2 + $0x30] sm:$0xff] %vm371, %v369
      %379 = vst.msk [vmem:[#allocation2 + $0x38] sm:$0xff] %vm371, %v370
      // Predicated region
      $region37: #{deeplab_forward.13} parent=31 // pred_check
        %p380 = pneg %p220
      $region38: #{deeplab_forward.13} parent=31 // pred_check_branch
        %382 = sbr.rel (%p380) target = $region40
      $region39: #{deeplab_forward.13} parent=31 // pred_region
        %v383 = vld [vmem:[#allocation2] sm:$0xff]
        %v384 = vld [vmem:[#allocation2 + $0x8] sm:$0xff]
        %v385 = vld [vmem:[#allocation2 + $0x10] sm:$0xff]
        %v386 = vld [vmem:[#allocation2 + $0x18] sm:$0xff]
        %v387 = vld [vmem:[#allocation2 + $0x20] sm:$0xff]
        %v388 = vld [vmem:[#allocation2 + $0x28] sm:$0xff]
        %v389 = vld [vmem:[#allocation2 + $0x30] sm:$0xff]
        %v390 = vld [vmem:[#allocation2 + $0x38] sm:$0xff]
        %v391 = vld [vmem:[%s2] sm:$0x1]
        %v393 = vlaneseq
        %v394 = vshrl.u32 %v393, 7
        %v395 = vsub.s32 0, %v394
        %v396 = vrot.slane %v391, %v395
        %v398 = vadd.f32 %v383, %v396
        %v399 = vadd.f32 %v384, %v396
        %v400 = vadd.f32 %v385, %v396
        %v401 = vadd.f32 %v386, %v396
        %v402 = vadd.f32 %v387, %v396
        %v403 = vadd.f32 %v388, %v396
        %v404 = vadd.f32 %v389, %v396
        %v405 = vadd.f32 %v390, %v396
        %406 = vst.msk [vmem:[%s217] sm:$0xff] %vm371, %v398
        %407 = vst.msk [vmem:[%s217 + $0x8] sm:$0xff] %vm371, %v399
        %408 = vst.msk [vmem:[%s217 + $0x10] sm:$0xff] %vm371, %v400
        %409 = vst.msk [vmem:[%s217 + $0x18] sm:$0xff] %vm371, %v401
        %410 = vst.msk [vmem:[%s217 + $0x20] sm:$0xff] %vm371, %v402
        %411 = vst.msk [vmem:[%s217 + $0x28] sm:$0xff] %vm371, %v403
        %412 = vst.msk [vmem:[%s217 + $0x30] sm:$0xff] %vm371, %v404
        %413 = vst.msk [vmem:[%s217 + $0x38] sm:$0xff] %vm371, %v405
      $region40: #{deeplab_forward.13} parent=31 // pred_fallthru
        _
      %s414 = smul.u32 8, %s18
      %p415 = scmp.lt.s32.totalorder %s414, 15
      %s416 = scalar_select %p415, %s414, 15
      %s417 = smul.addr %s416, 8
      %s418 = scalar_lea.vmem %s3, %s417
      // Predicated region
      $region41: #{deeplab_forward.13} parent=31 // pred_check
        %p419 = pneg %p119
      $region42: #{deeplab_forward.13} parent=31 // pred_check_branch
        %421 = sbr.rel (%p419) target = $region44
      $region43: #{deeplab_forward.13} parent=31 // pred_region
        %s422 = smul.u32 8, %s18
      $region44: #{deeplab_forward.13} parent=31 // pred_fallthru
        _
    $region32: #{deeplab_forward.13} parent=5 // pred_fallthru
      _
    %p423 = scmp.le.s32.totalorder 2, %s9
    // Predicated region
    $region45: #{deeplab_forward.13} parent=5 // pred_check
      %p424 = pneg %p423
    $region46: #{deeplab_forward.13} parent=5 // pred_check_branch
      %426 = sbr.rel (%p424) target = $region48
    $region47: #{deeplab_forward.13} parent=5 // pred_region
      %s427 = ssub.s32 %s9, 2
      // Predicated region
      $region49: #{deeplab_forward.13} parent=47 // pred_check
        %p428 = pneg %p125
      $region50: #{deeplab_forward.13} parent=47 // pred_check_branch
        %430 = sbr.rel (%p428) target = $region52
      $region51: #{deeplab_forward.13} parent=47 // pred_region
        %s431 = smul.u32 8, %s20
        %p432 = scmp.lt.s32.totalorder %s431, 15
        %s433 = scalar_select %p432, %s431, 15
        %s434 = smul.addr %s433, 8
        %s435 = scalar_lea.vmem %s3, %s434
      $region52: #{deeplab_forward.13} parent=47 // pred_fallthru
        _
    $region48: #{deeplab_forward.13} parent=5 // pred_fallthru
      _
  $region6: #{deeplab_forward.13} parent=0 // loop_footer
    %s13 = sadd.s32 1, %s9
  $region7: #{deeplab_forward.13} parent=0 // loop_footer_branch
    %8 = sbr.rel target = $region3
  $region8: #{deeplab_forward.13} parent=0 // loop_exit
    _

</llo_original>
